<compile_context>
chip_gen: v5e
topology: v5e:2x2
jax: 0.10.0
libtpu: 0.0.40
codegen_flags: <defaults>
</compile_context>

<pallas_src>
import functools

import jax
import jax.numpy as jnp
from jax.experimental import pallas as pl
from jax.experimental.pallas import tpu as pltpu

EPS = 1e-5


# ----------------------------- Pallas kernels ------------------------------

def _conv_bn_relu_kernel(p_ref, w_ref, g_ref, b_ref, o_ref, *, inv_m):
    """Fused: im2col-matmul (MXU, bf16 in / f32 acc) + BN(batch stats) + ReLU."""
    acc = jnp.dot(p_ref[...], w_ref[...], preferred_element_type=jnp.float32)
    mean = jnp.sum(acc, axis=0, keepdims=True) * inv_m          # (1, C)
    cent = acc - mean
    var = jnp.sum(cent * cent, axis=0, keepdims=True) * inv_m   # biased var (BN train)
    scale = g_ref[...] * jax.lax.rsqrt(var + EPS)               # rsqrt -> EUP slot
    o_ref[...] = jnp.maximum(cent * scale + b_ref[...], 0.0)


def _conv_bn_add_relu_kernel(p_ref, w_ref, g_ref, b_ref, r_ref, o_ref, *, inv_m):
    """Same as above plus fused residual add before the ReLU."""
    acc = jnp.dot(p_ref[...], w_ref[...], preferred_element_type=jnp.float32)
    mean = jnp.sum(acc, axis=0, keepdims=True) * inv_m
    cent = acc - mean
    var = jnp.sum(cent * cent, axis=0, keepdims=True) * inv_m
    scale = g_ref[...] * jax.lax.rsqrt(var + EPS)
    o_ref[...] = jnp.maximum(cent * scale + b_ref[...] + r_ref[...], 0.0)


# --------------------------- pallas_call wrapper ----------------------------

def fused_conv_bn_act(patches, w_mat, gamma, beta, residual=None):
    """conv (im2col matmul) + BN batch-stats + affine [+ residual] + ReLU,
    all inside a single pallas_call with grid=(1,).

      patches : (M, 9*Cin) f32     w_mat : (9*Cin, Cout) f32
      gamma, beta : (Cout,) f32    residual : optional (M, Cout) f32
    """
    M, K = patches.shape
    C = w_mat.shape[1]

    # bf16 MXU inputs (full-rate MXU on v6e/v7x, halves DMA bytes); all BN /
    # elementwise math stays in f32 (v5e VPU/EUP have no bf16; f32 acc anyway).
    p_bf = patches.astype(jnp.bfloat16)
    w_bf = w_mat.astype(jnp.bfloat16)
    g = gamma.reshape(1, C).astype(jnp.float32)
    b = beta.reshape(1, C).astype(jnp.float32)

    def full(shape):
        return pl.BlockSpec(shape, lambda i: (0,) * len(shape))

    in_specs = [full((M, K)), full((K, C)), full((1, C)), full((1, C))]
    args = [p_bf, w_bf, g, b]
    if residual is None:
        kernel = functools.partial(_conv_bn_relu_kernel, inv_m=1.0 / M)
    else:
        kernel = functools.partial(_conv_bn_add_relu_kernel, inv_m=1.0 / M)
        in_specs.append(full((M, C)))
        args.append(residual.astype(jnp.float32))

    return pl.pallas_call(
        kernel,
        out_shape=jax.ShapeDtypeStruct((M, C), jnp.float32),
        grid=(1,),                      # whole problem in one VMEM-resident step
        in_specs=in_specs,
        out_specs=full((M, C)),
        compiler_params=pltpu.CompilerParams(
            dimension_semantics=("arbitrary",)),
    )(*args)


# ------------------------------- JAX glue ----------------------------------

def _extract_patches(x_nhwc, stride):
    """XLA-side im2col for a 3x3 conv with padding=1. Returns (M, 9*C) + dims."""
    N, H, W, C = x_nhwc.shape
    xp = jnp.pad(x_nhwc, ((0, 0), (1, 1), (1, 1), (0, 0)))
    Ho = (H + 2 - 3) // stride + 1
    Wo = (W + 2 - 3) // stride + 1
    pieces = []
    for ky in range(3):
        for kx in range(3):
            pieces.append(xp[:, ky:ky + stride * (Ho - 1) + 1:stride,
                             kx:kx + stride * (Wo - 1) + 1:stride, :])
    p = jnp.concatenate(pieces, axis=-1)          # (N, Ho, Wo, 9*C)
    return p.reshape(N * Ho * Wo, 9 * C), (N, Ho, Wo)
# TODO(synk): for production batch/spatial sizes, move im2col inside the kernel
# (halo-tiled NHWC input + 9 shifted slabs) to avoid the 9x patch HBM traffic;
# at these toy shapes the fused conv+BN kernel dominates and XLA im2col is
# negligible.


def conv_bn_relu(x_nhwc, w, gamma, beta, stride):
    patches, (N, Ho, Wo) = _extract_patches(x_nhwc, stride)
    out = fused_conv_bn_act(patches, w, gamma, beta)
    return out.reshape(N, Ho, Wo, -1)


def basic_block(x_nhwc, bp):
    """BasicBlock: relu(bn2(conv2(relu(bn1(conv1(x))))) + shortcut(x))."""
    stride = bp['stride']
    in_planes = x_nhwc.shape[-1]
    planes = bp['w2'].shape[1]

    h = conv_bn_relu(x_nhwc, bp['w1'], bp['g1'], bp['b1'], stride)
    N, Ho, Wo, _ = h.shape

    if stride != 1 or in_planes != planes:
        # option-'A' shortcut: spatial ::2 subsample + zero-pad channels.
        sc = x_nhwc[:, ::2, ::2, :]
        pad = planes // 4
        sc = jnp.pad(sc, ((0, 0), (0, 0), (0, 0), (pad, pad)))
    else:
        sc = x_nhwc
    res = sc.reshape(N * Ho * Wo, planes)

    patches2, _ = _extract_patches(h, 1)
    out = fused_conv_bn_act(patches2, bp['w2'], bp['g2'], bp['b2'], residual=res)
    return out.reshape(N, Ho, Wo, planes)


# ------------------------------ parameters ----------------------------------

def _kaiming_conv(key, cin, cout):
    fan_in = cin * 9
    std = (2.0 / fan_in) ** 0.5
    w = jax.random.normal(key, (3, 3, cin, cout), jnp.float32) * std
    return w.reshape(9 * cin, cout)               # (ky,kx,cin) ordering == patches


def init_params(key, num_blocks=(2, 2, 2)):
    params = {}
    key, k = jax.random.split(key)
    params['conv1'] = _kaiming_conv(k, 3, 16)
    params['bn1_g'] = jnp.ones(16, jnp.float32)
    params['bn1_b'] = jnp.zeros(16, jnp.float32)

    in_planes = 16
    layers = []
    for planes, nb, stride0 in zip((16, 32, 64), num_blocks, (1, 2, 2)):
        blocks = []
        strides = [stride0] + [1] * (nb - 1)
        for s in strides:
            key, k1, k2 = jax.random.split(key, 3)
            blocks.append(dict(
                w1=_kaiming_conv(k1, in_planes, planes),
                g1=jnp.ones(planes, jnp.float32),
                b1=jnp.zeros(planes, jnp.float32),
                w2=_kaiming_conv(k2, planes, planes),
                g2=jnp.ones(planes, jnp.float32),
                b2=jnp.zeros(planes, jnp.float32),
                stride=s,
            ))
            in_planes = planes
        layers.append(blocks)
    params['layers'] = layers
    return params


# -------------------------------- forward -----------------------------------

def forward(params, x_nchw):
    x = jnp.transpose(x_nchw, (0, 2, 3, 1)).astype(jnp.float32)   # -> NHWC

    # stem: relu(bn1(conv1(x)))
    out = conv_bn_relu(x, params['conv1'], params['bn1_g'], params['bn1_b'], 1)

    # layer1
    for bp in params['layers'][0]:
        out = basic_block(out, bp)

    # layer2[0] -> out1 ; layer2[1:] -> out2
    out1 = basic_block(out, params['layers'][1][0])
    out2 = out1
    for bp in params['layers'][1][1:]:
        out2 = basic_block(out2, bp)

    # layer3[0] -> out3 ; layer3[1:] -> out4
    out3 = basic_block(out2, params['layers'][2][0])
    out4 = out3
    for bp in params['layers'][2][1:]:
        out4 = basic_block(out4, bp)

    to_nchw = lambda t: jnp.transpose(t, (0, 3, 1, 2))
    return [to_nchw(out1), to_nchw(out3), to_nchw(out4)]


if __name__ == "__main__":
    key = jax.random.PRNGKey(0)
    kparam, kx = jax.random.split(key)

    # Small config consistent with the module: num_blocks=(2,2,2), CIFAR-style
    # 3-channel input at reduced 16x16 spatial, batch=2.
    params = init_params(kparam, num_blocks=(2, 2, 2))
    x = jax.random.normal(kx, (2, 3, 16, 16), jnp.float32)

    fwd = jax.jit(lambda inp: forward(params, inp))
    out1, out3, out4 = fwd(x)
    jax.block_until_ready((out1, out3, out4))

    assert out1.shape == (2, 32, 8, 8), out1.shape   # layer2[0] output
    assert out3.shape == (2, 64, 4, 4), out3.shape   # layer3[0] output
    assert out4.shape == (2, 64, 4, 4), out4.shape   # layer3[1:] output
    assert all(bool(jnp.isfinite(o).all()) for o in (out1, out3, out4))

    print("KERNEL_OK")
</pallas_src>

<mosaic_0001>
module attributes {stable_mosaic.version = 11 : i64} {
  func.func @_conv_bn_relu_kernel(%arg0: i32, %arg1: memref<512x27xbf16, #tpu.memory_space<vmem>>, %arg2: memref<27x16xbf16, #tpu.memory_space<vmem>>, %arg3: memref<1x16xf32, #tpu.memory_space<vmem>>, %arg4: memref<1x16xf32, #tpu.memory_space<vmem>>, %arg5: memref<512x16xf32, #tpu.memory_space<vmem>>) attributes {dimension_semantics = [#tpu.dimension_semantics<arbitrary>], iteration_bounds = array<i64: 1>, scalar_prefetch = 0 : i64, scratch_operands = 0 : i64, tpu.core_type = #tpu.core_type<tc>, window_params = [{pipeline_mode = #tpu.pipeline_mode<synchronous>, transform_indices = @transform_0, window_bounds = array<i64: 512, 27>}, {pipeline_mode = #tpu.pipeline_mode<synchronous>, transform_indices = @transform_1, window_bounds = array<i64: 27, 16>}, {pipeline_mode = #tpu.pipeline_mode<synchronous>, transform_indices = @transform_2, window_bounds = array<i64: 1, 16>}, {pipeline_mode = #tpu.pipeline_mode<synchronous>, transform_indices = @transform_3, window_bounds = array<i64: 1, 16>}, {pipeline_mode = #tpu.pipeline_mode<synchronous>, transform_indices = @transform_4, window_bounds = array<i64: 512, 16>}]} {
    %c0 = arith.constant 0 : index
    %c0_0 = arith.constant 0 : index
    %0 = vector.load %arg1[%c0, %c0_0] : memref<512x27xbf16, #tpu.memory_space<vmem>>, vector<512x27xbf16>
    %c0_1 = arith.constant 0 : index
    %c0_2 = arith.constant 0 : index
    %1 = vector.load %arg2[%c0_1, %c0_2] : memref<27x16xbf16, #tpu.memory_space<vmem>>, vector<27x16xbf16>
    %cst = arith.constant dense<0.000000e+00> : vector<512x16xf32>
    %2 = tpu.matmul %0, %1, %cst {dimension_numbers = #tpu.dot_dimension_numbers<[1], [0], [0], [1], [0, 0, 1, 1], [], []>} : vector<512x27xbf16>, vector<27x16xbf16>, vector<512x16xf32> -> vector<512x16xf32>
    %cst_3 = arith.constant dense<0.000000e+00> : vector<16xf32>
    %3 = vector.multi_reduction <add>, %2, %cst_3 [0] : vector<512x16xf32> to vector<16xf32>
    %4 = vector.shape_cast %3 : vector<16xf32> to vector<1x16xf32>
    %cst_4 = arith.constant 0.001953125 : f32
    %5 = vector.broadcast %cst_4 : f32 to vector<1x16xf32>
    %6 = arith.mulf %4, %5 : vector<1x16xf32>
    %7 = vector.broadcast %6 : vector<1x16xf32> to vector<512x16xf32>
    %8 = arith.subf %2, %7 : vector<512x16xf32>
    %9 = arith.mulf %8, %8 : vector<512x16xf32>
    %cst_5 = arith.constant dense<0.000000e+00> : vector<16xf32>
    %10 = vector.multi_reduction <add>, %9, %cst_5 [0] : vector<512x16xf32> to vector<16xf32>
    %11 = vector.shape_cast %10 : vector<16xf32> to vector<1x16xf32>
    %cst_6 = arith.constant 0.001953125 : f32
    %12 = vector.broadcast %cst_6 : f32 to vector<1x16xf32>
    %13 = arith.mulf %11, %12 : vector<1x16xf32>
    %c0_7 = arith.constant 0 : index
    %c0_8 = arith.constant 0 : index
    %14 = vector.load %arg3[%c0_7, %c0_8] : memref<1x16xf32, #tpu.memory_space<vmem>>, vector<1x16xf32>
    %cst_9 = arith.constant 9.99999974E-6 : f32
    %15 = vector.broadcast %cst_9 : f32 to vector<1x16xf32>
    %16 = arith.addf %13, %15 : vector<1x16xf32>
    %17 = math.rsqrt %16 : vector<1x16xf32>
    %18 = arith.mulf %14, %17 : vector<1x16xf32>
    %19 = vector.broadcast %18 : vector<1x16xf32> to vector<512x16xf32>
    %20 = arith.mulf %8, %19 : vector<512x16xf32>
    %c0_10 = arith.constant 0 : index
    %c0_11 = arith.constant 0 : index
    %21 = vector.load %arg4[%c0_10, %c0_11] : memref<1x16xf32, #tpu.memory_space<vmem>>, vector<1x16xf32>
    %22 = vector.broadcast %21 : vector<1x16xf32> to vector<512x16xf32>
    %23 = arith.addf %20, %22 : vector<512x16xf32>
    %cst_12 = arith.constant 0.000000e+00 : f32
    %24 = vector.broadcast %cst_12 : f32 to vector<512x16xf32>
    %25 = arith.maximumf %23, %24 : vector<512x16xf32>
    %c0_13 = arith.constant 0 : index
    %c0_14 = arith.constant 0 : index
    %26 = vector.load %arg5[%c0_13, %c0_14] : memref<512x16xf32, #tpu.memory_space<vmem>>, vector<512x16xf32>
    tpu.vector_store %arg5[%c0_13, %c0_14], %25 {strides = array<i32>} : memref<512x16xf32, #tpu.memory_space<vmem>>, vector<512x16xf32>,
    return
  }
  func.func @transform_0(%arg0: i32) -> (i32, i32) {
    %c0_i32 = arith.constant 0 : i32
    %c0_i32_0 = arith.constant 0 : i32
    %c0_i32_1 = arith.constant 0 : i32
    return %c0_i32, %c0_i32_0 : i32, i32
  }
  func.func @transform_1(%arg0: i32) -> (i32, i32) {
    %c0_i32 = arith.constant 0 : i32
    %c0_i32_0 = arith.constant 0 : i32
    %c0_i32_1 = arith.constant 0 : i32
    return %c0_i32, %c0_i32_0 : i32, i32
  }
  func.func @transform_2(%arg0: i32) -> (i32, i32) {
    %c0_i32 = arith.constant 0 : i32
    %c0_i32_0 = arith.constant 0 : i32
    %c0_i32_1 = arith.constant 0 : i32
    return %c0_i32, %c0_i32_0 : i32, i32
  }
  func.func @transform_3(%arg0: i32) -> (i32, i32) {
    %c0_i32 = arith.constant 0 : i32
    %c0_i32_0 = arith.constant 0 : i32
    %c0_i32_1 = arith.constant 0 : i32
    return %c0_i32, %c0_i32_0 : i32, i32
  }
  func.func @transform_4(%arg0: i32) -> (i32, i32) {
    %c0_i32 = arith.constant 0 : i32
    %c0_i32_0 = arith.constant 0 : i32
    %c0_i32_1 = arith.constant 0 : i32
    return %c0_i32, %c0_i32_0 : i32, i32
  }
}

module attributes {stable_mosaic.version = 11 : i64} {
  func.func @_conv_bn_add_relu_kernel(%arg0: i32, %arg1: memref<512x144xbf16, #tpu.memory_space<vmem>>, %arg2: memref<144x16xbf16, #tpu.memory_space<vmem>>, %arg3: memref<1x16xf32, #tpu.memory_space<vmem>>, %arg4: memref<1x16xf32, #tpu.memory_space<vmem>>, %arg5: memref<512x16xf32, #tpu.memory_space<vmem>>, %arg6: memref<512x16xf32, #tpu.memory_space<vmem>>) attributes {dimension_semantics = [#tpu.dimension_semantics<arbitrary>], iteration_bounds = array<i64: 1>, scalar_prefetch = 0 : i64, scratch_operands = 0 : i64, tpu.core_type = #tpu.core_type<tc>, window_params = [{pipeline_mode = #tpu.pipeline_mode<synchronous>, transform_indices = @transform_0, window_bounds = array<i64: 512, 144>}, {pipeline_mode = #tpu.pipeline_mode<synchronous>, transform_indices = @transform_1, window_bounds = array<i64: 144, 16>}, {pipeline_mode = #tpu.pipeline_mode<synchronous>, transform_indices = @transform_2, window_bounds = array<i64: 1, 16>}, {pipeline_mode = #tpu.pipeline_mode<synchronous>, transform_indices = @transform_3, window_bounds = array<i64: 1, 16>}, {pipeline_mode = #tpu.pipeline_mode<synchronous>, transform_indices = @transform_4, window_bounds = array<i64: 512, 16>}, {pipeline_mode = #tpu.pipeline_mode<synchronous>, transform_indices = @transform_5, window_bounds = array<i64: 512, 16>}]} {
    %c0 = arith.constant 0 : index
    %c0_0 = arith.constant 0 : index
    %0 = vector.load %arg1[%c0, %c0_0] : memref<512x144xbf16, #tpu.memory_space<vmem>>, vector<512x144xbf16>
    %c0_1 = arith.constant 0 : index
    %c0_2 = arith.constant 0 : index
    %1 = vector.load %arg2[%c0_1, %c0_2] : memref<144x16xbf16, #tpu.memory_space<vmem>>, vector<144x16xbf16>
    %cst = arith.constant dense<0.000000e+00> : vector<512x16xf32>
    %2 = tpu.matmul %0, %1, %cst {dimension_numbers = #tpu.dot_dimension_numbers<[1], [0], [0], [1], [0, 0, 1, 1], [], []>} : vector<512x144xbf16>, vector<144x16xbf16>, vector<512x16xf32> -> vector<512x16xf32>
    %cst_3 = arith.constant dense<0.000000e+00> : vector<16xf32>
    %3 = vector.multi_reduction <add>, %2, %cst_3 [0] : vector<512x16xf32> to vector<16xf32>
    %4 = vector.shape_cast %3 : vector<16xf32> to vector<1x16xf32>
    %cst_4 = arith.constant 0.001953125 : f32
    %5 = vector.broadcast %cst_4 : f32 to vector<1x16xf32>
    %6 = arith.mulf %4, %5 : vector<1x16xf32>
    %7 = vector.broadcast %6 : vector<1x16xf32> to vector<512x16xf32>
    %8 = arith.subf %2, %7 : vector<512x16xf32>
    %9 = arith.mulf %8, %8 : vector<512x16xf32>
    %cst_5 = arith.constant dense<0.000000e+00> : vector<16xf32>
    %10 = vector.multi_reduction <add>, %9, %cst_5 [0] : vector<512x16xf32> to vector<16xf32>
    %11 = vector.shape_cast %10 : vector<16xf32> to vector<1x16xf32>
    %cst_6 = arith.constant 0.001953125 : f32
    %12 = vector.broadcast %cst_6 : f32 to vector<1x16xf32>
    %13 = arith.mulf %11, %12 : vector<1x16xf32>
    %c0_7 = arith.constant 0 : index
    %c0_8 = arith.constant 0 : index
    %14 = vector.load %arg3[%c0_7, %c0_8] : memref<1x16xf32, #tpu.memory_space<vmem>>, vector<1x16xf32>
    %cst_9 = arith.constant 9.99999974E-6 : f32
    %15 = vector.broadcast %cst_9 : f32 to vector<1x16xf32>
    %16 = arith.addf %13, %15 : vector<1x16xf32>
    %17 = math.rsqrt %16 : vector<1x16xf32>
    %18 = arith.mulf %14, %17 : vector<1x16xf32>
    %19 = vector.broadcast %18 : vector<1x16xf32> to vector<512x16xf32>
    %20 = arith.mulf %8, %19 : vector<512x16xf32>
    %c0_10 = arith.constant 0 : index
    %c0_11 = arith.constant 0 : index
    %21 = vector.load %arg4[%c0_10, %c0_11] : memref<1x16xf32, #tpu.memory_space<vmem>>, vector<1x16xf32>
    %22 = vector.broadcast %21 : vector<1x16xf32> to vector<512x16xf32>
    %23 = arith.addf %20, %22 : vector<512x16xf32>
    %c0_12 = arith.constant 0 : index
    %c0_13 = arith.constant 0 : index
    %24 = vector.load %arg5[%c0_12, %c0_13] : memref<512x16xf32, #tpu.memory_space<vmem>>, vector<512x16xf32>
    %25 = arith.addf %23, %24 : vector<512x16xf32>
    %cst_14 = arith.constant 0.000000e+00 : f32
    %26 = vector.broadcast %cst_14 : f32 to vector<512x16xf32>
    %27 = arith.maximumf %25, %26 : vector<512x16xf32>
    %c0_15 = arith.constant 0 : index
    %c0_16 = arith.constant 0 : index
    %28 = vector.load %arg6[%c0_15, %c0_16] : memref<512x16xf32, #tpu.memory_space<vmem>>, vector<512x16xf32>
    tpu.vector_store %arg6[%c0_15, %c0_16], %27 {strides = array<i32>} : memref<512x16xf32, #tpu.memory_space<vmem>>, vector<512x16xf32>,
    return
  }
  func.func @transform_0(%arg0: i32) -> (i32, i32) {
    %c0_i32 = arith.constant 0 : i32
    %c0_i32_0 = arith.constant 0 : i32
    %c0_i32_1 = arith.constant 0 : i32
    return %c0_i32, %c0_i32_0 : i32, i32
  }
  func.func @transform_1(%arg0: i32) -> (i32, i32) {
    %c0_i32 = arith.constant 0 : i32
    %c0_i32_0 = arith.constant 0 : i32
    %c0_i32_1 = arith.constant 0 : i32
    return %c0_i32, %c0_i32_0 : i32, i32
  }
  func.func @transform_2(%arg0: i32) -> (i32, i32) {
    %c0_i32 = arith.constant 0 : i32
    %c0_i32_0 = arith.constant 0 : i32
    %c0_i32_1 = arith.constant 0 : i32
    return %c0_i32, %c0_i32_0 : i32, i32
  }
  func.func @transform_3(%arg0: i32) -> (i32, i32) {
    %c0_i32 = arith.constant 0 : i32
    %c0_i32_0 = arith.constant 0 : i32
    %c0_i32_1 = arith.constant 0 : i32
    return %c0_i32, %c0_i32_0 : i32, i32
  }
  func.func @transform_4(%arg0: i32) -> (i32, i32) {
    %c0_i32 = arith.constant 0 : i32
    %c0_i32_0 = arith.constant 0 : i32
    %c0_i32_1 = arith.constant 0 : i32
    return %c0_i32, %c0_i32_0 : i32, i32
  }
  func.func @transform_5(%arg0: i32) -> (i32, i32) {
    %c0_i32 = arith.constant 0 : i32
    %c0_i32_0 = arith.constant 0 : i32
    %c0_i32_1 = arith.constant 0 : i32
    return %c0_i32, %c0_i32_0 : i32, i32
  }
}

module attributes {stable_mosaic.version = 11 : i64} {
  func.func @_conv_bn_relu_kernel(%arg0: i32, %arg1: memref<512x144xbf16, #tpu.memory_space<vmem>>, %arg2: memref<144x16xbf16, #tpu.memory_space<vmem>>, %arg3: memref<1x16xf32, #tpu.memory_space<vmem>>, %arg4: memref<1x16xf32, #tpu.memory_space<vmem>>, %arg5: memref<512x16xf32, #tpu.memory_space<vmem>>) attributes {dimension_semantics = [#tpu.dimension_semantics<arbitrary>], iteration_bounds = array<i64: 1>, scalar_prefetch = 0 : i64, scratch_operands = 0 : i64, tpu.core_type = #tpu.core_type<tc>, window_params = [{pipeline_mode = #tpu.pipeline_mode<synchronous>, transform_indices = @transform_0, window_bounds = array<i64: 512, 144>}, {pipeline_mode = #tpu.pipeline_mode<synchronous>, transform_indices = @transform_1, window_bounds = array<i64: 144, 16>}, {pipeline_mode = #tpu.pipeline_mode<synchronous>, transform_indices = @transform_2, window_bounds = array<i64: 1, 16>}, {pipeline_mode = #tpu.pipeline_mode<synchronous>, transform_indices = @transform_3, window_bounds = array<i64: 1, 16>}, {pipeline_mode = #tpu.pipeline_mode<synchronous>, transform_indices = @transform_4, window_bounds = array<i64: 512, 16>}]} {
    %c0 = arith.constant 0 : index
    %c0_0 = arith.constant 0 : index
    %0 = vector.load %arg1[%c0, %c0_0] : memref<512x144xbf16, #tpu.memory_space<vmem>>, vector<512x144xbf16>
    %c0_1 = arith.constant 0 : index
    %c0_2 = arith.constant 0 : index
    %1 = vector.load %arg2[%c0_1, %c0_2] : memref<144x16xbf16, #tpu.memory_space<vmem>>, vector<144x16xbf16>
    %cst = arith.constant dense<0.000000e+00> : vector<512x16xf32>
    %2 = tpu.matmul %0, %1, %cst {dimension_numbers = #tpu.dot_dimension_numbers<[1], [0], [0], [1], [0, 0, 1, 1], [], []>} : vector<512x144xbf16>, vector<144x16xbf16>, vector<512x16xf32> -> vector<512x16xf32>
    %cst_3 = arith.constant dense<0.000000e+00> : vector<16xf32>
    %3 = vector.multi_reduction <add>, %2, %cst_3 [0] : vector<512x16xf32> to vector<16xf32>
    %4 = vector.shape_cast %3 : vector<16xf32> to vector<1x16xf32>
    %cst_4 = arith.constant 0.001953125 : f32
    %5 = vector.broadcast %cst_4 : f32 to vector<1x16xf32>
    %6 = arith.mulf %4, %5 : vector<1x16xf32>
    %7 = vector.broadcast %6 : vector<1x16xf32> to vector<512x16xf32>
    %8 = arith.subf %2, %7 : vector<512x16xf32>
    %9 = arith.mulf %8, %8 : vector<512x16xf32>
    %cst_5 = arith.constant dense<0.000000e+00> : vector<16xf32>
    %10 = vector.multi_reduction <add>, %9, %cst_5 [0] : vector<512x16xf32> to vector<16xf32>
    %11 = vector.shape_cast %10 : vector<16xf32> to vector<1x16xf32>
    %cst_6 = arith.constant 0.001953125 : f32
    %12 = vector.broadcast %cst_6 : f32 to vector<1x16xf32>
    %13 = arith.mulf %11, %12 : vector<1x16xf32>
    %c0_7 = arith.constant 0 : index
    %c0_8 = arith.constant 0 : index
    %14 = vector.load %arg3[%c0_7, %c0_8] : memref<1x16xf32, #tpu.memory_space<vmem>>, vector<1x16xf32>
    %cst_9 = arith.constant 9.99999974E-6 : f32
    %15 = vector.broadcast %cst_9 : f32 to vector<1x16xf32>
    %16 = arith.addf %13, %15 : vector<1x16xf32>
    %17 = math.rsqrt %16 : vector<1x16xf32>
    %18 = arith.mulf %14, %17 : vector<1x16xf32>
    %19 = vector.broadcast %18 : vector<1x16xf32> to vector<512x16xf32>
    %20 = arith.mulf %8, %19 : vector<512x16xf32>
    %c0_10 = arith.constant 0 : index
    %c0_11 = arith.constant 0 : index
    %21 = vector.load %arg4[%c0_10, %c0_11] : memref<1x16xf32, #tpu.memory_space<vmem>>, vector<1x16xf32>
    %22 = vector.broadcast %21 : vector<1x16xf32> to vector<512x16xf32>
    %23 = arith.addf %20, %22 : vector<512x16xf32>
    %cst_12 = arith.constant 0.000000e+00 : f32
    %24 = vector.broadcast %cst_12 : f32 to vector<512x16xf32>
    %25 = arith.maximumf %23, %24 : vector<512x16xf32>
    %c0_13 = arith.constant 0 : index
    %c0_14 = arith.constant 0 : index
    %26 = vector.load %arg5[%c0_13, %c0_14] : memref<512x16xf32, #tpu.memory_space<vmem>>, vector<512x16xf32>
    tpu.vector_store %arg5[%c0_13, %c0_14], %25 {strides = array<i32>} : memref<512x16xf32, #tpu.memory_space<vmem>>, vector<512x16xf32>,
    return
  }
  func.func @transform_0(%arg0: i32) -> (i32, i32) {
    %c0_i32 = arith.constant 0 : i32
    %c0_i32_0 = arith.constant 0 : i32
    %c0_i32_1 = arith.constant 0 : i32
    return %c0_i32, %c0_i32_0 : i32, i32
  }
  func.func @transform_1(%arg0: i32) -> (i32, i32) {
    %c0_i32 = arith.constant 0 : i32
    %c0_i32_0 = arith.constant 0 : i32
    %c0_i32_1 = arith.constant 0 : i32
    return %c0_i32, %c0_i32_0 : i32, i32
  }
  func.func @transform_2(%arg0: i32) -> (i32, i32) {
    %c0_i32 = arith.constant 0 : i32
    %c0_i32_0 = arith.constant 0 : i32
    %c0_i32_1 = arith.constant 0 : i32
    return %c0_i32, %c0_i32_0 : i32, i32
  }
  func.func @transform_3(%arg0: i32) -> (i32, i32) {
    %c0_i32 = arith.constant 0 : i32
    %c0_i32_0 = arith.constant 0 : i32
    %c0_i32_1 = arith.constant 0 : i32
    return %c0_i32, %c0_i32_0 : i32, i32
  }
  func.func @transform_4(%arg0: i32) -> (i32, i32) {
    %c0_i32 = arith.constant 0 : i32
    %c0_i32_0 = arith.constant 0 : i32
    %c0_i32_1 = arith.constant 0 : i32
    return %c0_i32, %c0_i32_0 : i32, i32
  }
}

module attributes {stable_mosaic.version = 11 : i64} {
  func.func @_conv_bn_relu_kernel(%arg0: i32, %arg1: memref<128x144xbf16, #tpu.memory_space<vmem>>, %arg2: memref<144x32xbf16, #tpu.memory_space<vmem>>, %arg3: memref<1x32xf32, #tpu.memory_space<vmem>>, %arg4: memref<1x32xf32, #tpu.memory_space<vmem>>, %arg5: memref<128x32xf32, #tpu.memory_space<vmem>>) attributes {dimension_semantics = [#tpu.dimension_semantics<arbitrary>], iteration_bounds = array<i64: 1>, scalar_prefetch = 0 : i64, scratch_operands = 0 : i64, tpu.core_type = #tpu.core_type<tc>, window_params = [{pipeline_mode = #tpu.pipeline_mode<synchronous>, transform_indices = @transform_0, window_bounds = array<i64: 128, 144>}, {pipeline_mode = #tpu.pipeline_mode<synchronous>, transform_indices = @transform_1, window_bounds = array<i64: 144, 32>}, {pipeline_mode = #tpu.pipeline_mode<synchronous>, transform_indices = @transform_2, window_bounds = array<i64: 1, 32>}, {pipeline_mode = #tpu.pipeline_mode<synchronous>, transform_indices = @transform_3, window_bounds = array<i64: 1, 32>}, {pipeline_mode = #tpu.pipeline_mode<synchronous>, transform_indices = @transform_4, window_bounds = array<i64: 128, 32>}]} {
    %c0 = arith.constant 0 : index
    %c0_0 = arith.constant 0 : index
    %0 = vector.load %arg1[%c0, %c0_0] : memref<128x144xbf16, #tpu.memory_space<vmem>>, vector<128x144xbf16>
    %c0_1 = arith.constant 0 : index
    %c0_2 = arith.constant 0 : index
    %1 = vector.load %arg2[%c0_1, %c0_2] : memref<144x32xbf16, #tpu.memory_space<vmem>>, vector<144x32xbf16>
    %cst = arith.constant dense<0.000000e+00> : vector<128x32xf32>
    %2 = tpu.matmul %0, %1, %cst {dimension_numbers = #tpu.dot_dimension_numbers<[1], [0], [0], [1], [0, 0, 1, 1], [], []>} : vector<128x144xbf16>, vector<144x32xbf16>, vector<128x32xf32> -> vector<128x32xf32>
    %cst_3 = arith.constant dense<0.000000e+00> : vector<32xf32>
    %3 = vector.multi_reduction <add>, %2, %cst_3 [0] : vector<128x32xf32> to vector<32xf32>
    %4 = vector.shape_cast %3 : vector<32xf32> to vector<1x32xf32>
    %cst_4 = arith.constant 7.812500e-03 : f32
    %5 = vector.broadcast %cst_4 : f32 to vector<1x32xf32>
    %6 = arith.mulf %4, %5 : vector<1x32xf32>
    %7 = vector.broadcast %6 : vector<1x32xf32> to vector<128x32xf32>
    %8 = arith.subf %2, %7 : vector<128x32xf32>
    %9 = arith.mulf %8, %8 : vector<128x32xf32>
    %cst_5 = arith.constant dense<0.000000e+00> : vector<32xf32>
    %10 = vector.multi_reduction <add>, %9, %cst_5 [0] : vector<128x32xf32> to vector<32xf32>
    %11 = vector.shape_cast %10 : vector<32xf32> to vector<1x32xf32>
    %cst_6 = arith.constant 7.812500e-03 : f32
    %12 = vector.broadcast %cst_6 : f32 to vector<1x32xf32>
    %13 = arith.mulf %11, %12 : vector<1x32xf32>
    %c0_7 = arith.constant 0 : index
    %c0_8 = arith.constant 0 : index
    %14 = vector.load %arg3[%c0_7, %c0_8] : memref<1x32xf32, #tpu.memory_space<vmem>>, vector<1x32xf32>
    %cst_9 = arith.constant 9.99999974E-6 : f32
    %15 = vector.broadcast %cst_9 : f32 to vector<1x32xf32>
    %16 = arith.addf %13, %15 : vector<1x32xf32>
    %17 = math.rsqrt %16 : vector<1x32xf32>
    %18 = arith.mulf %14, %17 : vector<1x32xf32>
    %19 = vector.broadcast %18 : vector<1x32xf32> to vector<128x32xf32>
    %20 = arith.mulf %8, %19 : vector<128x32xf32>
    %c0_10 = arith.constant 0 : index
    %c0_11 = arith.constant 0 : index
    %21 = vector.load %arg4[%c0_10, %c0_11] : memref<1x32xf32, #tpu.memory_space<vmem>>, vector<1x32xf32>
    %22 = vector.broadcast %21 : vector<1x32xf32> to vector<128x32xf32>
    %23 = arith.addf %20, %22 : vector<128x32xf32>
    %cst_12 = arith.constant 0.000000e+00 : f32
    %24 = vector.broadcast %cst_12 : f32 to vector<128x32xf32>
    %25 = arith.maximumf %23, %24 : vector<128x32xf32>
    %c0_13 = arith.constant 0 : index
    %c0_14 = arith.constant 0 : index
    %26 = vector.load %arg5[%c0_13, %c0_14] : memref<128x32xf32, #tpu.memory_space<vmem>>, vector<128x32xf32>
    tpu.vector_store %arg5[%c0_13, %c0_14], %25 {strides = array<i32>} : memref<128x32xf32, #tpu.memory_space<vmem>>, vector<128x32xf32>,
    return
  }
  func.func @transform_0(%arg0: i32) -> (i32, i32) {
    %c0_i32 = arith.constant 0 : i32
    %c0_i32_0 = arith.constant 0 : i32
    %c0_i32_1 = arith.constant 0 : i32
    return %c0_i32, %c0_i32_0 : i32, i32
  }
  func.func @transform_1(%arg0: i32) -> (i32, i32) {
    %c0_i32 = arith.constant 0 : i32
    %c0_i32_0 = arith.constant 0 : i32
    %c0_i32_1 = arith.constant 0 : i32
    return %c0_i32, %c0_i32_0 : i32, i32
  }
  func.func @transform_2(%arg0: i32) -> (i32, i32) {
    %c0_i32 = arith.constant 0 : i32
    %c0_i32_0 = arith.constant 0 : i32
    %c0_i32_1 = arith.constant 0 : i32
    return %c0_i32, %c0_i32_0 : i32, i32
  }
  func.func @transform_3(%arg0: i32) -> (i32, i32) {
    %c0_i32 = arith.constant 0 : i32
    %c0_i32_0 = arith.constant 0 : i32
    %c0_i32_1 = arith.constant 0 : i32
    return %c0_i32, %c0_i32_0 : i32, i32
  }
  func.func @transform_4(%arg0: i32) -> (i32, i32) {
    %c0_i32 = arith.constant 0 : i32
    %c0_i32_0 = arith.constant 0 : i32
    %c0_i32_1 = arith.constant 0 : i32
    return %c0_i32, %c0_i32_0 : i32, i32
  }
}

module attributes {stable_mosaic.version = 11 : i64} {
  func.func @_conv_bn_add_relu_kernel(%arg0: i32, %arg1: memref<128x288xbf16, #tpu.memory_space<vmem>>, %arg2: memref<288x32xbf16, #tpu.memory_space<vmem>>, %arg3: memref<1x32xf32, #tpu.memory_space<vmem>>, %arg4: memref<1x32xf32, #tpu.memory_space<vmem>>, %arg5: memref<128x32xf32, #tpu.memory_space<vmem>>, %arg6: memref<128x32xf32, #tpu.memory_space<vmem>>) attributes {dimension_semantics = [#tpu.dimension_semantics<arbitrary>], iteration_bounds = array<i64: 1>, scalar_prefetch = 0 : i64, scratch_operands = 0 : i64, tpu.core_type = #tpu.core_type<tc>, window_params = [{pipeline_mode = #tpu.pipeline_mode<synchronous>, transform_indices = @transform_0, window_bounds = array<i64: 128, 288>}, {pipeline_mode = #tpu.pipeline_mode<synchronous>, transform_indices = @transform_1, window_bounds = array<i64: 288, 32>}, {pipeline_mode = #tpu.pipeline_mode<synchronous>, transform_indices = @transform_2, window_bounds = array<i64: 1, 32>}, {pipeline_mode = #tpu.pipeline_mode<synchronous>, transform_indices = @transform_3, window_bounds = array<i64: 1, 32>}, {pipeline_mode = #tpu.pipeline_mode<synchronous>, transform_indices = @transform_4, window_bounds = array<i64: 128, 32>}, {pipeline_mode = #tpu.pipeline_mode<synchronous>, transform_indices = @transform_5, window_bounds = array<i64: 128, 32>}]} {
    %c0 = arith.constant 0 : index
    %c0_0 = arith.constant 0 : index
    %0 = vector.load %arg1[%c0, %c0_0] : memref<128x288xbf16, #tpu.memory_space<vmem>>, vector<128x288xbf16>
    %c0_1 = arith.constant 0 : index
    %c0_2 = arith.constant 0 : index
    %1 = vector.load %arg2[%c0_1, %c0_2] : memref<288x32xbf16, #tpu.memory_space<vmem>>, vector<288x32xbf16>
    %cst = arith.constant dense<0.000000e+00> : vector<128x32xf32>
    %2 = tpu.matmul %0, %1, %cst {dimension_numbers = #tpu.dot_dimension_numbers<[1], [0], [0], [1], [0, 0, 1, 1], [], []>} : vector<128x288xbf16>, vector<288x32xbf16>, vector<128x32xf32> -> vector<128x32xf32>
    %cst_3 = arith.constant dense<0.000000e+00> : vector<32xf32>
    %3 = vector.multi_reduction <add>, %2, %cst_3 [0] : vector<128x32xf32> to vector<32xf32>
    %4 = vector.shape_cast %3 : vector<32xf32> to vector<1x32xf32>
    %cst_4 = arith.constant 7.812500e-03 : f32
    %5 = vector.broadcast %cst_4 : f32 to vector<1x32xf32>
    %6 = arith.mulf %4, %5 : vector<1x32xf32>
    %7 = vector.broadcast %6 : vector<1x32xf32> to vector<128x32xf32>
    %8 = arith.subf %2, %7 : vector<128x32xf32>
    %9 = arith.mulf %8, %8 : vector<128x32xf32>
    %cst_5 = arith.constant dense<0.000000e+00> : vector<32xf32>
    %10 = vector.multi_reduction <add>, %9, %cst_5 [0] : vector<128x32xf32> to vector<32xf32>
    %11 = vector.shape_cast %10 : vector<32xf32> to vector<1x32xf32>
    %cst_6 = arith.constant 7.812500e-03 : f32
    %12 = vector.broadcast %cst_6 : f32 to vector<1x32xf32>
    %13 = arith.mulf %11, %12 : vector<1x32xf32>
    %c0_7 = arith.constant 0 : index
    %c0_8 = arith.constant 0 : index
    %14 = vector.load %arg3[%c0_7, %c0_8] : memref<1x32xf32, #tpu.memory_space<vmem>>, vector<1x32xf32>
    %cst_9 = arith.constant 9.99999974E-6 : f32
    %15 = vector.broadcast %cst_9 : f32 to vector<1x32xf32>
    %16 = arith.addf %13, %15 : vector<1x32xf32>
    %17 = math.rsqrt %16 : vector<1x32xf32>
    %18 = arith.mulf %14, %17 : vector<1x32xf32>
    %19 = vector.broadcast %18 : vector<1x32xf32> to vector<128x32xf32>
    %20 = arith.mulf %8, %19 : vector<128x32xf32>
    %c0_10 = arith.constant 0 : index
    %c0_11 = arith.constant 0 : index
    %21 = vector.load %arg4[%c0_10, %c0_11] : memref<1x32xf32, #tpu.memory_space<vmem>>, vector<1x32xf32>
    %22 = vector.broadcast %21 : vector<1x32xf32> to vector<128x32xf32>
    %23 = arith.addf %20, %22 : vector<128x32xf32>
    %c0_12 = arith.constant 0 : index
    %c0_13 = arith.constant 0 : index
    %24 = vector.load %arg5[%c0_12, %c0_13] : memref<128x32xf32, #tpu.memory_space<vmem>>, vector<128x32xf32>
    %25 = arith.addf %23, %24 : vector<128x32xf32>
    %cst_14 = arith.constant 0.000000e+00 : f32
    %26 = vector.broadcast %cst_14 : f32 to vector<128x32xf32>
    %27 = arith.maximumf %25, %26 : vector<128x32xf32>
    %c0_15 = arith.constant 0 : index
    %c0_16 = arith.constant 0 : index
    %28 = vector.load %arg6[%c0_15, %c0_16] : memref<128x32xf32, #tpu.memory_space<vmem>>, vector<128x32xf32>
    tpu.vector_store %arg6[%c0_15, %c0_16], %27 {strides = array<i32>} : memref<128x32xf32, #tpu.memory_space<vmem>>, vector<128x32xf32>,
    return
  }
  func.func @transform_0(%arg0: i32) -> (i32, i32) {
    %c0_i32 = arith.constant 0 : i32
    %c0_i32_0 = arith.constant 0 : i32
    %c0_i32_1 = arith.constant 0 : i32
    return %c0_i32, %c0_i32_0 : i32, i32
  }
  func.func @transform_1(%arg0: i32) -> (i32, i32) {
    %c0_i32 = arith.constant 0 : i32
    %c0_i32_0 = arith.constant 0 : i32
    %c0_i32_1 = arith.constant 0 : i32
    return %c0_i32, %c0_i32_0 : i32, i32
  }
  func.func @transform_2(%arg0: i32) -> (i32, i32) {
    %c0_i32 = arith.constant 0 : i32
    %c0_i32_0 = arith.constant 0 : i32
    %c0_i32_1 = arith.constant 0 : i32
    return %c0_i32, %c0_i32_0 : i32, i32
  }
  func.func @transform_3(%arg0: i32) -> (i32, i32) {
    %c0_i32 = arith.constant 0 : i32
    %c0_i32_0 = arith.constant 0 : i32
    %c0_i32_1 = arith.constant 0 : i32
    return %c0_i32, %c0_i32_0 : i32, i32
  }
  func.func @transform_4(%arg0: i32) -> (i32, i32) {
    %c0_i32 = arith.constant 0 : i32
    %c0_i32_0 = arith.constant 0 : i32
    %c0_i32_1 = arith.constant 0 : i32
    return %c0_i32, %c0_i32_0 : i32, i32
  }
  func.func @transform_5(%arg0: i32) -> (i32, i32) {
    %c0_i32 = arith.constant 0 : i32
    %c0_i32_0 = arith.constant 0 : i32
    %c0_i32_1 = arith.constant 0 : i32
    return %c0_i32, %c0_i32_0 : i32, i32
  }
}

module attributes {stable_mosaic.version = 11 : i64} {
  func.func @_conv_bn_relu_kernel(%arg0: i32, %arg1: memref<128x288xbf16, #tpu.memory_space<vmem>>, %arg2: memref<288x32xbf16, #tpu.memory_space<vmem>>, %arg3: memref<1x32xf32, #tpu.memory_space<vmem>>, %arg4: memref<1x32xf32, #tpu.memory_space<vmem>>, %arg5: memref<128x32xf32, #tpu.memory_space<vmem>>) attributes {dimension_semantics = [#tpu.dimension_semantics<arbitrary>], iteration_bounds = array<i64: 1>, scalar_prefetch = 0 : i64, scratch_operands = 0 : i64, tpu.core_type = #tpu.core_type<tc>, window_params = [{pipeline_mode = #tpu.pipeline_mode<synchronous>, transform_indices = @transform_0, window_bounds = array<i64: 128, 288>}, {pipeline_mode = #tpu.pipeline_mode<synchronous>, transform_indices = @transform_1, window_bounds = array<i64: 288, 32>}, {pipeline_mode = #tpu.pipeline_mode<synchronous>, transform_indices = @transform_2, window_bounds = array<i64: 1, 32>}, {pipeline_mode = #tpu.pipeline_mode<synchronous>, transform_indices = @transform_3, window_bounds = array<i64: 1, 32>}, {pipeline_mode = #tpu.pipeline_mode<synchronous>, transform_indices = @transform_4, window_bounds = array<i64: 128, 32>}]} {
    %c0 = arith.constant 0 : index
    %c0_0 = arith.constant 0 : index
    %0 = vector.load %arg1[%c0, %c0_0] : memref<128x288xbf16, #tpu.memory_space<vmem>>, vector<128x288xbf16>
    %c0_1 = arith.constant 0 : index
    %c0_2 = arith.constant 0 : index
    %1 = vector.load %arg2[%c0_1, %c0_2] : memref<288x32xbf16, #tpu.memory_space<vmem>>, vector<288x32xbf16>
    %cst = arith.constant dense<0.000000e+00> : vector<128x32xf32>
    %2 = tpu.matmul %0, %1, %cst {dimension_numbers = #tpu.dot_dimension_numbers<[1], [0], [0], [1], [0, 0, 1, 1], [], []>} : vector<128x288xbf16>, vector<288x32xbf16>, vector<128x32xf32> -> vector<128x32xf32>
    %cst_3 = arith.constant dense<0.000000e+00> : vector<32xf32>
    %3 = vector.multi_reduction <add>, %2, %cst_3 [0] : vector<128x32xf32> to vector<32xf32>
    %4 = vector.shape_cast %3 : vector<32xf32> to vector<1x32xf32>
    %cst_4 = arith.constant 7.812500e-03 : f32
    %5 = vector.broadcast %cst_4 : f32 to vector<1x32xf32>
    %6 = arith.mulf %4, %5 : vector<1x32xf32>
    %7 = vector.broadcast %6 : vector<1x32xf32> to vector<128x32xf32>
    %8 = arith.subf %2, %7 : vector<128x32xf32>
    %9 = arith.mulf %8, %8 : vector<128x32xf32>
    %cst_5 = arith.constant dense<0.000000e+00> : vector<32xf32>
    %10 = vector.multi_reduction <add>, %9, %cst_5 [0] : vector<128x32xf32> to vector<32xf32>
    %11 = vector.shape_cast %10 : vector<32xf32> to vector<1x32xf32>
    %cst_6 = arith.constant 7.812500e-03 : f32
    %12 = vector.broadcast %cst_6 : f32 to vector<1x32xf32>
    %13 = arith.mulf %11, %12 : vector<1x32xf32>
    %c0_7 = arith.constant 0 : index
    %c0_8 = arith.constant 0 : index
    %14 = vector.load %arg3[%c0_7, %c0_8] : memref<1x32xf32, #tpu.memory_space<vmem>>, vector<1x32xf32>
    %cst_9 = arith.constant 9.99999974E-6 : f32
    %15 = vector.broadcast %cst_9 : f32 to vector<1x32xf32>
    %16 = arith.addf %13, %15 : vector<1x32xf32>
    %17 = math.rsqrt %16 : vector<1x32xf32>
    %18 = arith.mulf %14, %17 : vector<1x32xf32>
    %19 = vector.broadcast %18 : vector<1x32xf32> to vector<128x32xf32>
    %20 = arith.mulf %8, %19 : vector<128x32xf32>
    %c0_10 = arith.constant 0 : index
    %c0_11 = arith.constant 0 : index
    %21 = vector.load %arg4[%c0_10, %c0_11] : memref<1x32xf32, #tpu.memory_space<vmem>>, vector<1x32xf32>
    %22 = vector.broadcast %21 : vector<1x32xf32> to vector<128x32xf32>
    %23 = arith.addf %20, %22 : vector<128x32xf32>
    %cst_12 = arith.constant 0.000000e+00 : f32
    %24 = vector.broadcast %cst_12 : f32 to vector<128x32xf32>
    %25 = arith.maximumf %23, %24 : vector<128x32xf32>
    %c0_13 = arith.constant 0 : index
    %c0_14 = arith.constant 0 : index
    %26 = vector.load %arg5[%c0_13, %c0_14] : memref<128x32xf32, #tpu.memory_space<vmem>>, vector<128x32xf32>
    tpu.vector_store %arg5[%c0_13, %c0_14], %25 {strides = array<i32>} : memref<128x32xf32, #tpu.memory_space<vmem>>, vector<128x32xf32>,
    return
  }
  func.func @transform_0(%arg0: i32) -> (i32, i32) {
    %c0_i32 = arith.constant 0 : i32
    %c0_i32_0 = arith.constant 0 : i32
    %c0_i32_1 = arith.constant 0 : i32
    return %c0_i32, %c0_i32_0 : i32, i32
  }
  func.func @transform_1(%arg0: i32) -> (i32, i32) {
    %c0_i32 = arith.constant 0 : i32
    %c0_i32_0 = arith.constant 0 : i32
    %c0_i32_1 = arith.constant 0 : i32
    return %c0_i32, %c0_i32_0 : i32, i32
  }
  func.func @transform_2(%arg0: i32) -> (i32, i32) {
    %c0_i32 = arith.constant 0 : i32
    %c0_i32_0 = arith.constant 0 : i32
    %c0_i32_1 = arith.constant 0 : i32
    return %c0_i32, %c0_i32_0 : i32, i32
  }
  func.func @transform_3(%arg0: i32) -> (i32, i32) {
    %c0_i32 = arith.constant 0 : i32
    %c0_i32_0 = arith.constant 0 : i32
    %c0_i32_1 = arith.constant 0 : i32
    return %c0_i32, %c0_i32_0 : i32, i32
  }
  func.func @transform_4(%arg0: i32) -> (i32, i32) {
    %c0_i32 = arith.constant 0 : i32
    %c0_i32_0 = arith.constant 0 : i32
    %c0_i32_1 = arith.constant 0 : i32
    return %c0_i32, %c0_i32_0 : i32, i32
  }
}

module attributes {stable_mosaic.version = 11 : i64} {
  func.func @_conv_bn_relu_kernel(%arg0: i32, %arg1: memref<32x288xbf16, #tpu.memory_space<vmem>>, %arg2: memref<288x64xbf16, #tpu.memory_space<vmem>>, %arg3: memref<1x64xf32, #tpu.memory_space<vmem>>, %arg4: memref<1x64xf32, #tpu.memory_space<vmem>>, %arg5: memref<32x64xf32, #tpu.memory_space<vmem>>) attributes {dimension_semantics = [#tpu.dimension_semantics<arbitrary>], iteration_bounds = array<i64: 1>, scalar_prefetch = 0 : i64, scratch_operands = 0 : i64, tpu.core_type = #tpu.core_type<tc>, window_params = [{pipeline_mode = #tpu.pipeline_mode<synchronous>, transform_indices = @transform_0, window_bounds = array<i64: 32, 288>}, {pipeline_mode = #tpu.pipeline_mode<synchronous>, transform_indices = @transform_1, window_bounds = array<i64: 288, 64>}, {pipeline_mode = #tpu.pipeline_mode<synchronous>, transform_indices = @transform_2, window_bounds = array<i64: 1, 64>}, {pipeline_mode = #tpu.pipeline_mode<synchronous>, transform_indices = @transform_3, window_bounds = array<i64: 1, 64>}, {pipeline_mode = #tpu.pipeline_mode<synchronous>, transform_indices = @transform_4, window_bounds = array<i64: 32, 64>}]} {
    %c0 = arith.constant 0 : index
    %c0_0 = arith.constant 0 : index
    %0 = vector.load %arg1[%c0, %c0_0] : memref<32x288xbf16, #tpu.memory_space<vmem>>, vector<32x288xbf16>
    %c0_1 = arith.constant 0 : index
    %c0_2 = arith.constant 0 : index
    %1 = vector.load %arg2[%c0_1, %c0_2] : memref<288x64xbf16, #tpu.memory_space<vmem>>, vector<288x64xbf16>
    %cst = arith.constant dense<0.000000e+00> : vector<32x64xf32>
    %2 = tpu.matmul %0, %1, %cst {dimension_numbers = #tpu.dot_dimension_numbers<[1], [0], [0], [1], [0, 0, 1, 1], [], []>} : vector<32x288xbf16>, vector<288x64xbf16>, vector<32x64xf32> -> vector<32x64xf32>
    %cst_3 = arith.constant dense<0.000000e+00> : vector<64xf32>
    %3 = vector.multi_reduction <add>, %2, %cst_3 [0] : vector<32x64xf32> to vector<64xf32>
    %4 = vector.shape_cast %3 : vector<64xf32> to vector<1x64xf32>
    %cst_4 = arith.constant 3.125000e-02 : f32
    %5 = vector.broadcast %cst_4 : f32 to vector<1x64xf32>
    %6 = arith.mulf %4, %5 : vector<1x64xf32>
    %7 = vector.broadcast %6 : vector<1x64xf32> to vector<32x64xf32>
    %8 = arith.subf %2, %7 : vector<32x64xf32>
    %9 = arith.mulf %8, %8 : vector<32x64xf32>
    %cst_5 = arith.constant dense<0.000000e+00> : vector<64xf32>
    %10 = vector.multi_reduction <add>, %9, %cst_5 [0] : vector<32x64xf32> to vector<64xf32>
    %11 = vector.shape_cast %10 : vector<64xf32> to vector<1x64xf32>
    %cst_6 = arith.constant 3.125000e-02 : f32
    %12 = vector.broadcast %cst_6 : f32 to vector<1x64xf32>
    %13 = arith.mulf %11, %12 : vector<1x64xf32>
    %c0_7 = arith.constant 0 : index
    %c0_8 = arith.constant 0 : index
    %14 = vector.load %arg3[%c0_7, %c0_8] : memref<1x64xf32, #tpu.memory_space<vmem>>, vector<1x64xf32>
    %cst_9 = arith.constant 9.99999974E-6 : f32
    %15 = vector.broadcast %cst_9 : f32 to vector<1x64xf32>
    %16 = arith.addf %13, %15 : vector<1x64xf32>
    %17 = math.rsqrt %16 : vector<1x64xf32>
    %18 = arith.mulf %14, %17 : vector<1x64xf32>
    %19 = vector.broadcast %18 : vector<1x64xf32> to vector<32x64xf32>
    %20 = arith.mulf %8, %19 : vector<32x64xf32>
    %c0_10 = arith.constant 0 : index
    %c0_11 = arith.constant 0 : index
    %21 = vector.load %arg4[%c0_10, %c0_11] : memref<1x64xf32, #tpu.memory_space<vmem>>, vector<1x64xf32>
    %22 = vector.broadcast %21 : vector<1x64xf32> to vector<32x64xf32>
    %23 = arith.addf %20, %22 : vector<32x64xf32>
    %cst_12 = arith.constant 0.000000e+00 : f32
    %24 = vector.broadcast %cst_12 : f32 to vector<32x64xf32>
    %25 = arith.maximumf %23, %24 : vector<32x64xf32>
    %c0_13 = arith.constant 0 : index
    %c0_14 = arith.constant 0 : index
    %26 = vector.load %arg5[%c0_13, %c0_14] : memref<32x64xf32, #tpu.memory_space<vmem>>, vector<32x64xf32>
    tpu.vector_store %arg5[%c0_13, %c0_14], %25 {strides = array<i32>} : memref<32x64xf32, #tpu.memory_space<vmem>>, vector<32x64xf32>,
    return
  }
  func.func @transform_0(%arg0: i32) -> (i32, i32) {
    %c0_i32 = arith.constant 0 : i32
    %c0_i32_0 = arith.constant 0 : i32
    %c0_i32_1 = arith.constant 0 : i32
    return %c0_i32, %c0_i32_0 : i32, i32
  }
  func.func @transform_1(%arg0: i32) -> (i32, i32) {
    %c0_i32 = arith.constant 0 : i32
    %c0_i32_0 = arith.constant 0 : i32
    %c0_i32_1 = arith.constant 0 : i32
    return %c0_i32, %c0_i32_0 : i32, i32
  }
  func.func @transform_2(%arg0: i32) -> (i32, i32) {
    %c0_i32 = arith.constant 0 : i32
    %c0_i32_0 = arith.constant 0 : i32
    %c0_i32_1 = arith.constant 0 : i32
    return %c0_i32, %c0_i32_0 : i32, i32
  }
  func.func @transform_3(%arg0: i32) -> (i32, i32) {
    %c0_i32 = arith.constant 0 : i32
    %c0_i32_0 = arith.constant 0 : i32
    %c0_i32_1 = arith.constant 0 : i32
    return %c0_i32, %c0_i32_0 : i32, i32
  }
  func.func @transform_4(%arg0: i32) -> (i32, i32) {
    %c0_i32 = arith.constant 0 : i32
    %c0_i32_0 = arith.constant 0 : i32
    %c0_i32_1 = arith.constant 0 : i32
    return %c0_i32, %c0_i32_0 : i32, i32
  }
}

module attributes {stable_mosaic.version = 11 : i64} {
  func.func @_conv_bn_add_relu_kernel(%arg0: i32, %arg1: memref<32x576xbf16, #tpu.memory_space<vmem>>, %arg2: memref<576x64xbf16, #tpu.memory_space<vmem>>, %arg3: memref<1x64xf32, #tpu.memory_space<vmem>>, %arg4: memref<1x64xf32, #tpu.memory_space<vmem>>, %arg5: memref<32x64xf32, #tpu.memory_space<vmem>>, %arg6: memref<32x64xf32, #tpu.memory_space<vmem>>) attributes {dimension_semantics = [#tpu.dimension_semantics<arbitrary>], iteration_bounds = array<i64: 1>, scalar_prefetch = 0 : i64, scratch_operands = 0 : i64, tpu.core_type = #tpu.core_type<tc>, window_params = [{pipeline_mode = #tpu.pipeline_mode<synchronous>, transform_indices = @transform_0, window_bounds = array<i64: 32, 576>}, {pipeline_mode = #tpu.pipeline_mode<synchronous>, transform_indices = @transform_1, window_bounds = array<i64: 576, 64>}, {pipeline_mode = #tpu.pipeline_mode<synchronous>, transform_indices = @transform_2, window_bounds = array<i64: 1, 64>}, {pipeline_mode = #tpu.pipeline_mode<synchronous>, transform_indices = @transform_3, window_bounds = array<i64: 1, 64>}, {pipeline_mode = #tpu.pipeline_mode<synchronous>, transform_indices = @transform_4, window_bounds = array<i64: 32, 64>}, {pipeline_mode = #tpu.pipeline_mode<synchronous>, transform_indices = @transform_5, window_bounds = array<i64: 32, 64>}]} {
    %c0 = arith.constant 0 : index
    %c0_0 = arith.constant 0 : index
    %0 = vector.load %arg1[%c0, %c0_0] : memref<32x576xbf16, #tpu.memory_space<vmem>>, vector<32x576xbf16>
    %c0_1 = arith.constant 0 : index
    %c0_2 = arith.constant 0 : index
    %1 = vector.load %arg2[%c0_1, %c0_2] : memref<576x64xbf16, #tpu.memory_space<vmem>>, vector<576x64xbf16>
    %cst = arith.constant dense<0.000000e+00> : vector<32x64xf32>
    %2 = tpu.matmul %0, %1, %cst {dimension_numbers = #tpu.dot_dimension_numbers<[1], [0], [0], [1], [0, 0, 1, 1], [], []>} : vector<32x576xbf16>, vector<576x64xbf16>, vector<32x64xf32> -> vector<32x64xf32>
    %cst_3 = arith.constant dense<0.000000e+00> : vector<64xf32>
    %3 = vector.multi_reduction <add>, %2, %cst_3 [0] : vector<32x64xf32> to vector<64xf32>
    %4 = vector.shape_cast %3 : vector<64xf32> to vector<1x64xf32>
    %cst_4 = arith.constant 3.125000e-02 : f32
    %5 = vector.broadcast %cst_4 : f32 to vector<1x64xf32>
    %6 = arith.mulf %4, %5 : vector<1x64xf32>
    %7 = vector.broadcast %6 : vector<1x64xf32> to vector<32x64xf32>
    %8 = arith.subf %2, %7 : vector<32x64xf32>
    %9 = arith.mulf %8, %8 : vector<32x64xf32>
    %cst_5 = arith.constant dense<0.000000e+00> : vector<64xf32>
    %10 = vector.multi_reduction <add>, %9, %cst_5 [0] : vector<32x64xf32> to vector<64xf32>
    %11 = vector.shape_cast %10 : vector<64xf32> to vector<1x64xf32>
    %cst_6 = arith.constant 3.125000e-02 : f32
    %12 = vector.broadcast %cst_6 : f32 to vector<1x64xf32>
    %13 = arith.mulf %11, %12 : vector<1x64xf32>
    %c0_7 = arith.constant 0 : index
    %c0_8 = arith.constant 0 : index
    %14 = vector.load %arg3[%c0_7, %c0_8] : memref<1x64xf32, #tpu.memory_space<vmem>>, vector<1x64xf32>
    %cst_9 = arith.constant 9.99999974E-6 : f32
    %15 = vector.broadcast %cst_9 : f32 to vector<1x64xf32>
    %16 = arith.addf %13, %15 : vector<1x64xf32>
    %17 = math.rsqrt %16 : vector<1x64xf32>
    %18 = arith.mulf %14, %17 : vector<1x64xf32>
    %19 = vector.broadcast %18 : vector<1x64xf32> to vector<32x64xf32>
    %20 = arith.mulf %8, %19 : vector<32x64xf32>
    %c0_10 = arith.constant 0 : index
    %c0_11 = arith.constant 0 : index
    %21 = vector.load %arg4[%c0_10, %c0_11] : memref<1x64xf32, #tpu.memory_space<vmem>>, vector<1x64xf32>
    %22 = vector.broadcast %21 : vector<1x64xf32> to vector<32x64xf32>
    %23 = arith.addf %20, %22 : vector<32x64xf32>
    %c0_12 = arith.constant 0 : index
    %c0_13 = arith.constant 0 : index
    %24 = vector.load %arg5[%c0_12, %c0_13] : memref<32x64xf32, #tpu.memory_space<vmem>>, vector<32x64xf32>
    %25 = arith.addf %23, %24 : vector<32x64xf32>
    %cst_14 = arith.constant 0.000000e+00 : f32
    %26 = vector.broadcast %cst_14 : f32 to vector<32x64xf32>
    %27 = arith.maximumf %25, %26 : vector<32x64xf32>
    %c0_15 = arith.constant 0 : index
    %c0_16 = arith.constant 0 : index
    %28 = vector.load %arg6[%c0_15, %c0_16] : memref<32x64xf32, #tpu.memory_space<vmem>>, vector<32x64xf32>
    tpu.vector_store %arg6[%c0_15, %c0_16], %27 {strides = array<i32>} : memref<32x64xf32, #tpu.memory_space<vmem>>, vector<32x64xf32>,
    return
  }
  func.func @transform_0(%arg0: i32) -> (i32, i32) {
    %c0_i32 = arith.constant 0 : i32
    %c0_i32_0 = arith.constant 0 : i32
    %c0_i32_1 = arith.constant 0 : i32
    return %c0_i32, %c0_i32_0 : i32, i32
  }
  func.func @transform_1(%arg0: i32) -> (i32, i32) {
    %c0_i32 = arith.constant 0 : i32
    %c0_i32_0 = arith.constant 0 : i32
    %c0_i32_1 = arith.constant 0 : i32
    return %c0_i32, %c0_i32_0 : i32, i32
  }
  func.func @transform_2(%arg0: i32) -> (i32, i32) {
    %c0_i32 = arith.constant 0 : i32
    %c0_i32_0 = arith.constant 0 : i32
    %c0_i32_1 = arith.constant 0 : i32
    return %c0_i32, %c0_i32_0 : i32, i32
  }
  func.func @transform_3(%arg0: i32) -> (i32, i32) {
    %c0_i32 = arith.constant 0 : i32
    %c0_i32_0 = arith.constant 0 : i32
    %c0_i32_1 = arith.constant 0 : i32
    return %c0_i32, %c0_i32_0 : i32, i32
  }
  func.func @transform_4(%arg0: i32) -> (i32, i32) {
    %c0_i32 = arith.constant 0 : i32
    %c0_i32_0 = arith.constant 0 : i32
    %c0_i32_1 = arith.constant 0 : i32
    return %c0_i32, %c0_i32_0 : i32, i32
  }
  func.func @transform_5(%arg0: i32) -> (i32, i32) {
    %c0_i32 = arith.constant 0 : i32
    %c0_i32_0 = arith.constant 0 : i32
    %c0_i32_1 = arith.constant 0 : i32
    return %c0_i32, %c0_i32_0 : i32, i32
  }
}

module attributes {stable_mosaic.version = 11 : i64} {
  func.func @_conv_bn_relu_kernel(%arg0: i32, %arg1: memref<32x576xbf16, #tpu.memory_space<vmem>>, %arg2: memref<576x64xbf16, #tpu.memory_space<vmem>>, %arg3: memref<1x64xf32, #tpu.memory_space<vmem>>, %arg4: memref<1x64xf32, #tpu.memory_space<vmem>>, %arg5: memref<32x64xf32, #tpu.memory_space<vmem>>) attributes {dimension_semantics = [#tpu.dimension_semantics<arbitrary>], iteration_bounds = array<i64: 1>, scalar_prefetch = 0 : i64, scratch_operands = 0 : i64, tpu.core_type = #tpu.core_type<tc>, window_params = [{pipeline_mode = #tpu.pipeline_mode<synchronous>, transform_indices = @transform_0, window_bounds = array<i64: 32, 576>}, {pipeline_mode = #tpu.pipeline_mode<synchronous>, transform_indices = @transform_1, window_bounds = array<i64: 576, 64>}, {pipeline_mode = #tpu.pipeline_mode<synchronous>, transform_indices = @transform_2, window_bounds = array<i64: 1, 64>}, {pipeline_mode = #tpu.pipeline_mode<synchronous>, transform_indices = @transform_3, window_bounds = array<i64: 1, 64>}, {pipeline_mode = #tpu.pipeline_mode<synchronous>, transform_indices = @transform_4, window_bounds = array<i64: 32, 64>}]} {
    %c0 = arith.constant 0 : index
    %c0_0 = arith.constant 0 : index
    %0 = vector.load %arg1[%c0, %c0_0] : memref<32x576xbf16, #tpu.memory_space<vmem>>, vector<32x576xbf16>
    %c0_1 = arith.constant 0 : index
    %c0_2 = arith.constant 0 : index
    %1 = vector.load %arg2[%c0_1, %c0_2] : memref<576x64xbf16, #tpu.memory_space<vmem>>, vector<576x64xbf16>
    %cst = arith.constant dense<0.000000e+00> : vector<32x64xf32>
    %2 = tpu.matmul %0, %1, %cst {dimension_numbers = #tpu.dot_dimension_numbers<[1], [0], [0], [1], [0, 0, 1, 1], [], []>} : vector<32x576xbf16>, vector<576x64xbf16>, vector<32x64xf32> -> vector<32x64xf32>
    %cst_3 = arith.constant dense<0.000000e+00> : vector<64xf32>
    %3 = vector.multi_reduction <add>, %2, %cst_3 [0] : vector<32x64xf32> to vector<64xf32>
    %4 = vector.shape_cast %3 : vector<64xf32> to vector<1x64xf32>
    %cst_4 = arith.constant 3.125000e-02 : f32
    %5 = vector.broadcast %cst_4 : f32 to vector<1x64xf32>
    %6 = arith.mulf %4, %5 : vector<1x64xf32>
    %7 = vector.broadcast %6 : vector<1x64xf32> to vector<32x64xf32>
    %8 = arith.subf %2, %7 : vector<32x64xf32>
    %9 = arith.mulf %8, %8 : vector<32x64xf32>
    %cst_5 = arith.constant dense<0.000000e+00> : vector<64xf32>
    %10 = vector.multi_reduction <add>, %9, %cst_5 [0] : vector<32x64xf32> to vector<64xf32>
    %11 = vector.shape_cast %10 : vector<64xf32> to vector<1x64xf32>
    %cst_6 = arith.constant 3.125000e-02 : f32
    %12 = vector.broadcast %cst_6 : f32 to vector<1x64xf32>
    %13 = arith.mulf %11, %12 : vector<1x64xf32>
    %c0_7 = arith.constant 0 : index
    %c0_8 = arith.constant 0 : index
    %14 = vector.load %arg3[%c0_7, %c0_8] : memref<1x64xf32, #tpu.memory_space<vmem>>, vector<1x64xf32>
    %cst_9 = arith.constant 9.99999974E-6 : f32
    %15 = vector.broadcast %cst_9 : f32 to vector<1x64xf32>
    %16 = arith.addf %13, %15 : vector<1x64xf32>
    %17 = math.rsqrt %16 : vector<1x64xf32>
    %18 = arith.mulf %14, %17 : vector<1x64xf32>
    %19 = vector.broadcast %18 : vector<1x64xf32> to vector<32x64xf32>
    %20 = arith.mulf %8, %19 : vector<32x64xf32>
    %c0_10 = arith.constant 0 : index
    %c0_11 = arith.constant 0 : index
    %21 = vector.load %arg4[%c0_10, %c0_11] : memref<1x64xf32, #tpu.memory_space<vmem>>, vector<1x64xf32>
    %22 = vector.broadcast %21 : vector<1x64xf32> to vector<32x64xf32>
    %23 = arith.addf %20, %22 : vector<32x64xf32>
    %cst_12 = arith.constant 0.000000e+00 : f32
    %24 = vector.broadcast %cst_12 : f32 to vector<32x64xf32>
    %25 = arith.maximumf %23, %24 : vector<32x64xf32>
    %c0_13 = arith.constant 0 : index
    %c0_14 = arith.constant 0 : index
    %26 = vector.load %arg5[%c0_13, %c0_14] : memref<32x64xf32, #tpu.memory_space<vmem>>, vector<32x64xf32>
    tpu.vector_store %arg5[%c0_13, %c0_14], %25 {strides = array<i32>} : memref<32x64xf32, #tpu.memory_space<vmem>>, vector<32x64xf32>,
    return
  }
  func.func @transform_0(%arg0: i32) -> (i32, i32) {
    %c0_i32 = arith.constant 0 : i32
    %c0_i32_0 = arith.constant 0 : i32
    %c0_i32_1 = arith.constant 0 : i32
    return %c0_i32, %c0_i32_0 : i32, i32
  }
  func.func @transform_1(%arg0: i32) -> (i32, i32) {
    %c0_i32 = arith.constant 0 : i32
    %c0_i32_0 = arith.constant 0 : i32
    %c0_i32_1 = arith.constant 0 : i32
    return %c0_i32, %c0_i32_0 : i32, i32
  }
  func.func @transform_2(%arg0: i32) -> (i32, i32) {
    %c0_i32 = arith.constant 0 : i32
    %c0_i32_0 = arith.constant 0 : i32
    %c0_i32_1 = arith.constant 0 : i32
    return %c0_i32, %c0_i32_0 : i32, i32
  }
  func.func @transform_3(%arg0: i32) -> (i32, i32) {
    %c0_i32 = arith.constant 0 : i32
    %c0_i32_0 = arith.constant 0 : i32
    %c0_i32_1 = arith.constant 0 : i32
    return %c0_i32, %c0_i32_0 : i32, i32
  }
  func.func @transform_4(%arg0: i32) -> (i32, i32) {
    %c0_i32 = arith.constant 0 : i32
    %c0_i32_0 = arith.constant 0 : i32
    %c0_i32_1 = arith.constant 0 : i32
    return %c0_i32, %c0_i32_0 : i32, i32
  }
}

module attributes {stable_mosaic.version = 11 : i64} {
  func.func @_conv_bn_add_relu_kernel(%arg0: i32, %arg1: memref<32x576xbf16, #tpu.memory_space<vmem>>, %arg2: memref<576x64xbf16, #tpu.memory_space<vmem>>, %arg3: memref<1x64xf32, #tpu.memory_space<vmem>>, %arg4: memref<1x64xf32, #tpu.memory_space<vmem>>, %arg5: memref<32x64xf32, #tpu.memory_space<vmem>>, %arg6: memref<32x64xf32, #tpu.memory_space<vmem>>) attributes {dimension_semantics = [#tpu.dimension_semantics<arbitrary>], iteration_bounds = array<i64: 1>, scalar_prefetch = 0 : i64, scratch_operands = 0 : i64, tpu.core_type = #tpu.core_type<tc>, window_params = [{pipeline_mode = #tpu.pipeline_mode<synchronous>, transform_indices = @transform_0, window_bounds = array<i64: 32, 576>}, {pipeline_mode = #tpu.pipeline_mode<synchronous>, transform_indices = @transform_1, window_bounds = array<i64: 576, 64>}, {pipeline_mode = #tpu.pipeline_mode<synchronous>, transform_indices = @transform_2, window_bounds = array<i64: 1, 64>}, {pipeline_mode = #tpu.pipeline_mode<synchronous>, transform_indices = @transform_3, window_bounds = array<i64: 1, 64>}, {pipeline_mode = #tpu.pipeline_mode<synchronous>, transform_indices = @transform_4, window_bounds = array<i64: 32, 64>}, {pipeline_mode = #tpu.pipeline_mode<synchronous>, transform_indices = @transform_5, window_bounds = array<i64: 32, 64>}]} {
    %c0 = arith.constant 0 : index
    %c0_0 = arith.constant 0 : index
    %0 = vector.load %arg1[%c0, %c0_0] : memref<32x576xbf16, #tpu.memory_space<vmem>>, vector<32x576xbf16>
    %c0_1 = arith.constant 0 : index
    %c0_2 = arith.constant 0 : index
    %1 = vector.load %arg2[%c0_1, %c0_2] : memref<576x64xbf16, #tpu.memory_space<vmem>>, vector<576x64xbf16>
    %cst = arith.constant dense<0.000000e+00> : vector<32x64xf32>
    %2 = tpu.matmul %0, %1, %cst {dimension_numbers = #tpu.dot_dimension_numbers<[1], [0], [0], [1], [0, 0, 1, 1], [], []>} : vector<32x576xbf16>, vector<576x64xbf16>, vector<32x64xf32> -> vector<32x64xf32>
    %cst_3 = arith.constant dense<0.000000e+00> : vector<64xf32>
    %3 = vector.multi_reduction <add>, %2, %cst_3 [0] : vector<32x64xf32> to vector<64xf32>
    %4 = vector.shape_cast %3 : vector<64xf32> to vector<1x64xf32>
    %cst_4 = arith.constant 3.125000e-02 : f32
    %5 = vector.broadcast %cst_4 : f32 to vector<1x64xf32>
    %6 = arith.mulf %4, %5 : vector<1x64xf32>
    %7 = vector.broadcast %6 : vector<1x64xf32> to vector<32x64xf32>
    %8 = arith.subf %2, %7 : vector<32x64xf32>
    %9 = arith.mulf %8, %8 : vector<32x64xf32>
    %cst_5 = arith.constant dense<0.000000e+00> : vector<64xf32>
    %10 = vector.multi_reduction <add>, %9, %cst_5 [0] : vector<32x64xf32> to vector<64xf32>
    %11 = vector.shape_cast %10 : vector<64xf32> to vector<1x64xf32>
    %cst_6 = arith.constant 3.125000e-02 : f32
    %12 = vector.broadcast %cst_6 : f32 to vector<1x64xf32>
    %13 = arith.mulf %11, %12 : vector<1x64xf32>
    %c0_7 = arith.constant 0 : index
    %c0_8 = arith.constant 0 : index
    %14 = vector.load %arg3[%c0_7, %c0_8] : memref<1x64xf32, #tpu.memory_space<vmem>>, vector<1x64xf32>
    %cst_9 = arith.constant 9.99999974E-6 : f32
    %15 = vector.broadcast %cst_9 : f32 to vector<1x64xf32>
    %16 = arith.addf %13, %15 : vector<1x64xf32>
    %17 = math.rsqrt %16 : vector<1x64xf32>
    %18 = arith.mulf %14, %17 : vector<1x64xf32>
    %19 = vector.broadcast %18 : vector<1x64xf32> to vector<32x64xf32>
    %20 = arith.mulf %8, %19 : vector<32x64xf32>
    %c0_10 = arith.constant 0 : index
    %c0_11 = arith.constant 0 : index
    %21 = vector.load %arg4[%c0_10, %c0_11] : memref<1x64xf32, #tpu.memory_space<vmem>>, vector<1x64xf32>
    %22 = vector.broadcast %21 : vector<1x64xf32> to vector<32x64xf32>
    %23 = arith.addf %20, %22 : vector<32x64xf32>
    %c0_12 = arith.constant 0 : index
    %c0_13 = arith.constant 0 : index
    %24 = vector.load %arg5[%c0_12, %c0_13] : memref<32x64xf32, #tpu.memory_space<vmem>>, vector<32x64xf32>
    %25 = arith.addf %23, %24 : vector<32x64xf32>
    %cst_14 = arith.constant 0.000000e+00 : f32
    %26 = vector.broadcast %cst_14 : f32 to vector<32x64xf32>
    %27 = arith.maximumf %25, %26 : vector<32x64xf32>
    %c0_15 = arith.constant 0 : index
    %c0_16 = arith.constant 0 : index
    %28 = vector.load %arg6[%c0_15, %c0_16] : memref<32x64xf32, #tpu.memory_space<vmem>>, vector<32x64xf32>
    tpu.vector_store %arg6[%c0_15, %c0_16], %27 {strides = array<i32>} : memref<32x64xf32, #tpu.memory_space<vmem>>, vector<32x64xf32>,
    return
  }
  func.func @transform_0(%arg0: i32) -> (i32, i32) {
    %c0_i32 = arith.constant 0 : i32
    %c0_i32_0 = arith.constant 0 : i32
    %c0_i32_1 = arith.constant 0 : i32
    return %c0_i32, %c0_i32_0 : i32, i32
  }
  func.func @transform_1(%arg0: i32) -> (i32, i32) {
    %c0_i32 = arith.constant 0 : i32
    %c0_i32_0 = arith.constant 0 : i32
    %c0_i32_1 = arith.constant 0 : i32
    return %c0_i32, %c0_i32_0 : i32, i32
  }
  func.func @transform_2(%arg0: i32) -> (i32, i32) {
    %c0_i32 = arith.constant 0 : i32
    %c0_i32_0 = arith.constant 0 : i32
    %c0_i32_1 = arith.constant 0 : i32
    return %c0_i32, %c0_i32_0 : i32, i32
  }
  func.func @transform_3(%arg0: i32) -> (i32, i32) {
    %c0_i32 = arith.constant 0 : i32
    %c0_i32_0 = arith.constant 0 : i32
    %c0_i32_1 = arith.constant 0 : i32
    return %c0_i32, %c0_i32_0 : i32, i32
  }
  func.func @transform_4(%arg0: i32) -> (i32, i32) {
    %c0_i32 = arith.constant 0 : i32
    %c0_i32_0 = arith.constant 0 : i32
    %c0_i32_1 = arith.constant 0 : i32
    return %c0_i32, %c0_i32_0 : i32, i32
  }
  func.func @transform_5(%arg0: i32) -> (i32, i32) {
    %c0_i32 = arith.constant 0 : i32
    %c0_i32_0 = arith.constant 0 : i32
    %c0_i32_1 = arith.constant 0 : i32
    return %c0_i32, %c0_i32_0 : i32, i32
  }
}

</mosaic_0001>

<llo_original>
// kernel: _lambda_.13
$region0: #{_lambda_.13}
  #allocation0 [shape = 'u32[]', space=smem, size = 0x4, offset = 0x4, fixed_abs, tag = 'smem constant byte address 0x4 - core index']
  #allocation1 [shape = 'u32[72,128]{1,0:T(1,128)}', space=vmem, size = 0x9000, scoped, tag = 'internal scratch']
  %s0 = inlined_call_operand.vmem [shape: bf16[512,27], index: 0, kind: input, shape index: {}]
  %s1 = inlined_call_operand.vmem [shape: bf16[27,16], index: 1, kind: input, shape index: {}]
  %s2 = inlined_call_operand.vmem [shape: f32[1,16], index: 2, kind: input, shape index: {}]
  %s3 = inlined_call_operand.vmem [shape: f32[1,16], index: 3, kind: input, shape index: {}]
  %s4 = inlined_call_operand.vmem [shape: f32[512,16], index: 4, kind: output, shape index: {}]
  %s5 = sld [smem:[#allocation0]]
  $region26: #{_lambda_.13} parent=0
    _
  %s7 = ssub.s32 1, %s5
  %s8 = scalar_select 0, %s7, %s5
  // Predicated region
  $region2: #{_lambda_.13} parent=0 // pred_check
    _
  $region3: #{_lambda_.13} parent=0 // pred_check_branch
    %10 = sbr.rel (0) target = $region5
  $region4: #{_lambda_.13} parent=0 // pred_region
    _
  $region5: #{_lambda_.13} parent=0 // pred_fallthru
    _
  // Predicated region
  $region6: #{_lambda_.13} parent=0 // pred_check
    _
  $region7: #{_lambda_.13} parent=0 // pred_check_branch
    %12 = sbr.rel (0) target = $region9
  $region8: #{_lambda_.13} parent=0 // pred_region
    _
  $region9: #{_lambda_.13} parent=0 // pred_fallthru
    _
  // Predicated region
  $region10: #{_lambda_.13} parent=0 // pred_check
    _
  $region11: #{_lambda_.13} parent=0 // pred_check_branch
    %14 = sbr.rel (0) target = $region13
  $region12: #{_lambda_.13} parent=0 // pred_region
    _
  $region13: #{_lambda_.13} parent=0 // pred_fallthru
    _
  // Predicated region
  $region14: #{_lambda_.13} parent=0 // pred_check
    _
  $region15: #{_lambda_.13} parent=0 // pred_check_branch
    %16 = sbr.rel (0) target = $region17
  $region16: #{_lambda_.13} parent=0 // pred_region
    _
  $region17: #{_lambda_.13} parent=0 // pred_fallthru
    _
  %v18 = vld [vmem:[%s0] sm:$0xf]
  %v19 = vld [vmem:[%s0 + $0x4] sm:$0xf]
  %v20 = vld [vmem:[%s0 + $0x8] sm:$0xf]
  %v21 = vld [vmem:[%s0 + $0xc] sm:$0xf]
  %v22 = vld [vmem:[%s0 + $0x10] sm:$0xf]
  %v23 = vld [vmem:[%s0 + $0x14] sm:$0xf]
  %v24 = vld [vmem:[%s0 + $0x18] sm:$0xf]
  %v25 = vld [vmem:[%s0 + $0x1c] sm:$0xf]
  %v26 = vld [vmem:[%s0 + $0x20] sm:$0xf]
  %v27 = vld [vmem:[%s0 + $0x24] sm:$0xf]
  %v28 = vld [vmem:[%s0 + $0x28] sm:$0xf]
  %v29 = vld [vmem:[%s0 + $0x2c] sm:$0xf]
  %v30 = vld [vmem:[%s0 + $0x30] sm:$0xf]
  %v31 = vld [vmem:[%s0 + $0x34] sm:$0xf]
  %v32 = vld [vmem:[%s0 + $0x38] sm:$0xf]
  %v33 = vld [vmem:[%s0 + $0x3c] sm:$0xf]
  %v34 = vld [vmem:[%s0 + $0x40] sm:$0xf]
  %v35 = vld [vmem:[%s0 + $0x44] sm:$0xf]
  %v36 = vld [vmem:[%s0 + $0x48] sm:$0xf]
  %v37 = vld [vmem:[%s0 + $0x4c] sm:$0xf]
  %v38 = vld [vmem:[%s0 + $0x50] sm:$0xf]
  %v39 = vld [vmem:[%s0 + $0x54] sm:$0xf]
  %v40 = vld [vmem:[%s0 + $0x58] sm:$0xf]
  %v41 = vld [vmem:[%s0 + $0x5c] sm:$0xf]
  %v42 = vld [vmem:[%s0 + $0x60] sm:$0xf]
  %v43 = vld [vmem:[%s0 + $0x64] sm:$0xf]
  %v44 = vld [vmem:[%s0 + $0x68] sm:$0xf]
  %v45 = vld [vmem:[%s0 + $0x6c] sm:$0xf]
  %v46 = vld [vmem:[%s0 + $0x70] sm:$0xf]
  %v47 = vld [vmem:[%s0 + $0x74] sm:$0xf]
  %v48 = vld [vmem:[%s0 + $0x78] sm:$0xf]
  %v49 = vld [vmem:[%s0 + $0x7c] sm:$0xf]
  %v50 = vld [vmem:[%s0 + $0x80] sm:$0xf]
  %v51 = vld [vmem:[%s0 + $0x84] sm:$0xf]
  %v52 = vld [vmem:[%s0 + $0x88] sm:$0xf]
  %v53 = vld [vmem:[%s0 + $0x8c] sm:$0xf]
  %v54 = vld [vmem:[%s0 + $0x90] sm:$0xf]
  %v55 = vld [vmem:[%s0 + $0x94] sm:$0xf]
  %v56 = vld [vmem:[%s0 + $0x98] sm:$0xf]
  %v57 = vld [vmem:[%s0 + $0x9c] sm:$0xf]
  %v58 = vld [vmem:[%s0 + $0xa0] sm:$0xf]
  %v59 = vld [vmem:[%s0 + $0xa4] sm:$0xf]
  %v60 = vld [vmem:[%s0 + $0xa8] sm:$0xf]
  %v61 = vld [vmem:[%s0 + $0xac] sm:$0xf]
  %v62 = vld [vmem:[%s0 + $0xb0] sm:$0xf]
  %v63 = vld [vmem:[%s0 + $0xb4] sm:$0xf]
  %v64 = vld [vmem:[%s0 + $0xb8] sm:$0xf]
  %v65 = vld [vmem:[%s0 + $0xbc] sm:$0xf]
  %v66 = vld [vmem:[%s0 + $0xc0] sm:$0xf]
  %v67 = vld [vmem:[%s0 + $0xc4] sm:$0xf]
  %v68 = vld [vmem:[%s0 + $0xc8] sm:$0xf]
  %v69 = vld [vmem:[%s0 + $0xcc] sm:$0xf]
  %v70 = vld [vmem:[%s0 + $0xd0] sm:$0xf]
  %v71 = vld [vmem:[%s0 + $0xd4] sm:$0xf]
  %v72 = vld [vmem:[%s0 + $0xd8] sm:$0xf]
  %v73 = vld [vmem:[%s0 + $0xdc] sm:$0xf]
  %v74 = vld [vmem:[%s0 + $0xe0] sm:$0xf]
  %v75 = vld [vmem:[%s0 + $0xe4] sm:$0xf]
  %v76 = vld [vmem:[%s0 + $0xe8] sm:$0xf]
  %v77 = vld [vmem:[%s0 + $0xec] sm:$0xf]
  %v78 = vld [vmem:[%s0 + $0xf0] sm:$0xf]
  %v79 = vld [vmem:[%s0 + $0xf4] sm:$0xf]
  %v80 = vld [vmem:[%s0 + $0xf8] sm:$0xf]
  %v81 = vld [vmem:[%s0 + $0xfc] sm:$0xf]
  %v82 = vld [vmem:[%s1] sm:$0xf]
  %v83 = vld [vmem:[%s1 + $0x4] sm:$0xf]
  %v84 = vld [vmem:[%s1 + $0x8] sm:$0xf]
  %v85 = vld [vmem:[%s1 + $0xc] sm:$0x3]
  %v150 = vunpack.c.l.b16 %v18
  %v151 = vunpack.c.l.b16 %v19
  %v152 = vunpack.c.l.b16 %v20
  %v153 = vunpack.c.l.b16 %v21
  %v154 = vunpack.c.l.b16 %v22
  %v155 = vunpack.c.l.b16 %v23
  %v156 = vunpack.c.l.b16 %v24
  %v157 = vunpack.c.l.b16 %v25
  %v158 = vunpack.c.l.b16 %v26
  %v159 = vunpack.c.l.b16 %v27
  %v160 = vunpack.c.l.b16 %v28
  %v161 = vunpack.c.l.b16 %v29
  %v162 = vunpack.c.l.b16 %v30
  %v163 = vunpack.c.l.b16 %v31
  %v164 = vunpack.c.l.b16 %v32
  %v165 = vunpack.c.l.b16 %v33
  %v166 = vunpack.c.l.b16 %v34
  %v167 = vunpack.c.l.b16 %v35
  %v168 = vunpack.c.l.b16 %v36
  %v169 = vunpack.c.l.b16 %v37
  %v170 = vunpack.c.l.b16 %v38
  %v171 = vunpack.c.l.b16 %v39
  %v172 = vunpack.c.l.b16 %v40
  %v173 = vunpack.c.l.b16 %v41
  %v174 = vunpack.c.l.b16 %v42
  %v175 = vunpack.c.l.b16 %v43
  %v176 = vunpack.c.l.b16 %v44
  %v177 = vunpack.c.l.b16 %v45
  %v178 = vunpack.c.l.b16 %v46
  %v179 = vunpack.c.l.b16 %v47
  %v180 = vunpack.c.l.b16 %v48
  %v181 = vunpack.c.l.b16 %v49
  %v182 = vunpack.c.l.b16 %v50
  %v183 = vunpack.c.l.b16 %v51
  %v184 = vunpack.c.l.b16 %v52
  %v185 = vunpack.c.l.b16 %v53
  %v186 = vunpack.c.l.b16 %v54
  %v187 = vunpack.c.l.b16 %v55
  %v188 = vunpack.c.l.b16 %v56
  %v189 = vunpack.c.l.b16 %v57
  %v190 = vunpack.c.l.b16 %v58
  %v191 = vunpack.c.l.b16 %v59
  %v192 = vunpack.c.l.b16 %v60
  %v193 = vunpack.c.l.b16 %v61
  %v194 = vunpack.c.l.b16 %v62
  %v195 = vunpack.c.l.b16 %v63
  %v196 = vunpack.c.l.b16 %v64
  %v197 = vunpack.c.l.b16 %v65
  %v198 = vunpack.c.l.b16 %v66
  %v199 = vunpack.c.l.b16 %v67
  %v200 = vunpack.c.l.b16 %v68
  %v201 = vunpack.c.l.b16 %v69
  %v202 = vunpack.c.l.b16 %v70
  %v203 = vunpack.c.l.b16 %v71
  %v204 = vunpack.c.l.b16 %v72
  %v205 = vunpack.c.l.b16 %v73
  %v206 = vunpack.c.l.b16 %v74
  %v207 = vunpack.c.l.b16 %v75
  %v208 = vunpack.c.l.b16 %v76
  %v209 = vunpack.c.l.b16 %v77
  %v210 = vunpack.c.l.b16 %v78
  %v211 = vunpack.c.l.b16 %v79
  %v212 = vunpack.c.l.b16 %v80
  %v213 = vunpack.c.l.b16 %v81
  %v214 = vpack.c.b16 %v151, %v150
  %v215 = vpack.c.b16 %v153, %v152
  %v216 = vpack.c.b16 %v155, %v154
  %v217 = vpack.c.b16 %v157, %v156
  %v218 = vpack.c.b16 %v159, %v158
  %v219 = vpack.c.b16 %v161, %v160
  %v220 = vpack.c.b16 %v163, %v162
  %v221 = vpack.c.b16 %v165, %v164
  %v222 = vpack.c.b16 %v167, %v166
  %v223 = vpack.c.b16 %v169, %v168
  %v224 = vpack.c.b16 %v171, %v170
  %v225 = vpack.c.b16 %v173, %v172
  %v226 = vpack.c.b16 %v175, %v174
  %v227 = vpack.c.b16 %v177, %v176
  %v228 = vpack.c.b16 %v179, %v178
  %v229 = vpack.c.b16 %v181, %v180
  %v230 = vpack.c.b16 %v183, %v182
  %v231 = vpack.c.b16 %v185, %v184
  %v232 = vpack.c.b16 %v187, %v186
  %v233 = vpack.c.b16 %v189, %v188
  %v234 = vpack.c.b16 %v191, %v190
  %v235 = vpack.c.b16 %v193, %v192
  %v236 = vpack.c.b16 %v195, %v194
  %v237 = vpack.c.b16 %v197, %v196
  %v238 = vpack.c.b16 %v199, %v198
  %v239 = vpack.c.b16 %v201, %v200
  %v240 = vpack.c.b16 %v203, %v202
  %v241 = vpack.c.b16 %v205, %v204
  %v242 = vpack.c.b16 %v207, %v206
  %v243 = vpack.c.b16 %v209, %v208
  %v244 = vpack.c.b16 %v211, %v210
  %v245 = vpack.c.b16 %v213, %v212
  %v250 = vunpack.c.l.b16 %v82
  %v251 = vunpack.c.l.b16 %v83
  %v252 = vunpack.c.l.b16 %v84
  %v253 = vunpack.c.l.b16 %v85
  %v254 = vpack.c.b16 %v251, %v250
  %v255 = vpack.c.b16 %v253, %v252
  %vm257 = vcmask 220160
  %v259 = vsel %vm257, %v214, 0
  %v262 = vsel %vm257, %v215, 0
  %v265 = vsel %vm257, %v216, 0
  %v268 = vsel %vm257, %v217, 0
  %v271 = vsel %vm257, %v218, 0
  %v274 = vsel %vm257, %v219, 0
  %v277 = vsel %vm257, %v220, 0
  %v280 = vsel %vm257, %v221, 0
  %v283 = vsel %vm257, %v222, 0
  %v286 = vsel %vm257, %v223, 0
  %v289 = vsel %vm257, %v224, 0
  %v292 = vsel %vm257, %v225, 0
  %v295 = vsel %vm257, %v226, 0
  %v298 = vsel %vm257, %v227, 0
  %v301 = vsel %vm257, %v228, 0
  %v304 = vsel %vm257, %v229, 0
  %v307 = vsel %vm257, %v230, 0
  %v310 = vsel %vm257, %v231, 0
  %v313 = vsel %vm257, %v232, 0
  %v316 = vsel %vm257, %v233, 0
  %v319 = vsel %vm257, %v234, 0
  %v322 = vsel %vm257, %v235, 0
  %v325 = vsel %vm257, %v236, 0
  %v328 = vsel %vm257, %v237, 0
  %v331 = vsel %vm257, %v238, 0
  %v334 = vsel %vm257, %v239, 0
  %v337 = vsel %vm257, %v240, 0
  %v340 = vsel %vm257, %v241, 0
  %v343 = vsel %vm257, %v242, 0
  %v346 = vsel %vm257, %v243, 0
  %v349 = vsel %vm257, %v244, 0
  %v352 = vsel %vm257, %v245, 0
  %vm354 = vcmask 1044480
  %vm355 = vcmask 1045504
  %v356 = vsel %vm354, 4294967295, 65535
  %v357 = vsel %vm355, %v356, 0
  %v359 = vand.u32 %v255, %v357
  %361 = vmatpush.bf16.msra.mxu0 0
  %362 = vmatpush.bf16.msra.mxu0 0
  %363 = vmatpush.bf16.msra.mxu0 0
  %364 = vmatpush.bf16.msra.mxu0 0
  %365 = vmatpush.bf16.msra.mxu0 0
  %366 = vmatpush.bf16.msra.mxu0 0
  %367 = vmatpush.bf16.msra.mxu0 %v359
  %368 = vmatpush.bf16.msra.mxu0 %v254
  %369 = vmatmul.bf16.gmra.mxu0 %v259
  %v370 = vpop.f32.mrf.mxu0
  %v371 = vadd.f32 0.0, %v370
  %v372 = vpop.f32.mrf.mxu0
  %v373 = vadd.f32 0.0, %v372
  %374 = vmatmul.bf16.gmra.mxu0 %v262
  %v375 = vpop.f32.mrf.mxu0
  %v376 = vadd.f32 0.0, %v375
  %v377 = vpop.f32.mrf.mxu0
  %v378 = vadd.f32 0.0, %v377
  %379 = vmatmul.bf16.gmra.mxu0 %v265
  %v380 = vpop.f32.mrf.mxu0
  %v381 = vadd.f32 0.0, %v380
  %v382 = vpop.f32.mrf.mxu0
  %v383 = vadd.f32 0.0, %v382
  %384 = vmatmul.bf16.gmra.mxu0 %v268
  %v385 = vpop.f32.mrf.mxu0
  %v386 = vadd.f32 0.0, %v385
  %v387 = vpop.f32.mrf.mxu0
  %v388 = vadd.f32 0.0, %v387
  %389 = vmatmul.bf16.gmra.mxu0 %v271
  %v390 = vpop.f32.mrf.mxu0
  %v391 = vadd.f32 0.0, %v390
  %v392 = vpop.f32.mrf.mxu0
  %v393 = vadd.f32 0.0, %v392
  %394 = vmatmul.bf16.gmra.mxu0 %v274
  %v395 = vpop.f32.mrf.mxu0
  %v396 = vadd.f32 0.0, %v395
  %v397 = vpop.f32.mrf.mxu0
  %v398 = vadd.f32 0.0, %v397
  %399 = vmatmul.bf16.gmra.mxu0 %v277
  %v400 = vpop.f32.mrf.mxu0
  %v401 = vadd.f32 0.0, %v400
  %v402 = vpop.f32.mrf.mxu0
  %v403 = vadd.f32 0.0, %v402
  %404 = vmatmul.bf16.gmra.mxu0 %v280
  %v405 = vpop.f32.mrf.mxu0
  %v406 = vadd.f32 0.0, %v405
  %v407 = vpop.f32.mrf.mxu0
  %v408 = vadd.f32 0.0, %v407
  %409 = vmatmul.bf16.gmra.mxu0 %v283
  %v410 = vpop.f32.mrf.mxu0
  %v411 = vadd.f32 0.0, %v410
  %v412 = vpop.f32.mrf.mxu0
  %v413 = vadd.f32 0.0, %v412
  %414 = vmatmul.bf16.gmra.mxu0 %v286
  %v415 = vpop.f32.mrf.mxu0
  %v416 = vadd.f32 0.0, %v415
  %v417 = vpop.f32.mrf.mxu0
  %v418 = vadd.f32 0.0, %v417
  %419 = vmatmul.bf16.gmra.mxu0 %v289
  %v420 = vpop.f32.mrf.mxu0
  %v421 = vadd.f32 0.0, %v420
  %v422 = vpop.f32.mrf.mxu0
  %v423 = vadd.f32 0.0, %v422
  %424 = vmatmul.bf16.gmra.mxu0 %v292
  %v425 = vpop.f32.mrf.mxu0
  %v426 = vadd.f32 0.0, %v425
  %v427 = vpop.f32.mrf.mxu0
  %v428 = vadd.f32 0.0, %v427
  %429 = vmatmul.bf16.gmra.mxu0 %v295
  %v430 = vpop.f32.mrf.mxu0
  %v431 = vadd.f32 0.0, %v430
  %v432 = vpop.f32.mrf.mxu0
  %v433 = vadd.f32 0.0, %v432
  %434 = vmatmul.bf16.gmra.mxu0 %v298
  %v435 = vpop.f32.mrf.mxu0
  %v436 = vadd.f32 0.0, %v435
  %v437 = vpop.f32.mrf.mxu0
  %v438 = vadd.f32 0.0, %v437
  %439 = vmatmul.bf16.gmra.mxu0 %v301
  %v440 = vpop.f32.mrf.mxu0
  %v441 = vadd.f32 0.0, %v440
  %v442 = vpop.f32.mrf.mxu0
  %v443 = vadd.f32 0.0, %v442
  %444 = vmatmul.bf16.gmra.mxu0 %v304
  %v445 = vpop.f32.mrf.mxu0
  %v446 = vadd.f32 0.0, %v445
  %v447 = vpop.f32.mrf.mxu0
  %v448 = vadd.f32 0.0, %v447
  %449 = vmatmul.bf16.gmra.mxu0 %v307
  %v450 = vpop.f32.mrf.mxu0
  %v451 = vadd.f32 0.0, %v450
  %v452 = vpop.f32.mrf.mxu0
  %v453 = vadd.f32 0.0, %v452
  %454 = vmatmul.bf16.gmra.mxu0 %v310
  %v455 = vpop.f32.mrf.mxu0
  %v456 = vadd.f32 0.0, %v455
  %v457 = vpop.f32.mrf.mxu0
  %v458 = vadd.f32 0.0, %v457
  %459 = vmatmul.bf16.gmra.mxu0 %v313
  %v460 = vpop.f32.mrf.mxu0
  %v461 = vadd.f32 0.0, %v460
  %v462 = vpop.f32.mrf.mxu0
  %v463 = vadd.f32 0.0, %v462
  %464 = vmatmul.bf16.gmra.mxu0 %v316
  %v465 = vpop.f32.mrf.mxu0
  %v466 = vadd.f32 0.0, %v465
  %v467 = vpop.f32.mrf.mxu0
  %v468 = vadd.f32 0.0, %v467
  %469 = vmatmul.bf16.gmra.mxu0 %v319
  %v470 = vpop.f32.mrf.mxu0
  %v471 = vadd.f32 0.0, %v470
  %v472 = vpop.f32.mrf.mxu0
  %v473 = vadd.f32 0.0, %v472
  %474 = vmatmul.bf16.gmra.mxu0 %v322
  %v475 = vpop.f32.mrf.mxu0
  %v476 = vadd.f32 0.0, %v475
  %v477 = vpop.f32.mrf.mxu0
  %v478 = vadd.f32 0.0, %v477
  %479 = vmatmul.bf16.gmra.mxu0 %v325
  %v480 = vpop.f32.mrf.mxu0
  %v481 = vadd.f32 0.0, %v480
  %v482 = vpop.f32.mrf.mxu0
  %v483 = vadd.f32 0.0, %v482
  %484 = vmatmul.bf16.gmra.mxu0 %v328
  %v485 = vpop.f32.mrf.mxu0
  %v486 = vadd.f32 0.0, %v485
  %v487 = vpop.f32.mrf.mxu0
  %v488 = vadd.f32 0.0, %v487
  %489 = vmatmul.bf16.gmra.mxu0 %v331
  %v490 = vpop.f32.mrf.mxu0
  %v491 = vadd.f32 0.0, %v490
  %v492 = vpop.f32.mrf.mxu0
  %v493 = vadd.f32 0.0, %v492
  %494 = vmatmul.bf16.gmra.mxu0 %v334
  %v495 = vpop.f32.mrf.mxu0
  %v496 = vadd.f32 0.0, %v495
  %v497 = vpop.f32.mrf.mxu0
  %v498 = vadd.f32 0.0, %v497
  %499 = vmatmul.bf16.gmra.mxu0 %v337
  %v500 = vpop.f32.mrf.mxu0
  %v501 = vadd.f32 0.0, %v500
  %v502 = vpop.f32.mrf.mxu0
  %v503 = vadd.f32 0.0, %v502
  %504 = vmatmul.bf16.gmra.mxu0 %v340
  %v505 = vpop.f32.mrf.mxu0
  %v506 = vadd.f32 0.0, %v505
  %v507 = vpop.f32.mrf.mxu0
  %v508 = vadd.f32 0.0, %v507
  %509 = vmatmul.bf16.gmra.mxu0 %v343
  %v510 = vpop.f32.mrf.mxu0
  %v511 = vadd.f32 0.0, %v510
  %v512 = vpop.f32.mrf.mxu0
  %v513 = vadd.f32 0.0, %v512
  %514 = vmatmul.bf16.gmra.mxu0 %v346
  %v515 = vpop.f32.mrf.mxu0
  %v516 = vadd.f32 0.0, %v515
  %v517 = vpop.f32.mrf.mxu0
  %v518 = vadd.f32 0.0, %v517
  %519 = vmatmul.bf16.gmra.mxu0 %v349
  %v520 = vpop.f32.mrf.mxu0
  %v521 = vadd.f32 0.0, %v520
  %v522 = vpop.f32.mrf.mxu0
  %v523 = vadd.f32 0.0, %v522
  %524 = vmatmul.bf16.gmra.mxu0 %v352
  %v525 = vpop.f32.mrf.mxu0
  %v526 = vadd.f32 0.0, %v525
  %v527 = vpop.f32.mrf.mxu0
  %v528 = vadd.f32 0.0, %v527
  %529 = vdwg.mxu0
  %vm530 = vcmask 130048
  %v531 = vsel %vm530, %v371, 0.0
  %v532 = vsel %vm530, %v373, 0.0
  %v533 = vadd.f32 %v531, %v532
  %v534 = vsel %vm530, %v376, 0.0
  %v535 = vadd.f32 %v533, %v534
  %v536 = vsel %vm530, %v378, 0.0
  %v537 = vadd.f32 %v535, %v536
  %v538 = vsel %vm530, %v381, 0.0
  %v539 = vadd.f32 %v537, %v538
  %v540 = vsel %vm530, %v383, 0.0
  %v541 = vadd.f32 %v539, %v540
  %v542 = vsel %vm530, %v386, 0.0
  %v543 = vadd.f32 %v541, %v542
  %v544 = vsel %vm530, %v388, 0.0
  %v545 = vadd.f32 %v543, %v544
  %v546 = vsel %vm530, %v391, 0.0
  %v547 = vadd.f32 %v545, %v546
  %v548 = vsel %vm530, %v393, 0.0
  %v549 = vadd.f32 %v547, %v548
  %v550 = vsel %vm530, %v396, 0.0
  %v551 = vadd.f32 %v549, %v550
  %v552 = vsel %vm530, %v398, 0.0
  %v553 = vadd.f32 %v551, %v552
  %v554 = vsel %vm530, %v401, 0.0
  %v555 = vadd.f32 %v553, %v554
  %v556 = vsel %vm530, %v403, 0.0
  %v557 = vadd.f32 %v555, %v556
  %v558 = vsel %vm530, %v406, 0.0
  %v559 = vadd.f32 %v557, %v558
  %v560 = vsel %vm530, %v408, 0.0
  %v561 = vadd.f32 %v559, %v560
  %v562 = vsel %vm530, %v411, 0.0
  %v563 = vadd.f32 %v561, %v562
  %v564 = vsel %vm530, %v413, 0.0
  %v565 = vadd.f32 %v563, %v564
  %v566 = vsel %vm530, %v416, 0.0
  %v567 = vadd.f32 %v565, %v566
  %v568 = vsel %vm530, %v418, 0.0
  %v569 = vadd.f32 %v567, %v568
  %v570 = vsel %vm530, %v421, 0.0
  %v571 = vadd.f32 %v569, %v570
  %v572 = vsel %vm530, %v423, 0.0
  %v573 = vadd.f32 %v571, %v572
  %v574 = vsel %vm530, %v426, 0.0
  %v575 = vadd.f32 %v573, %v574
  %v576 = vsel %vm530, %v428, 0.0
  %v577 = vadd.f32 %v575, %v576
  %v578 = vsel %vm530, %v431, 0.0
  %v579 = vadd.f32 %v577, %v578
  %v580 = vsel %vm530, %v433, 0.0
  %v581 = vadd.f32 %v579, %v580
  %v582 = vsel %vm530, %v436, 0.0
  %v583 = vadd.f32 %v581, %v582
  %v584 = vsel %vm530, %v438, 0.0
  %v585 = vadd.f32 %v583, %v584
  %v586 = vsel %vm530, %v441, 0.0
  %v587 = vadd.f32 %v585, %v586
  %v588 = vsel %vm530, %v443, 0.0
  %v589 = vadd.f32 %v587, %v588
  %v590 = vsel %vm530, %v446, 0.0
  %v591 = vadd.f32 %v589, %v590
  %v592 = vsel %vm530, %v448, 0.0
  %v593 = vadd.f32 %v591, %v592
  %v594 = vsel %vm530, %v451, 0.0
  %v595 = vadd.f32 %v593, %v594
  %v596 = vsel %vm530, %v453, 0.0
  %v597 = vadd.f32 %v595, %v596
  %v598 = vsel %vm530, %v456, 0.0
  %v599 = vadd.f32 %v597, %v598
  %v600 = vsel %vm530, %v458, 0.0
  %v601 = vadd.f32 %v599, %v600
  %v602 = vsel %vm530, %v461, 0.0
  %v603 = vadd.f32 %v601, %v602
  %v604 = vsel %vm530, %v463, 0.0
  %v605 = vadd.f32 %v603, %v604
  %v606 = vsel %vm530, %v466, 0.0
  %v607 = vadd.f32 %v605, %v606
  %v608 = vsel %vm530, %v468, 0.0
  %v609 = vadd.f32 %v607, %v608
  %v610 = vsel %vm530, %v471, 0.0
  %v611 = vadd.f32 %v609, %v610
  %v612 = vsel %vm530, %v473, 0.0
  %v613 = vadd.f32 %v611, %v612
  %v614 = vsel %vm530, %v476, 0.0
  %v615 = vadd.f32 %v613, %v614
  %v616 = vsel %vm530, %v478, 0.0
  %v617 = vadd.f32 %v615, %v616
  %v618 = vsel %vm530, %v481, 0.0
  %v619 = vadd.f32 %v617, %v618
  %v620 = vsel %vm530, %v483, 0.0
  %v621 = vadd.f32 %v619, %v620
  %v622 = vsel %vm530, %v486, 0.0
  %v623 = vadd.f32 %v621, %v622
  %v624 = vsel %vm530, %v488, 0.0
  %v625 = vadd.f32 %v623, %v624
  %v626 = vsel %vm530, %v491, 0.0
  %v627 = vadd.f32 %v625, %v626
  %v628 = vsel %vm530, %v493, 0.0
  %v629 = vadd.f32 %v627, %v628
  %v630 = vsel %vm530, %v496, 0.0
  %v631 = vadd.f32 %v629, %v630
  %v632 = vsel %vm530, %v498, 0.0
  %v633 = vadd.f32 %v631, %v632
  %v634 = vsel %vm530, %v501, 0.0
  %v635 = vadd.f32 %v633, %v634
  %v636 = vsel %vm530, %v503, 0.0
  %v637 = vadd.f32 %v635, %v636
  %v638 = vsel %vm530, %v506, 0.0
  %v639 = vadd.f32 %v637, %v638
  %v640 = vsel %vm530, %v508, 0.0
  %v641 = vadd.f32 %v639, %v640
  %v642 = vsel %vm530, %v511, 0.0
  %v643 = vadd.f32 %v641, %v642
  %v644 = vsel %vm530, %v513, 0.0
  %v645 = vadd.f32 %v643, %v644
  %v646 = vsel %vm530, %v516, 0.0
  %v647 = vadd.f32 %v645, %v646
  %v648 = vsel %vm530, %v518, 0.0
  %v649 = vadd.f32 %v647, %v648
  %v650 = vsel %vm530, %v521, 0.0
  %v651 = vadd.f32 %v649, %v650
  %v652 = vsel %vm530, %v523, 0.0
  %v653 = vadd.f32 %v651, %v652
  %v654 = vsel %vm530, %v526, 0.0
  %v655 = vadd.f32 %v653, %v654
  %v656 = vsel %vm530, %v528, 0.0
  %v657 = vadd.f32 %v655, %v656
  %v658 = vrot.slane %v657, 4
  %v659 = vadd.f32 %v657, %v658
  %v660 = vrot.slane %v659, 2
  %v661 = vadd.f32 %v659, %v660
  %v662 = vrot.slane %v661, 1
  %v663 = vadd.f32 %v661, %v662
  %v664 = vmul.f32 %v663, 0.001953125
  %v665 = vsub.f32 %v371, %v664
  %v666 = vsub.f32 %v373, %v664
  %v667 = vsub.f32 %v376, %v664
  %v668 = vsub.f32 %v378, %v664
  %v669 = vsub.f32 %v381, %v664
  %v670 = vsub.f32 %v383, %v664
  %v671 = vsub.f32 %v386, %v664
  %v672 = vsub.f32 %v388, %v664
  %v673 = vsub.f32 %v391, %v664
  %v674 = vsub.f32 %v393, %v664
  %v675 = vsub.f32 %v396, %v664
  %v676 = vsub.f32 %v398, %v664
  %v677 = vsub.f32 %v401, %v664
  %v678 = vsub.f32 %v403, %v664
  %v679 = vsub.f32 %v406, %v664
  %v680 = vsub.f32 %v408, %v664
  %v681 = vsub.f32 %v411, %v664
  %v682 = vsub.f32 %v413, %v664
  %v683 = vsub.f32 %v416, %v664
  %v684 = vsub.f32 %v418, %v664
  %v685 = vsub.f32 %v421, %v664
  %v686 = vsub.f32 %v423, %v664
  %v687 = vsub.f32 %v426, %v664
  %v688 = vsub.f32 %v428, %v664
  %v689 = vsub.f32 %v431, %v664
  %v690 = vsub.f32 %v433, %v664
  %v691 = vsub.f32 %v436, %v664
  %v692 = vsub.f32 %v438, %v664
  %v693 = vsub.f32 %v441, %v664
  %v694 = vsub.f32 %v443, %v664
  %v695 = vsub.f32 %v446, %v664
  %v696 = vsub.f32 %v448, %v664
  %v697 = vsub.f32 %v451, %v664
  %v698 = vsub.f32 %v453, %v664
  %v699 = vsub.f32 %v456, %v664
  %v700 = vsub.f32 %v458, %v664
  %v701 = vsub.f32 %v461, %v664
  %v702 = vsub.f32 %v463, %v664
  %v703 = vsub.f32 %v466, %v664
  %v704 = vsub.f32 %v468, %v664
  %v705 = vsub.f32 %v471, %v664
  %v706 = vsub.f32 %v473, %v664
  %v707 = vsub.f32 %v476, %v664
  %v708 = vsub.f32 %v478, %v664
  %v709 = vsub.f32 %v481, %v664
  %v710 = vsub.f32 %v483, %v664
  %v711 = vsub.f32 %v486, %v664
  %v712 = vsub.f32 %v488, %v664
  %v713 = vsub.f32 %v491, %v664
  %v714 = vsub.f32 %v493, %v664
  %v715 = vsub.f32 %v496, %v664
  %v716 = vsub.f32 %v498, %v664
  %v717 = vsub.f32 %v501, %v664
  %v718 = vsub.f32 %v503, %v664
  %v719 = vsub.f32 %v506, %v664
  %v720 = vsub.f32 %v508, %v664
  %v721 = vsub.f32 %v511, %v664
  %v722 = vsub.f32 %v513, %v664
  %v723 = vsub.f32 %v516, %v664
  %v724 = vsub.f32 %v518, %v664
  %v725 = vsub.f32 %v521, %v664
  %v726 = vsub.f32 %v523, %v664
  %v727 = vsub.f32 %v526, %v664
  %v728 = vsub.f32 %v528, %v664
  %v729 = vmul.f32 %v665, %v665
  %v730 = vmul.f32 %v666, %v666
  %v731 = vmul.f32 %v667, %v667
  %v732 = vmul.f32 %v668, %v668
  %v733 = vmul.f32 %v669, %v669
  %v734 = vmul.f32 %v670, %v670
  %v735 = vmul.f32 %v671, %v671
  %v736 = vmul.f32 %v672, %v672
  %v737 = vmul.f32 %v673, %v673
  %v738 = vmul.f32 %v674, %v674
  %v739 = vmul.f32 %v675, %v675
  %v740 = vmul.f32 %v676, %v676
  %v741 = vmul.f32 %v677, %v677
  %v742 = vmul.f32 %v678, %v678
  %v743 = vmul.f32 %v679, %v679
  %v744 = vmul.f32 %v680, %v680
  %v745 = vmul.f32 %v681, %v681
  %v746 = vmul.f32 %v682, %v682
  %v747 = vmul.f32 %v683, %v683
  %v748 = vmul.f32 %v684, %v684
  %v749 = vmul.f32 %v685, %v685
  %v750 = vmul.f32 %v686, %v686
  %v751 = vmul.f32 %v687, %v687
  %v752 = vmul.f32 %v688, %v688
  %v753 = vmul.f32 %v689, %v689
  %v754 = vmul.f32 %v690, %v690
  %v755 = vmul.f32 %v691, %v691
  %v756 = vmul.f32 %v692, %v692
  %v757 = vmul.f32 %v693, %v693
  %v758 = vmul.f32 %v694, %v694
  %v759 = vmul.f32 %v695, %v695
  %v760 = vmul.f32 %v696, %v696
  %v761 = vmul.f32 %v697, %v697
  %v762 = vmul.f32 %v698, %v698
  %v763 = vmul.f32 %v699, %v699
  %v764 = vmul.f32 %v700, %v700
  %v765 = vmul.f32 %v701, %v701
  %v766 = vmul.f32 %v702, %v702
  %v767 = vmul.f32 %v703, %v703
  %v768 = vmul.f32 %v704, %v704
  %v769 = vmul.f32 %v705, %v705
  %v770 = vmul.f32 %v706, %v706
  %v771 = vmul.f32 %v707, %v707
  %v772 = vmul.f32 %v708, %v708
  %v773 = vmul.f32 %v709, %v709
  %v774 = vmul.f32 %v710, %v710
  %v775 = vmul.f32 %v711, %v711
  %v776 = vmul.f32 %v712, %v712
  %v777 = vmul.f32 %v713, %v713
  %v778 = vmul.f32 %v714, %v714
  %v779 = vmul.f32 %v715, %v715
  %v780 = vmul.f32 %v716, %v716
  %v781 = vmul.f32 %v717, %v717
  %v782 = vmul.f32 %v718, %v718
  %v783 = vmul.f32 %v719, %v719
  %v784 = vmul.f32 %v720, %v720
  %v785 = vmul.f32 %v721, %v721
  %v786 = vmul.f32 %v722, %v722
  %v787 = vmul.f32 %v723, %v723
  %v788 = vmul.f32 %v724, %v724
  %v789 = vmul.f32 %v725, %v725
  %v790 = vmul.f32 %v726, %v726
  %v791 = vmul.f32 %v727, %v727
  %v792 = vmul.f32 %v728, %v728
  %v793 = vsel %vm530, %v729, 0.0
  %v794 = vsel %vm530, %v730, 0.0
  %v795 = vadd.f32 %v793, %v794
  %v796 = vsel %vm530, %v731, 0.0
  %v797 = vadd.f32 %v795, %v796
  %v798 = vsel %vm530, %v732, 0.0
  %v799 = vadd.f32 %v797, %v798
  %v800 = vsel %vm530, %v733, 0.0
  %v801 = vadd.f32 %v799, %v800
  %v802 = vsel %vm530, %v734, 0.0
  %v803 = vadd.f32 %v801, %v802
  %v804 = vsel %vm530, %v735, 0.0
  %v805 = vadd.f32 %v803, %v804
  %v806 = vsel %vm530, %v736, 0.0
  %v807 = vadd.f32 %v805, %v806
  %v808 = vsel %vm530, %v737, 0.0
  %v809 = vadd.f32 %v807, %v808
  %v810 = vsel %vm530, %v738, 0.0
  %v811 = vadd.f32 %v809, %v810
  %v812 = vsel %vm530, %v739, 0.0
  %v813 = vadd.f32 %v811, %v812
  %v814 = vsel %vm530, %v740, 0.0
  %v815 = vadd.f32 %v813, %v814
  %v816 = vsel %vm530, %v741, 0.0
  %v817 = vadd.f32 %v815, %v816
  %v818 = vsel %vm530, %v742, 0.0
  %v819 = vadd.f32 %v817, %v818
  %v820 = vsel %vm530, %v743, 0.0
  %v821 = vadd.f32 %v819, %v820
  %v822 = vsel %vm530, %v744, 0.0
  %v823 = vadd.f32 %v821, %v822
  %v824 = vsel %vm530, %v745, 0.0
  %v825 = vadd.f32 %v823, %v824
  %v826 = vsel %vm530, %v746, 0.0
  %v827 = vadd.f32 %v825, %v826
  %v828 = vsel %vm530, %v747, 0.0
  %v829 = vadd.f32 %v827, %v828
  %v830 = vsel %vm530, %v748, 0.0
  %v831 = vadd.f32 %v829, %v830
  %v832 = vsel %vm530, %v749, 0.0
  %v833 = vadd.f32 %v831, %v832
  %v834 = vsel %vm530, %v750, 0.0
  %v835 = vadd.f32 %v833, %v834
  %v836 = vsel %vm530, %v751, 0.0
  %v837 = vadd.f32 %v835, %v836
  %v838 = vsel %vm530, %v752, 0.0
  %v839 = vadd.f32 %v837, %v838
  %v840 = vsel %vm530, %v753, 0.0
  %v841 = vadd.f32 %v839, %v840
  %v842 = vsel %vm530, %v754, 0.0
  %v843 = vadd.f32 %v841, %v842
  %v844 = vsel %vm530, %v755, 0.0
  %v845 = vadd.f32 %v843, %v844
  %v846 = vsel %vm530, %v756, 0.0
  %v847 = vadd.f32 %v845, %v846
  %v848 = vsel %vm530, %v757, 0.0
  %v849 = vadd.f32 %v847, %v848
  %v850 = vsel %vm530, %v758, 0.0
  %v851 = vadd.f32 %v849, %v850
  %v852 = vsel %vm530, %v759, 0.0
  %v853 = vadd.f32 %v851, %v852
  %v854 = vsel %vm530, %v760, 0.0
  %v855 = vadd.f32 %v853, %v854
  %v856 = vsel %vm530, %v761, 0.0
  %v857 = vadd.f32 %v855, %v856
  %v858 = vsel %vm530, %v762, 0.0
  %v859 = vadd.f32 %v857, %v858
  %v860 = vsel %vm530, %v763, 0.0
  %v861 = vadd.f32 %v859, %v860
  %v862 = vsel %vm530, %v764, 0.0
  %v863 = vadd.f32 %v861, %v862
  %v864 = vsel %vm530, %v765, 0.0
  %v865 = vadd.f32 %v863, %v864
  %v866 = vsel %vm530, %v766, 0.0
  %v867 = vadd.f32 %v865, %v866
  %v868 = vsel %vm530, %v767, 0.0
  %v869 = vadd.f32 %v867, %v868
  %v870 = vsel %vm530, %v768, 0.0
  %v871 = vadd.f32 %v869, %v870
  %v872 = vsel %vm530, %v769, 0.0
  %v873 = vadd.f32 %v871, %v872
  %v874 = vsel %vm530, %v770, 0.0
  %v875 = vadd.f32 %v873, %v874
  %v876 = vsel %vm530, %v771, 0.0
  %v877 = vadd.f32 %v875, %v876
  %v878 = vsel %vm530, %v772, 0.0
  %v879 = vadd.f32 %v877, %v878
  %v880 = vsel %vm530, %v773, 0.0
  %v881 = vadd.f32 %v879, %v880
  %v882 = vsel %vm530, %v774, 0.0
  %v883 = vadd.f32 %v881, %v882
  %v884 = vsel %vm530, %v775, 0.0
  %v885 = vadd.f32 %v883, %v884
  %v886 = vsel %vm530, %v776, 0.0
  %v887 = vadd.f32 %v885, %v886
  %v888 = vsel %vm530, %v777, 0.0
  %v889 = vadd.f32 %v887, %v888
  %v890 = vsel %vm530, %v778, 0.0
  %v891 = vadd.f32 %v889, %v890
  %v892 = vsel %vm530, %v779, 0.0
  %v893 = vadd.f32 %v891, %v892
  %v894 = vsel %vm530, %v780, 0.0
  %v895 = vadd.f32 %v893, %v894
  %v896 = vsel %vm530, %v781, 0.0
  %v897 = vadd.f32 %v895, %v896
  %v898 = vsel %vm530, %v782, 0.0
  %v899 = vadd.f32 %v897, %v898
  %v900 = vsel %vm530, %v783, 0.0
  %v901 = vadd.f32 %v899, %v900
  %v902 = vsel %vm530, %v784, 0.0
  %v903 = vadd.f32 %v901, %v902
  %v904 = vsel %vm530, %v785, 0.0
  %v905 = vadd.f32 %v903, %v904
  %v906 = vsel %vm530, %v786, 0.0
  %v907 = vadd.f32 %v905, %v906
  %v908 = vsel %vm530, %v787, 0.0
  %v909 = vadd.f32 %v907, %v908
  %v910 = vsel %vm530, %v788, 0.0
  %v911 = vadd.f32 %v909, %v910
  %v912 = vsel %vm530, %v789, 0.0
  %v913 = vadd.f32 %v911, %v912
  %v914 = vsel %vm530, %v790, 0.0
  %v915 = vadd.f32 %v913, %v914
  %v916 = vsel %vm530, %v791, 0.0
  %v917 = vadd.f32 %v915, %v916
  %v918 = vsel %vm530, %v792, 0.0
  %v919 = vadd.f32 %v917, %v918
  %v920 = vrot.slane %v919, 4
  %v921 = vadd.f32 %v919, %v920
  %v922 = vrot.slane %v921, 2
  %v923 = vadd.f32 %v921, %v922
  %v924 = vrot.slane %v923, 1
  %v925 = vadd.f32 %v923, %v924
  %v926 = vmul.f32 %v925, 0.001953125
  %v927 = vld [vmem:[%s2] sm:$0x1]
  %v928 = vadd.f32 %v926, 1e-05
  %v929 = vrsqrt.pop %v928
  %v930 = vmul.f32 %v929, %v928
  %v931 = vmul.f32 %v930, %v929
  %v932 = vmul.f32 0.5, %v931
  %v933 = vsub.f32 1.5, %v932
  %v934 = vmul.f32 %v929, %v933
  %vm935 = vweird.f32 %v928
  %vm936 = vweird.f32 %v929
  %vm937 = vmor %vm935, %vm936
  %v938 = vsel %vm937, %v929, %v934
  %v939 = vmul.f32 %v927, %v938
  %v941 = vperm.slane %v939, 0
  %v943 = vmul.f32 %v665, %v941
  %v944 = vmul.f32 %v666, %v941
  %v945 = vmul.f32 %v667, %v941
  %v946 = vmul.f32 %v668, %v941
  %v947 = vmul.f32 %v669, %v941
  %v948 = vmul.f32 %v670, %v941
  %v949 = vmul.f32 %v671, %v941
  %v950 = vmul.f32 %v672, %v941
  %v951 = vmul.f32 %v673, %v941
  %v952 = vmul.f32 %v674, %v941
  %v953 = vmul.f32 %v675, %v941
  %v954 = vmul.f32 %v676, %v941
  %v955 = vmul.f32 %v677, %v941
  %v956 = vmul.f32 %v678, %v941
  %v957 = vmul.f32 %v679, %v941
  %v958 = vmul.f32 %v680, %v941
  %v959 = vmul.f32 %v681, %v941
  %v960 = vmul.f32 %v682, %v941
  %v961 = vmul.f32 %v683, %v941
  %v962 = vmul.f32 %v684, %v941
  %v963 = vmul.f32 %v685, %v941
  %v964 = vmul.f32 %v686, %v941
  %v965 = vmul.f32 %v687, %v941
  %v966 = vmul.f32 %v688, %v941
  %v967 = vmul.f32 %v689, %v941
  %v968 = vmul.f32 %v690, %v941
  %v969 = vmul.f32 %v691, %v941
  %v970 = vmul.f32 %v692, %v941
  %v971 = vmul.f32 %v693, %v941
  %v972 = vmul.f32 %v694, %v941
  %v973 = vmul.f32 %v695, %v941
  %v974 = vmul.f32 %v696, %v941
  %v975 = vmul.f32 %v697, %v941
  %v976 = vmul.f32 %v698, %v941
  %v977 = vmul.f32 %v699, %v941
  %v978 = vmul.f32 %v700, %v941
  %v979 = vmul.f32 %v701, %v941
  %v980 = vmul.f32 %v702, %v941
  %v981 = vmul.f32 %v703, %v941
  %v982 = vmul.f32 %v704, %v941
  %v983 = vmul.f32 %v705, %v941
  %v984 = vmul.f32 %v706, %v941
  %v985 = vmul.f32 %v707, %v941
  %v986 = vmul.f32 %v708, %v941
  %v987 = vmul.f32 %v709, %v941
  %v988 = vmul.f32 %v710, %v941
  %v989 = vmul.f32 %v711, %v941
  %v990 = vmul.f32 %v712, %v941
  %v991 = vmul.f32 %v713, %v941
  %v992 = vmul.f32 %v714, %v941
  %v993 = vmul.f32 %v715, %v941
  %v994 = vmul.f32 %v716, %v941
  %v995 = vmul.f32 %v717, %v941
  %v996 = vmul.f32 %v718, %v941
  %v997 = vmul.f32 %v719, %v941
  %v998 = vmul.f32 %v720, %v941
  %v999 = vmul.f32 %v721, %v941
  %v1000 = vmul.f32 %v722, %v941
  %v1001 = vmul.f32 %v723, %v941
  %v1002 = vmul.f32 %v724, %v941
  %v1003 = vmul.f32 %v725, %v941
  %v1004 = vmul.f32 %v726, %v941
  %v1005 = vmul.f32 %v727, %v941
  %v1006 = vmul.f32 %v728, %v941
  %v1007 = vld [vmem:[%s3] sm:$0x1]
  %v1009 = vperm.slane %v1007, 0
  %v1011 = vadd.f32 %v943, %v1009
  %v1012 = vadd.f32 %v944, %v1009
  %v1013 = vadd.f32 %v945, %v1009
  %v1014 = vadd.f32 %v946, %v1009
  %v1015 = vadd.f32 %v947, %v1009
  %v1016 = vadd.f32 %v948, %v1009
  %v1017 = vadd.f32 %v949, %v1009
  %v1018 = vadd.f32 %v950, %v1009
  %v1019 = vadd.f32 %v951, %v1009
  %v1020 = vadd.f32 %v952, %v1009
  %v1021 = vadd.f32 %v953, %v1009
  %v1022 = vadd.f32 %v954, %v1009
  %v1023 = vadd.f32 %v955, %v1009
  %v1024 = vadd.f32 %v956, %v1009
  %v1025 = vadd.f32 %v957, %v1009
  %v1026 = vadd.f32 %v958, %v1009
  %v1027 = vadd.f32 %v959, %v1009
  %v1028 = vadd.f32 %v960, %v1009
  %v1029 = vadd.f32 %v961, %v1009
  %v1030 = vadd.f32 %v962, %v1009
  %v1031 = vadd.f32 %v963, %v1009
  %v1032 = vadd.f32 %v964, %v1009
  %v1033 = vadd.f32 %v965, %v1009
  %v1034 = vadd.f32 %v966, %v1009
  %v1035 = vadd.f32 %v967, %v1009
  %v1036 = vadd.f32 %v968, %v1009
  %v1037 = vadd.f32 %v969, %v1009
  %v1038 = vadd.f32 %v970, %v1009
  %v1039 = vadd.f32 %v971, %v1009
  %v1040 = vadd.f32 %v972, %v1009
  %v1041 = vadd.f32 %v973, %v1009
  %v1042 = vadd.f32 %v974, %v1009
  %v1043 = vadd.f32 %v975, %v1009
  %v1044 = vadd.f32 %v976, %v1009
  %v1045 = vadd.f32 %v977, %v1009
  %v1046 = vadd.f32 %v978, %v1009
  %v1047 = vadd.f32 %v979, %v1009
  %v1048 = vadd.f32 %v980, %v1009
  %v1049 = vadd.f32 %v981, %v1009
  %v1050 = vadd.f32 %v982, %v1009
  %v1051 = vadd.f32 %v983, %v1009
  %v1052 = vadd.f32 %v984, %v1009
  %v1053 = vadd.f32 %v985, %v1009
  %v1054 = vadd.f32 %v986, %v1009
  %v1055 = vadd.f32 %v987, %v1009
  %v1056 = vadd.f32 %v988, %v1009
  %v1057 = vadd.f32 %v989, %v1009
  %v1058 = vadd.f32 %v990, %v1009
  %v1059 = vadd.f32 %v991, %v1009
  %v1060 = vadd.f32 %v992, %v1009
  %v1061 = vadd.f32 %v993, %v1009
  %v1062 = vadd.f32 %v994, %v1009
  %v1063 = vadd.f32 %v995, %v1009
  %v1064 = vadd.f32 %v996, %v1009
  %v1065 = vadd.f32 %v997, %v1009
  %v1066 = vadd.f32 %v998, %v1009
  %v1067 = vadd.f32 %v999, %v1009
  %v1068 = vadd.f32 %v1000, %v1009
  %v1069 = vadd.f32 %v1001, %v1009
  %v1070 = vadd.f32 %v1002, %v1009
  %v1071 = vadd.f32 %v1003, %v1009
  %v1072 = vadd.f32 %v1004, %v1009
  %v1073 = vadd.f32 %v1005, %v1009
  %v1074 = vadd.f32 %v1006, %v1009
  %v1075 = vmax.f32 %v1011, 0.0
  %v1076 = vmax.f32 %v1012, 0.0
  %v1077 = vmax.f32 %v1013, 0.0
  %v1078 = vmax.f32 %v1014, 0.0
  %v1079 = vmax.f32 %v1015, 0.0
  %v1080 = vmax.f32 %v1016, 0.0
  %v1081 = vmax.f32 %v1017, 0.0
  %v1082 = vmax.f32 %v1018, 0.0
  %v1083 = vmax.f32 %v1019, 0.0
  %v1084 = vmax.f32 %v1020, 0.0
  %v1085 = vmax.f32 %v1021, 0.0
  %v1086 = vmax.f32 %v1022, 0.0
  %v1087 = vmax.f32 %v1023, 0.0
  %v1088 = vmax.f32 %v1024, 0.0
  %v1089 = vmax.f32 %v1025, 0.0
  %v1090 = vmax.f32 %v1026, 0.0
  %v1091 = vmax.f32 %v1027, 0.0
  %v1092 = vmax.f32 %v1028, 0.0
  %v1093 = vmax.f32 %v1029, 0.0
  %v1094 = vmax.f32 %v1030, 0.0
  %v1095 = vmax.f32 %v1031, 0.0
  %v1096 = vmax.f32 %v1032, 0.0
  %v1097 = vmax.f32 %v1033, 0.0
  %v1098 = vmax.f32 %v1034, 0.0
  %v1099 = vmax.f32 %v1035, 0.0
  %v1100 = vmax.f32 %v1036, 0.0
  %v1101 = vmax.f32 %v1037, 0.0
  %v1102 = vmax.f32 %v1038, 0.0
  %v1103 = vmax.f32 %v1039, 0.0
  %v1104 = vmax.f32 %v1040, 0.0
  %v1105 = vmax.f32 %v1041, 0.0
  %v1106 = vmax.f32 %v1042, 0.0
  %v1107 = vmax.f32 %v1043, 0.0
  %v1108 = vmax.f32 %v1044, 0.0
  %v1109 = vmax.f32 %v1045, 0.0
  %v1110 = vmax.f32 %v1046, 0.0
  %v1111 = vmax.f32 %v1047, 0.0
  %v1112 = vmax.f32 %v1048, 0.0
  %v1113 = vmax.f32 %v1049, 0.0
  %v1114 = vmax.f32 %v1050, 0.0
  %v1115 = vmax.f32 %v1051, 0.0
  %v1116 = vmax.f32 %v1052, 0.0
  %v1117 = vmax.f32 %v1053, 0.0
  %v1118 = vmax.f32 %v1054, 0.0
  %v1119 = vmax.f32 %v1055, 0.0
  %v1120 = vmax.f32 %v1056, 0.0
  %v1121 = vmax.f32 %v1057, 0.0
  %v1122 = vmax.f32 %v1058, 0.0
  %v1123 = vmax.f32 %v1059, 0.0
  %v1124 = vmax.f32 %v1060, 0.0
  %v1125 = vmax.f32 %v1061, 0.0
  %v1126 = vmax.f32 %v1062, 0.0
  %v1127 = vmax.f32 %v1063, 0.0
  %v1128 = vmax.f32 %v1064, 0.0
  %v1129 = vmax.f32 %v1065, 0.0
  %v1130 = vmax.f32 %v1066, 0.0
  %v1131 = vmax.f32 %v1067, 0.0
  %v1132 = vmax.f32 %v1068, 0.0
  %v1133 = vmax.f32 %v1069, 0.0
  %v1134 = vmax.f32 %v1070, 0.0
  %v1135 = vmax.f32 %v1071, 0.0
  %v1136 = vmax.f32 %v1072, 0.0
  %v1137 = vmax.f32 %v1073, 0.0
  %v1138 = vmax.f32 %v1074, 0.0
  %1139 = vst.msk [vmem:[%s4] sm:$0xff] %vm530, %v1075
  %1140 = vst.msk [vmem:[%s4 + $0x8] sm:$0xff] %vm530, %v1076
  %1141 = vst.msk [vmem:[%s4 + $0x10] sm:$0xff] %vm530, %v1077
  %1142 = vst.msk [vmem:[%s4 + $0x18] sm:$0xff] %vm530, %v1078
  %1143 = vst.msk [vmem:[%s4 + $0x20] sm:$0xff] %vm530, %v1079
  %1144 = vst.msk [vmem:[%s4 + $0x28] sm:$0xff] %vm530, %v1080
  %1145 = vst.msk [vmem:[%s4 + $0x30] sm:$0xff] %vm530, %v1081
  %1146 = vst.msk [vmem:[%s4 + $0x38] sm:$0xff] %vm530, %v1082
  %1147 = vst.msk [vmem:[%s4 + $0x40] sm:$0xff] %vm530, %v1083
  %1148 = vst.msk [vmem:[%s4 + $0x48] sm:$0xff] %vm530, %v1084
  %1149 = vst.msk [vmem:[%s4 + $0x50] sm:$0xff] %vm530, %v1085
  %1150 = vst.msk [vmem:[%s4 + $0x58] sm:$0xff] %vm530, %v1086
  %1151 = vst.msk [vmem:[%s4 + $0x60] sm:$0xff] %vm530, %v1087
  %1152 = vst.msk [vmem:[%s4 + $0x68] sm:$0xff] %vm530, %v1088
  %1153 = vst.msk [vmem:[%s4 + $0x70] sm:$0xff] %vm530, %v1089
  %1154 = vst.msk [vmem:[%s4 + $0x78] sm:$0xff] %vm530, %v1090
  %1155 = vst.msk [vmem:[%s4 + $0x80] sm:$0xff] %vm530, %v1091
  %1156 = vst.msk [vmem:[%s4 + $0x88] sm:$0xff] %vm530, %v1092
  %1157 = vst.msk [vmem:[%s4 + $0x90] sm:$0xff] %vm530, %v1093
  %1158 = vst.msk [vmem:[%s4 + $0x98] sm:$0xff] %vm530, %v1094
  %1159 = vst.msk [vmem:[%s4 + $0xa0] sm:$0xff] %vm530, %v1095
  %1160 = vst.msk [vmem:[%s4 + $0xa8] sm:$0xff] %vm530, %v1096
  %1161 = vst.msk [vmem:[%s4 + $0xb0] sm:$0xff] %vm530, %v1097
  %1162 = vst.msk [vmem:[%s4 + $0xb8] sm:$0xff] %vm530, %v1098
  %1163 = vst.msk [vmem:[%s4 + $0xc0] sm:$0xff] %vm530, %v1099
  %1164 = vst.msk [vmem:[%s4 + $0xc8] sm:$0xff] %vm530, %v1100
  %1165 = vst.msk [vmem:[%s4 + $0xd0] sm:$0xff] %vm530, %v1101
  %1166 = vst.msk [vmem:[%s4 + $0xd8] sm:$0xff] %vm530, %v1102
  %1167 = vst.msk [vmem:[%s4 + $0xe0] sm:$0xff] %vm530, %v1103
  %1168 = vst.msk [vmem:[%s4 + $0xe8] sm:$0xff] %vm530, %v1104
  %1169 = vst.msk [vmem:[%s4 + $0xf0] sm:$0xff] %vm530, %v1105
  %1170 = vst.msk [vmem:[%s4 + $0xf8] sm:$0xff] %vm530, %v1106
  %1171 = vst.msk [vmem:[%s4 + $0x100] sm:$0xff] %vm530, %v1107
  %1172 = vst.msk [vmem:[%s4 + $0x108] sm:$0xff] %vm530, %v1108
  %1173 = vst.msk [vmem:[%s4 + $0x110] sm:$0xff] %vm530, %v1109
  %1174 = vst.msk [vmem:[%s4 + $0x118] sm:$0xff] %vm530, %v1110
  %1175 = vst.msk [vmem:[%s4 + $0x120] sm:$0xff] %vm530, %v1111
  %1176 = vst.msk [vmem:[%s4 + $0x128] sm:$0xff] %vm530, %v1112
  %1177 = vst.msk [vmem:[%s4 + $0x130] sm:$0xff] %vm530, %v1113
  %1178 = vst.msk [vmem:[%s4 + $0x138] sm:$0xff] %vm530, %v1114
  %1179 = vst.msk [vmem:[%s4 + $0x140] sm:$0xff] %vm530, %v1115
  %1180 = vst.msk [vmem:[%s4 + $0x148] sm:$0xff] %vm530, %v1116
  %1181 = vst.msk [vmem:[%s4 + $0x150] sm:$0xff] %vm530, %v1117
  %1182 = vst.msk [vmem:[%s4 + $0x158] sm:$0xff] %vm530, %v1118
  %1183 = vst.msk [vmem:[%s4 + $0x160] sm:$0xff] %vm530, %v1119
  %1184 = vst.msk [vmem:[%s4 + $0x168] sm:$0xff] %vm530, %v1120
  %1185 = vst.msk [vmem:[%s4 + $0x170] sm:$0xff] %vm530, %v1121
  %1186 = vst.msk [vmem:[%s4 + $0x178] sm:$0xff] %vm530, %v1122
  %1187 = vst.msk [vmem:[%s4 + $0x180] sm:$0xff] %vm530, %v1123
  %1188 = vst.msk [vmem:[%s4 + $0x188] sm:$0xff] %vm530, %v1124
  %1189 = vst.msk [vmem:[%s4 + $0x190] sm:$0xff] %vm530, %v1125
  %1190 = vst.msk [vmem:[%s4 + $0x198] sm:$0xff] %vm530, %v1126
  %1191 = vst.msk [vmem:[%s4 + $0x1a0] sm:$0xff] %vm530, %v1127
  %1192 = vst.msk [vmem:[%s4 + $0x1a8] sm:$0xff] %vm530, %v1128
  %1193 = vst.msk [vmem:[%s4 + $0x1b0] sm:$0xff] %vm530, %v1129
  %1194 = vst.msk [vmem:[%s4 + $0x1b8] sm:$0xff] %vm530, %v1130
  %1195 = vst.msk [vmem:[%s4 + $0x1c0] sm:$0xff] %vm530, %v1131
  %1196 = vst.msk [vmem:[%s4 + $0x1c8] sm:$0xff] %vm530, %v1132
  %1197 = vst.msk [vmem:[%s4 + $0x1d0] sm:$0xff] %vm530, %v1133
  %1198 = vst.msk [vmem:[%s4 + $0x1d8] sm:$0xff] %vm530, %v1134
  %1199 = vst.msk [vmem:[%s4 + $0x1e0] sm:$0xff] %vm530, %v1135
  %1200 = vst.msk [vmem:[%s4 + $0x1e8] sm:$0xff] %vm530, %v1136
  %1201 = vst.msk [vmem:[%s4 + $0x1f0] sm:$0xff] %vm530, %v1137
  %1202 = vst.msk [vmem:[%s4 + $0x1f8] sm:$0xff] %vm530, %v1138
  // Predicated region
  $region18: #{_lambda_.13} parent=0 // pred_check
    _
  $region19: #{_lambda_.13} parent=0 // pred_check_branch
    %1204 = sbr.rel (0) target = $region21
  $region20: #{_lambda_.13} parent=0 // pred_region
    _
  $region21: #{_lambda_.13} parent=0 // pred_fallthru
    _
  // Predicated region
  $region22: #{_lambda_.13} parent=0 // pred_check
    _
  $region23: #{_lambda_.13} parent=0 // pred_check_branch
    %1206 = sbr.rel (0) target = $region25
  $region24: #{_lambda_.13} parent=0 // pred_region
    _
  $region25: #{_lambda_.13} parent=0 // pred_fallthru
    _

// kernel: _lambda_.15
$region0: #{_lambda_.15}
  #allocation0 [shape = 'u32[]', space=smem, size = 0x4, offset = 0x4, fixed_abs, tag = 'smem constant byte address 0x4 - core index']
  #allocation1 [shape = 'u32[72,128]{1,0:T(1,128)}', space=vmem, size = 0x9000, scoped, tag = 'internal scratch']
  %s0 = inlined_call_operand.vmem [shape: bf16[512,144], index: 0, kind: input, shape index: {}]
  %s1 = inlined_call_operand.vmem [shape: bf16[144,16], index: 1, kind: input, shape index: {}]
  %s2 = inlined_call_operand.vmem [shape: f32[1,16], index: 2, kind: input, shape index: {}]
  %s3 = inlined_call_operand.vmem [shape: f32[1,16], index: 3, kind: input, shape index: {}]
  %s4 = inlined_call_operand.vmem [shape: f32[512,16], index: 4, kind: input, shape index: {}]
  %s5 = inlined_call_operand.vmem [shape: f32[512,16], index: 5, kind: output, shape index: {}]
  %s6 = sld [smem:[#allocation0]]
  $region30: #{_lambda_.15} parent=0
    _
  %s8 = ssub.s32 1, %s6
  %s9 = scalar_select 0, %s8, %s6
  // Predicated region
  $region2: #{_lambda_.15} parent=0 // pred_check
    _
  $region3: #{_lambda_.15} parent=0 // pred_check_branch
    %11 = sbr.rel (0) target = $region5
  $region4: #{_lambda_.15} parent=0 // pred_region
    _
  $region5: #{_lambda_.15} parent=0 // pred_fallthru
    _
  // Predicated region
  $region6: #{_lambda_.15} parent=0 // pred_check
    _
  $region7: #{_lambda_.15} parent=0 // pred_check_branch
    %13 = sbr.rel (0) target = $region9
  $region8: #{_lambda_.15} parent=0 // pred_region
    _
  $region9: #{_lambda_.15} parent=0 // pred_fallthru
    _
  // Predicated region
  $region10: #{_lambda_.15} parent=0 // pred_check
    _
  $region11: #{_lambda_.15} parent=0 // pred_check_branch
    %15 = sbr.rel (0) target = $region13
  $region12: #{_lambda_.15} parent=0 // pred_region
    _
  $region13: #{_lambda_.15} parent=0 // pred_fallthru
    _
  // Predicated region
  $region14: #{_lambda_.15} parent=0 // pred_check
    _
  $region15: #{_lambda_.15} parent=0 // pred_check_branch
    %17 = sbr.rel (0) target = $region17
  $region16: #{_lambda_.15} parent=0 // pred_region
    _
  $region17: #{_lambda_.15} parent=0 // pred_fallthru
    _
  // Predicated region
  $region18: #{_lambda_.15} parent=0 // pred_check
    _
  $region19: #{_lambda_.15} parent=0 // pred_check_branch
    %19 = sbr.rel (0) target = $region21
  $region20: #{_lambda_.15} parent=0 // pred_region
    _
  $region21: #{_lambda_.15} parent=0 // pred_fallthru
    _
  %v21 = vld [vmem:[%s0] sm:$0xff]
  %v22 = vld [vmem:[%s0 + $0x8] sm:$0xff]
  %v23 = vld [vmem:[%s0 + $0x10] sm:$0xff]
  %v24 = vld [vmem:[%s0 + $0x18] sm:$0xff]
  %v25 = vld [vmem:[%s0 + $0x20] sm:$0xff]
  %v26 = vld [vmem:[%s0 + $0x28] sm:$0xff]
  %v27 = vld [vmem:[%s0 + $0x30] sm:$0xff]
  %v28 = vld [vmem:[%s0 + $0x38] sm:$0xff]
  %v29 = vld [vmem:[%s0 + $0x40] sm:$0xff]
  %v30 = vld [vmem:[%s0 + $0x48] sm:$0xff]
  %v31 = vld [vmem:[%s0 + $0x50] sm:$0xff]
  %v32 = vld [vmem:[%s0 + $0x58] sm:$0xff]
  %v33 = vld [vmem:[%s0 + $0x60] sm:$0xff]
  %v34 = vld [vmem:[%s0 + $0x68] sm:$0xff]
  %v35 = vld [vmem:[%s0 + $0x70] sm:$0xff]
  %v36 = vld [vmem:[%s0 + $0x78] sm:$0xff]
  %v37 = vld [vmem:[%s0 + $0x80] sm:$0xff]
  %v38 = vld [vmem:[%s0 + $0x88] sm:$0xff]
  %v39 = vld [vmem:[%s0 + $0x90] sm:$0xff]
  %v40 = vld [vmem:[%s0 + $0x98] sm:$0xff]
  %v41 = vld [vmem:[%s0 + $0xa0] sm:$0xff]
  %v42 = vld [vmem:[%s0 + $0xa8] sm:$0xff]
  %v43 = vld [vmem:[%s0 + $0xb0] sm:$0xff]
  %v44 = vld [vmem:[%s0 + $0xb8] sm:$0xff]
  %v45 = vld [vmem:[%s0 + $0xc0] sm:$0xff]
  %v46 = vld [vmem:[%s0 + $0xc8] sm:$0xff]
  %v47 = vld [vmem:[%s0 + $0xd0] sm:$0xff]
  %v48 = vld [vmem:[%s0 + $0xd8] sm:$0xff]
  %v49 = vld [vmem:[%s0 + $0xe0] sm:$0xff]
  %v50 = vld [vmem:[%s0 + $0xe8] sm:$0xff]
  %v51 = vld [vmem:[%s0 + $0xf0] sm:$0xff]
  %v52 = vld [vmem:[%s0 + $0xf8] sm:$0xff]
  %v53 = vld [vmem:[%s0 + $0x100] sm:$0xff]
  %v54 = vld [vmem:[%s0 + $0x108] sm:$0xff]
  %v55 = vld [vmem:[%s0 + $0x110] sm:$0xff]
  %v56 = vld [vmem:[%s0 + $0x118] sm:$0xff]
  %v57 = vld [vmem:[%s0 + $0x120] sm:$0xff]
  %v58 = vld [vmem:[%s0 + $0x128] sm:$0xff]
  %v59 = vld [vmem:[%s0 + $0x130] sm:$0xff]
  %v60 = vld [vmem:[%s0 + $0x138] sm:$0xff]
  %v61 = vld [vmem:[%s0 + $0x140] sm:$0xff]
  %v62 = vld [vmem:[%s0 + $0x148] sm:$0xff]
  %v63 = vld [vmem:[%s0 + $0x150] sm:$0xff]
  %v64 = vld [vmem:[%s0 + $0x158] sm:$0xff]
  %v65 = vld [vmem:[%s0 + $0x160] sm:$0xff]
  %v66 = vld [vmem:[%s0 + $0x168] sm:$0xff]
  %v67 = vld [vmem:[%s0 + $0x170] sm:$0xff]
  %v68 = vld [vmem:[%s0 + $0x178] sm:$0xff]
  %v69 = vld [vmem:[%s0 + $0x180] sm:$0xff]
  %v70 = vld [vmem:[%s0 + $0x188] sm:$0xff]
  %v71 = vld [vmem:[%s0 + $0x190] sm:$0xff]
  %v72 = vld [vmem:[%s0 + $0x198] sm:$0xff]
  %v73 = vld [vmem:[%s0 + $0x1a0] sm:$0xff]
  %v74 = vld [vmem:[%s0 + $0x1a8] sm:$0xff]
  %v75 = vld [vmem:[%s0 + $0x1b0] sm:$0xff]
  %v76 = vld [vmem:[%s0 + $0x1b8] sm:$0xff]
  %v77 = vld [vmem:[%s0 + $0x1c0] sm:$0xff]
  %v78 = vld [vmem:[%s0 + $0x1c8] sm:$0xff]
  %v79 = vld [vmem:[%s0 + $0x1d0] sm:$0xff]
  %v80 = vld [vmem:[%s0 + $0x1d8] sm:$0xff]
  %v81 = vld [vmem:[%s0 + $0x1e0] sm:$0xff]
  %v82 = vld [vmem:[%s0 + $0x1e8] sm:$0xff]
  %v83 = vld [vmem:[%s0 + $0x1f0] sm:$0xff]
  %v84 = vld [vmem:[%s0 + $0x1f8] sm:$0xff]
  %v85 = vld [vmem:[%s1] sm:$0xf]
  %v86 = vld [vmem:[%s1 + $0x4] sm:$0xf]
  %v87 = vld [vmem:[%s1 + $0x8] sm:$0xf]
  %v88 = vld [vmem:[%s1 + $0xc] sm:$0xf]
  %v89 = vld [vmem:[%s1 + $0x10] sm:$0xf]
  %v90 = vld [vmem:[%s1 + $0x14] sm:$0xf]
  %v91 = vld [vmem:[%s1 + $0x18] sm:$0xf]
  %v92 = vld [vmem:[%s1 + $0x1c] sm:$0xf]
  %v93 = vld [vmem:[%s1 + $0x20] sm:$0xf]
  %v94 = vld [vmem:[%s1 + $0x24] sm:$0xf]
  %v95 = vld [vmem:[%s1 + $0x28] sm:$0xf]
  %v96 = vld [vmem:[%s1 + $0x2c] sm:$0xf]
  %v97 = vld [vmem:[%s1 + $0x30] sm:$0xf]
  %v98 = vld [vmem:[%s1 + $0x34] sm:$0xf]
  %v99 = vld [vmem:[%s1 + $0x38] sm:$0xf]
  %v100 = vld [vmem:[%s1 + $0x3c] sm:$0xf]
  %v101 = vld [vmem:[%s1 + $0x40] sm:$0xf]
  %v102 = vld [vmem:[%s1 + $0x44] sm:$0xf]
  %v167 = vunpack.c.l.b16 %v21
  %v168 = vunpack.c.h.b16 %v21
  %v169 = vunpack.c.l.b16 %v22
  %v170 = vunpack.c.h.b16 %v22
  %v171 = vunpack.c.l.b16 %v23
  %v172 = vunpack.c.h.b16 %v23
  %v173 = vunpack.c.l.b16 %v24
  %v174 = vunpack.c.h.b16 %v24
  %v175 = vunpack.c.l.b16 %v25
  %v176 = vunpack.c.h.b16 %v25
  %v177 = vunpack.c.l.b16 %v26
  %v178 = vunpack.c.h.b16 %v26
  %v179 = vunpack.c.l.b16 %v27
  %v180 = vunpack.c.h.b16 %v27
  %v181 = vunpack.c.l.b16 %v28
  %v182 = vunpack.c.h.b16 %v28
  %v183 = vunpack.c.l.b16 %v29
  %v184 = vunpack.c.h.b16 %v29
  %v185 = vunpack.c.l.b16 %v30
  %v186 = vunpack.c.h.b16 %v30
  %v187 = vunpack.c.l.b16 %v31
  %v188 = vunpack.c.h.b16 %v31
  %v189 = vunpack.c.l.b16 %v32
  %v190 = vunpack.c.h.b16 %v32
  %v191 = vunpack.c.l.b16 %v33
  %v192 = vunpack.c.h.b16 %v33
  %v193 = vunpack.c.l.b16 %v34
  %v194 = vunpack.c.h.b16 %v34
  %v195 = vunpack.c.l.b16 %v35
  %v196 = vunpack.c.h.b16 %v35
  %v197 = vunpack.c.l.b16 %v36
  %v198 = vunpack.c.h.b16 %v36
  %v199 = vunpack.c.l.b16 %v37
  %v200 = vunpack.c.h.b16 %v37
  %v201 = vunpack.c.l.b16 %v38
  %v202 = vunpack.c.h.b16 %v38
  %v203 = vunpack.c.l.b16 %v39
  %v204 = vunpack.c.h.b16 %v39
  %v205 = vunpack.c.l.b16 %v40
  %v206 = vunpack.c.h.b16 %v40
  %v207 = vunpack.c.l.b16 %v41
  %v208 = vunpack.c.h.b16 %v41
  %v209 = vunpack.c.l.b16 %v42
  %v210 = vunpack.c.h.b16 %v42
  %v211 = vunpack.c.l.b16 %v43
  %v212 = vunpack.c.h.b16 %v43
  %v213 = vunpack.c.l.b16 %v44
  %v214 = vunpack.c.h.b16 %v44
  %v215 = vunpack.c.l.b16 %v45
  %v216 = vunpack.c.h.b16 %v45
  %v217 = vunpack.c.l.b16 %v46
  %v218 = vunpack.c.h.b16 %v46
  %v219 = vunpack.c.l.b16 %v47
  %v220 = vunpack.c.h.b16 %v47
  %v221 = vunpack.c.l.b16 %v48
  %v222 = vunpack.c.h.b16 %v48
  %v223 = vunpack.c.l.b16 %v49
  %v224 = vunpack.c.h.b16 %v49
  %v225 = vunpack.c.l.b16 %v50
  %v226 = vunpack.c.h.b16 %v50
  %v227 = vunpack.c.l.b16 %v51
  %v228 = vunpack.c.h.b16 %v51
  %v229 = vunpack.c.l.b16 %v52
  %v230 = vunpack.c.h.b16 %v52
  %v231 = vunpack.c.l.b16 %v53
  %v232 = vunpack.c.h.b16 %v53
  %v233 = vunpack.c.l.b16 %v54
  %v234 = vunpack.c.h.b16 %v54
  %v235 = vunpack.c.l.b16 %v55
  %v236 = vunpack.c.h.b16 %v55
  %v237 = vunpack.c.l.b16 %v56
  %v238 = vunpack.c.h.b16 %v56
  %v239 = vunpack.c.l.b16 %v57
  %v240 = vunpack.c.h.b16 %v57
  %v241 = vunpack.c.l.b16 %v58
  %v242 = vunpack.c.h.b16 %v58
  %v243 = vunpack.c.l.b16 %v59
  %v244 = vunpack.c.h.b16 %v59
  %v245 = vunpack.c.l.b16 %v60
  %v246 = vunpack.c.h.b16 %v60
  %v247 = vunpack.c.l.b16 %v61
  %v248 = vunpack.c.h.b16 %v61
  %v249 = vunpack.c.l.b16 %v62
  %v250 = vunpack.c.h.b16 %v62
  %v251 = vunpack.c.l.b16 %v63
  %v252 = vunpack.c.h.b16 %v63
  %v253 = vunpack.c.l.b16 %v64
  %v254 = vunpack.c.h.b16 %v64
  %v255 = vunpack.c.l.b16 %v65
  %v256 = vunpack.c.h.b16 %v65
  %v257 = vunpack.c.l.b16 %v66
  %v258 = vunpack.c.h.b16 %v66
  %v259 = vunpack.c.l.b16 %v67
  %v260 = vunpack.c.h.b16 %v67
  %v261 = vunpack.c.l.b16 %v68
  %v262 = vunpack.c.h.b16 %v68
  %v263 = vunpack.c.l.b16 %v69
  %v264 = vunpack.c.h.b16 %v69
  %v265 = vunpack.c.l.b16 %v70
  %v266 = vunpack.c.h.b16 %v70
  %v267 = vunpack.c.l.b16 %v71
  %v268 = vunpack.c.h.b16 %v71
  %v269 = vunpack.c.l.b16 %v72
  %v270 = vunpack.c.h.b16 %v72
  %v271 = vunpack.c.l.b16 %v73
  %v272 = vunpack.c.h.b16 %v73
  %v273 = vunpack.c.l.b16 %v74
  %v274 = vunpack.c.h.b16 %v74
  %v275 = vunpack.c.l.b16 %v75
  %v276 = vunpack.c.h.b16 %v75
  %v277 = vunpack.c.l.b16 %v76
  %v278 = vunpack.c.h.b16 %v76
  %v279 = vunpack.c.l.b16 %v77
  %v280 = vunpack.c.h.b16 %v77
  %v281 = vunpack.c.l.b16 %v78
  %v282 = vunpack.c.h.b16 %v78
  %v283 = vunpack.c.l.b16 %v79
  %v284 = vunpack.c.h.b16 %v79
  %v285 = vunpack.c.l.b16 %v80
  %v286 = vunpack.c.h.b16 %v80
  %v287 = vunpack.c.l.b16 %v81
  %v288 = vunpack.c.h.b16 %v81
  %v289 = vunpack.c.l.b16 %v82
  %v290 = vunpack.c.h.b16 %v82
  %v291 = vunpack.c.l.b16 %v83
  %v292 = vunpack.c.h.b16 %v83
  %v293 = vunpack.c.l.b16 %v84
  %v294 = vunpack.c.h.b16 %v84
  %v295 = vpack.c.b16 %v169, %v167
  %v296 = vpack.c.b16 %v170, %v168
  %v297 = vpack.c.b16 %v173, %v171
  %v298 = vpack.c.b16 %v174, %v172
  %v299 = vpack.c.b16 %v177, %v175
  %v300 = vpack.c.b16 %v178, %v176
  %v301 = vpack.c.b16 %v181, %v179
  %v302 = vpack.c.b16 %v182, %v180
  %v303 = vpack.c.b16 %v185, %v183
  %v304 = vpack.c.b16 %v186, %v184
  %v305 = vpack.c.b16 %v189, %v187
  %v306 = vpack.c.b16 %v190, %v188
  %v307 = vpack.c.b16 %v193, %v191
  %v308 = vpack.c.b16 %v194, %v192
  %v309 = vpack.c.b16 %v197, %v195
  %v310 = vpack.c.b16 %v198, %v196
  %v311 = vpack.c.b16 %v201, %v199
  %v312 = vpack.c.b16 %v202, %v200
  %v313 = vpack.c.b16 %v205, %v203
  %v314 = vpack.c.b16 %v206, %v204
  %v315 = vpack.c.b16 %v209, %v207
  %v316 = vpack.c.b16 %v210, %v208
  %v317 = vpack.c.b16 %v213, %v211
  %v318 = vpack.c.b16 %v214, %v212
  %v319 = vpack.c.b16 %v217, %v215
  %v320 = vpack.c.b16 %v218, %v216
  %v321 = vpack.c.b16 %v221, %v219
  %v322 = vpack.c.b16 %v222, %v220
  %v323 = vpack.c.b16 %v225, %v223
  %v324 = vpack.c.b16 %v226, %v224
  %v325 = vpack.c.b16 %v229, %v227
  %v326 = vpack.c.b16 %v230, %v228
  %v327 = vpack.c.b16 %v233, %v231
  %v328 = vpack.c.b16 %v234, %v232
  %v329 = vpack.c.b16 %v237, %v235
  %v330 = vpack.c.b16 %v238, %v236
  %v331 = vpack.c.b16 %v241, %v239
  %v332 = vpack.c.b16 %v242, %v240
  %v333 = vpack.c.b16 %v245, %v243
  %v334 = vpack.c.b16 %v246, %v244
  %v335 = vpack.c.b16 %v249, %v247
  %v336 = vpack.c.b16 %v250, %v248
  %v337 = vpack.c.b16 %v253, %v251
  %v338 = vpack.c.b16 %v254, %v252
  %v339 = vpack.c.b16 %v257, %v255
  %v340 = vpack.c.b16 %v258, %v256
  %v341 = vpack.c.b16 %v261, %v259
  %v342 = vpack.c.b16 %v262, %v260
  %v343 = vpack.c.b16 %v265, %v263
  %v344 = vpack.c.b16 %v266, %v264
  %v345 = vpack.c.b16 %v269, %v267
  %v346 = vpack.c.b16 %v270, %v268
  %v347 = vpack.c.b16 %v273, %v271
  %v348 = vpack.c.b16 %v274, %v272
  %v349 = vpack.c.b16 %v277, %v275
  %v350 = vpack.c.b16 %v278, %v276
  %v351 = vpack.c.b16 %v281, %v279
  %v352 = vpack.c.b16 %v282, %v280
  %v353 = vpack.c.b16 %v285, %v283
  %v354 = vpack.c.b16 %v286, %v284
  %v355 = vpack.c.b16 %v289, %v287
  %v356 = vpack.c.b16 %v290, %v288
  %v357 = vpack.c.b16 %v293, %v291
  %v358 = vpack.c.b16 %v294, %v292
  %v409 = vunpack.c.l.b16 %v85
  %v410 = vunpack.c.l.b16 %v86
  %v411 = vunpack.c.l.b16 %v87
  %v412 = vunpack.c.l.b16 %v88
  %v413 = vunpack.c.l.b16 %v89
  %v414 = vunpack.c.l.b16 %v90
  %v415 = vunpack.c.l.b16 %v91
  %v416 = vunpack.c.l.b16 %v92
  %v417 = vunpack.c.l.b16 %v93
  %v418 = vunpack.c.l.b16 %v94
  %v419 = vunpack.c.l.b16 %v95
  %v420 = vunpack.c.l.b16 %v96
  %v421 = vunpack.c.l.b16 %v97
  %v422 = vunpack.c.l.b16 %v98
  %v423 = vunpack.c.l.b16 %v99
  %v424 = vunpack.c.l.b16 %v100
  %v425 = vunpack.c.l.b16 %v101
  %v426 = vunpack.c.l.b16 %v102
  %v427 = vpack.c.b16 %v410, %v409
  %v428 = vpack.c.b16 %v412, %v411
  %v429 = vpack.c.b16 %v414, %v413
  %v430 = vpack.c.b16 %v416, %v415
  %v431 = vpack.c.b16 %v418, %v417
  %v432 = vpack.c.b16 %v420, %v419
  %v433 = vpack.c.b16 %v422, %v421
  %v434 = vpack.c.b16 %v424, %v423
  %v435 = vpack.c.b16 %v426, %v425
  %vm445 = vcmask 130048
  %v447 = vsel %vm445, %v296, 0
  %v450 = vsel %vm445, %v298, 0
  %v453 = vsel %vm445, %v300, 0
  %v456 = vsel %vm445, %v302, 0
  %v459 = vsel %vm445, %v304, 0
  %v462 = vsel %vm445, %v306, 0
  %v465 = vsel %vm445, %v308, 0
  %v468 = vsel %vm445, %v310, 0
  %v471 = vsel %vm445, %v312, 0
  %v474 = vsel %vm445, %v314, 0
  %v477 = vsel %vm445, %v316, 0
  %v480 = vsel %vm445, %v318, 0
  %v483 = vsel %vm445, %v320, 0
  %v486 = vsel %vm445, %v322, 0
  %v489 = vsel %vm445, %v324, 0
  %v492 = vsel %vm445, %v326, 0
  %v495 = vsel %vm445, %v328, 0
  %v498 = vsel %vm445, %v330, 0
  %v501 = vsel %vm445, %v332, 0
  %v504 = vsel %vm445, %v334, 0
  %v507 = vsel %vm445, %v336, 0
  %v510 = vsel %vm445, %v338, 0
  %v513 = vsel %vm445, %v340, 0
  %v516 = vsel %vm445, %v342, 0
  %v519 = vsel %vm445, %v344, 0
  %v522 = vsel %vm445, %v346, 0
  %v525 = vsel %vm445, %v348, 0
  %v528 = vsel %vm445, %v350, 0
  %v531 = vsel %vm445, %v352, 0
  %v534 = vsel %vm445, %v354, 0
  %v537 = vsel %vm445, %v356, 0
  %v540 = vsel %vm445, %v358, 0
  %542 = vmatpush.bf16.msra.mxu0 %v434
  %543 = vmatpush.bf16.msra.mxu0 %v433
  %544 = vmatpush.bf16.msra.mxu0 %v432
  %545 = vmatpush.bf16.msra.mxu0 %v431
  %546 = vmatpush.bf16.msra.mxu0 %v430
  %547 = vmatpush.bf16.msra.mxu0 %v429
  %548 = vmatpush.bf16.msra.mxu0 %v428
  %549 = vmatpush.bf16.msra.mxu0 %v427
  %550 = vmatmul.bf16.gmra.mxu0 %v295
  %v551 = vpop.f32.mrf.mxu0
  %v552 = vadd.f32 0.0, %v551
  %v553 = vpop.f32.mrf.mxu0
  %v554 = vadd.f32 0.0, %v553
  %555 = vmatmul.bf16.gmra.mxu0 %v297
  %v556 = vpop.f32.mrf.mxu0
  %v557 = vadd.f32 0.0, %v556
  %v558 = vpop.f32.mrf.mxu0
  %v559 = vadd.f32 0.0, %v558
  %560 = vmatmul.bf16.gmra.mxu0 %v299
  %v561 = vpop.f32.mrf.mxu0
  %v562 = vadd.f32 0.0, %v561
  %v563 = vpop.f32.mrf.mxu0
  %v564 = vadd.f32 0.0, %v563
  %565 = vmatmul.bf16.gmra.mxu0 %v301
  %v566 = vpop.f32.mrf.mxu0
  %v567 = vadd.f32 0.0, %v566
  %v568 = vpop.f32.mrf.mxu0
  %v569 = vadd.f32 0.0, %v568
  %570 = vmatmul.bf16.gmra.mxu0 %v303
  %v571 = vpop.f32.mrf.mxu0
  %v572 = vadd.f32 0.0, %v571
  %v573 = vpop.f32.mrf.mxu0
  %v574 = vadd.f32 0.0, %v573
  %575 = vmatmul.bf16.gmra.mxu0 %v305
  %v576 = vpop.f32.mrf.mxu0
  %v577 = vadd.f32 0.0, %v576
  %v578 = vpop.f32.mrf.mxu0
  %v579 = vadd.f32 0.0, %v578
  %580 = vmatmul.bf16.gmra.mxu0 %v307
  %v581 = vpop.f32.mrf.mxu0
  %v582 = vadd.f32 0.0, %v581
  %v583 = vpop.f32.mrf.mxu0
  %v584 = vadd.f32 0.0, %v583
  %585 = vmatmul.bf16.gmra.mxu0 %v309
  %v586 = vpop.f32.mrf.mxu0
  %v587 = vadd.f32 0.0, %v586
  %v588 = vpop.f32.mrf.mxu0
  %v589 = vadd.f32 0.0, %v588
  %590 = vmatmul.bf16.gmra.mxu0 %v311
  %v591 = vpop.f32.mrf.mxu0
  %v592 = vadd.f32 0.0, %v591
  %v593 = vpop.f32.mrf.mxu0
  %v594 = vadd.f32 0.0, %v593
  %595 = vmatmul.bf16.gmra.mxu0 %v313
  %v596 = vpop.f32.mrf.mxu0
  %v597 = vadd.f32 0.0, %v596
  %v598 = vpop.f32.mrf.mxu0
  %v599 = vadd.f32 0.0, %v598
  %600 = vmatmul.bf16.gmra.mxu0 %v315
  %v601 = vpop.f32.mrf.mxu0
  %v602 = vadd.f32 0.0, %v601
  %v603 = vpop.f32.mrf.mxu0
  %v604 = vadd.f32 0.0, %v603
  %605 = vmatmul.bf16.gmra.mxu0 %v317
  %v606 = vpop.f32.mrf.mxu0
  %v607 = vadd.f32 0.0, %v606
  %v608 = vpop.f32.mrf.mxu0
  %v609 = vadd.f32 0.0, %v608
  %610 = vmatmul.bf16.gmra.mxu0 %v319
  %v611 = vpop.f32.mrf.mxu0
  %v612 = vadd.f32 0.0, %v611
  %v613 = vpop.f32.mrf.mxu0
  %v614 = vadd.f32 0.0, %v613
  %615 = vmatmul.bf16.gmra.mxu0 %v321
  %v616 = vpop.f32.mrf.mxu0
  %v617 = vadd.f32 0.0, %v616
  %v618 = vpop.f32.mrf.mxu0
  %v619 = vadd.f32 0.0, %v618
  %620 = vmatmul.bf16.gmra.mxu0 %v323
  %v621 = vpop.f32.mrf.mxu0
  %v622 = vadd.f32 0.0, %v621
  %v623 = vpop.f32.mrf.mxu0
  %v624 = vadd.f32 0.0, %v623
  %625 = vmatmul.bf16.gmra.mxu0 %v325
  %v626 = vpop.f32.mrf.mxu0
  %v627 = vadd.f32 0.0, %v626
  %v628 = vpop.f32.mrf.mxu0
  %v629 = vadd.f32 0.0, %v628
  %630 = vmatmul.bf16.gmra.mxu0 %v327
  %v631 = vpop.f32.mrf.mxu0
  %v632 = vadd.f32 0.0, %v631
  %v633 = vpop.f32.mrf.mxu0
  %v634 = vadd.f32 0.0, %v633
  %635 = vmatmul.bf16.gmra.mxu0 %v329
  %v636 = vpop.f32.mrf.mxu0
  %v637 = vadd.f32 0.0, %v636
  %v638 = vpop.f32.mrf.mxu0
  %v639 = vadd.f32 0.0, %v638
  %640 = vmatmul.bf16.gmra.mxu0 %v331
  %v641 = vpop.f32.mrf.mxu0
  %v642 = vadd.f32 0.0, %v641
  %v643 = vpop.f32.mrf.mxu0
  %v644 = vadd.f32 0.0, %v643
  %645 = vmatmul.bf16.gmra.mxu0 %v333
  %v646 = vpop.f32.mrf.mxu0
  %v647 = vadd.f32 0.0, %v646
  %v648 = vpop.f32.mrf.mxu0
  %v649 = vadd.f32 0.0, %v648
  %650 = vmatmul.bf16.gmra.mxu0 %v335
  %v651 = vpop.f32.mrf.mxu0
  %v652 = vadd.f32 0.0, %v651
  %v653 = vpop.f32.mrf.mxu0
  %v654 = vadd.f32 0.0, %v653
  %655 = vmatmul.bf16.gmra.mxu0 %v337
  %v656 = vpop.f32.mrf.mxu0
  %v657 = vadd.f32 0.0, %v656
  %v658 = vpop.f32.mrf.mxu0
  %v659 = vadd.f32 0.0, %v658
  %660 = vmatmul.bf16.gmra.mxu0 %v339
  %v661 = vpop.f32.mrf.mxu0
  %v662 = vadd.f32 0.0, %v661
  %v663 = vpop.f32.mrf.mxu0
  %v664 = vadd.f32 0.0, %v663
  %665 = vmatmul.bf16.gmra.mxu0 %v341
  %v666 = vpop.f32.mrf.mxu0
  %v667 = vadd.f32 0.0, %v666
  %v668 = vpop.f32.mrf.mxu0
  %v669 = vadd.f32 0.0, %v668
  %670 = vmatmul.bf16.gmra.mxu0 %v343
  %v671 = vpop.f32.mrf.mxu0
  %v672 = vadd.f32 0.0, %v671
  %v673 = vpop.f32.mrf.mxu0
  %v674 = vadd.f32 0.0, %v673
  %675 = vmatmul.bf16.gmra.mxu0 %v345
  %v676 = vpop.f32.mrf.mxu0
  %v677 = vadd.f32 0.0, %v676
  %v678 = vpop.f32.mrf.mxu0
  %v679 = vadd.f32 0.0, %v678
  %680 = vmatmul.bf16.gmra.mxu0 %v347
  %v681 = vpop.f32.mrf.mxu0
  %v682 = vadd.f32 0.0, %v681
  %v683 = vpop.f32.mrf.mxu0
  %v684 = vadd.f32 0.0, %v683
  %685 = vmatmul.bf16.gmra.mxu0 %v349
  %v686 = vpop.f32.mrf.mxu0
  %v687 = vadd.f32 0.0, %v686
  %v688 = vpop.f32.mrf.mxu0
  %v689 = vadd.f32 0.0, %v688
  %690 = vmatmul.bf16.gmra.mxu0 %v351
  %v691 = vpop.f32.mrf.mxu0
  %v692 = vadd.f32 0.0, %v691
  %v693 = vpop.f32.mrf.mxu0
  %v694 = vadd.f32 0.0, %v693
  %695 = vmatmul.bf16.gmra.mxu0 %v353
  %v696 = vpop.f32.mrf.mxu0
  %v697 = vadd.f32 0.0, %v696
  %v698 = vpop.f32.mrf.mxu0
  %v699 = vadd.f32 0.0, %v698
  %700 = vmatmul.bf16.gmra.mxu0 %v355
  %v701 = vpop.f32.mrf.mxu0
  %v702 = vadd.f32 0.0, %v701
  %v703 = vpop.f32.mrf.mxu0
  %v704 = vadd.f32 0.0, %v703
  %705 = vmatmul.bf16.gmra.mxu0 %v357
  %v706 = vpop.f32.mrf.mxu0
  %v707 = vadd.f32 0.0, %v706
  %v708 = vpop.f32.mrf.mxu0
  %v709 = vadd.f32 0.0, %v708
  %710 = vdwg.mxu0
  %711 = vmatpush.bf16.msra.mxu0 0
  %712 = vmatpush.bf16.msra.mxu0 0
  %713 = vmatpush.bf16.msra.mxu0 0
  %714 = vmatpush.bf16.msra.mxu0 0
  %715 = vmatpush.bf16.msra.mxu0 0
  %716 = vmatpush.bf16.msra.mxu0 0
  %717 = vmatpush.bf16.msra.mxu0 0
  %718 = vmatpush.bf16.msra.mxu0 %v435
  %719 = vmatmul.bf16.gmra.mxu0 %v447
  %v720 = vpop.f32.mrf.mxu0
  %v721 = vadd.f32 %v552, %v720
  %v722 = vpop.f32.mrf.mxu0
  %v723 = vadd.f32 %v554, %v722
  %724 = vmatmul.bf16.gmra.mxu0 %v450
  %v725 = vpop.f32.mrf.mxu0
  %v726 = vadd.f32 %v557, %v725
  %v727 = vpop.f32.mrf.mxu0
  %v728 = vadd.f32 %v559, %v727
  %729 = vmatmul.bf16.gmra.mxu0 %v453
  %v730 = vpop.f32.mrf.mxu0
  %v731 = vadd.f32 %v562, %v730
  %v732 = vpop.f32.mrf.mxu0
  %v733 = vadd.f32 %v564, %v732
  %734 = vmatmul.bf16.gmra.mxu0 %v456
  %v735 = vpop.f32.mrf.mxu0
  %v736 = vadd.f32 %v567, %v735
  %v737 = vpop.f32.mrf.mxu0
  %v738 = vadd.f32 %v569, %v737
  %739 = vmatmul.bf16.gmra.mxu0 %v459
  %v740 = vpop.f32.mrf.mxu0
  %v741 = vadd.f32 %v572, %v740
  %v742 = vpop.f32.mrf.mxu0
  %v743 = vadd.f32 %v574, %v742
  %744 = vmatmul.bf16.gmra.mxu0 %v462
  %v745 = vpop.f32.mrf.mxu0
  %v746 = vadd.f32 %v577, %v745
  %v747 = vpop.f32.mrf.mxu0
  %v748 = vadd.f32 %v579, %v747
  %749 = vmatmul.bf16.gmra.mxu0 %v465
  %v750 = vpop.f32.mrf.mxu0
  %v751 = vadd.f32 %v582, %v750
  %v752 = vpop.f32.mrf.mxu0
  %v753 = vadd.f32 %v584, %v752
  %754 = vmatmul.bf16.gmra.mxu0 %v468
  %v755 = vpop.f32.mrf.mxu0
  %v756 = vadd.f32 %v587, %v755
  %v757 = vpop.f32.mrf.mxu0
  %v758 = vadd.f32 %v589, %v757
  %759 = vmatmul.bf16.gmra.mxu0 %v471
  %v760 = vpop.f32.mrf.mxu0
  %v761 = vadd.f32 %v592, %v760
  %v762 = vpop.f32.mrf.mxu0
  %v763 = vadd.f32 %v594, %v762
  %764 = vmatmul.bf16.gmra.mxu0 %v474
  %v765 = vpop.f32.mrf.mxu0
  %v766 = vadd.f32 %v597, %v765
  %v767 = vpop.f32.mrf.mxu0
  %v768 = vadd.f32 %v599, %v767
  %769 = vmatmul.bf16.gmra.mxu0 %v477
  %v770 = vpop.f32.mrf.mxu0
  %v771 = vadd.f32 %v602, %v770
  %v772 = vpop.f32.mrf.mxu0
  %v773 = vadd.f32 %v604, %v772
  %774 = vmatmul.bf16.gmra.mxu0 %v480
  %v775 = vpop.f32.mrf.mxu0
  %v776 = vadd.f32 %v607, %v775
  %v777 = vpop.f32.mrf.mxu0
  %v778 = vadd.f32 %v609, %v777
  %779 = vmatmul.bf16.gmra.mxu0 %v483
  %v780 = vpop.f32.mrf.mxu0
  %v781 = vadd.f32 %v612, %v780
  %v782 = vpop.f32.mrf.mxu0
  %v783 = vadd.f32 %v614, %v782
  %784 = vmatmul.bf16.gmra.mxu0 %v486
  %v785 = vpop.f32.mrf.mxu0
  %v786 = vadd.f32 %v617, %v785
  %v787 = vpop.f32.mrf.mxu0
  %v788 = vadd.f32 %v619, %v787
  %789 = vmatmul.bf16.gmra.mxu0 %v489
  %v790 = vpop.f32.mrf.mxu0
  %v791 = vadd.f32 %v622, %v790
  %v792 = vpop.f32.mrf.mxu0
  %v793 = vadd.f32 %v624, %v792
  %794 = vmatmul.bf16.gmra.mxu0 %v492
  %v795 = vpop.f32.mrf.mxu0
  %v796 = vadd.f32 %v627, %v795
  %v797 = vpop.f32.mrf.mxu0
  %v798 = vadd.f32 %v629, %v797
  %799 = vmatmul.bf16.gmra.mxu0 %v495
  %v800 = vpop.f32.mrf.mxu0
  %v801 = vadd.f32 %v632, %v800
  %v802 = vpop.f32.mrf.mxu0
  %v803 = vadd.f32 %v634, %v802
  %804 = vmatmul.bf16.gmra.mxu0 %v498
  %v805 = vpop.f32.mrf.mxu0
  %v806 = vadd.f32 %v637, %v805
  %v807 = vpop.f32.mrf.mxu0
  %v808 = vadd.f32 %v639, %v807
  %809 = vmatmul.bf16.gmra.mxu0 %v501
  %v810 = vpop.f32.mrf.mxu0
  %v811 = vadd.f32 %v642, %v810
  %v812 = vpop.f32.mrf.mxu0
  %v813 = vadd.f32 %v644, %v812
  %814 = vmatmul.bf16.gmra.mxu0 %v504
  %v815 = vpop.f32.mrf.mxu0
  %v816 = vadd.f32 %v647, %v815
  %v817 = vpop.f32.mrf.mxu0
  %v818 = vadd.f32 %v649, %v817
  %819 = vmatmul.bf16.gmra.mxu0 %v507
  %v820 = vpop.f32.mrf.mxu0
  %v821 = vadd.f32 %v652, %v820
  %v822 = vpop.f32.mrf.mxu0
  %v823 = vadd.f32 %v654, %v822
  %824 = vmatmul.bf16.gmra.mxu0 %v510
  %v825 = vpop.f32.mrf.mxu0
  %v826 = vadd.f32 %v657, %v825
  %v827 = vpop.f32.mrf.mxu0
  %v828 = vadd.f32 %v659, %v827
  %829 = vmatmul.bf16.gmra.mxu0 %v513
  %v830 = vpop.f32.mrf.mxu0
  %v831 = vadd.f32 %v662, %v830
  %v832 = vpop.f32.mrf.mxu0
  %v833 = vadd.f32 %v664, %v832
  %834 = vmatmul.bf16.gmra.mxu0 %v516
  %v835 = vpop.f32.mrf.mxu0
  %v836 = vadd.f32 %v667, %v835
  %v837 = vpop.f32.mrf.mxu0
  %v838 = vadd.f32 %v669, %v837
  %839 = vmatmul.bf16.gmra.mxu0 %v519
  %v840 = vpop.f32.mrf.mxu0
  %v841 = vadd.f32 %v672, %v840
  %v842 = vpop.f32.mrf.mxu0
  %v843 = vadd.f32 %v674, %v842
  %844 = vmatmul.bf16.gmra.mxu0 %v522
  %v845 = vpop.f32.mrf.mxu0
  %v846 = vadd.f32 %v677, %v845
  %v847 = vpop.f32.mrf.mxu0
  %v848 = vadd.f32 %v679, %v847
  %849 = vmatmul.bf16.gmra.mxu0 %v525
  %v850 = vpop.f32.mrf.mxu0
  %v851 = vadd.f32 %v682, %v850
  %v852 = vpop.f32.mrf.mxu0
  %v853 = vadd.f32 %v684, %v852
  %854 = vmatmul.bf16.gmra.mxu0 %v528
  %v855 = vpop.f32.mrf.mxu0
  %v856 = vadd.f32 %v687, %v855
  %v857 = vpop.f32.mrf.mxu0
  %v858 = vadd.f32 %v689, %v857
  %859 = vmatmul.bf16.gmra.mxu0 %v531
  %v860 = vpop.f32.mrf.mxu0
  %v861 = vadd.f32 %v692, %v860
  %v862 = vpop.f32.mrf.mxu0
  %v863 = vadd.f32 %v694, %v862
  %864 = vmatmul.bf16.gmra.mxu0 %v534
  %v865 = vpop.f32.mrf.mxu0
  %v866 = vadd.f32 %v697, %v865
  %v867 = vpop.f32.mrf.mxu0
  %v868 = vadd.f32 %v699, %v867
  %869 = vmatmul.bf16.gmra.mxu0 %v537
  %v870 = vpop.f32.mrf.mxu0
  %v871 = vadd.f32 %v702, %v870
  %v872 = vpop.f32.mrf.mxu0
  %v873 = vadd.f32 %v704, %v872
  %874 = vmatmul.bf16.gmra.mxu0 %v540
  %v875 = vpop.f32.mrf.mxu0
  %v876 = vadd.f32 %v707, %v875
  %v877 = vpop.f32.mrf.mxu0
  %v878 = vadd.f32 %v709, %v877
  %879 = vdwg.mxu0
  %v880 = vsel %vm445, %v721, 0.0
  %v881 = vsel %vm445, %v723, 0.0
  %v882 = vadd.f32 %v880, %v881
  %v883 = vsel %vm445, %v726, 0.0
  %v884 = vadd.f32 %v882, %v883
  %v885 = vsel %vm445, %v728, 0.0
  %v886 = vadd.f32 %v884, %v885
  %v887 = vsel %vm445, %v731, 0.0
  %v888 = vadd.f32 %v886, %v887
  %v889 = vsel %vm445, %v733, 0.0
  %v890 = vadd.f32 %v888, %v889
  %v891 = vsel %vm445, %v736, 0.0
  %v892 = vadd.f32 %v890, %v891
  %v893 = vsel %vm445, %v738, 0.0
  %v894 = vadd.f32 %v892, %v893
  %v895 = vsel %vm445, %v741, 0.0
  %v896 = vadd.f32 %v894, %v895
  %v897 = vsel %vm445, %v743, 0.0
  %v898 = vadd.f32 %v896, %v897
  %v899 = vsel %vm445, %v746, 0.0
  %v900 = vadd.f32 %v898, %v899
  %v901 = vsel %vm445, %v748, 0.0
  %v902 = vadd.f32 %v900, %v901
  %v903 = vsel %vm445, %v751, 0.0
  %v904 = vadd.f32 %v902, %v903
  %v905 = vsel %vm445, %v753, 0.0
  %v906 = vadd.f32 %v904, %v905
  %v907 = vsel %vm445, %v756, 0.0
  %v908 = vadd.f32 %v906, %v907
  %v909 = vsel %vm445, %v758, 0.0
  %v910 = vadd.f32 %v908, %v909
  %v911 = vsel %vm445, %v761, 0.0
  %v912 = vadd.f32 %v910, %v911
  %v913 = vsel %vm445, %v763, 0.0
  %v914 = vadd.f32 %v912, %v913
  %v915 = vsel %vm445, %v766, 0.0
  %v916 = vadd.f32 %v914, %v915
  %v917 = vsel %vm445, %v768, 0.0
  %v918 = vadd.f32 %v916, %v917
  %v919 = vsel %vm445, %v771, 0.0
  %v920 = vadd.f32 %v918, %v919
  %v921 = vsel %vm445, %v773, 0.0
  %v922 = vadd.f32 %v920, %v921
  %v923 = vsel %vm445, %v776, 0.0
  %v924 = vadd.f32 %v922, %v923
  %v925 = vsel %vm445, %v778, 0.0
  %v926 = vadd.f32 %v924, %v925
  %v927 = vsel %vm445, %v781, 0.0
  %v928 = vadd.f32 %v926, %v927
  %v929 = vsel %vm445, %v783, 0.0
  %v930 = vadd.f32 %v928, %v929
  %v931 = vsel %vm445, %v786, 0.0
  %v932 = vadd.f32 %v930, %v931
  %v933 = vsel %vm445, %v788, 0.0
  %v934 = vadd.f32 %v932, %v933
  %v935 = vsel %vm445, %v791, 0.0
  %v936 = vadd.f32 %v934, %v935
  %v937 = vsel %vm445, %v793, 0.0
  %v938 = vadd.f32 %v936, %v937
  %v939 = vsel %vm445, %v796, 0.0
  %v940 = vadd.f32 %v938, %v939
  %v941 = vsel %vm445, %v798, 0.0
  %v942 = vadd.f32 %v940, %v941
  %v943 = vsel %vm445, %v801, 0.0
  %v944 = vadd.f32 %v942, %v943
  %v945 = vsel %vm445, %v803, 0.0
  %v946 = vadd.f32 %v944, %v945
  %v947 = vsel %vm445, %v806, 0.0
  %v948 = vadd.f32 %v946, %v947
  %v949 = vsel %vm445, %v808, 0.0
  %v950 = vadd.f32 %v948, %v949
  %v951 = vsel %vm445, %v811, 0.0
  %v952 = vadd.f32 %v950, %v951
  %v953 = vsel %vm445, %v813, 0.0
  %v954 = vadd.f32 %v952, %v953
  %v955 = vsel %vm445, %v816, 0.0
  %v956 = vadd.f32 %v954, %v955
  %v957 = vsel %vm445, %v818, 0.0
  %v958 = vadd.f32 %v956, %v957
  %v959 = vsel %vm445, %v821, 0.0
  %v960 = vadd.f32 %v958, %v959
  %v961 = vsel %vm445, %v823, 0.0
  %v962 = vadd.f32 %v960, %v961
  %v963 = vsel %vm445, %v826, 0.0
  %v964 = vadd.f32 %v962, %v963
  %v965 = vsel %vm445, %v828, 0.0
  %v966 = vadd.f32 %v964, %v965
  %v967 = vsel %vm445, %v831, 0.0
  %v968 = vadd.f32 %v966, %v967
  %v969 = vsel %vm445, %v833, 0.0
  %v970 = vadd.f32 %v968, %v969
  %v971 = vsel %vm445, %v836, 0.0
  %v972 = vadd.f32 %v970, %v971
  %v973 = vsel %vm445, %v838, 0.0
  %v974 = vadd.f32 %v972, %v973
  %v975 = vsel %vm445, %v841, 0.0
  %v976 = vadd.f32 %v974, %v975
  %v977 = vsel %vm445, %v843, 0.0
  %v978 = vadd.f32 %v976, %v977
  %v979 = vsel %vm445, %v846, 0.0
  %v980 = vadd.f32 %v978, %v979
  %v981 = vsel %vm445, %v848, 0.0
  %v982 = vadd.f32 %v980, %v981
  %v983 = vsel %vm445, %v851, 0.0
  %v984 = vadd.f32 %v982, %v983
  %v985 = vsel %vm445, %v853, 0.0
  %v986 = vadd.f32 %v984, %v985
  %v987 = vsel %vm445, %v856, 0.0
  %v988 = vadd.f32 %v986, %v987
  %v989 = vsel %vm445, %v858, 0.0
  %v990 = vadd.f32 %v988, %v989
  %v991 = vsel %vm445, %v861, 0.0
  %v992 = vadd.f32 %v990, %v991
  %v993 = vsel %vm445, %v863, 0.0
  %v994 = vadd.f32 %v992, %v993
  %v995 = vsel %vm445, %v866, 0.0
  %v996 = vadd.f32 %v994, %v995
  %v997 = vsel %vm445, %v868, 0.0
  %v998 = vadd.f32 %v996, %v997
  %v999 = vsel %vm445, %v871, 0.0
  %v1000 = vadd.f32 %v998, %v999
  %v1001 = vsel %vm445, %v873, 0.0
  %v1002 = vadd.f32 %v1000, %v1001
  %v1003 = vsel %vm445, %v876, 0.0
  %v1004 = vadd.f32 %v1002, %v1003
  %v1005 = vsel %vm445, %v878, 0.0
  %v1006 = vadd.f32 %v1004, %v1005
  %v1007 = vrot.slane %v1006, 4
  %v1008 = vadd.f32 %v1006, %v1007
  %v1009 = vrot.slane %v1008, 2
  %v1010 = vadd.f32 %v1008, %v1009
  %v1011 = vrot.slane %v1010, 1
  %v1012 = vadd.f32 %v1010, %v1011
  %v1013 = vmul.f32 %v1012, 0.001953125
  %v1014 = vsub.f32 %v721, %v1013
  %v1015 = vsub.f32 %v723, %v1013
  %v1016 = vsub.f32 %v726, %v1013
  %v1017 = vsub.f32 %v728, %v1013
  %v1018 = vsub.f32 %v731, %v1013
  %v1019 = vsub.f32 %v733, %v1013
  %v1020 = vsub.f32 %v736, %v1013
  %v1021 = vsub.f32 %v738, %v1013
  %v1022 = vsub.f32 %v741, %v1013
  %v1023 = vsub.f32 %v743, %v1013
  %v1024 = vsub.f32 %v746, %v1013
  %v1025 = vsub.f32 %v748, %v1013
  %v1026 = vsub.f32 %v751, %v1013
  %v1027 = vsub.f32 %v753, %v1013
  %v1028 = vsub.f32 %v756, %v1013
  %v1029 = vsub.f32 %v758, %v1013
  %v1030 = vsub.f32 %v761, %v1013
  %v1031 = vsub.f32 %v763, %v1013
  %v1032 = vsub.f32 %v766, %v1013
  %v1033 = vsub.f32 %v768, %v1013
  %v1034 = vsub.f32 %v771, %v1013
  %v1035 = vsub.f32 %v773, %v1013
  %v1036 = vsub.f32 %v776, %v1013
  %v1037 = vsub.f32 %v778, %v1013
  %v1038 = vsub.f32 %v781, %v1013
  %v1039 = vsub.f32 %v783, %v1013
  %v1040 = vsub.f32 %v786, %v1013
  %v1041 = vsub.f32 %v788, %v1013
  %v1042 = vsub.f32 %v791, %v1013
  %v1043 = vsub.f32 %v793, %v1013
  %v1044 = vsub.f32 %v796, %v1013
  %v1045 = vsub.f32 %v798, %v1013
  %v1046 = vsub.f32 %v801, %v1013
  %v1047 = vsub.f32 %v803, %v1013
  %v1048 = vsub.f32 %v806, %v1013
  %v1049 = vsub.f32 %v808, %v1013
  %v1050 = vsub.f32 %v811, %v1013
  %v1051 = vsub.f32 %v813, %v1013
  %v1052 = vsub.f32 %v816, %v1013
  %v1053 = vsub.f32 %v818, %v1013
  %v1054 = vsub.f32 %v821, %v1013
  %v1055 = vsub.f32 %v823, %v1013
  %v1056 = vsub.f32 %v826, %v1013
  %v1057 = vsub.f32 %v828, %v1013
  %v1058 = vsub.f32 %v831, %v1013
  %v1059 = vsub.f32 %v833, %v1013
  %v1060 = vsub.f32 %v836, %v1013
  %v1061 = vsub.f32 %v838, %v1013
  %v1062 = vsub.f32 %v841, %v1013
  %v1063 = vsub.f32 %v843, %v1013
  %v1064 = vsub.f32 %v846, %v1013
  %v1065 = vsub.f32 %v848, %v1013
  %v1066 = vsub.f32 %v851, %v1013
  %v1067 = vsub.f32 %v853, %v1013
  %v1068 = vsub.f32 %v856, %v1013
  %v1069 = vsub.f32 %v858, %v1013
  %v1070 = vsub.f32 %v861, %v1013
  %v1071 = vsub.f32 %v863, %v1013
  %v1072 = vsub.f32 %v866, %v1013
  %v1073 = vsub.f32 %v868, %v1013
  %v1074 = vsub.f32 %v871, %v1013
  %v1075 = vsub.f32 %v873, %v1013
  %v1076 = vsub.f32 %v876, %v1013
  %v1077 = vsub.f32 %v878, %v1013
  %v1078 = vmul.f32 %v1014, %v1014
  %v1079 = vmul.f32 %v1015, %v1015
  %v1080 = vmul.f32 %v1016, %v1016
  %v1081 = vmul.f32 %v1017, %v1017
  %v1082 = vmul.f32 %v1018, %v1018
  %v1083 = vmul.f32 %v1019, %v1019
  %v1084 = vmul.f32 %v1020, %v1020
  %v1085 = vmul.f32 %v1021, %v1021
  %v1086 = vmul.f32 %v1022, %v1022
  %v1087 = vmul.f32 %v1023, %v1023
  %v1088 = vmul.f32 %v1024, %v1024
  %v1089 = vmul.f32 %v1025, %v1025
  %v1090 = vmul.f32 %v1026, %v1026
  %v1091 = vmul.f32 %v1027, %v1027
  %v1092 = vmul.f32 %v1028, %v1028
  %v1093 = vmul.f32 %v1029, %v1029
  %v1094 = vmul.f32 %v1030, %v1030
  %v1095 = vmul.f32 %v1031, %v1031
  %v1096 = vmul.f32 %v1032, %v1032
  %v1097 = vmul.f32 %v1033, %v1033
  %v1098 = vmul.f32 %v1034, %v1034
  %v1099 = vmul.f32 %v1035, %v1035
  %v1100 = vmul.f32 %v1036, %v1036
  %v1101 = vmul.f32 %v1037, %v1037
  %v1102 = vmul.f32 %v1038, %v1038
  %v1103 = vmul.f32 %v1039, %v1039
  %v1104 = vmul.f32 %v1040, %v1040
  %v1105 = vmul.f32 %v1041, %v1041
  %v1106 = vmul.f32 %v1042, %v1042
  %v1107 = vmul.f32 %v1043, %v1043
  %v1108 = vmul.f32 %v1044, %v1044
  %v1109 = vmul.f32 %v1045, %v1045
  %v1110 = vmul.f32 %v1046, %v1046
  %v1111 = vmul.f32 %v1047, %v1047
  %v1112 = vmul.f32 %v1048, %v1048
  %v1113 = vmul.f32 %v1049, %v1049
  %v1114 = vmul.f32 %v1050, %v1050
  %v1115 = vmul.f32 %v1051, %v1051
  %v1116 = vmul.f32 %v1052, %v1052
  %v1117 = vmul.f32 %v1053, %v1053
  %v1118 = vmul.f32 %v1054, %v1054
  %v1119 = vmul.f32 %v1055, %v1055
  %v1120 = vmul.f32 %v1056, %v1056
  %v1121 = vmul.f32 %v1057, %v1057
  %v1122 = vmul.f32 %v1058, %v1058
  %v1123 = vmul.f32 %v1059, %v1059
  %v1124 = vmul.f32 %v1060, %v1060
  %v1125 = vmul.f32 %v1061, %v1061
  %v1126 = vmul.f32 %v1062, %v1062
  %v1127 = vmul.f32 %v1063, %v1063
  %v1128 = vmul.f32 %v1064, %v1064
  %v1129 = vmul.f32 %v1065, %v1065
  %v1130 = vmul.f32 %v1066, %v1066
  %v1131 = vmul.f32 %v1067, %v1067
  %v1132 = vmul.f32 %v1068, %v1068
  %v1133 = vmul.f32 %v1069, %v1069
  %v1134 = vmul.f32 %v1070, %v1070
  %v1135 = vmul.f32 %v1071, %v1071
  %v1136 = vmul.f32 %v1072, %v1072
  %v1137 = vmul.f32 %v1073, %v1073
  %v1138 = vmul.f32 %v1074, %v1074
  %v1139 = vmul.f32 %v1075, %v1075
  %v1140 = vmul.f32 %v1076, %v1076
  %v1141 = vmul.f32 %v1077, %v1077
  %v1142 = vsel %vm445, %v1078, 0.0
  %v1143 = vsel %vm445, %v1079, 0.0
  %v1144 = vadd.f32 %v1142, %v1143
  %v1145 = vsel %vm445, %v1080, 0.0
  %v1146 = vadd.f32 %v1144, %v1145
  %v1147 = vsel %vm445, %v1081, 0.0
  %v1148 = vadd.f32 %v1146, %v1147
  %v1149 = vsel %vm445, %v1082, 0.0
  %v1150 = vadd.f32 %v1148, %v1149
  %v1151 = vsel %vm445, %v1083, 0.0
  %v1152 = vadd.f32 %v1150, %v1151
  %v1153 = vsel %vm445, %v1084, 0.0
  %v1154 = vadd.f32 %v1152, %v1153
  %v1155 = vsel %vm445, %v1085, 0.0
  %v1156 = vadd.f32 %v1154, %v1155
  %v1157 = vsel %vm445, %v1086, 0.0
  %v1158 = vadd.f32 %v1156, %v1157
  %v1159 = vsel %vm445, %v1087, 0.0
  %v1160 = vadd.f32 %v1158, %v1159
  %v1161 = vsel %vm445, %v1088, 0.0
  %v1162 = vadd.f32 %v1160, %v1161
  %v1163 = vsel %vm445, %v1089, 0.0
  %v1164 = vadd.f32 %v1162, %v1163
  %v1165 = vsel %vm445, %v1090, 0.0
  %v1166 = vadd.f32 %v1164, %v1165
  %v1167 = vsel %vm445, %v1091, 0.0
  %v1168 = vadd.f32 %v1166, %v1167
  %v1169 = vsel %vm445, %v1092, 0.0
  %v1170 = vadd.f32 %v1168, %v1169
  %v1171 = vsel %vm445, %v1093, 0.0
  %v1172 = vadd.f32 %v1170, %v1171
  %v1173 = vsel %vm445, %v1094, 0.0
  %v1174 = vadd.f32 %v1172, %v1173
  %v1175 = vsel %vm445, %v1095, 0.0
  %v1176 = vadd.f32 %v1174, %v1175
  %v1177 = vsel %vm445, %v1096, 0.0
  %v1178 = vadd.f32 %v1176, %v1177
  %v1179 = vsel %vm445, %v1097, 0.0
  %v1180 = vadd.f32 %v1178, %v1179
  %v1181 = vsel %vm445, %v1098, 0.0
  %v1182 = vadd.f32 %v1180, %v1181
  %v1183 = vsel %vm445, %v1099, 0.0
  %v1184 = vadd.f32 %v1182, %v1183
  %v1185 = vsel %vm445, %v1100, 0.0
  %v1186 = vadd.f32 %v1184, %v1185
  %v1187 = vsel %vm445, %v1101, 0.0
  %v1188 = vadd.f32 %v1186, %v1187
  %v1189 = vsel %vm445, %v1102, 0.0
  %v1190 = vadd.f32 %v1188, %v1189
  %v1191 = vsel %vm445, %v1103, 0.0
  %v1192 = vadd.f32 %v1190, %v1191
  %v1193 = vsel %vm445, %v1104, 0.0
  %v1194 = vadd.f32 %v1192, %v1193
  %v1195 = vsel %vm445, %v1105, 0.0
  %v1196 = vadd.f32 %v1194, %v1195
  %v1197 = vsel %vm445, %v1106, 0.0
  %v1198 = vadd.f32 %v1196, %v1197
  %v1199 = vsel %vm445, %v1107, 0.0
  %v1200 = vadd.f32 %v1198, %v1199
  %v1201 = vsel %vm445, %v1108, 0.0
  %v1202 = vadd.f32 %v1200, %v1201
  %v1203 = vsel %vm445, %v1109, 0.0
  %v1204 = vadd.f32 %v1202, %v1203
  %v1205 = vsel %vm445, %v1110, 0.0
  %v1206 = vadd.f32 %v1204, %v1205
  %v1207 = vsel %vm445, %v1111, 0.0
  %v1208 = vadd.f32 %v1206, %v1207
  %v1209 = vsel %vm445, %v1112, 0.0
  %v1210 = vadd.f32 %v1208, %v1209
  %v1211 = vsel %vm445, %v1113, 0.0
  %v1212 = vadd.f32 %v1210, %v1211
  %v1213 = vsel %vm445, %v1114, 0.0
  %v1214 = vadd.f32 %v1212, %v1213
  %v1215 = vsel %vm445, %v1115, 0.0
  %v1216 = vadd.f32 %v1214, %v1215
  %v1217 = vsel %vm445, %v1116, 0.0
  %v1218 = vadd.f32 %v1216, %v1217
  %v1219 = vsel %vm445, %v1117, 0.0
  %v1220 = vadd.f32 %v1218, %v1219
  %v1221 = vsel %vm445, %v1118, 0.0
  %v1222 = vadd.f32 %v1220, %v1221
  %v1223 = vsel %vm445, %v1119, 0.0
  %v1224 = vadd.f32 %v1222, %v1223
  %v1225 = vsel %vm445, %v1120, 0.0
  %v1226 = vadd.f32 %v1224, %v1225
  %v1227 = vsel %vm445, %v1121, 0.0
  %v1228 = vadd.f32 %v1226, %v1227
  %v1229 = vsel %vm445, %v1122, 0.0
  %v1230 = vadd.f32 %v1228, %v1229
  %v1231 = vsel %vm445, %v1123, 0.0
  %v1232 = vadd.f32 %v1230, %v1231
  %v1233 = vsel %vm445, %v1124, 0.0
  %v1234 = vadd.f32 %v1232, %v1233
  %v1235 = vsel %vm445, %v1125, 0.0
  %v1236 = vadd.f32 %v1234, %v1235
  %v1237 = vsel %vm445, %v1126, 0.0
  %v1238 = vadd.f32 %v1236, %v1237
  %v1239 = vsel %vm445, %v1127, 0.0
  %v1240 = vadd.f32 %v1238, %v1239
  %v1241 = vsel %vm445, %v1128, 0.0
  %v1242 = vadd.f32 %v1240, %v1241
  %v1243 = vsel %vm445, %v1129, 0.0
  %v1244 = vadd.f32 %v1242, %v1243
  %v1245 = vsel %vm445, %v1130, 0.0
  %v1246 = vadd.f32 %v1244, %v1245
  %v1247 = vsel %vm445, %v1131, 0.0
  %v1248 = vadd.f32 %v1246, %v1247
  %v1249 = vsel %vm445, %v1132, 0.0
  %v1250 = vadd.f32 %v1248, %v1249
  %v1251 = vsel %vm445, %v1133, 0.0
  %v1252 = vadd.f32 %v1250, %v1251
  %v1253 = vsel %vm445, %v1134, 0.0
  %v1254 = vadd.f32 %v1252, %v1253
  %v1255 = vsel %vm445, %v1135, 0.0
  %v1256 = vadd.f32 %v1254, %v1255
  %v1257 = vsel %vm445, %v1136, 0.0
  %v1258 = vadd.f32 %v1256, %v1257
  %v1259 = vsel %vm445, %v1137, 0.0
  %v1260 = vadd.f32 %v1258, %v1259
  %v1261 = vsel %vm445, %v1138, 0.0
  %v1262 = vadd.f32 %v1260, %v1261
  %v1263 = vsel %vm445, %v1139, 0.0
  %v1264 = vadd.f32 %v1262, %v1263
  %v1265 = vsel %vm445, %v1140, 0.0
  %v1266 = vadd.f32 %v1264, %v1265
  %v1267 = vsel %vm445, %v1141, 0.0
  %v1268 = vadd.f32 %v1266, %v1267
  %v1269 = vrot.slane %v1268, 4
  %v1270 = vadd.f32 %v1268, %v1269
  %v1271 = vrot.slane %v1270, 2
  %v1272 = vadd.f32 %v1270, %v1271
  %v1273 = vrot.slane %v1272, 1
  %v1274 = vadd.f32 %v1272, %v1273
  %v1275 = vmul.f32 %v1274, 0.001953125
  %v1276 = vld [vmem:[%s2] sm:$0x1]
  %v1277 = vadd.f32 %v1275, 1e-05
  %v1278 = vrsqrt.pop %v1277
  %v1279 = vmul.f32 %v1278, %v1277
  %v1280 = vmul.f32 %v1279, %v1278
  %v1281 = vmul.f32 0.5, %v1280
  %v1282 = vsub.f32 1.5, %v1281
  %v1283 = vmul.f32 %v1278, %v1282
  %vm1284 = vweird.f32 %v1277
  %vm1285 = vweird.f32 %v1278
  %vm1286 = vmor %vm1284, %vm1285
  %v1287 = vsel %vm1286, %v1278, %v1283
  %v1288 = vmul.f32 %v1276, %v1287
  %v1290 = vperm.slane %v1288, 0
  %v1292 = vmul.f32 %v1014, %v1290
  %v1293 = vmul.f32 %v1015, %v1290
  %v1294 = vmul.f32 %v1016, %v1290
  %v1295 = vmul.f32 %v1017, %v1290
  %v1296 = vmul.f32 %v1018, %v1290
  %v1297 = vmul.f32 %v1019, %v1290
  %v1298 = vmul.f32 %v1020, %v1290
  %v1299 = vmul.f32 %v1021, %v1290
  %v1300 = vmul.f32 %v1022, %v1290
  %v1301 = vmul.f32 %v1023, %v1290
  %v1302 = vmul.f32 %v1024, %v1290
  %v1303 = vmul.f32 %v1025, %v1290
  %v1304 = vmul.f32 %v1026, %v1290
  %v1305 = vmul.f32 %v1027, %v1290
  %v1306 = vmul.f32 %v1028, %v1290
  %v1307 = vmul.f32 %v1029, %v1290
  %v1308 = vmul.f32 %v1030, %v1290
  %v1309 = vmul.f32 %v1031, %v1290
  %v1310 = vmul.f32 %v1032, %v1290
  %v1311 = vmul.f32 %v1033, %v1290
  %v1312 = vmul.f32 %v1034, %v1290
  %v1313 = vmul.f32 %v1035, %v1290
  %v1314 = vmul.f32 %v1036, %v1290
  %v1315 = vmul.f32 %v1037, %v1290
  %v1316 = vmul.f32 %v1038, %v1290
  %v1317 = vmul.f32 %v1039, %v1290
  %v1318 = vmul.f32 %v1040, %v1290
  %v1319 = vmul.f32 %v1041, %v1290
  %v1320 = vmul.f32 %v1042, %v1290
  %v1321 = vmul.f32 %v1043, %v1290
  %v1322 = vmul.f32 %v1044, %v1290
  %v1323 = vmul.f32 %v1045, %v1290
  %v1324 = vmul.f32 %v1046, %v1290
  %v1325 = vmul.f32 %v1047, %v1290
  %v1326 = vmul.f32 %v1048, %v1290
  %v1327 = vmul.f32 %v1049, %v1290
  %v1328 = vmul.f32 %v1050, %v1290
  %v1329 = vmul.f32 %v1051, %v1290
  %v1330 = vmul.f32 %v1052, %v1290
  %v1331 = vmul.f32 %v1053, %v1290
  %v1332 = vmul.f32 %v1054, %v1290
  %v1333 = vmul.f32 %v1055, %v1290
  %v1334 = vmul.f32 %v1056, %v1290
  %v1335 = vmul.f32 %v1057, %v1290
  %v1336 = vmul.f32 %v1058, %v1290
  %v1337 = vmul.f32 %v1059, %v1290
  %v1338 = vmul.f32 %v1060, %v1290
  %v1339 = vmul.f32 %v1061, %v1290
  %v1340 = vmul.f32 %v1062, %v1290
  %v1341 = vmul.f32 %v1063, %v1290
  %v1342 = vmul.f32 %v1064, %v1290
  %v1343 = vmul.f32 %v1065, %v1290
  %v1344 = vmul.f32 %v1066, %v1290
  %v1345 = vmul.f32 %v1067, %v1290
  %v1346 = vmul.f32 %v1068, %v1290
  %v1347 = vmul.f32 %v1069, %v1290
  %v1348 = vmul.f32 %v1070, %v1290
  %v1349 = vmul.f32 %v1071, %v1290
  %v1350 = vmul.f32 %v1072, %v1290
  %v1351 = vmul.f32 %v1073, %v1290
  %v1352 = vmul.f32 %v1074, %v1290
  %v1353 = vmul.f32 %v1075, %v1290
  %v1354 = vmul.f32 %v1076, %v1290
  %v1355 = vmul.f32 %v1077, %v1290
  %v1356 = vld [vmem:[%s3] sm:$0x1]
  %v1358 = vperm.slane %v1356, 0
  %v1360 = vadd.f32 %v1292, %v1358
  %v1361 = vadd.f32 %v1293, %v1358
  %v1362 = vadd.f32 %v1294, %v1358
  %v1363 = vadd.f32 %v1295, %v1358
  %v1364 = vadd.f32 %v1296, %v1358
  %v1365 = vadd.f32 %v1297, %v1358
  %v1366 = vadd.f32 %v1298, %v1358
  %v1367 = vadd.f32 %v1299, %v1358
  %v1368 = vadd.f32 %v1300, %v1358
  %v1369 = vadd.f32 %v1301, %v1358
  %v1370 = vadd.f32 %v1302, %v1358
  %v1371 = vadd.f32 %v1303, %v1358
  %v1372 = vadd.f32 %v1304, %v1358
  %v1373 = vadd.f32 %v1305, %v1358
  %v1374 = vadd.f32 %v1306, %v1358
  %v1375 = vadd.f32 %v1307, %v1358
  %v1376 = vadd.f32 %v1308, %v1358
  %v1377 = vadd.f32 %v1309, %v1358
  %v1378 = vadd.f32 %v1310, %v1358
  %v1379 = vadd.f32 %v1311, %v1358
  %v1380 = vadd.f32 %v1312, %v1358
  %v1381 = vadd.f32 %v1313, %v1358
  %v1382 = vadd.f32 %v1314, %v1358
  %v1383 = vadd.f32 %v1315, %v1358
  %v1384 = vadd.f32 %v1316, %v1358
  %v1385 = vadd.f32 %v1317, %v1358
  %v1386 = vadd.f32 %v1318, %v1358
  %v1387 = vadd.f32 %v1319, %v1358
  %v1388 = vadd.f32 %v1320, %v1358
  %v1389 = vadd.f32 %v1321, %v1358
  %v1390 = vadd.f32 %v1322, %v1358
  %v1391 = vadd.f32 %v1323, %v1358
  %v1392 = vadd.f32 %v1324, %v1358
  %v1393 = vadd.f32 %v1325, %v1358
  %v1394 = vadd.f32 %v1326, %v1358
  %v1395 = vadd.f32 %v1327, %v1358
  %v1396 = vadd.f32 %v1328, %v1358
  %v1397 = vadd.f32 %v1329, %v1358
  %v1398 = vadd.f32 %v1330, %v1358
  %v1399 = vadd.f32 %v1331, %v1358
  %v1400 = vadd.f32 %v1332, %v1358
  %v1401 = vadd.f32 %v1333, %v1358
  %v1402 = vadd.f32 %v1334, %v1358
  %v1403 = vadd.f32 %v1335, %v1358
  %v1404 = vadd.f32 %v1336, %v1358
  %v1405 = vadd.f32 %v1337, %v1358
  %v1406 = vadd.f32 %v1338, %v1358
  %v1407 = vadd.f32 %v1339, %v1358
  %v1408 = vadd.f32 %v1340, %v1358
  %v1409 = vadd.f32 %v1341, %v1358
  %v1410 = vadd.f32 %v1342, %v1358
  %v1411 = vadd.f32 %v1343, %v1358
  %v1412 = vadd.f32 %v1344, %v1358
  %v1413 = vadd.f32 %v1345, %v1358
  %v1414 = vadd.f32 %v1346, %v1358
  %v1415 = vadd.f32 %v1347, %v1358
  %v1416 = vadd.f32 %v1348, %v1358
  %v1417 = vadd.f32 %v1349, %v1358
  %v1418 = vadd.f32 %v1350, %v1358
  %v1419 = vadd.f32 %v1351, %v1358
  %v1420 = vadd.f32 %v1352, %v1358
  %v1421 = vadd.f32 %v1353, %v1358
  %v1422 = vadd.f32 %v1354, %v1358
  %v1423 = vadd.f32 %v1355, %v1358
  %v1424 = vld [vmem:[%s4] sm:$0xff]
  %v1425 = vld [vmem:[%s4 + $0x8] sm:$0xff]
  %v1426 = vld [vmem:[%s4 + $0x10] sm:$0xff]
  %v1427 = vld [vmem:[%s4 + $0x18] sm:$0xff]
  %v1428 = vld [vmem:[%s4 + $0x20] sm:$0xff]
  %v1429 = vld [vmem:[%s4 + $0x28] sm:$0xff]
  %v1430 = vld [vmem:[%s4 + $0x30] sm:$0xff]
  %v1431 = vld [vmem:[%s4 + $0x38] sm:$0xff]
  %v1432 = vld [vmem:[%s4 + $0x40] sm:$0xff]
  %v1433 = vld [vmem:[%s4 + $0x48] sm:$0xff]
  %v1434 = vld [vmem:[%s4 + $0x50] sm:$0xff]
  %v1435 = vld [vmem:[%s4 + $0x58] sm:$0xff]
  %v1436 = vld [vmem:[%s4 + $0x60] sm:$0xff]
  %v1437 = vld [vmem:[%s4 + $0x68] sm:$0xff]
  %v1438 = vld [vmem:[%s4 + $0x70] sm:$0xff]
  %v1439 = vld [vmem:[%s4 + $0x78] sm:$0xff]
  %v1440 = vld [vmem:[%s4 + $0x80] sm:$0xff]
  %v1441 = vld [vmem:[%s4 + $0x88] sm:$0xff]
  %v1442 = vld [vmem:[%s4 + $0x90] sm:$0xff]
  %v1443 = vld [vmem:[%s4 + $0x98] sm:$0xff]
  %v1444 = vld [vmem:[%s4 + $0xa0] sm:$0xff]
  %v1445 = vld [vmem:[%s4 + $0xa8] sm:$0xff]
  %v1446 = vld [vmem:[%s4 + $0xb0] sm:$0xff]
  %v1447 = vld [vmem:[%s4 + $0xb8] sm:$0xff]
  %v1448 = vld [vmem:[%s4 + $0xc0] sm:$0xff]
  %v1449 = vld [vmem:[%s4 + $0xc8] sm:$0xff]
  %v1450 = vld [vmem:[%s4 + $0xd0] sm:$0xff]
  %v1451 = vld [vmem:[%s4 + $0xd8] sm:$0xff]
  %v1452 = vld [vmem:[%s4 + $0xe0] sm:$0xff]
  %v1453 = vld [vmem:[%s4 + $0xe8] sm:$0xff]
  %v1454 = vld [vmem:[%s4 + $0xf0] sm:$0xff]
  %v1455 = vld [vmem:[%s4 + $0xf8] sm:$0xff]
  %v1456 = vld [vmem:[%s4 + $0x100] sm:$0xff]
  %v1457 = vld [vmem:[%s4 + $0x108] sm:$0xff]
  %v1458 = vld [vmem:[%s4 + $0x110] sm:$0xff]
  %v1459 = vld [vmem:[%s4 + $0x118] sm:$0xff]
  %v1460 = vld [vmem:[%s4 + $0x120] sm:$0xff]
  %v1461 = vld [vmem:[%s4 + $0x128] sm:$0xff]
  %v1462 = vld [vmem:[%s4 + $0x130] sm:$0xff]
  %v1463 = vld [vmem:[%s4 + $0x138] sm:$0xff]
  %v1464 = vld [vmem:[%s4 + $0x140] sm:$0xff]
  %v1465 = vld [vmem:[%s4 + $0x148] sm:$0xff]
  %v1466 = vld [vmem:[%s4 + $0x150] sm:$0xff]
  %v1467 = vld [vmem:[%s4 + $0x158] sm:$0xff]
  %v1468 = vld [vmem:[%s4 + $0x160] sm:$0xff]
  %v1469 = vld [vmem:[%s4 + $0x168] sm:$0xff]
  %v1470 = vld [vmem:[%s4 + $0x170] sm:$0xff]
  %v1471 = vld [vmem:[%s4 + $0x178] sm:$0xff]
  %v1472 = vld [vmem:[%s4 + $0x180] sm:$0xff]
  %v1473 = vld [vmem:[%s4 + $0x188] sm:$0xff]
  %v1474 = vld [vmem:[%s4 + $0x190] sm:$0xff]
  %v1475 = vld [vmem:[%s4 + $0x198] sm:$0xff]
  %v1476 = vld [vmem:[%s4 + $0x1a0] sm:$0xff]
  %v1477 = vld [vmem:[%s4 + $0x1a8] sm:$0xff]
  %v1478 = vld [vmem:[%s4 + $0x1b0] sm:$0xff]
  %v1479 = vld [vmem:[%s4 + $0x1b8] sm:$0xff]
  %v1480 = vld [vmem:[%s4 + $0x1c0] sm:$0xff]
  %v1481 = vld [vmem:[%s4 + $0x1c8] sm:$0xff]
  %v1482 = vld [vmem:[%s4 + $0x1d0] sm:$0xff]
  %v1483 = vld [vmem:[%s4 + $0x1d8] sm:$0xff]
  %v1484 = vld [vmem:[%s4 + $0x1e0] sm:$0xff]
  %v1485 = vld [vmem:[%s4 + $0x1e8] sm:$0xff]
  %v1486 = vld [vmem:[%s4 + $0x1f0] sm:$0xff]
  %v1487 = vld [vmem:[%s4 + $0x1f8] sm:$0xff]
  %v1488 = vadd.f32 %v1360, %v1424
  %v1489 = vadd.f32 %v1361, %v1425
  %v1490 = vadd.f32 %v1362, %v1426
  %v1491 = vadd.f32 %v1363, %v1427
  %v1492 = vadd.f32 %v1364, %v1428
  %v1493 = vadd.f32 %v1365, %v1429
  %v1494 = vadd.f32 %v1366, %v1430
  %v1495 = vadd.f32 %v1367, %v1431
  %v1496 = vadd.f32 %v1368, %v1432
  %v1497 = vadd.f32 %v1369, %v1433
  %v1498 = vadd.f32 %v1370, %v1434
  %v1499 = vadd.f32 %v1371, %v1435
  %v1500 = vadd.f32 %v1372, %v1436
  %v1501 = vadd.f32 %v1373, %v1437
  %v1502 = vadd.f32 %v1374, %v1438
  %v1503 = vadd.f32 %v1375, %v1439
  %v1504 = vadd.f32 %v1376, %v1440
  %v1505 = vadd.f32 %v1377, %v1441
  %v1506 = vadd.f32 %v1378, %v1442
  %v1507 = vadd.f32 %v1379, %v1443
  %v1508 = vadd.f32 %v1380, %v1444
  %v1509 = vadd.f32 %v1381, %v1445
  %v1510 = vadd.f32 %v1382, %v1446
  %v1511 = vadd.f32 %v1383, %v1447
  %v1512 = vadd.f32 %v1384, %v1448
  %v1513 = vadd.f32 %v1385, %v1449
  %v1514 = vadd.f32 %v1386, %v1450
  %v1515 = vadd.f32 %v1387, %v1451
  %v1516 = vadd.f32 %v1388, %v1452
  %v1517 = vadd.f32 %v1389, %v1453
  %v1518 = vadd.f32 %v1390, %v1454
  %v1519 = vadd.f32 %v1391, %v1455
  %v1520 = vadd.f32 %v1392, %v1456
  %v1521 = vadd.f32 %v1393, %v1457
  %v1522 = vadd.f32 %v1394, %v1458
  %v1523 = vadd.f32 %v1395, %v1459
  %v1524 = vadd.f32 %v1396, %v1460
  %v1525 = vadd.f32 %v1397, %v1461
  %v1526 = vadd.f32 %v1398, %v1462
  %v1527 = vadd.f32 %v1399, %v1463
  %v1528 = vadd.f32 %v1400, %v1464
  %v1529 = vadd.f32 %v1401, %v1465
  %v1530 = vadd.f32 %v1402, %v1466
  %v1531 = vadd.f32 %v1403, %v1467
  %v1532 = vadd.f32 %v1404, %v1468
  %v1533 = vadd.f32 %v1405, %v1469
  %v1534 = vadd.f32 %v1406, %v1470
  %v1535 = vadd.f32 %v1407, %v1471
  %v1536 = vadd.f32 %v1408, %v1472
  %v1537 = vadd.f32 %v1409, %v1473
  %v1538 = vadd.f32 %v1410, %v1474
  %v1539 = vadd.f32 %v1411, %v1475
  %v1540 = vadd.f32 %v1412, %v1476
  %v1541 = vadd.f32 %v1413, %v1477
  %v1542 = vadd.f32 %v1414, %v1478
  %v1543 = vadd.f32 %v1415, %v1479
  %v1544 = vadd.f32 %v1416, %v1480
  %v1545 = vadd.f32 %v1417, %v1481
  %v1546 = vadd.f32 %v1418, %v1482
  %v1547 = vadd.f32 %v1419, %v1483
  %v1548 = vadd.f32 %v1420, %v1484
  %v1549 = vadd.f32 %v1421, %v1485
  %v1550 = vadd.f32 %v1422, %v1486
  %v1551 = vadd.f32 %v1423, %v1487
  %v1552 = vmax.f32 %v1488, 0.0
  %v1553 = vmax.f32 %v1489, 0.0
  %v1554 = vmax.f32 %v1490, 0.0
  %v1555 = vmax.f32 %v1491, 0.0
  %v1556 = vmax.f32 %v1492, 0.0
  %v1557 = vmax.f32 %v1493, 0.0
  %v1558 = vmax.f32 %v1494, 0.0
  %v1559 = vmax.f32 %v1495, 0.0
  %v1560 = vmax.f32 %v1496, 0.0
  %v1561 = vmax.f32 %v1497, 0.0
  %v1562 = vmax.f32 %v1498, 0.0
  %v1563 = vmax.f32 %v1499, 0.0
  %v1564 = vmax.f32 %v1500, 0.0
  %v1565 = vmax.f32 %v1501, 0.0
  %v1566 = vmax.f32 %v1502, 0.0
  %v1567 = vmax.f32 %v1503, 0.0
  %v1568 = vmax.f32 %v1504, 0.0
  %v1569 = vmax.f32 %v1505, 0.0
  %v1570 = vmax.f32 %v1506, 0.0
  %v1571 = vmax.f32 %v1507, 0.0
  %v1572 = vmax.f32 %v1508, 0.0
  %v1573 = vmax.f32 %v1509, 0.0
  %v1574 = vmax.f32 %v1510, 0.0
  %v1575 = vmax.f32 %v1511, 0.0
  %v1576 = vmax.f32 %v1512, 0.0
  %v1577 = vmax.f32 %v1513, 0.0
  %v1578 = vmax.f32 %v1514, 0.0
  %v1579 = vmax.f32 %v1515, 0.0
  %v1580 = vmax.f32 %v1516, 0.0
  %v1581 = vmax.f32 %v1517, 0.0
  %v1582 = vmax.f32 %v1518, 0.0
  %v1583 = vmax.f32 %v1519, 0.0
  %v1584 = vmax.f32 %v1520, 0.0
  %v1585 = vmax.f32 %v1521, 0.0
  %v1586 = vmax.f32 %v1522, 0.0
  %v1587 = vmax.f32 %v1523, 0.0
  %v1588 = vmax.f32 %v1524, 0.0
  %v1589 = vmax.f32 %v1525, 0.0
  %v1590 = vmax.f32 %v1526, 0.0
  %v1591 = vmax.f32 %v1527, 0.0
  %v1592 = vmax.f32 %v1528, 0.0
  %v1593 = vmax.f32 %v1529, 0.0
  %v1594 = vmax.f32 %v1530, 0.0
  %v1595 = vmax.f32 %v1531, 0.0
  %v1596 = vmax.f32 %v1532, 0.0
  %v1597 = vmax.f32 %v1533, 0.0
  %v1598 = vmax.f32 %v1534, 0.0
  %v1599 = vmax.f32 %v1535, 0.0
  %v1600 = vmax.f32 %v1536, 0.0
  %v1601 = vmax.f32 %v1537, 0.0
  %v1602 = vmax.f32 %v1538, 0.0
  %v1603 = vmax.f32 %v1539, 0.0
  %v1604 = vmax.f32 %v1540, 0.0
  %v1605 = vmax.f32 %v1541, 0.0
  %v1606 = vmax.f32 %v1542, 0.0
  %v1607 = vmax.f32 %v1543, 0.0
  %v1608 = vmax.f32 %v1544, 0.0
  %v1609 = vmax.f32 %v1545, 0.0
  %v1610 = vmax.f32 %v1546, 0.0
  %v1611 = vmax.f32 %v1547, 0.0
  %v1612 = vmax.f32 %v1548, 0.0
  %v1613 = vmax.f32 %v1549, 0.0
  %v1614 = vmax.f32 %v1550, 0.0
  %v1615 = vmax.f32 %v1551, 0.0
  %1616 = vst.msk [vmem:[%s5] sm:$0xff] %vm445, %v1552
  %1617 = vst.msk [vmem:[%s5 + $0x8] sm:$0xff] %vm445, %v1553
  %1618 = vst.msk [vmem:[%s5 + $0x10] sm:$0xff] %vm445, %v1554
  %1619 = vst.msk [vmem:[%s5 + $0x18] sm:$0xff] %vm445, %v1555
  %1620 = vst.msk [vmem:[%s5 + $0x20] sm:$0xff] %vm445, %v1556
  %1621 = vst.msk [vmem:[%s5 + $0x28] sm:$0xff] %vm445, %v1557
  %1622 = vst.msk [vmem:[%s5 + $0x30] sm:$0xff] %vm445, %v1558
  %1623 = vst.msk [vmem:[%s5 + $0x38] sm:$0xff] %vm445, %v1559
  %1624 = vst.msk [vmem:[%s5 + $0x40] sm:$0xff] %vm445, %v1560
  %1625 = vst.msk [vmem:[%s5 + $0x48] sm:$0xff] %vm445, %v1561
  %1626 = vst.msk [vmem:[%s5 + $0x50] sm:$0xff] %vm445, %v1562
  %1627 = vst.msk [vmem:[%s5 + $0x58] sm:$0xff] %vm445, %v1563
  %1628 = vst.msk [vmem:[%s5 + $0x60] sm:$0xff] %vm445, %v1564
  %1629 = vst.msk [vmem:[%s5 + $0x68] sm:$0xff] %vm445, %v1565
  %1630 = vst.msk [vmem:[%s5 + $0x70] sm:$0xff] %vm445, %v1566
  %1631 = vst.msk [vmem:[%s5 + $0x78] sm:$0xff] %vm445, %v1567
  %1632 = vst.msk [vmem:[%s5 + $0x80] sm:$0xff] %vm445, %v1568
  %1633 = vst.msk [vmem:[%s5 + $0x88] sm:$0xff] %vm445, %v1569
  %1634 = vst.msk [vmem:[%s5 + $0x90] sm:$0xff] %vm445, %v1570
  %1635 = vst.msk [vmem:[%s5 + $0x98] sm:$0xff] %vm445, %v1571
  %1636 = vst.msk [vmem:[%s5 + $0xa0] sm:$0xff] %vm445, %v1572
  %1637 = vst.msk [vmem:[%s5 + $0xa8] sm:$0xff] %vm445, %v1573
  %1638 = vst.msk [vmem:[%s5 + $0xb0] sm:$0xff] %vm445, %v1574
  %1639 = vst.msk [vmem:[%s5 + $0xb8] sm:$0xff] %vm445, %v1575
  %1640 = vst.msk [vmem:[%s5 + $0xc0] sm:$0xff] %vm445, %v1576
  %1641 = vst.msk [vmem:[%s5 + $0xc8] sm:$0xff] %vm445, %v1577
  %1642 = vst.msk [vmem:[%s5 + $0xd0] sm:$0xff] %vm445, %v1578
  %1643 = vst.msk [vmem:[%s5 + $0xd8] sm:$0xff] %vm445, %v1579
  %1644 = vst.msk [vmem:[%s5 + $0xe0] sm:$0xff] %vm445, %v1580
  %1645 = vst.msk [vmem:[%s5 + $0xe8] sm:$0xff] %vm445, %v1581
  %1646 = vst.msk [vmem:[%s5 + $0xf0] sm:$0xff] %vm445, %v1582
  %1647 = vst.msk [vmem:[%s5 + $0xf8] sm:$0xff] %vm445, %v1583
  %1648 = vst.msk [vmem:[%s5 + $0x100] sm:$0xff] %vm445, %v1584
  %1649 = vst.msk [vmem:[%s5 + $0x108] sm:$0xff] %vm445, %v1585
  %1650 = vst.msk [vmem:[%s5 + $0x110] sm:$0xff] %vm445, %v1586
  %1651 = vst.msk [vmem:[%s5 + $0x118] sm:$0xff] %vm445, %v1587
  %1652 = vst.msk [vmem:[%s5 + $0x120] sm:$0xff] %vm445, %v1588
  %1653 = vst.msk [vmem:[%s5 + $0x128] sm:$0xff] %vm445, %v1589
  %1654 = vst.msk [vmem:[%s5 + $0x130] sm:$0xff] %vm445, %v1590
  %1655 = vst.msk [vmem:[%s5 + $0x138] sm:$0xff] %vm445, %v1591
  %1656 = vst.msk [vmem:[%s5 + $0x140] sm:$0xff] %vm445, %v1592
  %1657 = vst.msk [vmem:[%s5 + $0x148] sm:$0xff] %vm445, %v1593
  %1658 = vst.msk [vmem:[%s5 + $0x150] sm:$0xff] %vm445, %v1594
  %1659 = vst.msk [vmem:[%s5 + $0x158] sm:$0xff] %vm445, %v1595
  %1660 = vst.msk [vmem:[%s5 + $0x160] sm:$0xff] %vm445, %v1596
  %1661 = vst.msk [vmem:[%s5 + $0x168] sm:$0xff] %vm445, %v1597
  %1662 = vst.msk [vmem:[%s5 + $0x170] sm:$0xff] %vm445, %v1598
  %1663 = vst.msk [vmem:[%s5 + $0x178] sm:$0xff] %vm445, %v1599
  %1664 = vst.msk [vmem:[%s5 + $0x180] sm:$0xff] %vm445, %v1600
  %1665 = vst.msk [vmem:[%s5 + $0x188] sm:$0xff] %vm445, %v1601
  %1666 = vst.msk [vmem:[%s5 + $0x190] sm:$0xff] %vm445, %v1602
  %1667 = vst.msk [vmem:[%s5 + $0x198] sm:$0xff] %vm445, %v1603
  %1668 = vst.msk [vmem:[%s5 + $0x1a0] sm:$0xff] %vm445, %v1604
  %1669 = vst.msk [vmem:[%s5 + $0x1a8] sm:$0xff] %vm445, %v1605
  %1670 = vst.msk [vmem:[%s5 + $0x1b0] sm:$0xff] %vm445, %v1606
  %1671 = vst.msk [vmem:[%s5 + $0x1b8] sm:$0xff] %vm445, %v1607
  %1672 = vst.msk [vmem:[%s5 + $0x1c0] sm:$0xff] %vm445, %v1608
  %1673 = vst.msk [vmem:[%s5 + $0x1c8] sm:$0xff] %vm445, %v1609
  %1674 = vst.msk [vmem:[%s5 + $0x1d0] sm:$0xff] %vm445, %v1610
  %1675 = vst.msk [vmem:[%s5 + $0x1d8] sm:$0xff] %vm445, %v1611
  %1676 = vst.msk [vmem:[%s5 + $0x1e0] sm:$0xff] %vm445, %v1612
  %1677 = vst.msk [vmem:[%s5 + $0x1e8] sm:$0xff] %vm445, %v1613
  %1678 = vst.msk [vmem:[%s5 + $0x1f0] sm:$0xff] %vm445, %v1614
  %1679 = vst.msk [vmem:[%s5 + $0x1f8] sm:$0xff] %vm445, %v1615
  // Predicated region
  $region22: #{_lambda_.15} parent=0 // pred_check
    _
  $region23: #{_lambda_.15} parent=0 // pred_check_branch
    %1681 = sbr.rel (0) target = $region25
  $region24: #{_lambda_.15} parent=0 // pred_region
    _
  $region25: #{_lambda_.15} parent=0 // pred_fallthru
    _
  // Predicated region
  $region26: #{_lambda_.15} parent=0 // pred_check
    _
  $region27: #{_lambda_.15} parent=0 // pred_check_branch
    %1683 = sbr.rel (0) target = $region29
  $region28: #{_lambda_.15} parent=0 // pred_region
    _
  $region29: #{_lambda_.15} parent=0 // pred_fallthru
    _

// kernel: _lambda_.14
$region0: #{_lambda_.14}
  #allocation0 [shape = 'u32[]', space=smem, size = 0x4, offset = 0x4, fixed_abs, tag = 'smem constant byte address 0x4 - core index']
  #allocation1 [shape = 'u32[72,128]{1,0:T(1,128)}', space=vmem, size = 0x9000, scoped, tag = 'internal scratch']
  %s0 = inlined_call_operand.vmem [shape: bf16[512,144], index: 0, kind: input, shape index: {}]
  %s1 = inlined_call_operand.vmem [shape: bf16[144,16], index: 1, kind: input, shape index: {}]
  %s2 = inlined_call_operand.vmem [shape: f32[1,16], index: 2, kind: input, shape index: {}]
  %s3 = inlined_call_operand.vmem [shape: f32[1,16], index: 3, kind: input, shape index: {}]
  %s4 = inlined_call_operand.vmem [shape: f32[512,16], index: 4, kind: output, shape index: {}]
  %s5 = sld [smem:[#allocation0]]
  $region26: #{_lambda_.14} parent=0
    _
  %s7 = ssub.s32 1, %s5
  %s8 = scalar_select 0, %s7, %s5
  // Predicated region
  $region2: #{_lambda_.14} parent=0 // pred_check
    _
  $region3: #{_lambda_.14} parent=0 // pred_check_branch
    %10 = sbr.rel (0) target = $region5
  $region4: #{_lambda_.14} parent=0 // pred_region
    _
  $region5: #{_lambda_.14} parent=0 // pred_fallthru
    _
  // Predicated region
  $region6: #{_lambda_.14} parent=0 // pred_check
    _
  $region7: #{_lambda_.14} parent=0 // pred_check_branch
    %12 = sbr.rel (0) target = $region9
  $region8: #{_lambda_.14} parent=0 // pred_region
    _
  $region9: #{_lambda_.14} parent=0 // pred_fallthru
    _
  // Predicated region
  $region10: #{_lambda_.14} parent=0 // pred_check
    _
  $region11: #{_lambda_.14} parent=0 // pred_check_branch
    %14 = sbr.rel (0) target = $region13
  $region12: #{_lambda_.14} parent=0 // pred_region
    _
  $region13: #{_lambda_.14} parent=0 // pred_fallthru
    _
  // Predicated region
  $region14: #{_lambda_.14} parent=0 // pred_check
    _
  $region15: #{_lambda_.14} parent=0 // pred_check_branch
    %16 = sbr.rel (0) target = $region17
  $region16: #{_lambda_.14} parent=0 // pred_region
    _
  $region17: #{_lambda_.14} parent=0 // pred_fallthru
    _
  %v18 = vld [vmem:[%s0] sm:$0xff]
  %v19 = vld [vmem:[%s0 + $0x8] sm:$0xff]
  %v20 = vld [vmem:[%s0 + $0x10] sm:$0xff]
  %v21 = vld [vmem:[%s0 + $0x18] sm:$0xff]
  %v22 = vld [vmem:[%s0 + $0x20] sm:$0xff]
  %v23 = vld [vmem:[%s0 + $0x28] sm:$0xff]
  %v24 = vld [vmem:[%s0 + $0x30] sm:$0xff]
  %v25 = vld [vmem:[%s0 + $0x38] sm:$0xff]
  %v26 = vld [vmem:[%s0 + $0x40] sm:$0xff]
  %v27 = vld [vmem:[%s0 + $0x48] sm:$0xff]
  %v28 = vld [vmem:[%s0 + $0x50] sm:$0xff]
  %v29 = vld [vmem:[%s0 + $0x58] sm:$0xff]
  %v30 = vld [vmem:[%s0 + $0x60] sm:$0xff]
  %v31 = vld [vmem:[%s0 + $0x68] sm:$0xff]
  %v32 = vld [vmem:[%s0 + $0x70] sm:$0xff]
  %v33 = vld [vmem:[%s0 + $0x78] sm:$0xff]
  %v34 = vld [vmem:[%s0 + $0x80] sm:$0xff]
  %v35 = vld [vmem:[%s0 + $0x88] sm:$0xff]
  %v36 = vld [vmem:[%s0 + $0x90] sm:$0xff]
  %v37 = vld [vmem:[%s0 + $0x98] sm:$0xff]
  %v38 = vld [vmem:[%s0 + $0xa0] sm:$0xff]
  %v39 = vld [vmem:[%s0 + $0xa8] sm:$0xff]
  %v40 = vld [vmem:[%s0 + $0xb0] sm:$0xff]
  %v41 = vld [vmem:[%s0 + $0xb8] sm:$0xff]
  %v42 = vld [vmem:[%s0 + $0xc0] sm:$0xff]
  %v43 = vld [vmem:[%s0 + $0xc8] sm:$0xff]
  %v44 = vld [vmem:[%s0 + $0xd0] sm:$0xff]
  %v45 = vld [vmem:[%s0 + $0xd8] sm:$0xff]
  %v46 = vld [vmem:[%s0 + $0xe0] sm:$0xff]
  %v47 = vld [vmem:[%s0 + $0xe8] sm:$0xff]
  %v48 = vld [vmem:[%s0 + $0xf0] sm:$0xff]
  %v49 = vld [vmem:[%s0 + $0xf8] sm:$0xff]
  %v50 = vld [vmem:[%s0 + $0x100] sm:$0xff]
  %v51 = vld [vmem:[%s0 + $0x108] sm:$0xff]
  %v52 = vld [vmem:[%s0 + $0x110] sm:$0xff]
  %v53 = vld [vmem:[%s0 + $0x118] sm:$0xff]
  %v54 = vld [vmem:[%s0 + $0x120] sm:$0xff]
  %v55 = vld [vmem:[%s0 + $0x128] sm:$0xff]
  %v56 = vld [vmem:[%s0 + $0x130] sm:$0xff]
  %v57 = vld [vmem:[%s0 + $0x138] sm:$0xff]
  %v58 = vld [vmem:[%s0 + $0x140] sm:$0xff]
  %v59 = vld [vmem:[%s0 + $0x148] sm:$0xff]
  %v60 = vld [vmem:[%s0 + $0x150] sm:$0xff]
  %v61 = vld [vmem:[%s0 + $0x158] sm:$0xff]
  %v62 = vld [vmem:[%s0 + $0x160] sm:$0xff]
  %v63 = vld [vmem:[%s0 + $0x168] sm:$0xff]
  %v64 = vld [vmem:[%s0 + $0x170] sm:$0xff]
  %v65 = vld [vmem:[%s0 + $0x178] sm:$0xff]
  %v66 = vld [vmem:[%s0 + $0x180] sm:$0xff]
  %v67 = vld [vmem:[%s0 + $0x188] sm:$0xff]
  %v68 = vld [vmem:[%s0 + $0x190] sm:$0xff]
  %v69 = vld [vmem:[%s0 + $0x198] sm:$0xff]
  %v70 = vld [vmem:[%s0 + $0x1a0] sm:$0xff]
  %v71 = vld [vmem:[%s0 + $0x1a8] sm:$0xff]
  %v72 = vld [vmem:[%s0 + $0x1b0] sm:$0xff]
  %v73 = vld [vmem:[%s0 + $0x1b8] sm:$0xff]
  %v74 = vld [vmem:[%s0 + $0x1c0] sm:$0xff]
  %v75 = vld [vmem:[%s0 + $0x1c8] sm:$0xff]
  %v76 = vld [vmem:[%s0 + $0x1d0] sm:$0xff]
  %v77 = vld [vmem:[%s0 + $0x1d8] sm:$0xff]
  %v78 = vld [vmem:[%s0 + $0x1e0] sm:$0xff]
  %v79 = vld [vmem:[%s0 + $0x1e8] sm:$0xff]
  %v80 = vld [vmem:[%s0 + $0x1f0] sm:$0xff]
  %v81 = vld [vmem:[%s0 + $0x1f8] sm:$0xff]
  %v82 = vld [vmem:[%s1] sm:$0xf]
  %v83 = vld [vmem:[%s1 + $0x4] sm:$0xf]
  %v84 = vld [vmem:[%s1 + $0x8] sm:$0xf]
  %v85 = vld [vmem:[%s1 + $0xc] sm:$0xf]
  %v86 = vld [vmem:[%s1 + $0x10] sm:$0xf]
  %v87 = vld [vmem:[%s1 + $0x14] sm:$0xf]
  %v88 = vld [vmem:[%s1 + $0x18] sm:$0xf]
  %v89 = vld [vmem:[%s1 + $0x1c] sm:$0xf]
  %v90 = vld [vmem:[%s1 + $0x20] sm:$0xf]
  %v91 = vld [vmem:[%s1 + $0x24] sm:$0xf]
  %v92 = vld [vmem:[%s1 + $0x28] sm:$0xf]
  %v93 = vld [vmem:[%s1 + $0x2c] sm:$0xf]
  %v94 = vld [vmem:[%s1 + $0x30] sm:$0xf]
  %v95 = vld [vmem:[%s1 + $0x34] sm:$0xf]
  %v96 = vld [vmem:[%s1 + $0x38] sm:$0xf]
  %v97 = vld [vmem:[%s1 + $0x3c] sm:$0xf]
  %v98 = vld [vmem:[%s1 + $0x40] sm:$0xf]
  %v99 = vld [vmem:[%s1 + $0x44] sm:$0xf]
  %v164 = vunpack.c.l.b16 %v18
  %v165 = vunpack.c.h.b16 %v18
  %v166 = vunpack.c.l.b16 %v19
  %v167 = vunpack.c.h.b16 %v19
  %v168 = vunpack.c.l.b16 %v20
  %v169 = vunpack.c.h.b16 %v20
  %v170 = vunpack.c.l.b16 %v21
  %v171 = vunpack.c.h.b16 %v21
  %v172 = vunpack.c.l.b16 %v22
  %v173 = vunpack.c.h.b16 %v22
  %v174 = vunpack.c.l.b16 %v23
  %v175 = vunpack.c.h.b16 %v23
  %v176 = vunpack.c.l.b16 %v24
  %v177 = vunpack.c.h.b16 %v24
  %v178 = vunpack.c.l.b16 %v25
  %v179 = vunpack.c.h.b16 %v25
  %v180 = vunpack.c.l.b16 %v26
  %v181 = vunpack.c.h.b16 %v26
  %v182 = vunpack.c.l.b16 %v27
  %v183 = vunpack.c.h.b16 %v27
  %v184 = vunpack.c.l.b16 %v28
  %v185 = vunpack.c.h.b16 %v28
  %v186 = vunpack.c.l.b16 %v29
  %v187 = vunpack.c.h.b16 %v29
  %v188 = vunpack.c.l.b16 %v30
  %v189 = vunpack.c.h.b16 %v30
  %v190 = vunpack.c.l.b16 %v31
  %v191 = vunpack.c.h.b16 %v31
  %v192 = vunpack.c.l.b16 %v32
  %v193 = vunpack.c.h.b16 %v32
  %v194 = vunpack.c.l.b16 %v33
  %v195 = vunpack.c.h.b16 %v33
  %v196 = vunpack.c.l.b16 %v34
  %v197 = vunpack.c.h.b16 %v34
  %v198 = vunpack.c.l.b16 %v35
  %v199 = vunpack.c.h.b16 %v35
  %v200 = vunpack.c.l.b16 %v36
  %v201 = vunpack.c.h.b16 %v36
  %v202 = vunpack.c.l.b16 %v37
  %v203 = vunpack.c.h.b16 %v37
  %v204 = vunpack.c.l.b16 %v38
  %v205 = vunpack.c.h.b16 %v38
  %v206 = vunpack.c.l.b16 %v39
  %v207 = vunpack.c.h.b16 %v39
  %v208 = vunpack.c.l.b16 %v40
  %v209 = vunpack.c.h.b16 %v40
  %v210 = vunpack.c.l.b16 %v41
  %v211 = vunpack.c.h.b16 %v41
  %v212 = vunpack.c.l.b16 %v42
  %v213 = vunpack.c.h.b16 %v42
  %v214 = vunpack.c.l.b16 %v43
  %v215 = vunpack.c.h.b16 %v43
  %v216 = vunpack.c.l.b16 %v44
  %v217 = vunpack.c.h.b16 %v44
  %v218 = vunpack.c.l.b16 %v45
  %v219 = vunpack.c.h.b16 %v45
  %v220 = vunpack.c.l.b16 %v46
  %v221 = vunpack.c.h.b16 %v46
  %v222 = vunpack.c.l.b16 %v47
  %v223 = vunpack.c.h.b16 %v47
  %v224 = vunpack.c.l.b16 %v48
  %v225 = vunpack.c.h.b16 %v48
  %v226 = vunpack.c.l.b16 %v49
  %v227 = vunpack.c.h.b16 %v49
  %v228 = vunpack.c.l.b16 %v50
  %v229 = vunpack.c.h.b16 %v50
  %v230 = vunpack.c.l.b16 %v51
  %v231 = vunpack.c.h.b16 %v51
  %v232 = vunpack.c.l.b16 %v52
  %v233 = vunpack.c.h.b16 %v52
  %v234 = vunpack.c.l.b16 %v53
  %v235 = vunpack.c.h.b16 %v53
  %v236 = vunpack.c.l.b16 %v54
  %v237 = vunpack.c.h.b16 %v54
  %v238 = vunpack.c.l.b16 %v55
  %v239 = vunpack.c.h.b16 %v55
  %v240 = vunpack.c.l.b16 %v56
  %v241 = vunpack.c.h.b16 %v56
  %v242 = vunpack.c.l.b16 %v57
  %v243 = vunpack.c.h.b16 %v57
  %v244 = vunpack.c.l.b16 %v58
  %v245 = vunpack.c.h.b16 %v58
  %v246 = vunpack.c.l.b16 %v59
  %v247 = vunpack.c.h.b16 %v59
  %v248 = vunpack.c.l.b16 %v60
  %v249 = vunpack.c.h.b16 %v60
  %v250 = vunpack.c.l.b16 %v61
  %v251 = vunpack.c.h.b16 %v61
  %v252 = vunpack.c.l.b16 %v62
  %v253 = vunpack.c.h.b16 %v62
  %v254 = vunpack.c.l.b16 %v63
  %v255 = vunpack.c.h.b16 %v63
  %v256 = vunpack.c.l.b16 %v64
  %v257 = vunpack.c.h.b16 %v64
  %v258 = vunpack.c.l.b16 %v65
  %v259 = vunpack.c.h.b16 %v65
  %v260 = vunpack.c.l.b16 %v66
  %v261 = vunpack.c.h.b16 %v66
  %v262 = vunpack.c.l.b16 %v67
  %v263 = vunpack.c.h.b16 %v67
  %v264 = vunpack.c.l.b16 %v68
  %v265 = vunpack.c.h.b16 %v68
  %v266 = vunpack.c.l.b16 %v69
  %v267 = vunpack.c.h.b16 %v69
  %v268 = vunpack.c.l.b16 %v70
  %v269 = vunpack.c.h.b16 %v70
  %v270 = vunpack.c.l.b16 %v71
  %v271 = vunpack.c.h.b16 %v71
  %v272 = vunpack.c.l.b16 %v72
  %v273 = vunpack.c.h.b16 %v72
  %v274 = vunpack.c.l.b16 %v73
  %v275 = vunpack.c.h.b16 %v73
  %v276 = vunpack.c.l.b16 %v74
  %v277 = vunpack.c.h.b16 %v74
  %v278 = vunpack.c.l.b16 %v75
  %v279 = vunpack.c.h.b16 %v75
  %v280 = vunpack.c.l.b16 %v76
  %v281 = vunpack.c.h.b16 %v76
  %v282 = vunpack.c.l.b16 %v77
  %v283 = vunpack.c.h.b16 %v77
  %v284 = vunpack.c.l.b16 %v78
  %v285 = vunpack.c.h.b16 %v78
  %v286 = vunpack.c.l.b16 %v79
  %v287 = vunpack.c.h.b16 %v79
  %v288 = vunpack.c.l.b16 %v80
  %v289 = vunpack.c.h.b16 %v80
  %v290 = vunpack.c.l.b16 %v81
  %v291 = vunpack.c.h.b16 %v81
  %v292 = vpack.c.b16 %v166, %v164
  %v293 = vpack.c.b16 %v167, %v165
  %v294 = vpack.c.b16 %v170, %v168
  %v295 = vpack.c.b16 %v171, %v169
  %v296 = vpack.c.b16 %v174, %v172
  %v297 = vpack.c.b16 %v175, %v173
  %v298 = vpack.c.b16 %v178, %v176
  %v299 = vpack.c.b16 %v179, %v177
  %v300 = vpack.c.b16 %v182, %v180
  %v301 = vpack.c.b16 %v183, %v181
  %v302 = vpack.c.b16 %v186, %v184
  %v303 = vpack.c.b16 %v187, %v185
  %v304 = vpack.c.b16 %v190, %v188
  %v305 = vpack.c.b16 %v191, %v189
  %v306 = vpack.c.b16 %v194, %v192
  %v307 = vpack.c.b16 %v195, %v193
  %v308 = vpack.c.b16 %v198, %v196
  %v309 = vpack.c.b16 %v199, %v197
  %v310 = vpack.c.b16 %v202, %v200
  %v311 = vpack.c.b16 %v203, %v201
  %v312 = vpack.c.b16 %v206, %v204
  %v313 = vpack.c.b16 %v207, %v205
  %v314 = vpack.c.b16 %v210, %v208
  %v315 = vpack.c.b16 %v211, %v209
  %v316 = vpack.c.b16 %v214, %v212
  %v317 = vpack.c.b16 %v215, %v213
  %v318 = vpack.c.b16 %v218, %v216
  %v319 = vpack.c.b16 %v219, %v217
  %v320 = vpack.c.b16 %v222, %v220
  %v321 = vpack.c.b16 %v223, %v221
  %v322 = vpack.c.b16 %v226, %v224
  %v323 = vpack.c.b16 %v227, %v225
  %v324 = vpack.c.b16 %v230, %v228
  %v325 = vpack.c.b16 %v231, %v229
  %v326 = vpack.c.b16 %v234, %v232
  %v327 = vpack.c.b16 %v235, %v233
  %v328 = vpack.c.b16 %v238, %v236
  %v329 = vpack.c.b16 %v239, %v237
  %v330 = vpack.c.b16 %v242, %v240
  %v331 = vpack.c.b16 %v243, %v241
  %v332 = vpack.c.b16 %v246, %v244
  %v333 = vpack.c.b16 %v247, %v245
  %v334 = vpack.c.b16 %v250, %v248
  %v335 = vpack.c.b16 %v251, %v249
  %v336 = vpack.c.b16 %v254, %v252
  %v337 = vpack.c.b16 %v255, %v253
  %v338 = vpack.c.b16 %v258, %v256
  %v339 = vpack.c.b16 %v259, %v257
  %v340 = vpack.c.b16 %v262, %v260
  %v341 = vpack.c.b16 %v263, %v261
  %v342 = vpack.c.b16 %v266, %v264
  %v343 = vpack.c.b16 %v267, %v265
  %v344 = vpack.c.b16 %v270, %v268
  %v345 = vpack.c.b16 %v271, %v269
  %v346 = vpack.c.b16 %v274, %v272
  %v347 = vpack.c.b16 %v275, %v273
  %v348 = vpack.c.b16 %v278, %v276
  %v349 = vpack.c.b16 %v279, %v277
  %v350 = vpack.c.b16 %v282, %v280
  %v351 = vpack.c.b16 %v283, %v281
  %v352 = vpack.c.b16 %v286, %v284
  %v353 = vpack.c.b16 %v287, %v285
  %v354 = vpack.c.b16 %v290, %v288
  %v355 = vpack.c.b16 %v291, %v289
  %v406 = vunpack.c.l.b16 %v82
  %v407 = vunpack.c.l.b16 %v83
  %v408 = vunpack.c.l.b16 %v84
  %v409 = vunpack.c.l.b16 %v85
  %v410 = vunpack.c.l.b16 %v86
  %v411 = vunpack.c.l.b16 %v87
  %v412 = vunpack.c.l.b16 %v88
  %v413 = vunpack.c.l.b16 %v89
  %v414 = vunpack.c.l.b16 %v90
  %v415 = vunpack.c.l.b16 %v91
  %v416 = vunpack.c.l.b16 %v92
  %v417 = vunpack.c.l.b16 %v93
  %v418 = vunpack.c.l.b16 %v94
  %v419 = vunpack.c.l.b16 %v95
  %v420 = vunpack.c.l.b16 %v96
  %v421 = vunpack.c.l.b16 %v97
  %v422 = vunpack.c.l.b16 %v98
  %v423 = vunpack.c.l.b16 %v99
  %v424 = vpack.c.b16 %v407, %v406
  %v425 = vpack.c.b16 %v409, %v408
  %v426 = vpack.c.b16 %v411, %v410
  %v427 = vpack.c.b16 %v413, %v412
  %v428 = vpack.c.b16 %v415, %v414
  %v429 = vpack.c.b16 %v417, %v416
  %v430 = vpack.c.b16 %v419, %v418
  %v431 = vpack.c.b16 %v421, %v420
  %v432 = vpack.c.b16 %v423, %v422
  %vm442 = vcmask 130048
  %v444 = vsel %vm442, %v293, 0
  %v447 = vsel %vm442, %v295, 0
  %v450 = vsel %vm442, %v297, 0
  %v453 = vsel %vm442, %v299, 0
  %v456 = vsel %vm442, %v301, 0
  %v459 = vsel %vm442, %v303, 0
  %v462 = vsel %vm442, %v305, 0
  %v465 = vsel %vm442, %v307, 0
  %v468 = vsel %vm442, %v309, 0
  %v471 = vsel %vm442, %v311, 0
  %v474 = vsel %vm442, %v313, 0
  %v477 = vsel %vm442, %v315, 0
  %v480 = vsel %vm442, %v317, 0
  %v483 = vsel %vm442, %v319, 0
  %v486 = vsel %vm442, %v321, 0
  %v489 = vsel %vm442, %v323, 0
  %v492 = vsel %vm442, %v325, 0
  %v495 = vsel %vm442, %v327, 0
  %v498 = vsel %vm442, %v329, 0
  %v501 = vsel %vm442, %v331, 0
  %v504 = vsel %vm442, %v333, 0
  %v507 = vsel %vm442, %v335, 0
  %v510 = vsel %vm442, %v337, 0
  %v513 = vsel %vm442, %v339, 0
  %v516 = vsel %vm442, %v341, 0
  %v519 = vsel %vm442, %v343, 0
  %v522 = vsel %vm442, %v345, 0
  %v525 = vsel %vm442, %v347, 0
  %v528 = vsel %vm442, %v349, 0
  %v531 = vsel %vm442, %v351, 0
  %v534 = vsel %vm442, %v353, 0
  %v537 = vsel %vm442, %v355, 0
  %539 = vmatpush.bf16.msra.mxu0 %v431
  %540 = vmatpush.bf16.msra.mxu0 %v430
  %541 = vmatpush.bf16.msra.mxu0 %v429
  %542 = vmatpush.bf16.msra.mxu0 %v428
  %543 = vmatpush.bf16.msra.mxu0 %v427
  %544 = vmatpush.bf16.msra.mxu0 %v426
  %545 = vmatpush.bf16.msra.mxu0 %v425
  %546 = vmatpush.bf16.msra.mxu0 %v424
  %547 = vmatmul.bf16.gmra.mxu0 %v292
  %v548 = vpop.f32.mrf.mxu0
  %v549 = vadd.f32 0.0, %v548
  %v550 = vpop.f32.mrf.mxu0
  %v551 = vadd.f32 0.0, %v550
  %552 = vmatmul.bf16.gmra.mxu0 %v294
  %v553 = vpop.f32.mrf.mxu0
  %v554 = vadd.f32 0.0, %v553
  %v555 = vpop.f32.mrf.mxu0
  %v556 = vadd.f32 0.0, %v555
  %557 = vmatmul.bf16.gmra.mxu0 %v296
  %v558 = vpop.f32.mrf.mxu0
  %v559 = vadd.f32 0.0, %v558
  %v560 = vpop.f32.mrf.mxu0
  %v561 = vadd.f32 0.0, %v560
  %562 = vmatmul.bf16.gmra.mxu0 %v298
  %v563 = vpop.f32.mrf.mxu0
  %v564 = vadd.f32 0.0, %v563
  %v565 = vpop.f32.mrf.mxu0
  %v566 = vadd.f32 0.0, %v565
  %567 = vmatmul.bf16.gmra.mxu0 %v300
  %v568 = vpop.f32.mrf.mxu0
  %v569 = vadd.f32 0.0, %v568
  %v570 = vpop.f32.mrf.mxu0
  %v571 = vadd.f32 0.0, %v570
  %572 = vmatmul.bf16.gmra.mxu0 %v302
  %v573 = vpop.f32.mrf.mxu0
  %v574 = vadd.f32 0.0, %v573
  %v575 = vpop.f32.mrf.mxu0
  %v576 = vadd.f32 0.0, %v575
  %577 = vmatmul.bf16.gmra.mxu0 %v304
  %v578 = vpop.f32.mrf.mxu0
  %v579 = vadd.f32 0.0, %v578
  %v580 = vpop.f32.mrf.mxu0
  %v581 = vadd.f32 0.0, %v580
  %582 = vmatmul.bf16.gmra.mxu0 %v306
  %v583 = vpop.f32.mrf.mxu0
  %v584 = vadd.f32 0.0, %v583
  %v585 = vpop.f32.mrf.mxu0
  %v586 = vadd.f32 0.0, %v585
  %587 = vmatmul.bf16.gmra.mxu0 %v308
  %v588 = vpop.f32.mrf.mxu0
  %v589 = vadd.f32 0.0, %v588
  %v590 = vpop.f32.mrf.mxu0
  %v591 = vadd.f32 0.0, %v590
  %592 = vmatmul.bf16.gmra.mxu0 %v310
  %v593 = vpop.f32.mrf.mxu0
  %v594 = vadd.f32 0.0, %v593
  %v595 = vpop.f32.mrf.mxu0
  %v596 = vadd.f32 0.0, %v595
  %597 = vmatmul.bf16.gmra.mxu0 %v312
  %v598 = vpop.f32.mrf.mxu0
  %v599 = vadd.f32 0.0, %v598
  %v600 = vpop.f32.mrf.mxu0
  %v601 = vadd.f32 0.0, %v600
  %602 = vmatmul.bf16.gmra.mxu0 %v314
  %v603 = vpop.f32.mrf.mxu0
  %v604 = vadd.f32 0.0, %v603
  %v605 = vpop.f32.mrf.mxu0
  %v606 = vadd.f32 0.0, %v605
  %607 = vmatmul.bf16.gmra.mxu0 %v316
  %v608 = vpop.f32.mrf.mxu0
  %v609 = vadd.f32 0.0, %v608
  %v610 = vpop.f32.mrf.mxu0
  %v611 = vadd.f32 0.0, %v610
  %612 = vmatmul.bf16.gmra.mxu0 %v318
  %v613 = vpop.f32.mrf.mxu0
  %v614 = vadd.f32 0.0, %v613
  %v615 = vpop.f32.mrf.mxu0
  %v616 = vadd.f32 0.0, %v615
  %617 = vmatmul.bf16.gmra.mxu0 %v320
  %v618 = vpop.f32.mrf.mxu0
  %v619 = vadd.f32 0.0, %v618
  %v620 = vpop.f32.mrf.mxu0
  %v621 = vadd.f32 0.0, %v620
  %622 = vmatmul.bf16.gmra.mxu0 %v322
  %v623 = vpop.f32.mrf.mxu0
  %v624 = vadd.f32 0.0, %v623
  %v625 = vpop.f32.mrf.mxu0
  %v626 = vadd.f32 0.0, %v625
  %627 = vmatmul.bf16.gmra.mxu0 %v324
  %v628 = vpop.f32.mrf.mxu0
  %v629 = vadd.f32 0.0, %v628
  %v630 = vpop.f32.mrf.mxu0
  %v631 = vadd.f32 0.0, %v630
  %632 = vmatmul.bf16.gmra.mxu0 %v326
  %v633 = vpop.f32.mrf.mxu0
  %v634 = vadd.f32 0.0, %v633
  %v635 = vpop.f32.mrf.mxu0
  %v636 = vadd.f32 0.0, %v635
  %637 = vmatmul.bf16.gmra.mxu0 %v328
  %v638 = vpop.f32.mrf.mxu0
  %v639 = vadd.f32 0.0, %v638
  %v640 = vpop.f32.mrf.mxu0
  %v641 = vadd.f32 0.0, %v640
  %642 = vmatmul.bf16.gmra.mxu0 %v330
  %v643 = vpop.f32.mrf.mxu0
  %v644 = vadd.f32 0.0, %v643
  %v645 = vpop.f32.mrf.mxu0
  %v646 = vadd.f32 0.0, %v645
  %647 = vmatmul.bf16.gmra.mxu0 %v332
  %v648 = vpop.f32.mrf.mxu0
  %v649 = vadd.f32 0.0, %v648
  %v650 = vpop.f32.mrf.mxu0
  %v651 = vadd.f32 0.0, %v650
  %652 = vmatmul.bf16.gmra.mxu0 %v334
  %v653 = vpop.f32.mrf.mxu0
  %v654 = vadd.f32 0.0, %v653
  %v655 = vpop.f32.mrf.mxu0
  %v656 = vadd.f32 0.0, %v655
  %657 = vmatmul.bf16.gmra.mxu0 %v336
  %v658 = vpop.f32.mrf.mxu0
  %v659 = vadd.f32 0.0, %v658
  %v660 = vpop.f32.mrf.mxu0
  %v661 = vadd.f32 0.0, %v660
  %662 = vmatmul.bf16.gmra.mxu0 %v338
  %v663 = vpop.f32.mrf.mxu0
  %v664 = vadd.f32 0.0, %v663
  %v665 = vpop.f32.mrf.mxu0
  %v666 = vadd.f32 0.0, %v665
  %667 = vmatmul.bf16.gmra.mxu0 %v340
  %v668 = vpop.f32.mrf.mxu0
  %v669 = vadd.f32 0.0, %v668
  %v670 = vpop.f32.mrf.mxu0
  %v671 = vadd.f32 0.0, %v670
  %672 = vmatmul.bf16.gmra.mxu0 %v342
  %v673 = vpop.f32.mrf.mxu0
  %v674 = vadd.f32 0.0, %v673
  %v675 = vpop.f32.mrf.mxu0
  %v676 = vadd.f32 0.0, %v675
  %677 = vmatmul.bf16.gmra.mxu0 %v344
  %v678 = vpop.f32.mrf.mxu0
  %v679 = vadd.f32 0.0, %v678
  %v680 = vpop.f32.mrf.mxu0
  %v681 = vadd.f32 0.0, %v680
  %682 = vmatmul.bf16.gmra.mxu0 %v346
  %v683 = vpop.f32.mrf.mxu0
  %v684 = vadd.f32 0.0, %v683
  %v685 = vpop.f32.mrf.mxu0
  %v686 = vadd.f32 0.0, %v685
  %687 = vmatmul.bf16.gmra.mxu0 %v348
  %v688 = vpop.f32.mrf.mxu0
  %v689 = vadd.f32 0.0, %v688
  %v690 = vpop.f32.mrf.mxu0
  %v691 = vadd.f32 0.0, %v690
  %692 = vmatmul.bf16.gmra.mxu0 %v350
  %v693 = vpop.f32.mrf.mxu0
  %v694 = vadd.f32 0.0, %v693
  %v695 = vpop.f32.mrf.mxu0
  %v696 = vadd.f32 0.0, %v695
  %697 = vmatmul.bf16.gmra.mxu0 %v352
  %v698 = vpop.f32.mrf.mxu0
  %v699 = vadd.f32 0.0, %v698
  %v700 = vpop.f32.mrf.mxu0
  %v701 = vadd.f32 0.0, %v700
  %702 = vmatmul.bf16.gmra.mxu0 %v354
  %v703 = vpop.f32.mrf.mxu0
  %v704 = vadd.f32 0.0, %v703
  %v705 = vpop.f32.mrf.mxu0
  %v706 = vadd.f32 0.0, %v705
  %707 = vdwg.mxu0
  %708 = vmatpush.bf16.msra.mxu0 0
  %709 = vmatpush.bf16.msra.mxu0 0
  %710 = vmatpush.bf16.msra.mxu0 0
  %711 = vmatpush.bf16.msra.mxu0 0
  %712 = vmatpush.bf16.msra.mxu0 0
  %713 = vmatpush.bf16.msra.mxu0 0
  %714 = vmatpush.bf16.msra.mxu0 0
  %715 = vmatpush.bf16.msra.mxu0 %v432
  %716 = vmatmul.bf16.gmra.mxu0 %v444
  %v717 = vpop.f32.mrf.mxu0
  %v718 = vadd.f32 %v549, %v717
  %v719 = vpop.f32.mrf.mxu0
  %v720 = vadd.f32 %v551, %v719
  %721 = vmatmul.bf16.gmra.mxu0 %v447
  %v722 = vpop.f32.mrf.mxu0
  %v723 = vadd.f32 %v554, %v722
  %v724 = vpop.f32.mrf.mxu0
  %v725 = vadd.f32 %v556, %v724
  %726 = vmatmul.bf16.gmra.mxu0 %v450
  %v727 = vpop.f32.mrf.mxu0
  %v728 = vadd.f32 %v559, %v727
  %v729 = vpop.f32.mrf.mxu0
  %v730 = vadd.f32 %v561, %v729
  %731 = vmatmul.bf16.gmra.mxu0 %v453
  %v732 = vpop.f32.mrf.mxu0
  %v733 = vadd.f32 %v564, %v732
  %v734 = vpop.f32.mrf.mxu0
  %v735 = vadd.f32 %v566, %v734
  %736 = vmatmul.bf16.gmra.mxu0 %v456
  %v737 = vpop.f32.mrf.mxu0
  %v738 = vadd.f32 %v569, %v737
  %v739 = vpop.f32.mrf.mxu0
  %v740 = vadd.f32 %v571, %v739
  %741 = vmatmul.bf16.gmra.mxu0 %v459
  %v742 = vpop.f32.mrf.mxu0
  %v743 = vadd.f32 %v574, %v742
  %v744 = vpop.f32.mrf.mxu0
  %v745 = vadd.f32 %v576, %v744
  %746 = vmatmul.bf16.gmra.mxu0 %v462
  %v747 = vpop.f32.mrf.mxu0
  %v748 = vadd.f32 %v579, %v747
  %v749 = vpop.f32.mrf.mxu0
  %v750 = vadd.f32 %v581, %v749
  %751 = vmatmul.bf16.gmra.mxu0 %v465
  %v752 = vpop.f32.mrf.mxu0
  %v753 = vadd.f32 %v584, %v752
  %v754 = vpop.f32.mrf.mxu0
  %v755 = vadd.f32 %v586, %v754
  %756 = vmatmul.bf16.gmra.mxu0 %v468
  %v757 = vpop.f32.mrf.mxu0
  %v758 = vadd.f32 %v589, %v757
  %v759 = vpop.f32.mrf.mxu0
  %v760 = vadd.f32 %v591, %v759
  %761 = vmatmul.bf16.gmra.mxu0 %v471
  %v762 = vpop.f32.mrf.mxu0
  %v763 = vadd.f32 %v594, %v762
  %v764 = vpop.f32.mrf.mxu0
  %v765 = vadd.f32 %v596, %v764
  %766 = vmatmul.bf16.gmra.mxu0 %v474
  %v767 = vpop.f32.mrf.mxu0
  %v768 = vadd.f32 %v599, %v767
  %v769 = vpop.f32.mrf.mxu0
  %v770 = vadd.f32 %v601, %v769
  %771 = vmatmul.bf16.gmra.mxu0 %v477
  %v772 = vpop.f32.mrf.mxu0
  %v773 = vadd.f32 %v604, %v772
  %v774 = vpop.f32.mrf.mxu0
  %v775 = vadd.f32 %v606, %v774
  %776 = vmatmul.bf16.gmra.mxu0 %v480
  %v777 = vpop.f32.mrf.mxu0
  %v778 = vadd.f32 %v609, %v777
  %v779 = vpop.f32.mrf.mxu0
  %v780 = vadd.f32 %v611, %v779
  %781 = vmatmul.bf16.gmra.mxu0 %v483
  %v782 = vpop.f32.mrf.mxu0
  %v783 = vadd.f32 %v614, %v782
  %v784 = vpop.f32.mrf.mxu0
  %v785 = vadd.f32 %v616, %v784
  %786 = vmatmul.bf16.gmra.mxu0 %v486
  %v787 = vpop.f32.mrf.mxu0
  %v788 = vadd.f32 %v619, %v787
  %v789 = vpop.f32.mrf.mxu0
  %v790 = vadd.f32 %v621, %v789
  %791 = vmatmul.bf16.gmra.mxu0 %v489
  %v792 = vpop.f32.mrf.mxu0
  %v793 = vadd.f32 %v624, %v792
  %v794 = vpop.f32.mrf.mxu0
  %v795 = vadd.f32 %v626, %v794
  %796 = vmatmul.bf16.gmra.mxu0 %v492
  %v797 = vpop.f32.mrf.mxu0
  %v798 = vadd.f32 %v629, %v797
  %v799 = vpop.f32.mrf.mxu0
  %v800 = vadd.f32 %v631, %v799
  %801 = vmatmul.bf16.gmra.mxu0 %v495
  %v802 = vpop.f32.mrf.mxu0
  %v803 = vadd.f32 %v634, %v802
  %v804 = vpop.f32.mrf.mxu0
  %v805 = vadd.f32 %v636, %v804
  %806 = vmatmul.bf16.gmra.mxu0 %v498
  %v807 = vpop.f32.mrf.mxu0
  %v808 = vadd.f32 %v639, %v807
  %v809 = vpop.f32.mrf.mxu0
  %v810 = vadd.f32 %v641, %v809
  %811 = vmatmul.bf16.gmra.mxu0 %v501
  %v812 = vpop.f32.mrf.mxu0
  %v813 = vadd.f32 %v644, %v812
  %v814 = vpop.f32.mrf.mxu0
  %v815 = vadd.f32 %v646, %v814
  %816 = vmatmul.bf16.gmra.mxu0 %v504
  %v817 = vpop.f32.mrf.mxu0
  %v818 = vadd.f32 %v649, %v817
  %v819 = vpop.f32.mrf.mxu0
  %v820 = vadd.f32 %v651, %v819
  %821 = vmatmul.bf16.gmra.mxu0 %v507
  %v822 = vpop.f32.mrf.mxu0
  %v823 = vadd.f32 %v654, %v822
  %v824 = vpop.f32.mrf.mxu0
  %v825 = vadd.f32 %v656, %v824
  %826 = vmatmul.bf16.gmra.mxu0 %v510
  %v827 = vpop.f32.mrf.mxu0
  %v828 = vadd.f32 %v659, %v827
  %v829 = vpop.f32.mrf.mxu0
  %v830 = vadd.f32 %v661, %v829
  %831 = vmatmul.bf16.gmra.mxu0 %v513
  %v832 = vpop.f32.mrf.mxu0
  %v833 = vadd.f32 %v664, %v832
  %v834 = vpop.f32.mrf.mxu0
  %v835 = vadd.f32 %v666, %v834
  %836 = vmatmul.bf16.gmra.mxu0 %v516
  %v837 = vpop.f32.mrf.mxu0
  %v838 = vadd.f32 %v669, %v837
  %v839 = vpop.f32.mrf.mxu0
  %v840 = vadd.f32 %v671, %v839
  %841 = vmatmul.bf16.gmra.mxu0 %v519
  %v842 = vpop.f32.mrf.mxu0
  %v843 = vadd.f32 %v674, %v842
  %v844 = vpop.f32.mrf.mxu0
  %v845 = vadd.f32 %v676, %v844
  %846 = vmatmul.bf16.gmra.mxu0 %v522
  %v847 = vpop.f32.mrf.mxu0
  %v848 = vadd.f32 %v679, %v847
  %v849 = vpop.f32.mrf.mxu0
  %v850 = vadd.f32 %v681, %v849
  %851 = vmatmul.bf16.gmra.mxu0 %v525
  %v852 = vpop.f32.mrf.mxu0
  %v853 = vadd.f32 %v684, %v852
  %v854 = vpop.f32.mrf.mxu0
  %v855 = vadd.f32 %v686, %v854
  %856 = vmatmul.bf16.gmra.mxu0 %v528
  %v857 = vpop.f32.mrf.mxu0
  %v858 = vadd.f32 %v689, %v857
  %v859 = vpop.f32.mrf.mxu0
  %v860 = vadd.f32 %v691, %v859
  %861 = vmatmul.bf16.gmra.mxu0 %v531
  %v862 = vpop.f32.mrf.mxu0
  %v863 = vadd.f32 %v694, %v862
  %v864 = vpop.f32.mrf.mxu0
  %v865 = vadd.f32 %v696, %v864
  %866 = vmatmul.bf16.gmra.mxu0 %v534
  %v867 = vpop.f32.mrf.mxu0
  %v868 = vadd.f32 %v699, %v867
  %v869 = vpop.f32.mrf.mxu0
  %v870 = vadd.f32 %v701, %v869
  %871 = vmatmul.bf16.gmra.mxu0 %v537
  %v872 = vpop.f32.mrf.mxu0
  %v873 = vadd.f32 %v704, %v872
  %v874 = vpop.f32.mrf.mxu0
  %v875 = vadd.f32 %v706, %v874
  %876 = vdwg.mxu0
  %v877 = vsel %vm442, %v718, 0.0
  %v878 = vsel %vm442, %v720, 0.0
  %v879 = vadd.f32 %v877, %v878
  %v880 = vsel %vm442, %v723, 0.0
  %v881 = vadd.f32 %v879, %v880
  %v882 = vsel %vm442, %v725, 0.0
  %v883 = vadd.f32 %v881, %v882
  %v884 = vsel %vm442, %v728, 0.0
  %v885 = vadd.f32 %v883, %v884
  %v886 = vsel %vm442, %v730, 0.0
  %v887 = vadd.f32 %v885, %v886
  %v888 = vsel %vm442, %v733, 0.0
  %v889 = vadd.f32 %v887, %v888
  %v890 = vsel %vm442, %v735, 0.0
  %v891 = vadd.f32 %v889, %v890
  %v892 = vsel %vm442, %v738, 0.0
  %v893 = vadd.f32 %v891, %v892
  %v894 = vsel %vm442, %v740, 0.0
  %v895 = vadd.f32 %v893, %v894
  %v896 = vsel %vm442, %v743, 0.0
  %v897 = vadd.f32 %v895, %v896
  %v898 = vsel %vm442, %v745, 0.0
  %v899 = vadd.f32 %v897, %v898
  %v900 = vsel %vm442, %v748, 0.0
  %v901 = vadd.f32 %v899, %v900
  %v902 = vsel %vm442, %v750, 0.0
  %v903 = vadd.f32 %v901, %v902
  %v904 = vsel %vm442, %v753, 0.0
  %v905 = vadd.f32 %v903, %v904
  %v906 = vsel %vm442, %v755, 0.0
  %v907 = vadd.f32 %v905, %v906
  %v908 = vsel %vm442, %v758, 0.0
  %v909 = vadd.f32 %v907, %v908
  %v910 = vsel %vm442, %v760, 0.0
  %v911 = vadd.f32 %v909, %v910
  %v912 = vsel %vm442, %v763, 0.0
  %v913 = vadd.f32 %v911, %v912
  %v914 = vsel %vm442, %v765, 0.0
  %v915 = vadd.f32 %v913, %v914
  %v916 = vsel %vm442, %v768, 0.0
  %v917 = vadd.f32 %v915, %v916
  %v918 = vsel %vm442, %v770, 0.0
  %v919 = vadd.f32 %v917, %v918
  %v920 = vsel %vm442, %v773, 0.0
  %v921 = vadd.f32 %v919, %v920
  %v922 = vsel %vm442, %v775, 0.0
  %v923 = vadd.f32 %v921, %v922
  %v924 = vsel %vm442, %v778, 0.0
  %v925 = vadd.f32 %v923, %v924
  %v926 = vsel %vm442, %v780, 0.0
  %v927 = vadd.f32 %v925, %v926
  %v928 = vsel %vm442, %v783, 0.0
  %v929 = vadd.f32 %v927, %v928
  %v930 = vsel %vm442, %v785, 0.0
  %v931 = vadd.f32 %v929, %v930
  %v932 = vsel %vm442, %v788, 0.0
  %v933 = vadd.f32 %v931, %v932
  %v934 = vsel %vm442, %v790, 0.0
  %v935 = vadd.f32 %v933, %v934
  %v936 = vsel %vm442, %v793, 0.0
  %v937 = vadd.f32 %v935, %v936
  %v938 = vsel %vm442, %v795, 0.0
  %v939 = vadd.f32 %v937, %v938
  %v940 = vsel %vm442, %v798, 0.0
  %v941 = vadd.f32 %v939, %v940
  %v942 = vsel %vm442, %v800, 0.0
  %v943 = vadd.f32 %v941, %v942
  %v944 = vsel %vm442, %v803, 0.0
  %v945 = vadd.f32 %v943, %v944
  %v946 = vsel %vm442, %v805, 0.0
  %v947 = vadd.f32 %v945, %v946
  %v948 = vsel %vm442, %v808, 0.0
  %v949 = vadd.f32 %v947, %v948
  %v950 = vsel %vm442, %v810, 0.0
  %v951 = vadd.f32 %v949, %v950
  %v952 = vsel %vm442, %v813, 0.0
  %v953 = vadd.f32 %v951, %v952
  %v954 = vsel %vm442, %v815, 0.0
  %v955 = vadd.f32 %v953, %v954
  %v956 = vsel %vm442, %v818, 0.0
  %v957 = vadd.f32 %v955, %v956
  %v958 = vsel %vm442, %v820, 0.0
  %v959 = vadd.f32 %v957, %v958
  %v960 = vsel %vm442, %v823, 0.0
  %v961 = vadd.f32 %v959, %v960
  %v962 = vsel %vm442, %v825, 0.0
  %v963 = vadd.f32 %v961, %v962
  %v964 = vsel %vm442, %v828, 0.0
  %v965 = vadd.f32 %v963, %v964
  %v966 = vsel %vm442, %v830, 0.0
  %v967 = vadd.f32 %v965, %v966
  %v968 = vsel %vm442, %v833, 0.0
  %v969 = vadd.f32 %v967, %v968
  %v970 = vsel %vm442, %v835, 0.0
  %v971 = vadd.f32 %v969, %v970
  %v972 = vsel %vm442, %v838, 0.0
  %v973 = vadd.f32 %v971, %v972
  %v974 = vsel %vm442, %v840, 0.0
  %v975 = vadd.f32 %v973, %v974
  %v976 = vsel %vm442, %v843, 0.0
  %v977 = vadd.f32 %v975, %v976
  %v978 = vsel %vm442, %v845, 0.0
  %v979 = vadd.f32 %v977, %v978
  %v980 = vsel %vm442, %v848, 0.0
  %v981 = vadd.f32 %v979, %v980
  %v982 = vsel %vm442, %v850, 0.0
  %v983 = vadd.f32 %v981, %v982
  %v984 = vsel %vm442, %v853, 0.0
  %v985 = vadd.f32 %v983, %v984
  %v986 = vsel %vm442, %v855, 0.0
  %v987 = vadd.f32 %v985, %v986
  %v988 = vsel %vm442, %v858, 0.0
  %v989 = vadd.f32 %v987, %v988
  %v990 = vsel %vm442, %v860, 0.0
  %v991 = vadd.f32 %v989, %v990
  %v992 = vsel %vm442, %v863, 0.0
  %v993 = vadd.f32 %v991, %v992
  %v994 = vsel %vm442, %v865, 0.0
  %v995 = vadd.f32 %v993, %v994
  %v996 = vsel %vm442, %v868, 0.0
  %v997 = vadd.f32 %v995, %v996
  %v998 = vsel %vm442, %v870, 0.0
  %v999 = vadd.f32 %v997, %v998
  %v1000 = vsel %vm442, %v873, 0.0
  %v1001 = vadd.f32 %v999, %v1000
  %v1002 = vsel %vm442, %v875, 0.0
  %v1003 = vadd.f32 %v1001, %v1002
  %v1004 = vrot.slane %v1003, 4
  %v1005 = vadd.f32 %v1003, %v1004
  %v1006 = vrot.slane %v1005, 2
  %v1007 = vadd.f32 %v1005, %v1006
  %v1008 = vrot.slane %v1007, 1
  %v1009 = vadd.f32 %v1007, %v1008
  %v1010 = vmul.f32 %v1009, 0.001953125
  %v1011 = vsub.f32 %v718, %v1010
  %v1012 = vsub.f32 %v720, %v1010
  %v1013 = vsub.f32 %v723, %v1010
  %v1014 = vsub.f32 %v725, %v1010
  %v1015 = vsub.f32 %v728, %v1010
  %v1016 = vsub.f32 %v730, %v1010
  %v1017 = vsub.f32 %v733, %v1010
  %v1018 = vsub.f32 %v735, %v1010
  %v1019 = vsub.f32 %v738, %v1010
  %v1020 = vsub.f32 %v740, %v1010
  %v1021 = vsub.f32 %v743, %v1010
  %v1022 = vsub.f32 %v745, %v1010
  %v1023 = vsub.f32 %v748, %v1010
  %v1024 = vsub.f32 %v750, %v1010
  %v1025 = vsub.f32 %v753, %v1010
  %v1026 = vsub.f32 %v755, %v1010
  %v1027 = vsub.f32 %v758, %v1010
  %v1028 = vsub.f32 %v760, %v1010
  %v1029 = vsub.f32 %v763, %v1010
  %v1030 = vsub.f32 %v765, %v1010
  %v1031 = vsub.f32 %v768, %v1010
  %v1032 = vsub.f32 %v770, %v1010
  %v1033 = vsub.f32 %v773, %v1010
  %v1034 = vsub.f32 %v775, %v1010
  %v1035 = vsub.f32 %v778, %v1010
  %v1036 = vsub.f32 %v780, %v1010
  %v1037 = vsub.f32 %v783, %v1010
  %v1038 = vsub.f32 %v785, %v1010
  %v1039 = vsub.f32 %v788, %v1010
  %v1040 = vsub.f32 %v790, %v1010
  %v1041 = vsub.f32 %v793, %v1010
  %v1042 = vsub.f32 %v795, %v1010
  %v1043 = vsub.f32 %v798, %v1010
  %v1044 = vsub.f32 %v800, %v1010
  %v1045 = vsub.f32 %v803, %v1010
  %v1046 = vsub.f32 %v805, %v1010
  %v1047 = vsub.f32 %v808, %v1010
  %v1048 = vsub.f32 %v810, %v1010
  %v1049 = vsub.f32 %v813, %v1010
  %v1050 = vsub.f32 %v815, %v1010
  %v1051 = vsub.f32 %v818, %v1010
  %v1052 = vsub.f32 %v820, %v1010
  %v1053 = vsub.f32 %v823, %v1010
  %v1054 = vsub.f32 %v825, %v1010
  %v1055 = vsub.f32 %v828, %v1010
  %v1056 = vsub.f32 %v830, %v1010
  %v1057 = vsub.f32 %v833, %v1010
  %v1058 = vsub.f32 %v835, %v1010
  %v1059 = vsub.f32 %v838, %v1010
  %v1060 = vsub.f32 %v840, %v1010
  %v1061 = vsub.f32 %v843, %v1010
  %v1062 = vsub.f32 %v845, %v1010
  %v1063 = vsub.f32 %v848, %v1010
  %v1064 = vsub.f32 %v850, %v1010
  %v1065 = vsub.f32 %v853, %v1010
  %v1066 = vsub.f32 %v855, %v1010
  %v1067 = vsub.f32 %v858, %v1010
  %v1068 = vsub.f32 %v860, %v1010
  %v1069 = vsub.f32 %v863, %v1010
  %v1070 = vsub.f32 %v865, %v1010
  %v1071 = vsub.f32 %v868, %v1010
  %v1072 = vsub.f32 %v870, %v1010
  %v1073 = vsub.f32 %v873, %v1010
  %v1074 = vsub.f32 %v875, %v1010
  %v1075 = vmul.f32 %v1011, %v1011
  %v1076 = vmul.f32 %v1012, %v1012
  %v1077 = vmul.f32 %v1013, %v1013
  %v1078 = vmul.f32 %v1014, %v1014
  %v1079 = vmul.f32 %v1015, %v1015
  %v1080 = vmul.f32 %v1016, %v1016
  %v1081 = vmul.f32 %v1017, %v1017
  %v1082 = vmul.f32 %v1018, %v1018
  %v1083 = vmul.f32 %v1019, %v1019
  %v1084 = vmul.f32 %v1020, %v1020
  %v1085 = vmul.f32 %v1021, %v1021
  %v1086 = vmul.f32 %v1022, %v1022
  %v1087 = vmul.f32 %v1023, %v1023
  %v1088 = vmul.f32 %v1024, %v1024
  %v1089 = vmul.f32 %v1025, %v1025
  %v1090 = vmul.f32 %v1026, %v1026
  %v1091 = vmul.f32 %v1027, %v1027
  %v1092 = vmul.f32 %v1028, %v1028
  %v1093 = vmul.f32 %v1029, %v1029
  %v1094 = vmul.f32 %v1030, %v1030
  %v1095 = vmul.f32 %v1031, %v1031
  %v1096 = vmul.f32 %v1032, %v1032
  %v1097 = vmul.f32 %v1033, %v1033
  %v1098 = vmul.f32 %v1034, %v1034
  %v1099 = vmul.f32 %v1035, %v1035
  %v1100 = vmul.f32 %v1036, %v1036
  %v1101 = vmul.f32 %v1037, %v1037
  %v1102 = vmul.f32 %v1038, %v1038
  %v1103 = vmul.f32 %v1039, %v1039
  %v1104 = vmul.f32 %v1040, %v1040
  %v1105 = vmul.f32 %v1041, %v1041
  %v1106 = vmul.f32 %v1042, %v1042
  %v1107 = vmul.f32 %v1043, %v1043
  %v1108 = vmul.f32 %v1044, %v1044
  %v1109 = vmul.f32 %v1045, %v1045
  %v1110 = vmul.f32 %v1046, %v1046
  %v1111 = vmul.f32 %v1047, %v1047
  %v1112 = vmul.f32 %v1048, %v1048
  %v1113 = vmul.f32 %v1049, %v1049
  %v1114 = vmul.f32 %v1050, %v1050
  %v1115 = vmul.f32 %v1051, %v1051
  %v1116 = vmul.f32 %v1052, %v1052
  %v1117 = vmul.f32 %v1053, %v1053
  %v1118 = vmul.f32 %v1054, %v1054
  %v1119 = vmul.f32 %v1055, %v1055
  %v1120 = vmul.f32 %v1056, %v1056
  %v1121 = vmul.f32 %v1057, %v1057
  %v1122 = vmul.f32 %v1058, %v1058
  %v1123 = vmul.f32 %v1059, %v1059
  %v1124 = vmul.f32 %v1060, %v1060
  %v1125 = vmul.f32 %v1061, %v1061
  %v1126 = vmul.f32 %v1062, %v1062
  %v1127 = vmul.f32 %v1063, %v1063
  %v1128 = vmul.f32 %v1064, %v1064
  %v1129 = vmul.f32 %v1065, %v1065
  %v1130 = vmul.f32 %v1066, %v1066
  %v1131 = vmul.f32 %v1067, %v1067
  %v1132 = vmul.f32 %v1068, %v1068
  %v1133 = vmul.f32 %v1069, %v1069
  %v1134 = vmul.f32 %v1070, %v1070
  %v1135 = vmul.f32 %v1071, %v1071
  %v1136 = vmul.f32 %v1072, %v1072
  %v1137 = vmul.f32 %v1073, %v1073
  %v1138 = vmul.f32 %v1074, %v1074
  %v1139 = vsel %vm442, %v1075, 0.0
  %v1140 = vsel %vm442, %v1076, 0.0
  %v1141 = vadd.f32 %v1139, %v1140
  %v1142 = vsel %vm442, %v1077, 0.0
  %v1143 = vadd.f32 %v1141, %v1142
  %v1144 = vsel %vm442, %v1078, 0.0
  %v1145 = vadd.f32 %v1143, %v1144
  %v1146 = vsel %vm442, %v1079, 0.0
  %v1147 = vadd.f32 %v1145, %v1146
  %v1148 = vsel %vm442, %v1080, 0.0
  %v1149 = vadd.f32 %v1147, %v1148
  %v1150 = vsel %vm442, %v1081, 0.0
  %v1151 = vadd.f32 %v1149, %v1150
  %v1152 = vsel %vm442, %v1082, 0.0
  %v1153 = vadd.f32 %v1151, %v1152
  %v1154 = vsel %vm442, %v1083, 0.0
  %v1155 = vadd.f32 %v1153, %v1154
  %v1156 = vsel %vm442, %v1084, 0.0
  %v1157 = vadd.f32 %v1155, %v1156
  %v1158 = vsel %vm442, %v1085, 0.0
  %v1159 = vadd.f32 %v1157, %v1158
  %v1160 = vsel %vm442, %v1086, 0.0
  %v1161 = vadd.f32 %v1159, %v1160
  %v1162 = vsel %vm442, %v1087, 0.0
  %v1163 = vadd.f32 %v1161, %v1162
  %v1164 = vsel %vm442, %v1088, 0.0
  %v1165 = vadd.f32 %v1163, %v1164
  %v1166 = vsel %vm442, %v1089, 0.0
  %v1167 = vadd.f32 %v1165, %v1166
  %v1168 = vsel %vm442, %v1090, 0.0
  %v1169 = vadd.f32 %v1167, %v1168
  %v1170 = vsel %vm442, %v1091, 0.0
  %v1171 = vadd.f32 %v1169, %v1170
  %v1172 = vsel %vm442, %v1092, 0.0
  %v1173 = vadd.f32 %v1171, %v1172
  %v1174 = vsel %vm442, %v1093, 0.0
  %v1175 = vadd.f32 %v1173, %v1174
  %v1176 = vsel %vm442, %v1094, 0.0
  %v1177 = vadd.f32 %v1175, %v1176
  %v1178 = vsel %vm442, %v1095, 0.0
  %v1179 = vadd.f32 %v1177, %v1178
  %v1180 = vsel %vm442, %v1096, 0.0
  %v1181 = vadd.f32 %v1179, %v1180
  %v1182 = vsel %vm442, %v1097, 0.0
  %v1183 = vadd.f32 %v1181, %v1182
  %v1184 = vsel %vm442, %v1098, 0.0
  %v1185 = vadd.f32 %v1183, %v1184
  %v1186 = vsel %vm442, %v1099, 0.0
  %v1187 = vadd.f32 %v1185, %v1186
  %v1188 = vsel %vm442, %v1100, 0.0
  %v1189 = vadd.f32 %v1187, %v1188
  %v1190 = vsel %vm442, %v1101, 0.0
  %v1191 = vadd.f32 %v1189, %v1190
  %v1192 = vsel %vm442, %v1102, 0.0
  %v1193 = vadd.f32 %v1191, %v1192
  %v1194 = vsel %vm442, %v1103, 0.0
  %v1195 = vadd.f32 %v1193, %v1194
  %v1196 = vsel %vm442, %v1104, 0.0
  %v1197 = vadd.f32 %v1195, %v1196
  %v1198 = vsel %vm442, %v1105, 0.0
  %v1199 = vadd.f32 %v1197, %v1198
  %v1200 = vsel %vm442, %v1106, 0.0
  %v1201 = vadd.f32 %v1199, %v1200
  %v1202 = vsel %vm442, %v1107, 0.0
  %v1203 = vadd.f32 %v1201, %v1202
  %v1204 = vsel %vm442, %v1108, 0.0
  %v1205 = vadd.f32 %v1203, %v1204
  %v1206 = vsel %vm442, %v1109, 0.0
  %v1207 = vadd.f32 %v1205, %v1206
  %v1208 = vsel %vm442, %v1110, 0.0
  %v1209 = vadd.f32 %v1207, %v1208
  %v1210 = vsel %vm442, %v1111, 0.0
  %v1211 = vadd.f32 %v1209, %v1210
  %v1212 = vsel %vm442, %v1112, 0.0
  %v1213 = vadd.f32 %v1211, %v1212
  %v1214 = vsel %vm442, %v1113, 0.0
  %v1215 = vadd.f32 %v1213, %v1214
  %v1216 = vsel %vm442, %v1114, 0.0
  %v1217 = vadd.f32 %v1215, %v1216
  %v1218 = vsel %vm442, %v1115, 0.0
  %v1219 = vadd.f32 %v1217, %v1218
  %v1220 = vsel %vm442, %v1116, 0.0
  %v1221 = vadd.f32 %v1219, %v1220
  %v1222 = vsel %vm442, %v1117, 0.0
  %v1223 = vadd.f32 %v1221, %v1222
  %v1224 = vsel %vm442, %v1118, 0.0
  %v1225 = vadd.f32 %v1223, %v1224
  %v1226 = vsel %vm442, %v1119, 0.0
  %v1227 = vadd.f32 %v1225, %v1226
  %v1228 = vsel %vm442, %v1120, 0.0
  %v1229 = vadd.f32 %v1227, %v1228
  %v1230 = vsel %vm442, %v1121, 0.0
  %v1231 = vadd.f32 %v1229, %v1230
  %v1232 = vsel %vm442, %v1122, 0.0
  %v1233 = vadd.f32 %v1231, %v1232
  %v1234 = vsel %vm442, %v1123, 0.0
  %v1235 = vadd.f32 %v1233, %v1234
  %v1236 = vsel %vm442, %v1124, 0.0
  %v1237 = vadd.f32 %v1235, %v1236
  %v1238 = vsel %vm442, %v1125, 0.0
  %v1239 = vadd.f32 %v1237, %v1238
  %v1240 = vsel %vm442, %v1126, 0.0
  %v1241 = vadd.f32 %v1239, %v1240
  %v1242 = vsel %vm442, %v1127, 0.0
  %v1243 = vadd.f32 %v1241, %v1242
  %v1244 = vsel %vm442, %v1128, 0.0
  %v1245 = vadd.f32 %v1243, %v1244
  %v1246 = vsel %vm442, %v1129, 0.0
  %v1247 = vadd.f32 %v1245, %v1246
  %v1248 = vsel %vm442, %v1130, 0.0
  %v1249 = vadd.f32 %v1247, %v1248
  %v1250 = vsel %vm442, %v1131, 0.0
  %v1251 = vadd.f32 %v1249, %v1250
  %v1252 = vsel %vm442, %v1132, 0.0
  %v1253 = vadd.f32 %v1251, %v1252
  %v1254 = vsel %vm442, %v1133, 0.0
  %v1255 = vadd.f32 %v1253, %v1254
  %v1256 = vsel %vm442, %v1134, 0.0
  %v1257 = vadd.f32 %v1255, %v1256
  %v1258 = vsel %vm442, %v1135, 0.0
  %v1259 = vadd.f32 %v1257, %v1258
  %v1260 = vsel %vm442, %v1136, 0.0
  %v1261 = vadd.f32 %v1259, %v1260
  %v1262 = vsel %vm442, %v1137, 0.0
  %v1263 = vadd.f32 %v1261, %v1262
  %v1264 = vsel %vm442, %v1138, 0.0
  %v1265 = vadd.f32 %v1263, %v1264
  %v1266 = vrot.slane %v1265, 4
  %v1267 = vadd.f32 %v1265, %v1266
  %v1268 = vrot.slane %v1267, 2
  %v1269 = vadd.f32 %v1267, %v1268
  %v1270 = vrot.slane %v1269, 1
  %v1271 = vadd.f32 %v1269, %v1270
  %v1272 = vmul.f32 %v1271, 0.001953125
  %v1273 = vld [vmem:[%s2] sm:$0x1]
  %v1274 = vadd.f32 %v1272, 1e-05
  %v1275 = vrsqrt.pop %v1274
  %v1276 = vmul.f32 %v1275, %v1274
  %v1277 = vmul.f32 %v1276, %v1275
  %v1278 = vmul.f32 0.5, %v1277
  %v1279 = vsub.f32 1.5, %v1278
  %v1280 = vmul.f32 %v1275, %v1279
  %vm1281 = vweird.f32 %v1274
  %vm1282 = vweird.f32 %v1275
  %vm1283 = vmor %vm1281, %vm1282
  %v1284 = vsel %vm1283, %v1275, %v1280
  %v1285 = vmul.f32 %v1273, %v1284
  %v1287 = vperm.slane %v1285, 0
  %v1289 = vmul.f32 %v1011, %v1287
  %v1290 = vmul.f32 %v1012, %v1287
  %v1291 = vmul.f32 %v1013, %v1287
  %v1292 = vmul.f32 %v1014, %v1287
  %v1293 = vmul.f32 %v1015, %v1287
  %v1294 = vmul.f32 %v1016, %v1287
  %v1295 = vmul.f32 %v1017, %v1287
  %v1296 = vmul.f32 %v1018, %v1287
  %v1297 = vmul.f32 %v1019, %v1287
  %v1298 = vmul.f32 %v1020, %v1287
  %v1299 = vmul.f32 %v1021, %v1287
  %v1300 = vmul.f32 %v1022, %v1287
  %v1301 = vmul.f32 %v1023, %v1287
  %v1302 = vmul.f32 %v1024, %v1287
  %v1303 = vmul.f32 %v1025, %v1287
  %v1304 = vmul.f32 %v1026, %v1287
  %v1305 = vmul.f32 %v1027, %v1287
  %v1306 = vmul.f32 %v1028, %v1287
  %v1307 = vmul.f32 %v1029, %v1287
  %v1308 = vmul.f32 %v1030, %v1287
  %v1309 = vmul.f32 %v1031, %v1287
  %v1310 = vmul.f32 %v1032, %v1287
  %v1311 = vmul.f32 %v1033, %v1287
  %v1312 = vmul.f32 %v1034, %v1287
  %v1313 = vmul.f32 %v1035, %v1287
  %v1314 = vmul.f32 %v1036, %v1287
  %v1315 = vmul.f32 %v1037, %v1287
  %v1316 = vmul.f32 %v1038, %v1287
  %v1317 = vmul.f32 %v1039, %v1287
  %v1318 = vmul.f32 %v1040, %v1287
  %v1319 = vmul.f32 %v1041, %v1287
  %v1320 = vmul.f32 %v1042, %v1287
  %v1321 = vmul.f32 %v1043, %v1287
  %v1322 = vmul.f32 %v1044, %v1287
  %v1323 = vmul.f32 %v1045, %v1287
  %v1324 = vmul.f32 %v1046, %v1287
  %v1325 = vmul.f32 %v1047, %v1287
  %v1326 = vmul.f32 %v1048, %v1287
  %v1327 = vmul.f32 %v1049, %v1287
  %v1328 = vmul.f32 %v1050, %v1287
  %v1329 = vmul.f32 %v1051, %v1287
  %v1330 = vmul.f32 %v1052, %v1287
  %v1331 = vmul.f32 %v1053, %v1287
  %v1332 = vmul.f32 %v1054, %v1287
  %v1333 = vmul.f32 %v1055, %v1287
  %v1334 = vmul.f32 %v1056, %v1287
  %v1335 = vmul.f32 %v1057, %v1287
  %v1336 = vmul.f32 %v1058, %v1287
  %v1337 = vmul.f32 %v1059, %v1287
  %v1338 = vmul.f32 %v1060, %v1287
  %v1339 = vmul.f32 %v1061, %v1287
  %v1340 = vmul.f32 %v1062, %v1287
  %v1341 = vmul.f32 %v1063, %v1287
  %v1342 = vmul.f32 %v1064, %v1287
  %v1343 = vmul.f32 %v1065, %v1287
  %v1344 = vmul.f32 %v1066, %v1287
  %v1345 = vmul.f32 %v1067, %v1287
  %v1346 = vmul.f32 %v1068, %v1287
  %v1347 = vmul.f32 %v1069, %v1287
  %v1348 = vmul.f32 %v1070, %v1287
  %v1349 = vmul.f32 %v1071, %v1287
  %v1350 = vmul.f32 %v1072, %v1287
  %v1351 = vmul.f32 %v1073, %v1287
  %v1352 = vmul.f32 %v1074, %v1287
  %v1353 = vld [vmem:[%s3] sm:$0x1]
  %v1355 = vperm.slane %v1353, 0
  %v1357 = vadd.f32 %v1289, %v1355
  %v1358 = vadd.f32 %v1290, %v1355
  %v1359 = vadd.f32 %v1291, %v1355
  %v1360 = vadd.f32 %v1292, %v1355
  %v1361 = vadd.f32 %v1293, %v1355
  %v1362 = vadd.f32 %v1294, %v1355
  %v1363 = vadd.f32 %v1295, %v1355
  %v1364 = vadd.f32 %v1296, %v1355
  %v1365 = vadd.f32 %v1297, %v1355
  %v1366 = vadd.f32 %v1298, %v1355
  %v1367 = vadd.f32 %v1299, %v1355
  %v1368 = vadd.f32 %v1300, %v1355
  %v1369 = vadd.f32 %v1301, %v1355
  %v1370 = vadd.f32 %v1302, %v1355
  %v1371 = vadd.f32 %v1303, %v1355
  %v1372 = vadd.f32 %v1304, %v1355
  %v1373 = vadd.f32 %v1305, %v1355
  %v1374 = vadd.f32 %v1306, %v1355
  %v1375 = vadd.f32 %v1307, %v1355
  %v1376 = vadd.f32 %v1308, %v1355
  %v1377 = vadd.f32 %v1309, %v1355
  %v1378 = vadd.f32 %v1310, %v1355
  %v1379 = vadd.f32 %v1311, %v1355
  %v1380 = vadd.f32 %v1312, %v1355
  %v1381 = vadd.f32 %v1313, %v1355
  %v1382 = vadd.f32 %v1314, %v1355
  %v1383 = vadd.f32 %v1315, %v1355
  %v1384 = vadd.f32 %v1316, %v1355
  %v1385 = vadd.f32 %v1317, %v1355
  %v1386 = vadd.f32 %v1318, %v1355
  %v1387 = vadd.f32 %v1319, %v1355
  %v1388 = vadd.f32 %v1320, %v1355
  %v1389 = vadd.f32 %v1321, %v1355
  %v1390 = vadd.f32 %v1322, %v1355
  %v1391 = vadd.f32 %v1323, %v1355
  %v1392 = vadd.f32 %v1324, %v1355
  %v1393 = vadd.f32 %v1325, %v1355
  %v1394 = vadd.f32 %v1326, %v1355
  %v1395 = vadd.f32 %v1327, %v1355
  %v1396 = vadd.f32 %v1328, %v1355
  %v1397 = vadd.f32 %v1329, %v1355
  %v1398 = vadd.f32 %v1330, %v1355
  %v1399 = vadd.f32 %v1331, %v1355
  %v1400 = vadd.f32 %v1332, %v1355
  %v1401 = vadd.f32 %v1333, %v1355
  %v1402 = vadd.f32 %v1334, %v1355
  %v1403 = vadd.f32 %v1335, %v1355
  %v1404 = vadd.f32 %v1336, %v1355
  %v1405 = vadd.f32 %v1337, %v1355
  %v1406 = vadd.f32 %v1338, %v1355
  %v1407 = vadd.f32 %v1339, %v1355
  %v1408 = vadd.f32 %v1340, %v1355
  %v1409 = vadd.f32 %v1341, %v1355
  %v1410 = vadd.f32 %v1342, %v1355
  %v1411 = vadd.f32 %v1343, %v1355
  %v1412 = vadd.f32 %v1344, %v1355
  %v1413 = vadd.f32 %v1345, %v1355
  %v1414 = vadd.f32 %v1346, %v1355
  %v1415 = vadd.f32 %v1347, %v1355
  %v1416 = vadd.f32 %v1348, %v1355
  %v1417 = vadd.f32 %v1349, %v1355
  %v1418 = vadd.f32 %v1350, %v1355
  %v1419 = vadd.f32 %v1351, %v1355
  %v1420 = vadd.f32 %v1352, %v1355
  %v1421 = vmax.f32 %v1357, 0.0
  %v1422 = vmax.f32 %v1358, 0.0
  %v1423 = vmax.f32 %v1359, 0.0
  %v1424 = vmax.f32 %v1360, 0.0
  %v1425 = vmax.f32 %v1361, 0.0
  %v1426 = vmax.f32 %v1362, 0.0
  %v1427 = vmax.f32 %v1363, 0.0
  %v1428 = vmax.f32 %v1364, 0.0
  %v1429 = vmax.f32 %v1365, 0.0
  %v1430 = vmax.f32 %v1366, 0.0
  %v1431 = vmax.f32 %v1367, 0.0
  %v1432 = vmax.f32 %v1368, 0.0
  %v1433 = vmax.f32 %v1369, 0.0
  %v1434 = vmax.f32 %v1370, 0.0
  %v1435 = vmax.f32 %v1371, 0.0
  %v1436 = vmax.f32 %v1372, 0.0
  %v1437 = vmax.f32 %v1373, 0.0
  %v1438 = vmax.f32 %v1374, 0.0
  %v1439 = vmax.f32 %v1375, 0.0
  %v1440 = vmax.f32 %v1376, 0.0
  %v1441 = vmax.f32 %v1377, 0.0
  %v1442 = vmax.f32 %v1378, 0.0
  %v1443 = vmax.f32 %v1379, 0.0
  %v1444 = vmax.f32 %v1380, 0.0
  %v1445 = vmax.f32 %v1381, 0.0
  %v1446 = vmax.f32 %v1382, 0.0
  %v1447 = vmax.f32 %v1383, 0.0
  %v1448 = vmax.f32 %v1384, 0.0
  %v1449 = vmax.f32 %v1385, 0.0
  %v1450 = vmax.f32 %v1386, 0.0
  %v1451 = vmax.f32 %v1387, 0.0
  %v1452 = vmax.f32 %v1388, 0.0
  %v1453 = vmax.f32 %v1389, 0.0
  %v1454 = vmax.f32 %v1390, 0.0
  %v1455 = vmax.f32 %v1391, 0.0
  %v1456 = vmax.f32 %v1392, 0.0
  %v1457 = vmax.f32 %v1393, 0.0
  %v1458 = vmax.f32 %v1394, 0.0
  %v1459 = vmax.f32 %v1395, 0.0
  %v1460 = vmax.f32 %v1396, 0.0
  %v1461 = vmax.f32 %v1397, 0.0
  %v1462 = vmax.f32 %v1398, 0.0
  %v1463 = vmax.f32 %v1399, 0.0
  %v1464 = vmax.f32 %v1400, 0.0
  %v1465 = vmax.f32 %v1401, 0.0
  %v1466 = vmax.f32 %v1402, 0.0
  %v1467 = vmax.f32 %v1403, 0.0
  %v1468 = vmax.f32 %v1404, 0.0
  %v1469 = vmax.f32 %v1405, 0.0
  %v1470 = vmax.f32 %v1406, 0.0
  %v1471 = vmax.f32 %v1407, 0.0
  %v1472 = vmax.f32 %v1408, 0.0
  %v1473 = vmax.f32 %v1409, 0.0
  %v1474 = vmax.f32 %v1410, 0.0
  %v1475 = vmax.f32 %v1411, 0.0
  %v1476 = vmax.f32 %v1412, 0.0
  %v1477 = vmax.f32 %v1413, 0.0
  %v1478 = vmax.f32 %v1414, 0.0
  %v1479 = vmax.f32 %v1415, 0.0
  %v1480 = vmax.f32 %v1416, 0.0
  %v1481 = vmax.f32 %v1417, 0.0
  %v1482 = vmax.f32 %v1418, 0.0
  %v1483 = vmax.f32 %v1419, 0.0
  %v1484 = vmax.f32 %v1420, 0.0
  %1485 = vst.msk [vmem:[%s4] sm:$0xff] %vm442, %v1421
  %1486 = vst.msk [vmem:[%s4 + $0x8] sm:$0xff] %vm442, %v1422
  %1487 = vst.msk [vmem:[%s4 + $0x10] sm:$0xff] %vm442, %v1423
  %1488 = vst.msk [vmem:[%s4 + $0x18] sm:$0xff] %vm442, %v1424
  %1489 = vst.msk [vmem:[%s4 + $0x20] sm:$0xff] %vm442, %v1425
  %1490 = vst.msk [vmem:[%s4 + $0x28] sm:$0xff] %vm442, %v1426
  %1491 = vst.msk [vmem:[%s4 + $0x30] sm:$0xff] %vm442, %v1427
  %1492 = vst.msk [vmem:[%s4 + $0x38] sm:$0xff] %vm442, %v1428
  %1493 = vst.msk [vmem:[%s4 + $0x40] sm:$0xff] %vm442, %v1429
  %1494 = vst.msk [vmem:[%s4 + $0x48] sm:$0xff] %vm442, %v1430
  %1495 = vst.msk [vmem:[%s4 + $0x50] sm:$0xff] %vm442, %v1431
  %1496 = vst.msk [vmem:[%s4 + $0x58] sm:$0xff] %vm442, %v1432
  %1497 = vst.msk [vmem:[%s4 + $0x60] sm:$0xff] %vm442, %v1433
  %1498 = vst.msk [vmem:[%s4 + $0x68] sm:$0xff] %vm442, %v1434
  %1499 = vst.msk [vmem:[%s4 + $0x70] sm:$0xff] %vm442, %v1435
  %1500 = vst.msk [vmem:[%s4 + $0x78] sm:$0xff] %vm442, %v1436
  %1501 = vst.msk [vmem:[%s4 + $0x80] sm:$0xff] %vm442, %v1437
  %1502 = vst.msk [vmem:[%s4 + $0x88] sm:$0xff] %vm442, %v1438
  %1503 = vst.msk [vmem:[%s4 + $0x90] sm:$0xff] %vm442, %v1439
  %1504 = vst.msk [vmem:[%s4 + $0x98] sm:$0xff] %vm442, %v1440
  %1505 = vst.msk [vmem:[%s4 + $0xa0] sm:$0xff] %vm442, %v1441
  %1506 = vst.msk [vmem:[%s4 + $0xa8] sm:$0xff] %vm442, %v1442
  %1507 = vst.msk [vmem:[%s4 + $0xb0] sm:$0xff] %vm442, %v1443
  %1508 = vst.msk [vmem:[%s4 + $0xb8] sm:$0xff] %vm442, %v1444
  %1509 = vst.msk [vmem:[%s4 + $0xc0] sm:$0xff] %vm442, %v1445
  %1510 = vst.msk [vmem:[%s4 + $0xc8] sm:$0xff] %vm442, %v1446
  %1511 = vst.msk [vmem:[%s4 + $0xd0] sm:$0xff] %vm442, %v1447
  %1512 = vst.msk [vmem:[%s4 + $0xd8] sm:$0xff] %vm442, %v1448
  %1513 = vst.msk [vmem:[%s4 + $0xe0] sm:$0xff] %vm442, %v1449
  %1514 = vst.msk [vmem:[%s4 + $0xe8] sm:$0xff] %vm442, %v1450
  %1515 = vst.msk [vmem:[%s4 + $0xf0] sm:$0xff] %vm442, %v1451
  %1516 = vst.msk [vmem:[%s4 + $0xf8] sm:$0xff] %vm442, %v1452
  %1517 = vst.msk [vmem:[%s4 + $0x100] sm:$0xff] %vm442, %v1453
  %1518 = vst.msk [vmem:[%s4 + $0x108] sm:$0xff] %vm442, %v1454
  %1519 = vst.msk [vmem:[%s4 + $0x110] sm:$0xff] %vm442, %v1455
  %1520 = vst.msk [vmem:[%s4 + $0x118] sm:$0xff] %vm442, %v1456
  %1521 = vst.msk [vmem:[%s4 + $0x120] sm:$0xff] %vm442, %v1457
  %1522 = vst.msk [vmem:[%s4 + $0x128] sm:$0xff] %vm442, %v1458
  %1523 = vst.msk [vmem:[%s4 + $0x130] sm:$0xff] %vm442, %v1459
  %1524 = vst.msk [vmem:[%s4 + $0x138] sm:$0xff] %vm442, %v1460
  %1525 = vst.msk [vmem:[%s4 + $0x140] sm:$0xff] %vm442, %v1461
  %1526 = vst.msk [vmem:[%s4 + $0x148] sm:$0xff] %vm442, %v1462
  %1527 = vst.msk [vmem:[%s4 + $0x150] sm:$0xff] %vm442, %v1463
  %1528 = vst.msk [vmem:[%s4 + $0x158] sm:$0xff] %vm442, %v1464
  %1529 = vst.msk [vmem:[%s4 + $0x160] sm:$0xff] %vm442, %v1465
  %1530 = vst.msk [vmem:[%s4 + $0x168] sm:$0xff] %vm442, %v1466
  %1531 = vst.msk [vmem:[%s4 + $0x170] sm:$0xff] %vm442, %v1467
  %1532 = vst.msk [vmem:[%s4 + $0x178] sm:$0xff] %vm442, %v1468
  %1533 = vst.msk [vmem:[%s4 + $0x180] sm:$0xff] %vm442, %v1469
  %1534 = vst.msk [vmem:[%s4 + $0x188] sm:$0xff] %vm442, %v1470
  %1535 = vst.msk [vmem:[%s4 + $0x190] sm:$0xff] %vm442, %v1471
  %1536 = vst.msk [vmem:[%s4 + $0x198] sm:$0xff] %vm442, %v1472
  %1537 = vst.msk [vmem:[%s4 + $0x1a0] sm:$0xff] %vm442, %v1473
  %1538 = vst.msk [vmem:[%s4 + $0x1a8] sm:$0xff] %vm442, %v1474
  %1539 = vst.msk [vmem:[%s4 + $0x1b0] sm:$0xff] %vm442, %v1475
  %1540 = vst.msk [vmem:[%s4 + $0x1b8] sm:$0xff] %vm442, %v1476
  %1541 = vst.msk [vmem:[%s4 + $0x1c0] sm:$0xff] %vm442, %v1477
  %1542 = vst.msk [vmem:[%s4 + $0x1c8] sm:$0xff] %vm442, %v1478
  %1543 = vst.msk [vmem:[%s4 + $0x1d0] sm:$0xff] %vm442, %v1479
  %1544 = vst.msk [vmem:[%s4 + $0x1d8] sm:$0xff] %vm442, %v1480
  %1545 = vst.msk [vmem:[%s4 + $0x1e0] sm:$0xff] %vm442, %v1481
  %1546 = vst.msk [vmem:[%s4 + $0x1e8] sm:$0xff] %vm442, %v1482
  %1547 = vst.msk [vmem:[%s4 + $0x1f0] sm:$0xff] %vm442, %v1483
  %1548 = vst.msk [vmem:[%s4 + $0x1f8] sm:$0xff] %vm442, %v1484
  // Predicated region
  $region18: #{_lambda_.14} parent=0 // pred_check
    _
  $region19: #{_lambda_.14} parent=0 // pred_check_branch
    %1550 = sbr.rel (0) target = $region21
  $region20: #{_lambda_.14} parent=0 // pred_region
    _
  $region21: #{_lambda_.14} parent=0 // pred_fallthru
    _
  // Predicated region
  $region22: #{_lambda_.14} parent=0 // pred_check
    _
  $region23: #{_lambda_.14} parent=0 // pred_check_branch
    %1552 = sbr.rel (0) target = $region25
  $region24: #{_lambda_.14} parent=0 // pred_region
    _
  $region25: #{_lambda_.14} parent=0 // pred_fallthru
    _

// kernel: _lambda_.18
$region0: #{_lambda_.18}
  #allocation0 [shape = 'u32[]', space=smem, size = 0x4, offset = 0x4, fixed_abs, tag = 'smem constant byte address 0x4 - core index']
  #allocation1 [shape = 'u32[72,128]{1,0:T(1,128)}', space=vmem, size = 0x9000, scoped, tag = 'internal scratch']
  %s0 = inlined_call_operand.vmem [shape: bf16[128,144], index: 0, kind: input, shape index: {}]
  %s1 = inlined_call_operand.vmem [shape: bf16[144,32], index: 1, kind: input, shape index: {}]
  %s2 = inlined_call_operand.vmem [shape: f32[1,32], index: 2, kind: input, shape index: {}]
  %s3 = inlined_call_operand.vmem [shape: f32[1,32], index: 3, kind: input, shape index: {}]
  %s4 = inlined_call_operand.vmem [shape: f32[128,32], index: 4, kind: output, shape index: {}]
  %s5 = sld [smem:[#allocation0]]
  $region26: #{_lambda_.18} parent=0
    _
  %s7 = ssub.s32 1, %s5
  %s8 = scalar_select 0, %s7, %s5
  // Predicated region
  $region2: #{_lambda_.18} parent=0 // pred_check
    _
  $region3: #{_lambda_.18} parent=0 // pred_check_branch
    %10 = sbr.rel (0) target = $region5
  $region4: #{_lambda_.18} parent=0 // pred_region
    _
  $region5: #{_lambda_.18} parent=0 // pred_fallthru
    _
  // Predicated region
  $region6: #{_lambda_.18} parent=0 // pred_check
    _
  $region7: #{_lambda_.18} parent=0 // pred_check_branch
    %12 = sbr.rel (0) target = $region9
  $region8: #{_lambda_.18} parent=0 // pred_region
    _
  $region9: #{_lambda_.18} parent=0 // pred_fallthru
    _
  // Predicated region
  $region10: #{_lambda_.18} parent=0 // pred_check
    _
  $region11: #{_lambda_.18} parent=0 // pred_check_branch
    %14 = sbr.rel (0) target = $region13
  $region12: #{_lambda_.18} parent=0 // pred_region
    _
  $region13: #{_lambda_.18} parent=0 // pred_fallthru
    _
  // Predicated region
  $region14: #{_lambda_.18} parent=0 // pred_check
    _
  $region15: #{_lambda_.18} parent=0 // pred_check_branch
    %16 = sbr.rel (0) target = $region17
  $region16: #{_lambda_.18} parent=0 // pred_region
    _
  $region17: #{_lambda_.18} parent=0 // pred_fallthru
    _
  %v18 = vld [vmem:[%s0] sm:$0xff]
  %v19 = vld [vmem:[%s0 + $0x8] sm:$0xff]
  %v20 = vld [vmem:[%s0 + $0x10] sm:$0xff]
  %v21 = vld [vmem:[%s0 + $0x18] sm:$0xff]
  %v22 = vld [vmem:[%s0 + $0x20] sm:$0xff]
  %v23 = vld [vmem:[%s0 + $0x28] sm:$0xff]
  %v24 = vld [vmem:[%s0 + $0x30] sm:$0xff]
  %v25 = vld [vmem:[%s0 + $0x38] sm:$0xff]
  %v26 = vld [vmem:[%s0 + $0x40] sm:$0xff]
  %v27 = vld [vmem:[%s0 + $0x48] sm:$0xff]
  %v28 = vld [vmem:[%s0 + $0x50] sm:$0xff]
  %v29 = vld [vmem:[%s0 + $0x58] sm:$0xff]
  %v30 = vld [vmem:[%s0 + $0x60] sm:$0xff]
  %v31 = vld [vmem:[%s0 + $0x68] sm:$0xff]
  %v32 = vld [vmem:[%s0 + $0x70] sm:$0xff]
  %v33 = vld [vmem:[%s0 + $0x78] sm:$0xff]
  %v34 = vld [vmem:[%s1] sm:$0xf]
  %v35 = vld [vmem:[%s1 + $0x4] sm:$0xf]
  %v36 = vld [vmem:[%s1 + $0x8] sm:$0xf]
  %v37 = vld [vmem:[%s1 + $0xc] sm:$0xf]
  %v38 = vld [vmem:[%s1 + $0x10] sm:$0xf]
  %v39 = vld [vmem:[%s1 + $0x14] sm:$0xf]
  %v40 = vld [vmem:[%s1 + $0x18] sm:$0xf]
  %v41 = vld [vmem:[%s1 + $0x1c] sm:$0xf]
  %v42 = vld [vmem:[%s1 + $0x20] sm:$0xf]
  %v43 = vld [vmem:[%s1 + $0x24] sm:$0xf]
  %v44 = vld [vmem:[%s1 + $0x28] sm:$0xf]
  %v45 = vld [vmem:[%s1 + $0x2c] sm:$0xf]
  %v46 = vld [vmem:[%s1 + $0x30] sm:$0xf]
  %v47 = vld [vmem:[%s1 + $0x34] sm:$0xf]
  %v48 = vld [vmem:[%s1 + $0x38] sm:$0xf]
  %v49 = vld [vmem:[%s1 + $0x3c] sm:$0xf]
  %v50 = vld [vmem:[%s1 + $0x40] sm:$0xf]
  %v51 = vld [vmem:[%s1 + $0x44] sm:$0xf]
  %v68 = vunpack.c.l.b16 %v18
  %v69 = vunpack.c.h.b16 %v18
  %v70 = vunpack.c.l.b16 %v19
  %v71 = vunpack.c.h.b16 %v19
  %v72 = vunpack.c.l.b16 %v20
  %v73 = vunpack.c.h.b16 %v20
  %v74 = vunpack.c.l.b16 %v21
  %v75 = vunpack.c.h.b16 %v21
  %v76 = vunpack.c.l.b16 %v22
  %v77 = vunpack.c.h.b16 %v22
  %v78 = vunpack.c.l.b16 %v23
  %v79 = vunpack.c.h.b16 %v23
  %v80 = vunpack.c.l.b16 %v24
  %v81 = vunpack.c.h.b16 %v24
  %v82 = vunpack.c.l.b16 %v25
  %v83 = vunpack.c.h.b16 %v25
  %v84 = vunpack.c.l.b16 %v26
  %v85 = vunpack.c.h.b16 %v26
  %v86 = vunpack.c.l.b16 %v27
  %v87 = vunpack.c.h.b16 %v27
  %v88 = vunpack.c.l.b16 %v28
  %v89 = vunpack.c.h.b16 %v28
  %v90 = vunpack.c.l.b16 %v29
  %v91 = vunpack.c.h.b16 %v29
  %v92 = vunpack.c.l.b16 %v30
  %v93 = vunpack.c.h.b16 %v30
  %v94 = vunpack.c.l.b16 %v31
  %v95 = vunpack.c.h.b16 %v31
  %v96 = vunpack.c.l.b16 %v32
  %v97 = vunpack.c.h.b16 %v32
  %v98 = vunpack.c.l.b16 %v33
  %v99 = vunpack.c.h.b16 %v33
  %v100 = vpack.c.b16 %v70, %v68
  %v101 = vpack.c.b16 %v71, %v69
  %v102 = vpack.c.b16 %v74, %v72
  %v103 = vpack.c.b16 %v75, %v73
  %v104 = vpack.c.b16 %v78, %v76
  %v105 = vpack.c.b16 %v79, %v77
  %v106 = vpack.c.b16 %v82, %v80
  %v107 = vpack.c.b16 %v83, %v81
  %v108 = vpack.c.b16 %v86, %v84
  %v109 = vpack.c.b16 %v87, %v85
  %v110 = vpack.c.b16 %v90, %v88
  %v111 = vpack.c.b16 %v91, %v89
  %v112 = vpack.c.b16 %v94, %v92
  %v113 = vpack.c.b16 %v95, %v93
  %v114 = vpack.c.b16 %v98, %v96
  %v115 = vpack.c.b16 %v99, %v97
  %v142 = vunpack.c.l.b16 %v34
  %v143 = vunpack.c.l.b16 %v35
  %v144 = vunpack.c.l.b16 %v36
  %v145 = vunpack.c.l.b16 %v37
  %v146 = vunpack.c.l.b16 %v38
  %v147 = vunpack.c.l.b16 %v39
  %v148 = vunpack.c.l.b16 %v40
  %v149 = vunpack.c.l.b16 %v41
  %v150 = vunpack.c.l.b16 %v42
  %v151 = vunpack.c.l.b16 %v43
  %v152 = vunpack.c.l.b16 %v44
  %v153 = vunpack.c.l.b16 %v45
  %v154 = vunpack.c.l.b16 %v46
  %v155 = vunpack.c.l.b16 %v47
  %v156 = vunpack.c.l.b16 %v48
  %v157 = vunpack.c.l.b16 %v49
  %v158 = vunpack.c.l.b16 %v50
  %v159 = vunpack.c.l.b16 %v51
  %v160 = vpack.c.b16 %v143, %v142
  %v161 = vpack.c.b16 %v145, %v144
  %v162 = vpack.c.b16 %v147, %v146
  %v163 = vpack.c.b16 %v149, %v148
  %v164 = vpack.c.b16 %v151, %v150
  %v165 = vpack.c.b16 %v153, %v152
  %v166 = vpack.c.b16 %v155, %v154
  %v167 = vpack.c.b16 %v157, %v156
  %v168 = vpack.c.b16 %v159, %v158
  %vm178 = vcmask 130048
  %v180 = vsel %vm178, %v101, 0
  %v183 = vsel %vm178, %v103, 0
  %v186 = vsel %vm178, %v105, 0
  %v189 = vsel %vm178, %v107, 0
  %v192 = vsel %vm178, %v109, 0
  %v195 = vsel %vm178, %v111, 0
  %v198 = vsel %vm178, %v113, 0
  %v201 = vsel %vm178, %v115, 0
  %203 = vmatpush.bf16.msra.mxu0 %v167
  %204 = vmatpush.bf16.msra.mxu0 %v166
  %205 = vmatpush.bf16.msra.mxu0 %v165
  %206 = vmatpush.bf16.msra.mxu0 %v164
  %207 = vmatpush.bf16.msra.mxu0 %v163
  %208 = vmatpush.bf16.msra.mxu0 %v162
  %209 = vmatpush.bf16.msra.mxu0 %v161
  %210 = vmatpush.bf16.msra.mxu0 %v160
  %211 = vmatmul.bf16.gmra.mxu0 %v100
  %v212 = vpop.f32.mrf.mxu0
  %v213 = vadd.f32 0.0, %v212
  %v214 = vpop.f32.mrf.mxu0
  %v215 = vadd.f32 0.0, %v214
  %216 = vmatmul.bf16.gmra.mxu0 %v102
  %v217 = vpop.f32.mrf.mxu0
  %v218 = vadd.f32 0.0, %v217
  %v219 = vpop.f32.mrf.mxu0
  %v220 = vadd.f32 0.0, %v219
  %221 = vmatmul.bf16.gmra.mxu0 %v104
  %v222 = vpop.f32.mrf.mxu0
  %v223 = vadd.f32 0.0, %v222
  %v224 = vpop.f32.mrf.mxu0
  %v225 = vadd.f32 0.0, %v224
  %226 = vmatmul.bf16.gmra.mxu0 %v106
  %v227 = vpop.f32.mrf.mxu0
  %v228 = vadd.f32 0.0, %v227
  %v229 = vpop.f32.mrf.mxu0
  %v230 = vadd.f32 0.0, %v229
  %231 = vmatmul.bf16.gmra.mxu0 %v108
  %v232 = vpop.f32.mrf.mxu0
  %v233 = vadd.f32 0.0, %v232
  %v234 = vpop.f32.mrf.mxu0
  %v235 = vadd.f32 0.0, %v234
  %236 = vmatmul.bf16.gmra.mxu0 %v110
  %v237 = vpop.f32.mrf.mxu0
  %v238 = vadd.f32 0.0, %v237
  %v239 = vpop.f32.mrf.mxu0
  %v240 = vadd.f32 0.0, %v239
  %241 = vmatmul.bf16.gmra.mxu0 %v112
  %v242 = vpop.f32.mrf.mxu0
  %v243 = vadd.f32 0.0, %v242
  %v244 = vpop.f32.mrf.mxu0
  %v245 = vadd.f32 0.0, %v244
  %246 = vmatmul.bf16.gmra.mxu0 %v114
  %v247 = vpop.f32.mrf.mxu0
  %v248 = vadd.f32 0.0, %v247
  %v249 = vpop.f32.mrf.mxu0
  %v250 = vadd.f32 0.0, %v249
  %251 = vdwg.mxu0
  %252 = vmatpush.bf16.msra.mxu0 0
  %253 = vmatpush.bf16.msra.mxu0 0
  %254 = vmatpush.bf16.msra.mxu0 0
  %255 = vmatpush.bf16.msra.mxu0 0
  %256 = vmatpush.bf16.msra.mxu0 0
  %257 = vmatpush.bf16.msra.mxu0 0
  %258 = vmatpush.bf16.msra.mxu0 0
  %259 = vmatpush.bf16.msra.mxu0 %v168
  %260 = vmatmul.bf16.gmra.mxu0 %v180
  %v261 = vpop.f32.mrf.mxu0
  %v262 = vadd.f32 %v213, %v261
  %v263 = vpop.f32.mrf.mxu0
  %v264 = vadd.f32 %v215, %v263
  %265 = vmatmul.bf16.gmra.mxu0 %v183
  %v266 = vpop.f32.mrf.mxu0
  %v267 = vadd.f32 %v218, %v266
  %v268 = vpop.f32.mrf.mxu0
  %v269 = vadd.f32 %v220, %v268
  %270 = vmatmul.bf16.gmra.mxu0 %v186
  %v271 = vpop.f32.mrf.mxu0
  %v272 = vadd.f32 %v223, %v271
  %v273 = vpop.f32.mrf.mxu0
  %v274 = vadd.f32 %v225, %v273
  %275 = vmatmul.bf16.gmra.mxu0 %v189
  %v276 = vpop.f32.mrf.mxu0
  %v277 = vadd.f32 %v228, %v276
  %v278 = vpop.f32.mrf.mxu0
  %v279 = vadd.f32 %v230, %v278
  %280 = vmatmul.bf16.gmra.mxu0 %v192
  %v281 = vpop.f32.mrf.mxu0
  %v282 = vadd.f32 %v233, %v281
  %v283 = vpop.f32.mrf.mxu0
  %v284 = vadd.f32 %v235, %v283
  %285 = vmatmul.bf16.gmra.mxu0 %v195
  %v286 = vpop.f32.mrf.mxu0
  %v287 = vadd.f32 %v238, %v286
  %v288 = vpop.f32.mrf.mxu0
  %v289 = vadd.f32 %v240, %v288
  %290 = vmatmul.bf16.gmra.mxu0 %v198
  %v291 = vpop.f32.mrf.mxu0
  %v292 = vadd.f32 %v243, %v291
  %v293 = vpop.f32.mrf.mxu0
  %v294 = vadd.f32 %v245, %v293
  %295 = vmatmul.bf16.gmra.mxu0 %v201
  %v296 = vpop.f32.mrf.mxu0
  %v297 = vadd.f32 %v248, %v296
  %v298 = vpop.f32.mrf.mxu0
  %v299 = vadd.f32 %v250, %v298
  %300 = vdwg.mxu0
  %vm301 = vcmask 261120
  %v302 = vsel %vm301, %v262, 0.0
  %v303 = vsel %vm301, %v264, 0.0
  %v304 = vadd.f32 %v302, %v303
  %v305 = vsel %vm301, %v267, 0.0
  %v306 = vadd.f32 %v304, %v305
  %v307 = vsel %vm301, %v269, 0.0
  %v308 = vadd.f32 %v306, %v307
  %v309 = vsel %vm301, %v272, 0.0
  %v310 = vadd.f32 %v308, %v309
  %v311 = vsel %vm301, %v274, 0.0
  %v312 = vadd.f32 %v310, %v311
  %v313 = vsel %vm301, %v277, 0.0
  %v314 = vadd.f32 %v312, %v313
  %v315 = vsel %vm301, %v279, 0.0
  %v316 = vadd.f32 %v314, %v315
  %v317 = vsel %vm301, %v282, 0.0
  %v318 = vadd.f32 %v316, %v317
  %v319 = vsel %vm301, %v284, 0.0
  %v320 = vadd.f32 %v318, %v319
  %v321 = vsel %vm301, %v287, 0.0
  %v322 = vadd.f32 %v320, %v321
  %v323 = vsel %vm301, %v289, 0.0
  %v324 = vadd.f32 %v322, %v323
  %v325 = vsel %vm301, %v292, 0.0
  %v326 = vadd.f32 %v324, %v325
  %v327 = vsel %vm301, %v294, 0.0
  %v328 = vadd.f32 %v326, %v327
  %v329 = vsel %vm301, %v297, 0.0
  %v330 = vadd.f32 %v328, %v329
  %v331 = vsel %vm301, %v299, 0.0
  %v332 = vadd.f32 %v330, %v331
  %v333 = vrot.slane %v332, 4
  %v334 = vadd.f32 %v332, %v333
  %v335 = vrot.slane %v334, 2
  %v336 = vadd.f32 %v334, %v335
  %v337 = vrot.slane %v336, 1
  %v338 = vadd.f32 %v336, %v337
  %v339 = vmul.f32 %v338, 0.0078125
  %v340 = vsub.f32 %v262, %v339
  %v341 = vsub.f32 %v264, %v339
  %v342 = vsub.f32 %v267, %v339
  %v343 = vsub.f32 %v269, %v339
  %v344 = vsub.f32 %v272, %v339
  %v345 = vsub.f32 %v274, %v339
  %v346 = vsub.f32 %v277, %v339
  %v347 = vsub.f32 %v279, %v339
  %v348 = vsub.f32 %v282, %v339
  %v349 = vsub.f32 %v284, %v339
  %v350 = vsub.f32 %v287, %v339
  %v351 = vsub.f32 %v289, %v339
  %v352 = vsub.f32 %v292, %v339
  %v353 = vsub.f32 %v294, %v339
  %v354 = vsub.f32 %v297, %v339
  %v355 = vsub.f32 %v299, %v339
  %v356 = vmul.f32 %v340, %v340
  %v357 = vmul.f32 %v341, %v341
  %v358 = vmul.f32 %v342, %v342
  %v359 = vmul.f32 %v343, %v343
  %v360 = vmul.f32 %v344, %v344
  %v361 = vmul.f32 %v345, %v345
  %v362 = vmul.f32 %v346, %v346
  %v363 = vmul.f32 %v347, %v347
  %v364 = vmul.f32 %v348, %v348
  %v365 = vmul.f32 %v349, %v349
  %v366 = vmul.f32 %v350, %v350
  %v367 = vmul.f32 %v351, %v351
  %v368 = vmul.f32 %v352, %v352
  %v369 = vmul.f32 %v353, %v353
  %v370 = vmul.f32 %v354, %v354
  %v371 = vmul.f32 %v355, %v355
  %v372 = vsel %vm301, %v356, 0.0
  %v373 = vsel %vm301, %v357, 0.0
  %v374 = vadd.f32 %v372, %v373
  %v375 = vsel %vm301, %v358, 0.0
  %v376 = vadd.f32 %v374, %v375
  %v377 = vsel %vm301, %v359, 0.0
  %v378 = vadd.f32 %v376, %v377
  %v379 = vsel %vm301, %v360, 0.0
  %v380 = vadd.f32 %v378, %v379
  %v381 = vsel %vm301, %v361, 0.0
  %v382 = vadd.f32 %v380, %v381
  %v383 = vsel %vm301, %v362, 0.0
  %v384 = vadd.f32 %v382, %v383
  %v385 = vsel %vm301, %v363, 0.0
  %v386 = vadd.f32 %v384, %v385
  %v387 = vsel %vm301, %v364, 0.0
  %v388 = vadd.f32 %v386, %v387
  %v389 = vsel %vm301, %v365, 0.0
  %v390 = vadd.f32 %v388, %v389
  %v391 = vsel %vm301, %v366, 0.0
  %v392 = vadd.f32 %v390, %v391
  %v393 = vsel %vm301, %v367, 0.0
  %v394 = vadd.f32 %v392, %v393
  %v395 = vsel %vm301, %v368, 0.0
  %v396 = vadd.f32 %v394, %v395
  %v397 = vsel %vm301, %v369, 0.0
  %v398 = vadd.f32 %v396, %v397
  %v399 = vsel %vm301, %v370, 0.0
  %v400 = vadd.f32 %v398, %v399
  %v401 = vsel %vm301, %v371, 0.0
  %v402 = vadd.f32 %v400, %v401
  %v403 = vrot.slane %v402, 4
  %v404 = vadd.f32 %v402, %v403
  %v405 = vrot.slane %v404, 2
  %v406 = vadd.f32 %v404, %v405
  %v407 = vrot.slane %v406, 1
  %v408 = vadd.f32 %v406, %v407
  %v409 = vmul.f32 %v408, 0.0078125
  %v410 = vld [vmem:[%s2] sm:$0x1]
  %v411 = vadd.f32 %v409, 1e-05
  %v412 = vrsqrt.pop %v411
  %v413 = vmul.f32 %v412, %v411
  %v414 = vmul.f32 %v413, %v412
  %v415 = vmul.f32 0.5, %v414
  %v416 = vsub.f32 1.5, %v415
  %v417 = vmul.f32 %v412, %v416
  %vm418 = vweird.f32 %v411
  %vm419 = vweird.f32 %v412
  %vm420 = vmor %vm418, %vm419
  %v421 = vsel %vm420, %v412, %v417
  %v422 = vmul.f32 %v410, %v421
  %v424 = vperm.slane %v422, 0
  %v426 = vmul.f32 %v340, %v424
  %v427 = vmul.f32 %v341, %v424
  %v428 = vmul.f32 %v342, %v424
  %v429 = vmul.f32 %v343, %v424
  %v430 = vmul.f32 %v344, %v424
  %v431 = vmul.f32 %v345, %v424
  %v432 = vmul.f32 %v346, %v424
  %v433 = vmul.f32 %v347, %v424
  %v434 = vmul.f32 %v348, %v424
  %v435 = vmul.f32 %v349, %v424
  %v436 = vmul.f32 %v350, %v424
  %v437 = vmul.f32 %v351, %v424
  %v438 = vmul.f32 %v352, %v424
  %v439 = vmul.f32 %v353, %v424
  %v440 = vmul.f32 %v354, %v424
  %v441 = vmul.f32 %v355, %v424
  %v442 = vld [vmem:[%s3] sm:$0x1]
  %v444 = vperm.slane %v442, 0
  %v446 = vadd.f32 %v426, %v444
  %v447 = vadd.f32 %v427, %v444
  %v448 = vadd.f32 %v428, %v444
  %v449 = vadd.f32 %v429, %v444
  %v450 = vadd.f32 %v430, %v444
  %v451 = vadd.f32 %v431, %v444
  %v452 = vadd.f32 %v432, %v444
  %v453 = vadd.f32 %v433, %v444
  %v454 = vadd.f32 %v434, %v444
  %v455 = vadd.f32 %v435, %v444
  %v456 = vadd.f32 %v436, %v444
  %v457 = vadd.f32 %v437, %v444
  %v458 = vadd.f32 %v438, %v444
  %v459 = vadd.f32 %v439, %v444
  %v460 = vadd.f32 %v440, %v444
  %v461 = vadd.f32 %v441, %v444
  %v462 = vmax.f32 %v446, 0.0
  %v463 = vmax.f32 %v447, 0.0
  %v464 = vmax.f32 %v448, 0.0
  %v465 = vmax.f32 %v449, 0.0
  %v466 = vmax.f32 %v450, 0.0
  %v467 = vmax.f32 %v451, 0.0
  %v468 = vmax.f32 %v452, 0.0
  %v469 = vmax.f32 %v453, 0.0
  %v470 = vmax.f32 %v454, 0.0
  %v471 = vmax.f32 %v455, 0.0
  %v472 = vmax.f32 %v456, 0.0
  %v473 = vmax.f32 %v457, 0.0
  %v474 = vmax.f32 %v458, 0.0
  %v475 = vmax.f32 %v459, 0.0
  %v476 = vmax.f32 %v460, 0.0
  %v477 = vmax.f32 %v461, 0.0
  %478 = vst.msk [vmem:[%s4] sm:$0xff] %vm301, %v462
  %479 = vst.msk [vmem:[%s4 + $0x8] sm:$0xff] %vm301, %v463
  %480 = vst.msk [vmem:[%s4 + $0x10] sm:$0xff] %vm301, %v464
  %481 = vst.msk [vmem:[%s4 + $0x18] sm:$0xff] %vm301, %v465
  %482 = vst.msk [vmem:[%s4 + $0x20] sm:$0xff] %vm301, %v466
  %483 = vst.msk [vmem:[%s4 + $0x28] sm:$0xff] %vm301, %v467
  %484 = vst.msk [vmem:[%s4 + $0x30] sm:$0xff] %vm301, %v468
  %485 = vst.msk [vmem:[%s4 + $0x38] sm:$0xff] %vm301, %v469
  %486 = vst.msk [vmem:[%s4 + $0x40] sm:$0xff] %vm301, %v470
  %487 = vst.msk [vmem:[%s4 + $0x48] sm:$0xff] %vm301, %v471
  %488 = vst.msk [vmem:[%s4 + $0x50] sm:$0xff] %vm301, %v472
  %489 = vst.msk [vmem:[%s4 + $0x58] sm:$0xff] %vm301, %v473
  %490 = vst.msk [vmem:[%s4 + $0x60] sm:$0xff] %vm301, %v474
  %491 = vst.msk [vmem:[%s4 + $0x68] sm:$0xff] %vm301, %v475
  %492 = vst.msk [vmem:[%s4 + $0x70] sm:$0xff] %vm301, %v476
  %493 = vst.msk [vmem:[%s4 + $0x78] sm:$0xff] %vm301, %v477
  // Predicated region
  $region18: #{_lambda_.18} parent=0 // pred_check
    _
  $region19: #{_lambda_.18} parent=0 // pred_check_branch
    %495 = sbr.rel (0) target = $region21
  $region20: #{_lambda_.18} parent=0 // pred_region
    _
  $region21: #{_lambda_.18} parent=0 // pred_fallthru
    _
  // Predicated region
  $region22: #{_lambda_.18} parent=0 // pred_check
    _
  $region23: #{_lambda_.18} parent=0 // pred_check_branch
    %497 = sbr.rel (0) target = $region25
  $region24: #{_lambda_.18} parent=0 // pred_region
    _
  $region25: #{_lambda_.18} parent=0 // pred_fallthru
    _

// kernel: _lambda_.19
$region0: #{_lambda_.19}
  #allocation0 [shape = 'u32[]', space=smem, size = 0x4, offset = 0x4, fixed_abs, tag = 'smem constant byte address 0x4 - core index']
  #allocation1 [shape = 'u32[72,128]{1,0:T(1,128)}', space=vmem, size = 0x9000, scoped, tag = 'internal scratch']
  %s0 = inlined_call_operand.vmem [shape: bf16[128,288], index: 0, kind: input, shape index: {}]
  %s1 = inlined_call_operand.vmem [shape: bf16[288,32], index: 1, kind: input, shape index: {}]
  %s2 = inlined_call_operand.vmem [shape: f32[1,32], index: 2, kind: input, shape index: {}]
  %s3 = inlined_call_operand.vmem [shape: f32[1,32], index: 3, kind: input, shape index: {}]
  %s4 = inlined_call_operand.vmem [shape: f32[128,32], index: 4, kind: input, shape index: {}]
  %s5 = inlined_call_operand.vmem [shape: f32[128,32], index: 5, kind: output, shape index: {}]
  %s6 = sld [smem:[#allocation0]]
  $region30: #{_lambda_.19} parent=0
    _
  %s8 = ssub.s32 1, %s6
  %s9 = scalar_select 0, %s8, %s6
  // Predicated region
  $region2: #{_lambda_.19} parent=0 // pred_check
    _
  $region3: #{_lambda_.19} parent=0 // pred_check_branch
    %11 = sbr.rel (0) target = $region5
  $region4: #{_lambda_.19} parent=0 // pred_region
    _
  $region5: #{_lambda_.19} parent=0 // pred_fallthru
    _
  // Predicated region
  $region6: #{_lambda_.19} parent=0 // pred_check
    _
  $region7: #{_lambda_.19} parent=0 // pred_check_branch
    %13 = sbr.rel (0) target = $region9
  $region8: #{_lambda_.19} parent=0 // pred_region
    _
  $region9: #{_lambda_.19} parent=0 // pred_fallthru
    _
  // Predicated region
  $region10: #{_lambda_.19} parent=0 // pred_check
    _
  $region11: #{_lambda_.19} parent=0 // pred_check_branch
    %15 = sbr.rel (0) target = $region13
  $region12: #{_lambda_.19} parent=0 // pred_region
    _
  $region13: #{_lambda_.19} parent=0 // pred_fallthru
    _
  // Predicated region
  $region14: #{_lambda_.19} parent=0 // pred_check
    _
  $region15: #{_lambda_.19} parent=0 // pred_check_branch
    %17 = sbr.rel (0) target = $region17
  $region16: #{_lambda_.19} parent=0 // pred_region
    _
  $region17: #{_lambda_.19} parent=0 // pred_fallthru
    _
  // Predicated region
  $region18: #{_lambda_.19} parent=0 // pred_check
    _
  $region19: #{_lambda_.19} parent=0 // pred_check_branch
    %19 = sbr.rel (0) target = $region21
  $region20: #{_lambda_.19} parent=0 // pred_region
    _
  $region21: #{_lambda_.19} parent=0 // pred_fallthru
    _
  %v21 = vld [vmem:[%s0] sm:$0xff]
  %v22 = vld [vmem:[%s0 + $0x8] sm:$0xf]
  %v23 = vld [vmem:[%s0 + $0xc] sm:$0xff]
  %v24 = vld [vmem:[%s0 + $0x14] sm:$0xf]
  %v25 = vld [vmem:[%s0 + $0x18] sm:$0xff]
  %v26 = vld [vmem:[%s0 + $0x20] sm:$0xf]
  %v27 = vld [vmem:[%s0 + $0x24] sm:$0xff]
  %v28 = vld [vmem:[%s0 + $0x2c] sm:$0xf]
  %v29 = vld [vmem:[%s0 + $0x30] sm:$0xff]
  %v30 = vld [vmem:[%s0 + $0x38] sm:$0xf]
  %v31 = vld [vmem:[%s0 + $0x3c] sm:$0xff]
  %v32 = vld [vmem:[%s0 + $0x44] sm:$0xf]
  %v33 = vld [vmem:[%s0 + $0x48] sm:$0xff]
  %v34 = vld [vmem:[%s0 + $0x50] sm:$0xf]
  %v35 = vld [vmem:[%s0 + $0x54] sm:$0xff]
  %v36 = vld [vmem:[%s0 + $0x5c] sm:$0xf]
  %v37 = vld [vmem:[%s0 + $0x60] sm:$0xff]
  %v38 = vld [vmem:[%s0 + $0x68] sm:$0xf]
  %v39 = vld [vmem:[%s0 + $0x6c] sm:$0xff]
  %v40 = vld [vmem:[%s0 + $0x74] sm:$0xf]
  %v41 = vld [vmem:[%s0 + $0x78] sm:$0xff]
  %v42 = vld [vmem:[%s0 + $0x80] sm:$0xf]
  %v43 = vld [vmem:[%s0 + $0x84] sm:$0xff]
  %v44 = vld [vmem:[%s0 + $0x8c] sm:$0xf]
  %v45 = vld [vmem:[%s0 + $0x90] sm:$0xff]
  %v46 = vld [vmem:[%s0 + $0x98] sm:$0xf]
  %v47 = vld [vmem:[%s0 + $0x9c] sm:$0xff]
  %v48 = vld [vmem:[%s0 + $0xa4] sm:$0xf]
  %v49 = vld [vmem:[%s0 + $0xa8] sm:$0xff]
  %v50 = vld [vmem:[%s0 + $0xb0] sm:$0xf]
  %v51 = vld [vmem:[%s0 + $0xb4] sm:$0xff]
  %v52 = vld [vmem:[%s0 + $0xbc] sm:$0xf]
  %v53 = vld [vmem:[%s1] sm:$0xf]
  %v54 = vld [vmem:[%s1 + $0x4] sm:$0xf]
  %v55 = vld [vmem:[%s1 + $0x8] sm:$0xf]
  %v56 = vld [vmem:[%s1 + $0xc] sm:$0xf]
  %v57 = vld [vmem:[%s1 + $0x10] sm:$0xf]
  %v58 = vld [vmem:[%s1 + $0x14] sm:$0xf]
  %v59 = vld [vmem:[%s1 + $0x18] sm:$0xf]
  %v60 = vld [vmem:[%s1 + $0x1c] sm:$0xf]
  %v61 = vld [vmem:[%s1 + $0x20] sm:$0xf]
  %v62 = vld [vmem:[%s1 + $0x24] sm:$0xf]
  %v63 = vld [vmem:[%s1 + $0x28] sm:$0xf]
  %v64 = vld [vmem:[%s1 + $0x2c] sm:$0xf]
  %v65 = vld [vmem:[%s1 + $0x30] sm:$0xf]
  %v66 = vld [vmem:[%s1 + $0x34] sm:$0xf]
  %v67 = vld [vmem:[%s1 + $0x38] sm:$0xf]
  %v68 = vld [vmem:[%s1 + $0x3c] sm:$0xf]
  %v69 = vld [vmem:[%s1 + $0x40] sm:$0xf]
  %v70 = vld [vmem:[%s1 + $0x44] sm:$0xf]
  %v71 = vld [vmem:[%s1 + $0x48] sm:$0xf]
  %v72 = vld [vmem:[%s1 + $0x4c] sm:$0xf]
  %v73 = vld [vmem:[%s1 + $0x50] sm:$0xf]
  %v74 = vld [vmem:[%s1 + $0x54] sm:$0xf]
  %v75 = vld [vmem:[%s1 + $0x58] sm:$0xf]
  %v76 = vld [vmem:[%s1 + $0x5c] sm:$0xf]
  %v77 = vld [vmem:[%s1 + $0x60] sm:$0xf]
  %v78 = vld [vmem:[%s1 + $0x64] sm:$0xf]
  %v79 = vld [vmem:[%s1 + $0x68] sm:$0xf]
  %v80 = vld [vmem:[%s1 + $0x6c] sm:$0xf]
  %v81 = vld [vmem:[%s1 + $0x70] sm:$0xf]
  %v82 = vld [vmem:[%s1 + $0x74] sm:$0xf]
  %v83 = vld [vmem:[%s1 + $0x78] sm:$0xf]
  %v84 = vld [vmem:[%s1 + $0x7c] sm:$0xf]
  %v85 = vld [vmem:[%s1 + $0x80] sm:$0xf]
  %v86 = vld [vmem:[%s1 + $0x84] sm:$0xf]
  %v87 = vld [vmem:[%s1 + $0x88] sm:$0xf]
  %v88 = vld [vmem:[%s1 + $0x8c] sm:$0xf]
  %v121 = vunpack.c.l.b16 %v21
  %v122 = vunpack.c.h.b16 %v21
  %v123 = vunpack.c.l.b16 %v22
  %v124 = vunpack.c.l.b16 %v23
  %v125 = vunpack.c.h.b16 %v23
  %v126 = vunpack.c.l.b16 %v24
  %v127 = vunpack.c.l.b16 %v25
  %v128 = vunpack.c.h.b16 %v25
  %v129 = vunpack.c.l.b16 %v26
  %v130 = vunpack.c.l.b16 %v27
  %v131 = vunpack.c.h.b16 %v27
  %v132 = vunpack.c.l.b16 %v28
  %v133 = vunpack.c.l.b16 %v29
  %v134 = vunpack.c.h.b16 %v29
  %v135 = vunpack.c.l.b16 %v30
  %v136 = vunpack.c.l.b16 %v31
  %v137 = vunpack.c.h.b16 %v31
  %v138 = vunpack.c.l.b16 %v32
  %v139 = vunpack.c.l.b16 %v33
  %v140 = vunpack.c.h.b16 %v33
  %v141 = vunpack.c.l.b16 %v34
  %v142 = vunpack.c.l.b16 %v35
  %v143 = vunpack.c.h.b16 %v35
  %v144 = vunpack.c.l.b16 %v36
  %v145 = vunpack.c.l.b16 %v37
  %v146 = vunpack.c.h.b16 %v37
  %v147 = vunpack.c.l.b16 %v38
  %v148 = vunpack.c.l.b16 %v39
  %v149 = vunpack.c.h.b16 %v39
  %v150 = vunpack.c.l.b16 %v40
  %v151 = vunpack.c.l.b16 %v41
  %v152 = vunpack.c.h.b16 %v41
  %v153 = vunpack.c.l.b16 %v42
  %v154 = vunpack.c.l.b16 %v43
  %v155 = vunpack.c.h.b16 %v43
  %v156 = vunpack.c.l.b16 %v44
  %v157 = vunpack.c.l.b16 %v45
  %v158 = vunpack.c.h.b16 %v45
  %v159 = vunpack.c.l.b16 %v46
  %v160 = vunpack.c.l.b16 %v47
  %v161 = vunpack.c.h.b16 %v47
  %v162 = vunpack.c.l.b16 %v48
  %v163 = vunpack.c.l.b16 %v49
  %v164 = vunpack.c.h.b16 %v49
  %v165 = vunpack.c.l.b16 %v50
  %v166 = vunpack.c.l.b16 %v51
  %v167 = vunpack.c.h.b16 %v51
  %v168 = vunpack.c.l.b16 %v52
  %v169 = vpack.c.b16 %v124, %v121
  %v170 = vpack.c.b16 %v125, %v122
  %v171 = vpack.c.b16 %v126, %v123
  %v172 = vpack.c.b16 %v130, %v127
  %v173 = vpack.c.b16 %v131, %v128
  %v174 = vpack.c.b16 %v132, %v129
  %v175 = vpack.c.b16 %v136, %v133
  %v176 = vpack.c.b16 %v137, %v134
  %v177 = vpack.c.b16 %v138, %v135
  %v178 = vpack.c.b16 %v142, %v139
  %v179 = vpack.c.b16 %v143, %v140
  %v180 = vpack.c.b16 %v144, %v141
  %v181 = vpack.c.b16 %v148, %v145
  %v182 = vpack.c.b16 %v149, %v146
  %v183 = vpack.c.b16 %v150, %v147
  %v184 = vpack.c.b16 %v154, %v151
  %v185 = vpack.c.b16 %v155, %v152
  %v186 = vpack.c.b16 %v156, %v153
  %v187 = vpack.c.b16 %v160, %v157
  %v188 = vpack.c.b16 %v161, %v158
  %v189 = vpack.c.b16 %v162, %v159
  %v190 = vpack.c.b16 %v166, %v163
  %v191 = vpack.c.b16 %v167, %v164
  %v192 = vpack.c.b16 %v168, %v165
  %v245 = vunpack.c.l.b16 %v53
  %v246 = vunpack.c.l.b16 %v54
  %v247 = vunpack.c.l.b16 %v55
  %v248 = vunpack.c.l.b16 %v56
  %v249 = vunpack.c.l.b16 %v57
  %v250 = vunpack.c.l.b16 %v58
  %v251 = vunpack.c.l.b16 %v59
  %v252 = vunpack.c.l.b16 %v60
  %v253 = vunpack.c.l.b16 %v61
  %v254 = vunpack.c.l.b16 %v62
  %v255 = vunpack.c.l.b16 %v63
  %v256 = vunpack.c.l.b16 %v64
  %v257 = vunpack.c.l.b16 %v65
  %v258 = vunpack.c.l.b16 %v66
  %v259 = vunpack.c.l.b16 %v67
  %v260 = vunpack.c.l.b16 %v68
  %v261 = vunpack.c.l.b16 %v69
  %v262 = vunpack.c.l.b16 %v70
  %v263 = vunpack.c.l.b16 %v71
  %v264 = vunpack.c.l.b16 %v72
  %v265 = vunpack.c.l.b16 %v73
  %v266 = vunpack.c.l.b16 %v74
  %v267 = vunpack.c.l.b16 %v75
  %v268 = vunpack.c.l.b16 %v76
  %v269 = vunpack.c.l.b16 %v77
  %v270 = vunpack.c.l.b16 %v78
  %v271 = vunpack.c.l.b16 %v79
  %v272 = vunpack.c.l.b16 %v80
  %v273 = vunpack.c.l.b16 %v81
  %v274 = vunpack.c.l.b16 %v82
  %v275 = vunpack.c.l.b16 %v83
  %v276 = vunpack.c.l.b16 %v84
  %v277 = vunpack.c.l.b16 %v85
  %v278 = vunpack.c.l.b16 %v86
  %v279 = vunpack.c.l.b16 %v87
  %v280 = vunpack.c.l.b16 %v88
  %v281 = vpack.c.b16 %v246, %v245
  %v282 = vpack.c.b16 %v248, %v247
  %v283 = vpack.c.b16 %v250, %v249
  %v284 = vpack.c.b16 %v252, %v251
  %v285 = vpack.c.b16 %v254, %v253
  %v286 = vpack.c.b16 %v256, %v255
  %v287 = vpack.c.b16 %v258, %v257
  %v288 = vpack.c.b16 %v260, %v259
  %v289 = vpack.c.b16 %v262, %v261
  %v290 = vpack.c.b16 %v264, %v263
  %v291 = vpack.c.b16 %v266, %v265
  %v292 = vpack.c.b16 %v268, %v267
  %v293 = vpack.c.b16 %v270, %v269
  %v294 = vpack.c.b16 %v272, %v271
  %v295 = vpack.c.b16 %v274, %v273
  %v296 = vpack.c.b16 %v276, %v275
  %v297 = vpack.c.b16 %v278, %v277
  %v298 = vpack.c.b16 %v280, %v279
  %vm317 = vcmask 261120
  %v319 = vsel %vm317, %v171, 0
  %v322 = vsel %vm317, %v174, 0
  %v325 = vsel %vm317, %v177, 0
  %v328 = vsel %vm317, %v180, 0
  %v331 = vsel %vm317, %v183, 0
  %v334 = vsel %vm317, %v186, 0
  %v337 = vsel %vm317, %v189, 0
  %v340 = vsel %vm317, %v192, 0
  %342 = vmatpush.bf16.msra.mxu0 %v288
  %343 = vmatpush.bf16.msra.mxu0 %v287
  %344 = vmatpush.bf16.msra.mxu0 %v286
  %345 = vmatpush.bf16.msra.mxu0 %v285
  %346 = vmatpush.bf16.msra.mxu0 %v284
  %347 = vmatpush.bf16.msra.mxu0 %v283
  %348 = vmatpush.bf16.msra.mxu0 %v282
  %349 = vmatpush.bf16.msra.mxu0 %v281
  %350 = vmatmul.bf16.gmra.mxu0 %v169
  %v351 = vpop.f32.mrf.mxu0
  %v352 = vadd.f32 0.0, %v351
  %v353 = vpop.f32.mrf.mxu0
  %v354 = vadd.f32 0.0, %v353
  %355 = vmatmul.bf16.gmra.mxu0 %v172
  %v356 = vpop.f32.mrf.mxu0
  %v357 = vadd.f32 0.0, %v356
  %v358 = vpop.f32.mrf.mxu0
  %v359 = vadd.f32 0.0, %v358
  %360 = vmatmul.bf16.gmra.mxu0 %v175
  %v361 = vpop.f32.mrf.mxu0
  %v362 = vadd.f32 0.0, %v361
  %v363 = vpop.f32.mrf.mxu0
  %v364 = vadd.f32 0.0, %v363
  %365 = vmatmul.bf16.gmra.mxu0 %v178
  %v366 = vpop.f32.mrf.mxu0
  %v367 = vadd.f32 0.0, %v366
  %v368 = vpop.f32.mrf.mxu0
  %v369 = vadd.f32 0.0, %v368
  %370 = vmatmul.bf16.gmra.mxu0 %v181
  %v371 = vpop.f32.mrf.mxu0
  %v372 = vadd.f32 0.0, %v371
  %v373 = vpop.f32.mrf.mxu0
  %v374 = vadd.f32 0.0, %v373
  %375 = vmatmul.bf16.gmra.mxu0 %v184
  %v376 = vpop.f32.mrf.mxu0
  %v377 = vadd.f32 0.0, %v376
  %v378 = vpop.f32.mrf.mxu0
  %v379 = vadd.f32 0.0, %v378
  %380 = vmatmul.bf16.gmra.mxu0 %v187
  %v381 = vpop.f32.mrf.mxu0
  %v382 = vadd.f32 0.0, %v381
  %v383 = vpop.f32.mrf.mxu0
  %v384 = vadd.f32 0.0, %v383
  %385 = vmatmul.bf16.gmra.mxu0 %v190
  %v386 = vpop.f32.mrf.mxu0
  %v387 = vadd.f32 0.0, %v386
  %v388 = vpop.f32.mrf.mxu0
  %v389 = vadd.f32 0.0, %v388
  %390 = vdwg.mxu0
  %391 = vmatpush.bf16.msra.mxu0 %v296
  %392 = vmatpush.bf16.msra.mxu0 %v295
  %393 = vmatpush.bf16.msra.mxu0 %v294
  %394 = vmatpush.bf16.msra.mxu0 %v293
  %395 = vmatpush.bf16.msra.mxu0 %v292
  %396 = vmatpush.bf16.msra.mxu0 %v291
  %397 = vmatpush.bf16.msra.mxu0 %v290
  %398 = vmatpush.bf16.msra.mxu0 %v289
  %399 = vmatmul.bf16.gmra.mxu0 %v170
  %v400 = vpop.f32.mrf.mxu0
  %v401 = vadd.f32 %v352, %v400
  %v402 = vpop.f32.mrf.mxu0
  %v403 = vadd.f32 %v354, %v402
  %404 = vmatmul.bf16.gmra.mxu0 %v173
  %v405 = vpop.f32.mrf.mxu0
  %v406 = vadd.f32 %v357, %v405
  %v407 = vpop.f32.mrf.mxu0
  %v408 = vadd.f32 %v359, %v407
  %409 = vmatmul.bf16.gmra.mxu0 %v176
  %v410 = vpop.f32.mrf.mxu0
  %v411 = vadd.f32 %v362, %v410
  %v412 = vpop.f32.mrf.mxu0
  %v413 = vadd.f32 %v364, %v412
  %414 = vmatmul.bf16.gmra.mxu0 %v179
  %v415 = vpop.f32.mrf.mxu0
  %v416 = vadd.f32 %v367, %v415
  %v417 = vpop.f32.mrf.mxu0
  %v418 = vadd.f32 %v369, %v417
  %419 = vmatmul.bf16.gmra.mxu0 %v182
  %v420 = vpop.f32.mrf.mxu0
  %v421 = vadd.f32 %v372, %v420
  %v422 = vpop.f32.mrf.mxu0
  %v423 = vadd.f32 %v374, %v422
  %424 = vmatmul.bf16.gmra.mxu0 %v185
  %v425 = vpop.f32.mrf.mxu0
  %v426 = vadd.f32 %v377, %v425
  %v427 = vpop.f32.mrf.mxu0
  %v428 = vadd.f32 %v379, %v427
  %429 = vmatmul.bf16.gmra.mxu0 %v188
  %v430 = vpop.f32.mrf.mxu0
  %v431 = vadd.f32 %v382, %v430
  %v432 = vpop.f32.mrf.mxu0
  %v433 = vadd.f32 %v384, %v432
  %434 = vmatmul.bf16.gmra.mxu0 %v191
  %v435 = vpop.f32.mrf.mxu0
  %v436 = vadd.f32 %v387, %v435
  %v437 = vpop.f32.mrf.mxu0
  %v438 = vadd.f32 %v389, %v437
  %439 = vdwg.mxu0
  %440 = vmatpush.bf16.msra.mxu0 0
  %441 = vmatpush.bf16.msra.mxu0 0
  %442 = vmatpush.bf16.msra.mxu0 0
  %443 = vmatpush.bf16.msra.mxu0 0
  %444 = vmatpush.bf16.msra.mxu0 0
  %445 = vmatpush.bf16.msra.mxu0 0
  %446 = vmatpush.bf16.msra.mxu0 %v298
  %447 = vmatpush.bf16.msra.mxu0 %v297
  %448 = vmatmul.bf16.gmra.mxu0 %v319
  %v449 = vpop.f32.mrf.mxu0
  %v450 = vadd.f32 %v401, %v449
  %v451 = vpop.f32.mrf.mxu0
  %v452 = vadd.f32 %v403, %v451
  %453 = vmatmul.bf16.gmra.mxu0 %v322
  %v454 = vpop.f32.mrf.mxu0
  %v455 = vadd.f32 %v406, %v454
  %v456 = vpop.f32.mrf.mxu0
  %v457 = vadd.f32 %v408, %v456
  %458 = vmatmul.bf16.gmra.mxu0 %v325
  %v459 = vpop.f32.mrf.mxu0
  %v460 = vadd.f32 %v411, %v459
  %v461 = vpop.f32.mrf.mxu0
  %v462 = vadd.f32 %v413, %v461
  %463 = vmatmul.bf16.gmra.mxu0 %v328
  %v464 = vpop.f32.mrf.mxu0
  %v465 = vadd.f32 %v416, %v464
  %v466 = vpop.f32.mrf.mxu0
  %v467 = vadd.f32 %v418, %v466
  %468 = vmatmul.bf16.gmra.mxu0 %v331
  %v469 = vpop.f32.mrf.mxu0
  %v470 = vadd.f32 %v421, %v469
  %v471 = vpop.f32.mrf.mxu0
  %v472 = vadd.f32 %v423, %v471
  %473 = vmatmul.bf16.gmra.mxu0 %v334
  %v474 = vpop.f32.mrf.mxu0
  %v475 = vadd.f32 %v426, %v474
  %v476 = vpop.f32.mrf.mxu0
  %v477 = vadd.f32 %v428, %v476
  %478 = vmatmul.bf16.gmra.mxu0 %v337
  %v479 = vpop.f32.mrf.mxu0
  %v480 = vadd.f32 %v431, %v479
  %v481 = vpop.f32.mrf.mxu0
  %v482 = vadd.f32 %v433, %v481
  %483 = vmatmul.bf16.gmra.mxu0 %v340
  %v484 = vpop.f32.mrf.mxu0
  %v485 = vadd.f32 %v436, %v484
  %v486 = vpop.f32.mrf.mxu0
  %v487 = vadd.f32 %v438, %v486
  %488 = vdwg.mxu0
  %v489 = vsel %vm317, %v450, 0.0
  %v490 = vsel %vm317, %v452, 0.0
  %v491 = vadd.f32 %v489, %v490
  %v492 = vsel %vm317, %v455, 0.0
  %v493 = vadd.f32 %v491, %v492
  %v494 = vsel %vm317, %v457, 0.0
  %v495 = vadd.f32 %v493, %v494
  %v496 = vsel %vm317, %v460, 0.0
  %v497 = vadd.f32 %v495, %v496
  %v498 = vsel %vm317, %v462, 0.0
  %v499 = vadd.f32 %v497, %v498
  %v500 = vsel %vm317, %v465, 0.0
  %v501 = vadd.f32 %v499, %v500
  %v502 = vsel %vm317, %v467, 0.0
  %v503 = vadd.f32 %v501, %v502
  %v504 = vsel %vm317, %v470, 0.0
  %v505 = vadd.f32 %v503, %v504
  %v506 = vsel %vm317, %v472, 0.0
  %v507 = vadd.f32 %v505, %v506
  %v508 = vsel %vm317, %v475, 0.0
  %v509 = vadd.f32 %v507, %v508
  %v510 = vsel %vm317, %v477, 0.0
  %v511 = vadd.f32 %v509, %v510
  %v512 = vsel %vm317, %v480, 0.0
  %v513 = vadd.f32 %v511, %v512
  %v514 = vsel %vm317, %v482, 0.0
  %v515 = vadd.f32 %v513, %v514
  %v516 = vsel %vm317, %v485, 0.0
  %v517 = vadd.f32 %v515, %v516
  %v518 = vsel %vm317, %v487, 0.0
  %v519 = vadd.f32 %v517, %v518
  %v520 = vrot.slane %v519, 4
  %v521 = vadd.f32 %v519, %v520
  %v522 = vrot.slane %v521, 2
  %v523 = vadd.f32 %v521, %v522
  %v524 = vrot.slane %v523, 1
  %v525 = vadd.f32 %v523, %v524
  %v526 = vmul.f32 %v525, 0.0078125
  %v527 = vsub.f32 %v450, %v526
  %v528 = vsub.f32 %v452, %v526
  %v529 = vsub.f32 %v455, %v526
  %v530 = vsub.f32 %v457, %v526
  %v531 = vsub.f32 %v460, %v526
  %v532 = vsub.f32 %v462, %v526
  %v533 = vsub.f32 %v465, %v526
  %v534 = vsub.f32 %v467, %v526
  %v535 = vsub.f32 %v470, %v526
  %v536 = vsub.f32 %v472, %v526
  %v537 = vsub.f32 %v475, %v526
  %v538 = vsub.f32 %v477, %v526
  %v539 = vsub.f32 %v480, %v526
  %v540 = vsub.f32 %v482, %v526
  %v541 = vsub.f32 %v485, %v526
  %v542 = vsub.f32 %v487, %v526
  %v543 = vmul.f32 %v527, %v527
  %v544 = vmul.f32 %v528, %v528
  %v545 = vmul.f32 %v529, %v529
  %v546 = vmul.f32 %v530, %v530
  %v547 = vmul.f32 %v531, %v531
  %v548 = vmul.f32 %v532, %v532
  %v549 = vmul.f32 %v533, %v533
  %v550 = vmul.f32 %v534, %v534
  %v551 = vmul.f32 %v535, %v535
  %v552 = vmul.f32 %v536, %v536
  %v553 = vmul.f32 %v537, %v537
  %v554 = vmul.f32 %v538, %v538
  %v555 = vmul.f32 %v539, %v539
  %v556 = vmul.f32 %v540, %v540
  %v557 = vmul.f32 %v541, %v541
  %v558 = vmul.f32 %v542, %v542
  %v559 = vsel %vm317, %v543, 0.0
  %v560 = vsel %vm317, %v544, 0.0
  %v561 = vadd.f32 %v559, %v560
  %v562 = vsel %vm317, %v545, 0.0
  %v563 = vadd.f32 %v561, %v562
  %v564 = vsel %vm317, %v546, 0.0
  %v565 = vadd.f32 %v563, %v564
  %v566 = vsel %vm317, %v547, 0.0
  %v567 = vadd.f32 %v565, %v566
  %v568 = vsel %vm317, %v548, 0.0
  %v569 = vadd.f32 %v567, %v568
  %v570 = vsel %vm317, %v549, 0.0
  %v571 = vadd.f32 %v569, %v570
  %v572 = vsel %vm317, %v550, 0.0
  %v573 = vadd.f32 %v571, %v572
  %v574 = vsel %vm317, %v551, 0.0
  %v575 = vadd.f32 %v573, %v574
  %v576 = vsel %vm317, %v552, 0.0
  %v577 = vadd.f32 %v575, %v576
  %v578 = vsel %vm317, %v553, 0.0
  %v579 = vadd.f32 %v577, %v578
  %v580 = vsel %vm317, %v554, 0.0
  %v581 = vadd.f32 %v579, %v580
  %v582 = vsel %vm317, %v555, 0.0
  %v583 = vadd.f32 %v581, %v582
  %v584 = vsel %vm317, %v556, 0.0
  %v585 = vadd.f32 %v583, %v584
  %v586 = vsel %vm317, %v557, 0.0
  %v587 = vadd.f32 %v585, %v586
  %v588 = vsel %vm317, %v558, 0.0
  %v589 = vadd.f32 %v587, %v588
  %v590 = vrot.slane %v589, 4
  %v591 = vadd.f32 %v589, %v590
  %v592 = vrot.slane %v591, 2
  %v593 = vadd.f32 %v591, %v592
  %v594 = vrot.slane %v593, 1
  %v595 = vadd.f32 %v593, %v594
  %v596 = vmul.f32 %v595, 0.0078125
  %v597 = vld [vmem:[%s2] sm:$0x1]
  %v598 = vadd.f32 %v596, 1e-05
  %v599 = vrsqrt.pop %v598
  %v600 = vmul.f32 %v599, %v598
  %v601 = vmul.f32 %v600, %v599
  %v602 = vmul.f32 0.5, %v601
  %v603 = vsub.f32 1.5, %v602
  %v604 = vmul.f32 %v599, %v603
  %vm605 = vweird.f32 %v598
  %vm606 = vweird.f32 %v599
  %vm607 = vmor %vm605, %vm606
  %v608 = vsel %vm607, %v599, %v604
  %v609 = vmul.f32 %v597, %v608
  %v611 = vperm.slane %v609, 0
  %v613 = vmul.f32 %v527, %v611
  %v614 = vmul.f32 %v528, %v611
  %v615 = vmul.f32 %v529, %v611
  %v616 = vmul.f32 %v530, %v611
  %v617 = vmul.f32 %v531, %v611
  %v618 = vmul.f32 %v532, %v611
  %v619 = vmul.f32 %v533, %v611
  %v620 = vmul.f32 %v534, %v611
  %v621 = vmul.f32 %v535, %v611
  %v622 = vmul.f32 %v536, %v611
  %v623 = vmul.f32 %v537, %v611
  %v624 = vmul.f32 %v538, %v611
  %v625 = vmul.f32 %v539, %v611
  %v626 = vmul.f32 %v540, %v611
  %v627 = vmul.f32 %v541, %v611
  %v628 = vmul.f32 %v542, %v611
  %v629 = vld [vmem:[%s3] sm:$0x1]
  %v631 = vperm.slane %v629, 0
  %v633 = vadd.f32 %v613, %v631
  %v634 = vadd.f32 %v614, %v631
  %v635 = vadd.f32 %v615, %v631
  %v636 = vadd.f32 %v616, %v631
  %v637 = vadd.f32 %v617, %v631
  %v638 = vadd.f32 %v618, %v631
  %v639 = vadd.f32 %v619, %v631
  %v640 = vadd.f32 %v620, %v631
  %v641 = vadd.f32 %v621, %v631
  %v642 = vadd.f32 %v622, %v631
  %v643 = vadd.f32 %v623, %v631
  %v644 = vadd.f32 %v624, %v631
  %v645 = vadd.f32 %v625, %v631
  %v646 = vadd.f32 %v626, %v631
  %v647 = vadd.f32 %v627, %v631
  %v648 = vadd.f32 %v628, %v631
  %v649 = vld [vmem:[%s4] sm:$0xff]
  %v650 = vld [vmem:[%s4 + $0x8] sm:$0xff]
  %v651 = vld [vmem:[%s4 + $0x10] sm:$0xff]
  %v652 = vld [vmem:[%s4 + $0x18] sm:$0xff]
  %v653 = vld [vmem:[%s4 + $0x20] sm:$0xff]
  %v654 = vld [vmem:[%s4 + $0x28] sm:$0xff]
  %v655 = vld [vmem:[%s4 + $0x30] sm:$0xff]
  %v656 = vld [vmem:[%s4 + $0x38] sm:$0xff]
  %v657 = vld [vmem:[%s4 + $0x40] sm:$0xff]
  %v658 = vld [vmem:[%s4 + $0x48] sm:$0xff]
  %v659 = vld [vmem:[%s4 + $0x50] sm:$0xff]
  %v660 = vld [vmem:[%s4 + $0x58] sm:$0xff]
  %v661 = vld [vmem:[%s4 + $0x60] sm:$0xff]
  %v662 = vld [vmem:[%s4 + $0x68] sm:$0xff]
  %v663 = vld [vmem:[%s4 + $0x70] sm:$0xff]
  %v664 = vld [vmem:[%s4 + $0x78] sm:$0xff]
  %v665 = vadd.f32 %v633, %v649
  %v666 = vadd.f32 %v634, %v650
  %v667 = vadd.f32 %v635, %v651
  %v668 = vadd.f32 %v636, %v652
  %v669 = vadd.f32 %v637, %v653
  %v670 = vadd.f32 %v638, %v654
  %v671 = vadd.f32 %v639, %v655
  %v672 = vadd.f32 %v640, %v656
  %v673 = vadd.f32 %v641, %v657
  %v674 = vadd.f32 %v642, %v658
  %v675 = vadd.f32 %v643, %v659
  %v676 = vadd.f32 %v644, %v660
  %v677 = vadd.f32 %v645, %v661
  %v678 = vadd.f32 %v646, %v662
  %v679 = vadd.f32 %v647, %v663
  %v680 = vadd.f32 %v648, %v664
  %v681 = vmax.f32 %v665, 0.0
  %v682 = vmax.f32 %v666, 0.0
  %v683 = vmax.f32 %v667, 0.0
  %v684 = vmax.f32 %v668, 0.0
  %v685 = vmax.f32 %v669, 0.0
  %v686 = vmax.f32 %v670, 0.0
  %v687 = vmax.f32 %v671, 0.0
  %v688 = vmax.f32 %v672, 0.0
  %v689 = vmax.f32 %v673, 0.0
  %v690 = vmax.f32 %v674, 0.0
  %v691 = vmax.f32 %v675, 0.0
  %v692 = vmax.f32 %v676, 0.0
  %v693 = vmax.f32 %v677, 0.0
  %v694 = vmax.f32 %v678, 0.0
  %v695 = vmax.f32 %v679, 0.0
  %v696 = vmax.f32 %v680, 0.0
  %697 = vst.msk [vmem:[%s5] sm:$0xff] %vm317, %v681
  %698 = vst.msk [vmem:[%s5 + $0x8] sm:$0xff] %vm317, %v682
  %699 = vst.msk [vmem:[%s5 + $0x10] sm:$0xff] %vm317, %v683
  %700 = vst.msk [vmem:[%s5 + $0x18] sm:$0xff] %vm317, %v684
  %701 = vst.msk [vmem:[%s5 + $0x20] sm:$0xff] %vm317, %v685
  %702 = vst.msk [vmem:[%s5 + $0x28] sm:$0xff] %vm317, %v686
  %703 = vst.msk [vmem:[%s5 + $0x30] sm:$0xff] %vm317, %v687
  %704 = vst.msk [vmem:[%s5 + $0x38] sm:$0xff] %vm317, %v688
  %705 = vst.msk [vmem:[%s5 + $0x40] sm:$0xff] %vm317, %v689
  %706 = vst.msk [vmem:[%s5 + $0x48] sm:$0xff] %vm317, %v690
  %707 = vst.msk [vmem:[%s5 + $0x50] sm:$0xff] %vm317, %v691
  %708 = vst.msk [vmem:[%s5 + $0x58] sm:$0xff] %vm317, %v692
  %709 = vst.msk [vmem:[%s5 + $0x60] sm:$0xff] %vm317, %v693
  %710 = vst.msk [vmem:[%s5 + $0x68] sm:$0xff] %vm317, %v694
  %711 = vst.msk [vmem:[%s5 + $0x70] sm:$0xff] %vm317, %v695
  %712 = vst.msk [vmem:[%s5 + $0x78] sm:$0xff] %vm317, %v696
  // Predicated region
  $region22: #{_lambda_.19} parent=0 // pred_check
    _
  $region23: #{_lambda_.19} parent=0 // pred_check_branch
    %714 = sbr.rel (0) target = $region25
  $region24: #{_lambda_.19} parent=0 // pred_region
    _
  $region25: #{_lambda_.19} parent=0 // pred_fallthru
    _
  // Predicated region
  $region26: #{_lambda_.19} parent=0 // pred_check
    _
  $region27: #{_lambda_.19} parent=0 // pred_check_branch
    %716 = sbr.rel (0) target = $region29
  $region28: #{_lambda_.19} parent=0 // pred_region
    _
  $region29: #{_lambda_.19} parent=0 // pred_fallthru
    _

// kernel: _lambda_.20
$region0: #{_lambda_.20}
  #allocation0 [shape = 'u32[]', space=smem, size = 0x4, offset = 0x4, fixed_abs, tag = 'smem constant byte address 0x4 - core index']
  #allocation1 [shape = 'u32[72,128]{1,0:T(1,128)}', space=vmem, size = 0x9000, scoped, tag = 'internal scratch']
  %s0 = inlined_call_operand.vmem [shape: bf16[128,288], index: 0, kind: input, shape index: {}]
  %s1 = inlined_call_operand.vmem [shape: bf16[288,32], index: 1, kind: input, shape index: {}]
  %s2 = inlined_call_operand.vmem [shape: f32[1,32], index: 2, kind: input, shape index: {}]
  %s3 = inlined_call_operand.vmem [shape: f32[1,32], index: 3, kind: input, shape index: {}]
  %s4 = inlined_call_operand.vmem [shape: f32[128,32], index: 4, kind: output, shape index: {}]
  %s5 = sld [smem:[#allocation0]]
  $region26: #{_lambda_.20} parent=0
    _
  %s7 = ssub.s32 1, %s5
  %s8 = scalar_select 0, %s7, %s5
  // Predicated region
  $region2: #{_lambda_.20} parent=0 // pred_check
    _
  $region3: #{_lambda_.20} parent=0 // pred_check_branch
    %10 = sbr.rel (0) target = $region5
  $region4: #{_lambda_.20} parent=0 // pred_region
    _
  $region5: #{_lambda_.20} parent=0 // pred_fallthru
    _
  // Predicated region
  $region6: #{_lambda_.20} parent=0 // pred_check
    _
  $region7: #{_lambda_.20} parent=0 // pred_check_branch
    %12 = sbr.rel (0) target = $region9
  $region8: #{_lambda_.20} parent=0 // pred_region
    _
  $region9: #{_lambda_.20} parent=0 // pred_fallthru
    _
  // Predicated region
  $region10: #{_lambda_.20} parent=0 // pred_check
    _
  $region11: #{_lambda_.20} parent=0 // pred_check_branch
    %14 = sbr.rel (0) target = $region13
  $region12: #{_lambda_.20} parent=0 // pred_region
    _
  $region13: #{_lambda_.20} parent=0 // pred_fallthru
    _
  // Predicated region
  $region14: #{_lambda_.20} parent=0 // pred_check
    _
  $region15: #{_lambda_.20} parent=0 // pred_check_branch
    %16 = sbr.rel (0) target = $region17
  $region16: #{_lambda_.20} parent=0 // pred_region
    _
  $region17: #{_lambda_.20} parent=0 // pred_fallthru
    _
  %v18 = vld [vmem:[%s0] sm:$0xff]
  %v19 = vld [vmem:[%s0 + $0x8] sm:$0xf]
  %v20 = vld [vmem:[%s0 + $0xc] sm:$0xff]
  %v21 = vld [vmem:[%s0 + $0x14] sm:$0xf]
  %v22 = vld [vmem:[%s0 + $0x18] sm:$0xff]
  %v23 = vld [vmem:[%s0 + $0x20] sm:$0xf]
  %v24 = vld [vmem:[%s0 + $0x24] sm:$0xff]
  %v25 = vld [vmem:[%s0 + $0x2c] sm:$0xf]
  %v26 = vld [vmem:[%s0 + $0x30] sm:$0xff]
  %v27 = vld [vmem:[%s0 + $0x38] sm:$0xf]
  %v28 = vld [vmem:[%s0 + $0x3c] sm:$0xff]
  %v29 = vld [vmem:[%s0 + $0x44] sm:$0xf]
  %v30 = vld [vmem:[%s0 + $0x48] sm:$0xff]
  %v31 = vld [vmem:[%s0 + $0x50] sm:$0xf]
  %v32 = vld [vmem:[%s0 + $0x54] sm:$0xff]
  %v33 = vld [vmem:[%s0 + $0x5c] sm:$0xf]
  %v34 = vld [vmem:[%s0 + $0x60] sm:$0xff]
  %v35 = vld [vmem:[%s0 + $0x68] sm:$0xf]
  %v36 = vld [vmem:[%s0 + $0x6c] sm:$0xff]
  %v37 = vld [vmem:[%s0 + $0x74] sm:$0xf]
  %v38 = vld [vmem:[%s0 + $0x78] sm:$0xff]
  %v39 = vld [vmem:[%s0 + $0x80] sm:$0xf]
  %v40 = vld [vmem:[%s0 + $0x84] sm:$0xff]
  %v41 = vld [vmem:[%s0 + $0x8c] sm:$0xf]
  %v42 = vld [vmem:[%s0 + $0x90] sm:$0xff]
  %v43 = vld [vmem:[%s0 + $0x98] sm:$0xf]
  %v44 = vld [vmem:[%s0 + $0x9c] sm:$0xff]
  %v45 = vld [vmem:[%s0 + $0xa4] sm:$0xf]
  %v46 = vld [vmem:[%s0 + $0xa8] sm:$0xff]
  %v47 = vld [vmem:[%s0 + $0xb0] sm:$0xf]
  %v48 = vld [vmem:[%s0 + $0xb4] sm:$0xff]
  %v49 = vld [vmem:[%s0 + $0xbc] sm:$0xf]
  %v50 = vld [vmem:[%s1] sm:$0xf]
  %v51 = vld [vmem:[%s1 + $0x4] sm:$0xf]
  %v52 = vld [vmem:[%s1 + $0x8] sm:$0xf]
  %v53 = vld [vmem:[%s1 + $0xc] sm:$0xf]
  %v54 = vld [vmem:[%s1 + $0x10] sm:$0xf]
  %v55 = vld [vmem:[%s1 + $0x14] sm:$0xf]
  %v56 = vld [vmem:[%s1 + $0x18] sm:$0xf]
  %v57 = vld [vmem:[%s1 + $0x1c] sm:$0xf]
  %v58 = vld [vmem:[%s1 + $0x20] sm:$0xf]
  %v59 = vld [vmem:[%s1 + $0x24] sm:$0xf]
  %v60 = vld [vmem:[%s1 + $0x28] sm:$0xf]
  %v61 = vld [vmem:[%s1 + $0x2c] sm:$0xf]
  %v62 = vld [vmem:[%s1 + $0x30] sm:$0xf]
  %v63 = vld [vmem:[%s1 + $0x34] sm:$0xf]
  %v64 = vld [vmem:[%s1 + $0x38] sm:$0xf]
  %v65 = vld [vmem:[%s1 + $0x3c] sm:$0xf]
  %v66 = vld [vmem:[%s1 + $0x40] sm:$0xf]
  %v67 = vld [vmem:[%s1 + $0x44] sm:$0xf]
  %v68 = vld [vmem:[%s1 + $0x48] sm:$0xf]
  %v69 = vld [vmem:[%s1 + $0x4c] sm:$0xf]
  %v70 = vld [vmem:[%s1 + $0x50] sm:$0xf]
  %v71 = vld [vmem:[%s1 + $0x54] sm:$0xf]
  %v72 = vld [vmem:[%s1 + $0x58] sm:$0xf]
  %v73 = vld [vmem:[%s1 + $0x5c] sm:$0xf]
  %v74 = vld [vmem:[%s1 + $0x60] sm:$0xf]
  %v75 = vld [vmem:[%s1 + $0x64] sm:$0xf]
  %v76 = vld [vmem:[%s1 + $0x68] sm:$0xf]
  %v77 = vld [vmem:[%s1 + $0x6c] sm:$0xf]
  %v78 = vld [vmem:[%s1 + $0x70] sm:$0xf]
  %v79 = vld [vmem:[%s1 + $0x74] sm:$0xf]
  %v80 = vld [vmem:[%s1 + $0x78] sm:$0xf]
  %v81 = vld [vmem:[%s1 + $0x7c] sm:$0xf]
  %v82 = vld [vmem:[%s1 + $0x80] sm:$0xf]
  %v83 = vld [vmem:[%s1 + $0x84] sm:$0xf]
  %v84 = vld [vmem:[%s1 + $0x88] sm:$0xf]
  %v85 = vld [vmem:[%s1 + $0x8c] sm:$0xf]
  %v118 = vunpack.c.l.b16 %v18
  %v119 = vunpack.c.h.b16 %v18
  %v120 = vunpack.c.l.b16 %v19
  %v121 = vunpack.c.l.b16 %v20
  %v122 = vunpack.c.h.b16 %v20
  %v123 = vunpack.c.l.b16 %v21
  %v124 = vunpack.c.l.b16 %v22
  %v125 = vunpack.c.h.b16 %v22
  %v126 = vunpack.c.l.b16 %v23
  %v127 = vunpack.c.l.b16 %v24
  %v128 = vunpack.c.h.b16 %v24
  %v129 = vunpack.c.l.b16 %v25
  %v130 = vunpack.c.l.b16 %v26
  %v131 = vunpack.c.h.b16 %v26
  %v132 = vunpack.c.l.b16 %v27
  %v133 = vunpack.c.l.b16 %v28
  %v134 = vunpack.c.h.b16 %v28
  %v135 = vunpack.c.l.b16 %v29
  %v136 = vunpack.c.l.b16 %v30
  %v137 = vunpack.c.h.b16 %v30
  %v138 = vunpack.c.l.b16 %v31
  %v139 = vunpack.c.l.b16 %v32
  %v140 = vunpack.c.h.b16 %v32
  %v141 = vunpack.c.l.b16 %v33
  %v142 = vunpack.c.l.b16 %v34
  %v143 = vunpack.c.h.b16 %v34
  %v144 = vunpack.c.l.b16 %v35
  %v145 = vunpack.c.l.b16 %v36
  %v146 = vunpack.c.h.b16 %v36
  %v147 = vunpack.c.l.b16 %v37
  %v148 = vunpack.c.l.b16 %v38
  %v149 = vunpack.c.h.b16 %v38
  %v150 = vunpack.c.l.b16 %v39
  %v151 = vunpack.c.l.b16 %v40
  %v152 = vunpack.c.h.b16 %v40
  %v153 = vunpack.c.l.b16 %v41
  %v154 = vunpack.c.l.b16 %v42
  %v155 = vunpack.c.h.b16 %v42
  %v156 = vunpack.c.l.b16 %v43
  %v157 = vunpack.c.l.b16 %v44
  %v158 = vunpack.c.h.b16 %v44
  %v159 = vunpack.c.l.b16 %v45
  %v160 = vunpack.c.l.b16 %v46
  %v161 = vunpack.c.h.b16 %v46
  %v162 = vunpack.c.l.b16 %v47
  %v163 = vunpack.c.l.b16 %v48
  %v164 = vunpack.c.h.b16 %v48
  %v165 = vunpack.c.l.b16 %v49
  %v166 = vpack.c.b16 %v121, %v118
  %v167 = vpack.c.b16 %v122, %v119
  %v168 = vpack.c.b16 %v123, %v120
  %v169 = vpack.c.b16 %v127, %v124
  %v170 = vpack.c.b16 %v128, %v125
  %v171 = vpack.c.b16 %v129, %v126
  %v172 = vpack.c.b16 %v133, %v130
  %v173 = vpack.c.b16 %v134, %v131
  %v174 = vpack.c.b16 %v135, %v132
  %v175 = vpack.c.b16 %v139, %v136
  %v176 = vpack.c.b16 %v140, %v137
  %v177 = vpack.c.b16 %v141, %v138
  %v178 = vpack.c.b16 %v145, %v142
  %v179 = vpack.c.b16 %v146, %v143
  %v180 = vpack.c.b16 %v147, %v144
  %v181 = vpack.c.b16 %v151, %v148
  %v182 = vpack.c.b16 %v152, %v149
  %v183 = vpack.c.b16 %v153, %v150
  %v184 = vpack.c.b16 %v157, %v154
  %v185 = vpack.c.b16 %v158, %v155
  %v186 = vpack.c.b16 %v159, %v156
  %v187 = vpack.c.b16 %v163, %v160
  %v188 = vpack.c.b16 %v164, %v161
  %v189 = vpack.c.b16 %v165, %v162
  %v242 = vunpack.c.l.b16 %v50
  %v243 = vunpack.c.l.b16 %v51
  %v244 = vunpack.c.l.b16 %v52
  %v245 = vunpack.c.l.b16 %v53
  %v246 = vunpack.c.l.b16 %v54
  %v247 = vunpack.c.l.b16 %v55
  %v248 = vunpack.c.l.b16 %v56
  %v249 = vunpack.c.l.b16 %v57
  %v250 = vunpack.c.l.b16 %v58
  %v251 = vunpack.c.l.b16 %v59
  %v252 = vunpack.c.l.b16 %v60
  %v253 = vunpack.c.l.b16 %v61
  %v254 = vunpack.c.l.b16 %v62
  %v255 = vunpack.c.l.b16 %v63
  %v256 = vunpack.c.l.b16 %v64
  %v257 = vunpack.c.l.b16 %v65
  %v258 = vunpack.c.l.b16 %v66
  %v259 = vunpack.c.l.b16 %v67
  %v260 = vunpack.c.l.b16 %v68
  %v261 = vunpack.c.l.b16 %v69
  %v262 = vunpack.c.l.b16 %v70
  %v263 = vunpack.c.l.b16 %v71
  %v264 = vunpack.c.l.b16 %v72
  %v265 = vunpack.c.l.b16 %v73
  %v266 = vunpack.c.l.b16 %v74
  %v267 = vunpack.c.l.b16 %v75
  %v268 = vunpack.c.l.b16 %v76
  %v269 = vunpack.c.l.b16 %v77
  %v270 = vunpack.c.l.b16 %v78
  %v271 = vunpack.c.l.b16 %v79
  %v272 = vunpack.c.l.b16 %v80
  %v273 = vunpack.c.l.b16 %v81
  %v274 = vunpack.c.l.b16 %v82
  %v275 = vunpack.c.l.b16 %v83
  %v276 = vunpack.c.l.b16 %v84
  %v277 = vunpack.c.l.b16 %v85
  %v278 = vpack.c.b16 %v243, %v242
  %v279 = vpack.c.b16 %v245, %v244
  %v280 = vpack.c.b16 %v247, %v246
  %v281 = vpack.c.b16 %v249, %v248
  %v282 = vpack.c.b16 %v251, %v250
  %v283 = vpack.c.b16 %v253, %v252
  %v284 = vpack.c.b16 %v255, %v254
  %v285 = vpack.c.b16 %v257, %v256
  %v286 = vpack.c.b16 %v259, %v258
  %v287 = vpack.c.b16 %v261, %v260
  %v288 = vpack.c.b16 %v263, %v262
  %v289 = vpack.c.b16 %v265, %v264
  %v290 = vpack.c.b16 %v267, %v266
  %v291 = vpack.c.b16 %v269, %v268
  %v292 = vpack.c.b16 %v271, %v270
  %v293 = vpack.c.b16 %v273, %v272
  %v294 = vpack.c.b16 %v275, %v274
  %v295 = vpack.c.b16 %v277, %v276
  %vm314 = vcmask 261120
  %v316 = vsel %vm314, %v168, 0
  %v319 = vsel %vm314, %v171, 0
  %v322 = vsel %vm314, %v174, 0
  %v325 = vsel %vm314, %v177, 0
  %v328 = vsel %vm314, %v180, 0
  %v331 = vsel %vm314, %v183, 0
  %v334 = vsel %vm314, %v186, 0
  %v337 = vsel %vm314, %v189, 0
  %339 = vmatpush.bf16.msra.mxu0 %v285
  %340 = vmatpush.bf16.msra.mxu0 %v284
  %341 = vmatpush.bf16.msra.mxu0 %v283
  %342 = vmatpush.bf16.msra.mxu0 %v282
  %343 = vmatpush.bf16.msra.mxu0 %v281
  %344 = vmatpush.bf16.msra.mxu0 %v280
  %345 = vmatpush.bf16.msra.mxu0 %v279
  %346 = vmatpush.bf16.msra.mxu0 %v278
  %347 = vmatmul.bf16.gmra.mxu0 %v166
  %v348 = vpop.f32.mrf.mxu0
  %v349 = vadd.f32 0.0, %v348
  %v350 = vpop.f32.mrf.mxu0
  %v351 = vadd.f32 0.0, %v350
  %352 = vmatmul.bf16.gmra.mxu0 %v169
  %v353 = vpop.f32.mrf.mxu0
  %v354 = vadd.f32 0.0, %v353
  %v355 = vpop.f32.mrf.mxu0
  %v356 = vadd.f32 0.0, %v355
  %357 = vmatmul.bf16.gmra.mxu0 %v172
  %v358 = vpop.f32.mrf.mxu0
  %v359 = vadd.f32 0.0, %v358
  %v360 = vpop.f32.mrf.mxu0
  %v361 = vadd.f32 0.0, %v360
  %362 = vmatmul.bf16.gmra.mxu0 %v175
  %v363 = vpop.f32.mrf.mxu0
  %v364 = vadd.f32 0.0, %v363
  %v365 = vpop.f32.mrf.mxu0
  %v366 = vadd.f32 0.0, %v365
  %367 = vmatmul.bf16.gmra.mxu0 %v178
  %v368 = vpop.f32.mrf.mxu0
  %v369 = vadd.f32 0.0, %v368
  %v370 = vpop.f32.mrf.mxu0
  %v371 = vadd.f32 0.0, %v370
  %372 = vmatmul.bf16.gmra.mxu0 %v181
  %v373 = vpop.f32.mrf.mxu0
  %v374 = vadd.f32 0.0, %v373
  %v375 = vpop.f32.mrf.mxu0
  %v376 = vadd.f32 0.0, %v375
  %377 = vmatmul.bf16.gmra.mxu0 %v184
  %v378 = vpop.f32.mrf.mxu0
  %v379 = vadd.f32 0.0, %v378
  %v380 = vpop.f32.mrf.mxu0
  %v381 = vadd.f32 0.0, %v380
  %382 = vmatmul.bf16.gmra.mxu0 %v187
  %v383 = vpop.f32.mrf.mxu0
  %v384 = vadd.f32 0.0, %v383
  %v385 = vpop.f32.mrf.mxu0
  %v386 = vadd.f32 0.0, %v385
  %387 = vdwg.mxu0
  %388 = vmatpush.bf16.msra.mxu0 %v293
  %389 = vmatpush.bf16.msra.mxu0 %v292
  %390 = vmatpush.bf16.msra.mxu0 %v291
  %391 = vmatpush.bf16.msra.mxu0 %v290
  %392 = vmatpush.bf16.msra.mxu0 %v289
  %393 = vmatpush.bf16.msra.mxu0 %v288
  %394 = vmatpush.bf16.msra.mxu0 %v287
  %395 = vmatpush.bf16.msra.mxu0 %v286
  %396 = vmatmul.bf16.gmra.mxu0 %v167
  %v397 = vpop.f32.mrf.mxu0
  %v398 = vadd.f32 %v349, %v397
  %v399 = vpop.f32.mrf.mxu0
  %v400 = vadd.f32 %v351, %v399
  %401 = vmatmul.bf16.gmra.mxu0 %v170
  %v402 = vpop.f32.mrf.mxu0
  %v403 = vadd.f32 %v354, %v402
  %v404 = vpop.f32.mrf.mxu0
  %v405 = vadd.f32 %v356, %v404
  %406 = vmatmul.bf16.gmra.mxu0 %v173
  %v407 = vpop.f32.mrf.mxu0
  %v408 = vadd.f32 %v359, %v407
  %v409 = vpop.f32.mrf.mxu0
  %v410 = vadd.f32 %v361, %v409
  %411 = vmatmul.bf16.gmra.mxu0 %v176
  %v412 = vpop.f32.mrf.mxu0
  %v413 = vadd.f32 %v364, %v412
  %v414 = vpop.f32.mrf.mxu0
  %v415 = vadd.f32 %v366, %v414
  %416 = vmatmul.bf16.gmra.mxu0 %v179
  %v417 = vpop.f32.mrf.mxu0
  %v418 = vadd.f32 %v369, %v417
  %v419 = vpop.f32.mrf.mxu0
  %v420 = vadd.f32 %v371, %v419
  %421 = vmatmul.bf16.gmra.mxu0 %v182
  %v422 = vpop.f32.mrf.mxu0
  %v423 = vadd.f32 %v374, %v422
  %v424 = vpop.f32.mrf.mxu0
  %v425 = vadd.f32 %v376, %v424
  %426 = vmatmul.bf16.gmra.mxu0 %v185
  %v427 = vpop.f32.mrf.mxu0
  %v428 = vadd.f32 %v379, %v427
  %v429 = vpop.f32.mrf.mxu0
  %v430 = vadd.f32 %v381, %v429
  %431 = vmatmul.bf16.gmra.mxu0 %v188
  %v432 = vpop.f32.mrf.mxu0
  %v433 = vadd.f32 %v384, %v432
  %v434 = vpop.f32.mrf.mxu0
  %v435 = vadd.f32 %v386, %v434
  %436 = vdwg.mxu0
  %437 = vmatpush.bf16.msra.mxu0 0
  %438 = vmatpush.bf16.msra.mxu0 0
  %439 = vmatpush.bf16.msra.mxu0 0
  %440 = vmatpush.bf16.msra.mxu0 0
  %441 = vmatpush.bf16.msra.mxu0 0
  %442 = vmatpush.bf16.msra.mxu0 0
  %443 = vmatpush.bf16.msra.mxu0 %v295
  %444 = vmatpush.bf16.msra.mxu0 %v294
  %445 = vmatmul.bf16.gmra.mxu0 %v316
  %v446 = vpop.f32.mrf.mxu0
  %v447 = vadd.f32 %v398, %v446
  %v448 = vpop.f32.mrf.mxu0
  %v449 = vadd.f32 %v400, %v448
  %450 = vmatmul.bf16.gmra.mxu0 %v319
  %v451 = vpop.f32.mrf.mxu0
  %v452 = vadd.f32 %v403, %v451
  %v453 = vpop.f32.mrf.mxu0
  %v454 = vadd.f32 %v405, %v453
  %455 = vmatmul.bf16.gmra.mxu0 %v322
  %v456 = vpop.f32.mrf.mxu0
  %v457 = vadd.f32 %v408, %v456
  %v458 = vpop.f32.mrf.mxu0
  %v459 = vadd.f32 %v410, %v458
  %460 = vmatmul.bf16.gmra.mxu0 %v325
  %v461 = vpop.f32.mrf.mxu0
  %v462 = vadd.f32 %v413, %v461
  %v463 = vpop.f32.mrf.mxu0
  %v464 = vadd.f32 %v415, %v463
  %465 = vmatmul.bf16.gmra.mxu0 %v328
  %v466 = vpop.f32.mrf.mxu0
  %v467 = vadd.f32 %v418, %v466
  %v468 = vpop.f32.mrf.mxu0
  %v469 = vadd.f32 %v420, %v468
  %470 = vmatmul.bf16.gmra.mxu0 %v331
  %v471 = vpop.f32.mrf.mxu0
  %v472 = vadd.f32 %v423, %v471
  %v473 = vpop.f32.mrf.mxu0
  %v474 = vadd.f32 %v425, %v473
  %475 = vmatmul.bf16.gmra.mxu0 %v334
  %v476 = vpop.f32.mrf.mxu0
  %v477 = vadd.f32 %v428, %v476
  %v478 = vpop.f32.mrf.mxu0
  %v479 = vadd.f32 %v430, %v478
  %480 = vmatmul.bf16.gmra.mxu0 %v337
  %v481 = vpop.f32.mrf.mxu0
  %v482 = vadd.f32 %v433, %v481
  %v483 = vpop.f32.mrf.mxu0
  %v484 = vadd.f32 %v435, %v483
  %485 = vdwg.mxu0
  %v486 = vsel %vm314, %v447, 0.0
  %v487 = vsel %vm314, %v449, 0.0
  %v488 = vadd.f32 %v486, %v487
  %v489 = vsel %vm314, %v452, 0.0
  %v490 = vadd.f32 %v488, %v489
  %v491 = vsel %vm314, %v454, 0.0
  %v492 = vadd.f32 %v490, %v491
  %v493 = vsel %vm314, %v457, 0.0
  %v494 = vadd.f32 %v492, %v493
  %v495 = vsel %vm314, %v459, 0.0
  %v496 = vadd.f32 %v494, %v495
  %v497 = vsel %vm314, %v462, 0.0
  %v498 = vadd.f32 %v496, %v497
  %v499 = vsel %vm314, %v464, 0.0
  %v500 = vadd.f32 %v498, %v499
  %v501 = vsel %vm314, %v467, 0.0
  %v502 = vadd.f32 %v500, %v501
  %v503 = vsel %vm314, %v469, 0.0
  %v504 = vadd.f32 %v502, %v503
  %v505 = vsel %vm314, %v472, 0.0
  %v506 = vadd.f32 %v504, %v505
  %v507 = vsel %vm314, %v474, 0.0
  %v508 = vadd.f32 %v506, %v507
  %v509 = vsel %vm314, %v477, 0.0
  %v510 = vadd.f32 %v508, %v509
  %v511 = vsel %vm314, %v479, 0.0
  %v512 = vadd.f32 %v510, %v511
  %v513 = vsel %vm314, %v482, 0.0
  %v514 = vadd.f32 %v512, %v513
  %v515 = vsel %vm314, %v484, 0.0
  %v516 = vadd.f32 %v514, %v515
  %v517 = vrot.slane %v516, 4
  %v518 = vadd.f32 %v516, %v517
  %v519 = vrot.slane %v518, 2
  %v520 = vadd.f32 %v518, %v519
  %v521 = vrot.slane %v520, 1
  %v522 = vadd.f32 %v520, %v521
  %v523 = vmul.f32 %v522, 0.0078125
  %v524 = vsub.f32 %v447, %v523
  %v525 = vsub.f32 %v449, %v523
  %v526 = vsub.f32 %v452, %v523
  %v527 = vsub.f32 %v454, %v523
  %v528 = vsub.f32 %v457, %v523
  %v529 = vsub.f32 %v459, %v523
  %v530 = vsub.f32 %v462, %v523
  %v531 = vsub.f32 %v464, %v523
  %v532 = vsub.f32 %v467, %v523
  %v533 = vsub.f32 %v469, %v523
  %v534 = vsub.f32 %v472, %v523
  %v535 = vsub.f32 %v474, %v523
  %v536 = vsub.f32 %v477, %v523
  %v537 = vsub.f32 %v479, %v523
  %v538 = vsub.f32 %v482, %v523
  %v539 = vsub.f32 %v484, %v523
  %v540 = vmul.f32 %v524, %v524
  %v541 = vmul.f32 %v525, %v525
  %v542 = vmul.f32 %v526, %v526
  %v543 = vmul.f32 %v527, %v527
  %v544 = vmul.f32 %v528, %v528
  %v545 = vmul.f32 %v529, %v529
  %v546 = vmul.f32 %v530, %v530
  %v547 = vmul.f32 %v531, %v531
  %v548 = vmul.f32 %v532, %v532
  %v549 = vmul.f32 %v533, %v533
  %v550 = vmul.f32 %v534, %v534
  %v551 = vmul.f32 %v535, %v535
  %v552 = vmul.f32 %v536, %v536
  %v553 = vmul.f32 %v537, %v537
  %v554 = vmul.f32 %v538, %v538
  %v555 = vmul.f32 %v539, %v539
  %v556 = vsel %vm314, %v540, 0.0
  %v557 = vsel %vm314, %v541, 0.0
  %v558 = vadd.f32 %v556, %v557
  %v559 = vsel %vm314, %v542, 0.0
  %v560 = vadd.f32 %v558, %v559
  %v561 = vsel %vm314, %v543, 0.0
  %v562 = vadd.f32 %v560, %v561
  %v563 = vsel %vm314, %v544, 0.0
  %v564 = vadd.f32 %v562, %v563
  %v565 = vsel %vm314, %v545, 0.0
  %v566 = vadd.f32 %v564, %v565
  %v567 = vsel %vm314, %v546, 0.0
  %v568 = vadd.f32 %v566, %v567
  %v569 = vsel %vm314, %v547, 0.0
  %v570 = vadd.f32 %v568, %v569
  %v571 = vsel %vm314, %v548, 0.0
  %v572 = vadd.f32 %v570, %v571
  %v573 = vsel %vm314, %v549, 0.0
  %v574 = vadd.f32 %v572, %v573
  %v575 = vsel %vm314, %v550, 0.0
  %v576 = vadd.f32 %v574, %v575
  %v577 = vsel %vm314, %v551, 0.0
  %v578 = vadd.f32 %v576, %v577
  %v579 = vsel %vm314, %v552, 0.0
  %v580 = vadd.f32 %v578, %v579
  %v581 = vsel %vm314, %v553, 0.0
  %v582 = vadd.f32 %v580, %v581
  %v583 = vsel %vm314, %v554, 0.0
  %v584 = vadd.f32 %v582, %v583
  %v585 = vsel %vm314, %v555, 0.0
  %v586 = vadd.f32 %v584, %v585
  %v587 = vrot.slane %v586, 4
  %v588 = vadd.f32 %v586, %v587
  %v589 = vrot.slane %v588, 2
  %v590 = vadd.f32 %v588, %v589
  %v591 = vrot.slane %v590, 1
  %v592 = vadd.f32 %v590, %v591
  %v593 = vmul.f32 %v592, 0.0078125
  %v594 = vld [vmem:[%s2] sm:$0x1]
  %v595 = vadd.f32 %v593, 1e-05
  %v596 = vrsqrt.pop %v595
  %v597 = vmul.f32 %v596, %v595
  %v598 = vmul.f32 %v597, %v596
  %v599 = vmul.f32 0.5, %v598
  %v600 = vsub.f32 1.5, %v599
  %v601 = vmul.f32 %v596, %v600
  %vm602 = vweird.f32 %v595
  %vm603 = vweird.f32 %v596
  %vm604 = vmor %vm602, %vm603
  %v605 = vsel %vm604, %v596, %v601
  %v606 = vmul.f32 %v594, %v605
  %v608 = vperm.slane %v606, 0
  %v610 = vmul.f32 %v524, %v608
  %v611 = vmul.f32 %v525, %v608
  %v612 = vmul.f32 %v526, %v608
  %v613 = vmul.f32 %v527, %v608
  %v614 = vmul.f32 %v528, %v608
  %v615 = vmul.f32 %v529, %v608
  %v616 = vmul.f32 %v530, %v608
  %v617 = vmul.f32 %v531, %v608
  %v618 = vmul.f32 %v532, %v608
  %v619 = vmul.f32 %v533, %v608
  %v620 = vmul.f32 %v534, %v608
  %v621 = vmul.f32 %v535, %v608
  %v622 = vmul.f32 %v536, %v608
  %v623 = vmul.f32 %v537, %v608
  %v624 = vmul.f32 %v538, %v608
  %v625 = vmul.f32 %v539, %v608
  %v626 = vld [vmem:[%s3] sm:$0x1]
  %v628 = vperm.slane %v626, 0
  %v630 = vadd.f32 %v610, %v628
  %v631 = vadd.f32 %v611, %v628
  %v632 = vadd.f32 %v612, %v628
  %v633 = vadd.f32 %v613, %v628
  %v634 = vadd.f32 %v614, %v628
  %v635 = vadd.f32 %v615, %v628
  %v636 = vadd.f32 %v616, %v628
  %v637 = vadd.f32 %v617, %v628
  %v638 = vadd.f32 %v618, %v628
  %v639 = vadd.f32 %v619, %v628
  %v640 = vadd.f32 %v620, %v628
  %v641 = vadd.f32 %v621, %v628
  %v642 = vadd.f32 %v622, %v628
  %v643 = vadd.f32 %v623, %v628
  %v644 = vadd.f32 %v624, %v628
  %v645 = vadd.f32 %v625, %v628
  %v646 = vmax.f32 %v630, 0.0
  %v647 = vmax.f32 %v631, 0.0
  %v648 = vmax.f32 %v632, 0.0
  %v649 = vmax.f32 %v633, 0.0
  %v650 = vmax.f32 %v634, 0.0
  %v651 = vmax.f32 %v635, 0.0
  %v652 = vmax.f32 %v636, 0.0
  %v653 = vmax.f32 %v637, 0.0
  %v654 = vmax.f32 %v638, 0.0
  %v655 = vmax.f32 %v639, 0.0
  %v656 = vmax.f32 %v640, 0.0
  %v657 = vmax.f32 %v641, 0.0
  %v658 = vmax.f32 %v642, 0.0
  %v659 = vmax.f32 %v643, 0.0
  %v660 = vmax.f32 %v644, 0.0
  %v661 = vmax.f32 %v645, 0.0
  %662 = vst.msk [vmem:[%s4] sm:$0xff] %vm314, %v646
  %663 = vst.msk [vmem:[%s4 + $0x8] sm:$0xff] %vm314, %v647
  %664 = vst.msk [vmem:[%s4 + $0x10] sm:$0xff] %vm314, %v648
  %665 = vst.msk [vmem:[%s4 + $0x18] sm:$0xff] %vm314, %v649
  %666 = vst.msk [vmem:[%s4 + $0x20] sm:$0xff] %vm314, %v650
  %667 = vst.msk [vmem:[%s4 + $0x28] sm:$0xff] %vm314, %v651
  %668 = vst.msk [vmem:[%s4 + $0x30] sm:$0xff] %vm314, %v652
  %669 = vst.msk [vmem:[%s4 + $0x38] sm:$0xff] %vm314, %v653
  %670 = vst.msk [vmem:[%s4 + $0x40] sm:$0xff] %vm314, %v654
  %671 = vst.msk [vmem:[%s4 + $0x48] sm:$0xff] %vm314, %v655
  %672 = vst.msk [vmem:[%s4 + $0x50] sm:$0xff] %vm314, %v656
  %673 = vst.msk [vmem:[%s4 + $0x58] sm:$0xff] %vm314, %v657
  %674 = vst.msk [vmem:[%s4 + $0x60] sm:$0xff] %vm314, %v658
  %675 = vst.msk [vmem:[%s4 + $0x68] sm:$0xff] %vm314, %v659
  %676 = vst.msk [vmem:[%s4 + $0x70] sm:$0xff] %vm314, %v660
  %677 = vst.msk [vmem:[%s4 + $0x78] sm:$0xff] %vm314, %v661
  // Predicated region
  $region18: #{_lambda_.20} parent=0 // pred_check
    _
  $region19: #{_lambda_.20} parent=0 // pred_check_branch
    %679 = sbr.rel (0) target = $region21
  $region20: #{_lambda_.20} parent=0 // pred_region
    _
  $region21: #{_lambda_.20} parent=0 // pred_fallthru
    _
  // Predicated region
  $region22: #{_lambda_.20} parent=0 // pred_check
    _
  $region23: #{_lambda_.20} parent=0 // pred_check_branch
    %681 = sbr.rel (0) target = $region25
  $region24: #{_lambda_.20} parent=0 // pred_region
    _
  $region25: #{_lambda_.20} parent=0 // pred_fallthru
    _

// kernel: _lambda_.22
$region0: #{_lambda_.22}
  #allocation0 [shape = 'u32[]', space=smem, size = 0x4, offset = 0x4, fixed_abs, tag = 'smem constant byte address 0x4 - core index']
  #allocation1 [shape = 'u32[72,128]{1,0:T(1,128)}', space=vmem, size = 0x9000, scoped, tag = 'internal scratch']
  %s0 = inlined_call_operand.vmem [shape: bf16[32,288], index: 0, kind: input, shape index: {}]
  %s1 = inlined_call_operand.vmem [shape: bf16[288,64], index: 1, kind: input, shape index: {}]
  %s2 = inlined_call_operand.vmem [shape: f32[1,64], index: 2, kind: input, shape index: {}]
  %s3 = inlined_call_operand.vmem [shape: f32[1,64], index: 3, kind: input, shape index: {}]
  %s4 = inlined_call_operand.vmem [shape: f32[32,64], index: 4, kind: output, shape index: {}]
  %s5 = sld [smem:[#allocation0]]
  $region26: #{_lambda_.22} parent=0
    _
  %s7 = ssub.s32 1, %s5
  %s8 = scalar_select 0, %s7, %s5
  // Predicated region
  $region2: #{_lambda_.22} parent=0 // pred_check
    _
  $region3: #{_lambda_.22} parent=0 // pred_check_branch
    %10 = sbr.rel (0) target = $region5
  $region4: #{_lambda_.22} parent=0 // pred_region
    _
  $region5: #{_lambda_.22} parent=0 // pred_fallthru
    _
  // Predicated region
  $region6: #{_lambda_.22} parent=0 // pred_check
    _
  $region7: #{_lambda_.22} parent=0 // pred_check_branch
    %12 = sbr.rel (0) target = $region9
  $region8: #{_lambda_.22} parent=0 // pred_region
    _
  $region9: #{_lambda_.22} parent=0 // pred_fallthru
    _
  // Predicated region
  $region10: #{_lambda_.22} parent=0 // pred_check
    _
  $region11: #{_lambda_.22} parent=0 // pred_check_branch
    %14 = sbr.rel (0) target = $region13
  $region12: #{_lambda_.22} parent=0 // pred_region
    _
  $region13: #{_lambda_.22} parent=0 // pred_fallthru
    _
  // Predicated region
  $region14: #{_lambda_.22} parent=0 // pred_check
    _
  $region15: #{_lambda_.22} parent=0 // pred_check_branch
    %16 = sbr.rel (0) target = $region17
  $region16: #{_lambda_.22} parent=0 // pred_region
    _
  $region17: #{_lambda_.22} parent=0 // pred_fallthru
    _
  %v18 = vld [vmem:[%s0] sm:$0xff]
  %v19 = vld [vmem:[%s0 + $0x8] sm:$0xf]
  %v20 = vld [vmem:[%s0 + $0xc] sm:$0xff]
  %v21 = vld [vmem:[%s0 + $0x14] sm:$0xf]
  %v22 = vld [vmem:[%s0 + $0x18] sm:$0xff]
  %v23 = vld [vmem:[%s0 + $0x20] sm:$0xf]
  %v24 = vld [vmem:[%s0 + $0x24] sm:$0xff]
  %v25 = vld [vmem:[%s0 + $0x2c] sm:$0xf]
  %v26 = vld [vmem:[%s1] sm:$0xf]
  %v27 = vld [vmem:[%s1 + $0x4] sm:$0xf]
  %v28 = vld [vmem:[%s1 + $0x8] sm:$0xf]
  %v29 = vld [vmem:[%s1 + $0xc] sm:$0xf]
  %v30 = vld [vmem:[%s1 + $0x10] sm:$0xf]
  %v31 = vld [vmem:[%s1 + $0x14] sm:$0xf]
  %v32 = vld [vmem:[%s1 + $0x18] sm:$0xf]
  %v33 = vld [vmem:[%s1 + $0x1c] sm:$0xf]
  %v34 = vld [vmem:[%s1 + $0x20] sm:$0xf]
  %v35 = vld [vmem:[%s1 + $0x24] sm:$0xf]
  %v36 = vld [vmem:[%s1 + $0x28] sm:$0xf]
  %v37 = vld [vmem:[%s1 + $0x2c] sm:$0xf]
  %v38 = vld [vmem:[%s1 + $0x30] sm:$0xf]
  %v39 = vld [vmem:[%s1 + $0x34] sm:$0xf]
  %v40 = vld [vmem:[%s1 + $0x38] sm:$0xf]
  %v41 = vld [vmem:[%s1 + $0x3c] sm:$0xf]
  %v42 = vld [vmem:[%s1 + $0x40] sm:$0xf]
  %v43 = vld [vmem:[%s1 + $0x44] sm:$0xf]
  %v44 = vld [vmem:[%s1 + $0x48] sm:$0xf]
  %v45 = vld [vmem:[%s1 + $0x4c] sm:$0xf]
  %v46 = vld [vmem:[%s1 + $0x50] sm:$0xf]
  %v47 = vld [vmem:[%s1 + $0x54] sm:$0xf]
  %v48 = vld [vmem:[%s1 + $0x58] sm:$0xf]
  %v49 = vld [vmem:[%s1 + $0x5c] sm:$0xf]
  %v50 = vld [vmem:[%s1 + $0x60] sm:$0xf]
  %v51 = vld [vmem:[%s1 + $0x64] sm:$0xf]
  %v52 = vld [vmem:[%s1 + $0x68] sm:$0xf]
  %v53 = vld [vmem:[%s1 + $0x6c] sm:$0xf]
  %v54 = vld [vmem:[%s1 + $0x70] sm:$0xf]
  %v55 = vld [vmem:[%s1 + $0x74] sm:$0xf]
  %v56 = vld [vmem:[%s1 + $0x78] sm:$0xf]
  %v57 = vld [vmem:[%s1 + $0x7c] sm:$0xf]
  %v58 = vld [vmem:[%s1 + $0x80] sm:$0xf]
  %v59 = vld [vmem:[%s1 + $0x84] sm:$0xf]
  %v60 = vld [vmem:[%s1 + $0x88] sm:$0xf]
  %v61 = vld [vmem:[%s1 + $0x8c] sm:$0xf]
  %v70 = vunpack.c.l.b16 %v18
  %v71 = vunpack.c.h.b16 %v18
  %v72 = vunpack.c.l.b16 %v19
  %v73 = vunpack.c.l.b16 %v20
  %v74 = vunpack.c.h.b16 %v20
  %v75 = vunpack.c.l.b16 %v21
  %v76 = vunpack.c.l.b16 %v22
  %v77 = vunpack.c.h.b16 %v22
  %v78 = vunpack.c.l.b16 %v23
  %v79 = vunpack.c.l.b16 %v24
  %v80 = vunpack.c.h.b16 %v24
  %v81 = vunpack.c.l.b16 %v25
  %v82 = vpack.c.b16 %v73, %v70
  %v83 = vpack.c.b16 %v74, %v71
  %v84 = vpack.c.b16 %v75, %v72
  %v85 = vpack.c.b16 %v79, %v76
  %v86 = vpack.c.b16 %v80, %v77
  %v87 = vpack.c.b16 %v81, %v78
  %v128 = vunpack.c.l.b16 %v26
  %v129 = vunpack.c.l.b16 %v27
  %v130 = vunpack.c.l.b16 %v28
  %v131 = vunpack.c.l.b16 %v29
  %v132 = vunpack.c.l.b16 %v30
  %v133 = vunpack.c.l.b16 %v31
  %v134 = vunpack.c.l.b16 %v32
  %v135 = vunpack.c.l.b16 %v33
  %v136 = vunpack.c.l.b16 %v34
  %v137 = vunpack.c.l.b16 %v35
  %v138 = vunpack.c.l.b16 %v36
  %v139 = vunpack.c.l.b16 %v37
  %v140 = vunpack.c.l.b16 %v38
  %v141 = vunpack.c.l.b16 %v39
  %v142 = vunpack.c.l.b16 %v40
  %v143 = vunpack.c.l.b16 %v41
  %v144 = vunpack.c.l.b16 %v42
  %v145 = vunpack.c.l.b16 %v43
  %v146 = vunpack.c.l.b16 %v44
  %v147 = vunpack.c.l.b16 %v45
  %v148 = vunpack.c.l.b16 %v46
  %v149 = vunpack.c.l.b16 %v47
  %v150 = vunpack.c.l.b16 %v48
  %v151 = vunpack.c.l.b16 %v49
  %v152 = vunpack.c.l.b16 %v50
  %v153 = vunpack.c.l.b16 %v51
  %v154 = vunpack.c.l.b16 %v52
  %v155 = vunpack.c.l.b16 %v53
  %v156 = vunpack.c.l.b16 %v54
  %v157 = vunpack.c.l.b16 %v55
  %v158 = vunpack.c.l.b16 %v56
  %v159 = vunpack.c.l.b16 %v57
  %v160 = vunpack.c.l.b16 %v58
  %v161 = vunpack.c.l.b16 %v59
  %v162 = vunpack.c.l.b16 %v60
  %v163 = vunpack.c.l.b16 %v61
  %v164 = vpack.c.b16 %v129, %v128
  %v165 = vpack.c.b16 %v131, %v130
  %v166 = vpack.c.b16 %v133, %v132
  %v167 = vpack.c.b16 %v135, %v134
  %v168 = vpack.c.b16 %v137, %v136
  %v169 = vpack.c.b16 %v139, %v138
  %v170 = vpack.c.b16 %v141, %v140
  %v171 = vpack.c.b16 %v143, %v142
  %v172 = vpack.c.b16 %v145, %v144
  %v173 = vpack.c.b16 %v147, %v146
  %v174 = vpack.c.b16 %v149, %v148
  %v175 = vpack.c.b16 %v151, %v150
  %v176 = vpack.c.b16 %v153, %v152
  %v177 = vpack.c.b16 %v155, %v154
  %v178 = vpack.c.b16 %v157, %v156
  %v179 = vpack.c.b16 %v159, %v158
  %v180 = vpack.c.b16 %v161, %v160
  %v181 = vpack.c.b16 %v163, %v162
  %vm200 = vcmask 261120
  %v202 = vsel %vm200, %v84, 0
  %v205 = vsel %vm200, %v87, 0
  %207 = vmatpush.bf16.msra.mxu0 %v171
  %208 = vmatpush.bf16.msra.mxu0 %v170
  %209 = vmatpush.bf16.msra.mxu0 %v169
  %210 = vmatpush.bf16.msra.mxu0 %v168
  %211 = vmatpush.bf16.msra.mxu0 %v167
  %212 = vmatpush.bf16.msra.mxu0 %v166
  %213 = vmatpush.bf16.msra.mxu0 %v165
  %214 = vmatpush.bf16.msra.mxu0 %v164
  %215 = vmatmul.bf16.gmra.mxu0 %v82
  %v216 = vpop.f32.mrf.mxu0
  %v217 = vadd.f32 0.0, %v216
  %v218 = vpop.f32.mrf.mxu0
  %v219 = vadd.f32 0.0, %v218
  %220 = vmatmul.bf16.gmra.mxu0 %v85
  %v221 = vpop.f32.mrf.mxu0
  %v222 = vadd.f32 0.0, %v221
  %v223 = vpop.f32.mrf.mxu0
  %v224 = vadd.f32 0.0, %v223
  %225 = vdwg.mxu0
  %226 = vmatpush.bf16.msra.mxu0 %v179
  %227 = vmatpush.bf16.msra.mxu0 %v178
  %228 = vmatpush.bf16.msra.mxu0 %v177
  %229 = vmatpush.bf16.msra.mxu0 %v176
  %230 = vmatpush.bf16.msra.mxu0 %v175
  %231 = vmatpush.bf16.msra.mxu0 %v174
  %232 = vmatpush.bf16.msra.mxu0 %v173
  %233 = vmatpush.bf16.msra.mxu0 %v172
  %234 = vmatmul.bf16.gmra.mxu0 %v83
  %v235 = vpop.f32.mrf.mxu0
  %v236 = vadd.f32 %v217, %v235
  %v237 = vpop.f32.mrf.mxu0
  %v238 = vadd.f32 %v219, %v237
  %239 = vmatmul.bf16.gmra.mxu0 %v86
  %v240 = vpop.f32.mrf.mxu0
  %v241 = vadd.f32 %v222, %v240
  %v242 = vpop.f32.mrf.mxu0
  %v243 = vadd.f32 %v224, %v242
  %244 = vdwg.mxu0
  %245 = vmatpush.bf16.msra.mxu0 0
  %246 = vmatpush.bf16.msra.mxu0 0
  %247 = vmatpush.bf16.msra.mxu0 0
  %248 = vmatpush.bf16.msra.mxu0 0
  %249 = vmatpush.bf16.msra.mxu0 0
  %250 = vmatpush.bf16.msra.mxu0 0
  %251 = vmatpush.bf16.msra.mxu0 %v181
  %252 = vmatpush.bf16.msra.mxu0 %v180
  %253 = vmatmul.bf16.gmra.mxu0 %v202
  %v254 = vpop.f32.mrf.mxu0
  %v255 = vadd.f32 %v236, %v254
  %v256 = vpop.f32.mrf.mxu0
  %v257 = vadd.f32 %v238, %v256
  %258 = vmatmul.bf16.gmra.mxu0 %v205
  %v259 = vpop.f32.mrf.mxu0
  %v260 = vadd.f32 %v241, %v259
  %v261 = vpop.f32.mrf.mxu0
  %v262 = vadd.f32 %v243, %v261
  %263 = vdwg.mxu0
  %vm264 = vcmask 523264
  %v265 = vsel %vm264, %v255, 0.0
  %v266 = vsel %vm264, %v257, 0.0
  %v267 = vadd.f32 %v265, %v266
  %v268 = vsel %vm264, %v260, 0.0
  %v269 = vadd.f32 %v267, %v268
  %v270 = vsel %vm264, %v262, 0.0
  %v271 = vadd.f32 %v269, %v270
  %v272 = vrot.slane %v271, 4
  %v273 = vadd.f32 %v271, %v272
  %v274 = vrot.slane %v273, 2
  %v275 = vadd.f32 %v273, %v274
  %v276 = vrot.slane %v275, 1
  %v277 = vadd.f32 %v275, %v276
  %v278 = vmul.f32 %v277, 0.03125
  %v279 = vsub.f32 %v255, %v278
  %v280 = vsub.f32 %v257, %v278
  %v281 = vsub.f32 %v260, %v278
  %v282 = vsub.f32 %v262, %v278
  %v283 = vmul.f32 %v279, %v279
  %v284 = vmul.f32 %v280, %v280
  %v285 = vmul.f32 %v281, %v281
  %v286 = vmul.f32 %v282, %v282
  %v287 = vsel %vm264, %v283, 0.0
  %v288 = vsel %vm264, %v284, 0.0
  %v289 = vadd.f32 %v287, %v288
  %v290 = vsel %vm264, %v285, 0.0
  %v291 = vadd.f32 %v289, %v290
  %v292 = vsel %vm264, %v286, 0.0
  %v293 = vadd.f32 %v291, %v292
  %v294 = vrot.slane %v293, 4
  %v295 = vadd.f32 %v293, %v294
  %v296 = vrot.slane %v295, 2
  %v297 = vadd.f32 %v295, %v296
  %v298 = vrot.slane %v297, 1
  %v299 = vadd.f32 %v297, %v298
  %v300 = vmul.f32 %v299, 0.03125
  %v301 = vld [vmem:[%s2] sm:$0x1]
  %v302 = vadd.f32 %v300, 1e-05
  %v303 = vrsqrt.pop %v302
  %v304 = vmul.f32 %v303, %v302
  %v305 = vmul.f32 %v304, %v303
  %v306 = vmul.f32 0.5, %v305
  %v307 = vsub.f32 1.5, %v306
  %v308 = vmul.f32 %v303, %v307
  %vm309 = vweird.f32 %v302
  %vm310 = vweird.f32 %v303
  %vm311 = vmor %vm309, %vm310
  %v312 = vsel %vm311, %v303, %v308
  %v313 = vmul.f32 %v301, %v312
  %v315 = vperm.slane %v313, 0
  %v317 = vmul.f32 %v279, %v315
  %v318 = vmul.f32 %v280, %v315
  %v319 = vmul.f32 %v281, %v315
  %v320 = vmul.f32 %v282, %v315
  %v321 = vld [vmem:[%s3] sm:$0x1]
  %v323 = vperm.slane %v321, 0
  %v325 = vadd.f32 %v317, %v323
  %v326 = vadd.f32 %v318, %v323
  %v327 = vadd.f32 %v319, %v323
  %v328 = vadd.f32 %v320, %v323
  %v329 = vmax.f32 %v325, 0.0
  %v330 = vmax.f32 %v326, 0.0
  %v331 = vmax.f32 %v327, 0.0
  %v332 = vmax.f32 %v328, 0.0
  %333 = vst.msk [vmem:[%s4] sm:$0xff] %vm264, %v329
  %334 = vst.msk [vmem:[%s4 + $0x8] sm:$0xff] %vm264, %v330
  %335 = vst.msk [vmem:[%s4 + $0x10] sm:$0xff] %vm264, %v331
  %336 = vst.msk [vmem:[%s4 + $0x18] sm:$0xff] %vm264, %v332
  // Predicated region
  $region18: #{_lambda_.22} parent=0 // pred_check
    _
  $region19: #{_lambda_.22} parent=0 // pred_check_branch
    %338 = sbr.rel (0) target = $region21
  $region20: #{_lambda_.22} parent=0 // pred_region
    _
  $region21: #{_lambda_.22} parent=0 // pred_fallthru
    _
  // Predicated region
  $region22: #{_lambda_.22} parent=0 // pred_check
    _
  $region23: #{_lambda_.22} parent=0 // pred_check_branch
    %340 = sbr.rel (0) target = $region25
  $region24: #{_lambda_.22} parent=0 // pred_region
    _
  $region25: #{_lambda_.22} parent=0 // pred_fallthru
    _

// kernel: _lambda_.23
$region0: #{_lambda_.23}
  #allocation0 [shape = 'u32[]', space=smem, size = 0x4, offset = 0x4, fixed_abs, tag = 'smem constant byte address 0x4 - core index']
  #allocation1 [shape = 'u32[72,128]{1,0:T(1,128)}', space=vmem, size = 0x9000, scoped, tag = 'internal scratch']
  %s0 = inlined_call_operand.vmem [shape: bf16[32,576], index: 0, kind: input, shape index: {}]
  %s1 = inlined_call_operand.vmem [shape: bf16[576,64], index: 1, kind: input, shape index: {}]
  %s2 = inlined_call_operand.vmem [shape: f32[1,64], index: 2, kind: input, shape index: {}]
  %s3 = inlined_call_operand.vmem [shape: f32[1,64], index: 3, kind: input, shape index: {}]
  %s4 = inlined_call_operand.vmem [shape: f32[32,64], index: 4, kind: input, shape index: {}]
  %s5 = inlined_call_operand.vmem [shape: f32[32,64], index: 5, kind: output, shape index: {}]
  %s6 = sld [smem:[#allocation0]]
  $region30: #{_lambda_.23} parent=0
    _
  %s8 = ssub.s32 1, %s6
  %s9 = scalar_select 0, %s8, %s6
  // Predicated region
  $region2: #{_lambda_.23} parent=0 // pred_check
    _
  $region3: #{_lambda_.23} parent=0 // pred_check_branch
    %11 = sbr.rel (0) target = $region5
  $region4: #{_lambda_.23} parent=0 // pred_region
    _
  $region5: #{_lambda_.23} parent=0 // pred_fallthru
    _
  // Predicated region
  $region6: #{_lambda_.23} parent=0 // pred_check
    _
  $region7: #{_lambda_.23} parent=0 // pred_check_branch
    %13 = sbr.rel (0) target = $region9
  $region8: #{_lambda_.23} parent=0 // pred_region
    _
  $region9: #{_lambda_.23} parent=0 // pred_fallthru
    _
  // Predicated region
  $region10: #{_lambda_.23} parent=0 // pred_check
    _
  $region11: #{_lambda_.23} parent=0 // pred_check_branch
    %15 = sbr.rel (0) target = $region13
  $region12: #{_lambda_.23} parent=0 // pred_region
    _
  $region13: #{_lambda_.23} parent=0 // pred_fallthru
    _
  // Predicated region
  $region14: #{_lambda_.23} parent=0 // pred_check
    _
  $region15: #{_lambda_.23} parent=0 // pred_check_branch
    %17 = sbr.rel (0) target = $region17
  $region16: #{_lambda_.23} parent=0 // pred_region
    _
  $region17: #{_lambda_.23} parent=0 // pred_fallthru
    _
  // Predicated region
  $region18: #{_lambda_.23} parent=0 // pred_check
    _
  $region19: #{_lambda_.23} parent=0 // pred_check_branch
    %19 = sbr.rel (0) target = $region21
  $region20: #{_lambda_.23} parent=0 // pred_region
    _
  $region21: #{_lambda_.23} parent=0 // pred_fallthru
    _
  %v21 = vld [vmem:[%s0] sm:$0xff]
  %v22 = vld [vmem:[%s0 + $0x8] sm:$0xff]
  %v23 = vld [vmem:[%s0 + $0x10] sm:$0xf]
  %v24 = vld [vmem:[%s0 + $0x14] sm:$0xff]
  %v25 = vld [vmem:[%s0 + $0x1c] sm:$0xff]
  %v26 = vld [vmem:[%s0 + $0x24] sm:$0xf]
  %v27 = vld [vmem:[%s0 + $0x28] sm:$0xff]
  %v28 = vld [vmem:[%s0 + $0x30] sm:$0xff]
  %v29 = vld [vmem:[%s0 + $0x38] sm:$0xf]
  %v30 = vld [vmem:[%s0 + $0x3c] sm:$0xff]
  %v31 = vld [vmem:[%s0 + $0x44] sm:$0xff]
  %v32 = vld [vmem:[%s0 + $0x4c] sm:$0xf]
  %v33 = vld [vmem:[%s1] sm:$0xf]
  %v34 = vld [vmem:[%s1 + $0x4] sm:$0xf]
  %v35 = vld [vmem:[%s1 + $0x8] sm:$0xf]
  %v36 = vld [vmem:[%s1 + $0xc] sm:$0xf]
  %v37 = vld [vmem:[%s1 + $0x10] sm:$0xf]
  %v38 = vld [vmem:[%s1 + $0x14] sm:$0xf]
  %v39 = vld [vmem:[%s1 + $0x18] sm:$0xf]
  %v40 = vld [vmem:[%s1 + $0x1c] sm:$0xf]
  %v41 = vld [vmem:[%s1 + $0x20] sm:$0xf]
  %v42 = vld [vmem:[%s1 + $0x24] sm:$0xf]
  %v43 = vld [vmem:[%s1 + $0x28] sm:$0xf]
  %v44 = vld [vmem:[%s1 + $0x2c] sm:$0xf]
  %v45 = vld [vmem:[%s1 + $0x30] sm:$0xf]
  %v46 = vld [vmem:[%s1 + $0x34] sm:$0xf]
  %v47 = vld [vmem:[%s1 + $0x38] sm:$0xf]
  %v48 = vld [vmem:[%s1 + $0x3c] sm:$0xf]
  %v49 = vld [vmem:[%s1 + $0x40] sm:$0xf]
  %v50 = vld [vmem:[%s1 + $0x44] sm:$0xf]
  %v51 = vld [vmem:[%s1 + $0x48] sm:$0xf]
  %v52 = vld [vmem:[%s1 + $0x4c] sm:$0xf]
  %v53 = vld [vmem:[%s1 + $0x50] sm:$0xf]
  %v54 = vld [vmem:[%s1 + $0x54] sm:$0xf]
  %v55 = vld [vmem:[%s1 + $0x58] sm:$0xf]
  %v56 = vld [vmem:[%s1 + $0x5c] sm:$0xf]
  %v57 = vld [vmem:[%s1 + $0x60] sm:$0xf]
  %v58 = vld [vmem:[%s1 + $0x64] sm:$0xf]
  %v59 = vld [vmem:[%s1 + $0x68] sm:$0xf]
  %v60 = vld [vmem:[%s1 + $0x6c] sm:$0xf]
  %v61 = vld [vmem:[%s1 + $0x70] sm:$0xf]
  %v62 = vld [vmem:[%s1 + $0x74] sm:$0xf]
  %v63 = vld [vmem:[%s1 + $0x78] sm:$0xf]
  %v64 = vld [vmem:[%s1 + $0x7c] sm:$0xf]
  %v65 = vld [vmem:[%s1 + $0x80] sm:$0xf]
  %v66 = vld [vmem:[%s1 + $0x84] sm:$0xf]
  %v67 = vld [vmem:[%s1 + $0x88] sm:$0xf]
  %v68 = vld [vmem:[%s1 + $0x8c] sm:$0xf]
  %v69 = vld [vmem:[%s1 + $0x90] sm:$0xf]
  %v70 = vld [vmem:[%s1 + $0x94] sm:$0xf]
  %v71 = vld [vmem:[%s1 + $0x98] sm:$0xf]
  %v72 = vld [vmem:[%s1 + $0x9c] sm:$0xf]
  %v73 = vld [vmem:[%s1 + $0xa0] sm:$0xf]
  %v74 = vld [vmem:[%s1 + $0xa4] sm:$0xf]
  %v75 = vld [vmem:[%s1 + $0xa8] sm:$0xf]
  %v76 = vld [vmem:[%s1 + $0xac] sm:$0xf]
  %v77 = vld [vmem:[%s1 + $0xb0] sm:$0xf]
  %v78 = vld [vmem:[%s1 + $0xb4] sm:$0xf]
  %v79 = vld [vmem:[%s1 + $0xb8] sm:$0xf]
  %v80 = vld [vmem:[%s1 + $0xbc] sm:$0xf]
  %v81 = vld [vmem:[%s1 + $0xc0] sm:$0xf]
  %v82 = vld [vmem:[%s1 + $0xc4] sm:$0xf]
  %v83 = vld [vmem:[%s1 + $0xc8] sm:$0xf]
  %v84 = vld [vmem:[%s1 + $0xcc] sm:$0xf]
  %v85 = vld [vmem:[%s1 + $0xd0] sm:$0xf]
  %v86 = vld [vmem:[%s1 + $0xd4] sm:$0xf]
  %v87 = vld [vmem:[%s1 + $0xd8] sm:$0xf]
  %v88 = vld [vmem:[%s1 + $0xdc] sm:$0xf]
  %v89 = vld [vmem:[%s1 + $0xe0] sm:$0xf]
  %v90 = vld [vmem:[%s1 + $0xe4] sm:$0xf]
  %v91 = vld [vmem:[%s1 + $0xe8] sm:$0xf]
  %v92 = vld [vmem:[%s1 + $0xec] sm:$0xf]
  %v93 = vld [vmem:[%s1 + $0xf0] sm:$0xf]
  %v94 = vld [vmem:[%s1 + $0xf4] sm:$0xf]
  %v95 = vld [vmem:[%s1 + $0xf8] sm:$0xf]
  %v96 = vld [vmem:[%s1 + $0xfc] sm:$0xf]
  %v97 = vld [vmem:[%s1 + $0x100] sm:$0xf]
  %v98 = vld [vmem:[%s1 + $0x104] sm:$0xf]
  %v99 = vld [vmem:[%s1 + $0x108] sm:$0xf]
  %v100 = vld [vmem:[%s1 + $0x10c] sm:$0xf]
  %v101 = vld [vmem:[%s1 + $0x110] sm:$0xf]
  %v102 = vld [vmem:[%s1 + $0x114] sm:$0xf]
  %v103 = vld [vmem:[%s1 + $0x118] sm:$0xf]
  %v104 = vld [vmem:[%s1 + $0x11c] sm:$0xf]
  %v117 = vunpack.c.l.b16 %v21
  %v118 = vunpack.c.h.b16 %v21
  %v119 = vunpack.c.l.b16 %v22
  %v120 = vunpack.c.h.b16 %v22
  %v121 = vunpack.c.l.b16 %v23
  %v122 = vunpack.c.l.b16 %v24
  %v123 = vunpack.c.h.b16 %v24
  %v124 = vunpack.c.l.b16 %v25
  %v125 = vunpack.c.h.b16 %v25
  %v126 = vunpack.c.l.b16 %v26
  %v127 = vunpack.c.l.b16 %v27
  %v128 = vunpack.c.h.b16 %v27
  %v129 = vunpack.c.l.b16 %v28
  %v130 = vunpack.c.h.b16 %v28
  %v131 = vunpack.c.l.b16 %v29
  %v132 = vunpack.c.l.b16 %v30
  %v133 = vunpack.c.h.b16 %v30
  %v134 = vunpack.c.l.b16 %v31
  %v135 = vunpack.c.h.b16 %v31
  %v136 = vunpack.c.l.b16 %v32
  %v137 = vpack.c.b16 %v122, %v117
  %v138 = vpack.c.b16 %v123, %v118
  %v139 = vpack.c.b16 %v124, %v119
  %v140 = vpack.c.b16 %v125, %v120
  %v141 = vpack.c.b16 %v126, %v121
  %v142 = vpack.c.b16 %v132, %v127
  %v143 = vpack.c.b16 %v133, %v128
  %v144 = vpack.c.b16 %v134, %v129
  %v145 = vpack.c.b16 %v135, %v130
  %v146 = vpack.c.b16 %v136, %v131
  %v227 = vunpack.c.l.b16 %v33
  %v228 = vunpack.c.l.b16 %v34
  %v229 = vunpack.c.l.b16 %v35
  %v230 = vunpack.c.l.b16 %v36
  %v231 = vunpack.c.l.b16 %v37
  %v232 = vunpack.c.l.b16 %v38
  %v233 = vunpack.c.l.b16 %v39
  %v234 = vunpack.c.l.b16 %v40
  %v235 = vunpack.c.l.b16 %v41
  %v236 = vunpack.c.l.b16 %v42
  %v237 = vunpack.c.l.b16 %v43
  %v238 = vunpack.c.l.b16 %v44
  %v239 = vunpack.c.l.b16 %v45
  %v240 = vunpack.c.l.b16 %v46
  %v241 = vunpack.c.l.b16 %v47
  %v242 = vunpack.c.l.b16 %v48
  %v243 = vunpack.c.l.b16 %v49
  %v244 = vunpack.c.l.b16 %v50
  %v245 = vunpack.c.l.b16 %v51
  %v246 = vunpack.c.l.b16 %v52
  %v247 = vunpack.c.l.b16 %v53
  %v248 = vunpack.c.l.b16 %v54
  %v249 = vunpack.c.l.b16 %v55
  %v250 = vunpack.c.l.b16 %v56
  %v251 = vunpack.c.l.b16 %v57
  %v252 = vunpack.c.l.b16 %v58
  %v253 = vunpack.c.l.b16 %v59
  %v254 = vunpack.c.l.b16 %v60
  %v255 = vunpack.c.l.b16 %v61
  %v256 = vunpack.c.l.b16 %v62
  %v257 = vunpack.c.l.b16 %v63
  %v258 = vunpack.c.l.b16 %v64
  %v259 = vunpack.c.l.b16 %v65
  %v260 = vunpack.c.l.b16 %v66
  %v261 = vunpack.c.l.b16 %v67
  %v262 = vunpack.c.l.b16 %v68
  %v263 = vunpack.c.l.b16 %v69
  %v264 = vunpack.c.l.b16 %v70
  %v265 = vunpack.c.l.b16 %v71
  %v266 = vunpack.c.l.b16 %v72
  %v267 = vunpack.c.l.b16 %v73
  %v268 = vunpack.c.l.b16 %v74
  %v269 = vunpack.c.l.b16 %v75
  %v270 = vunpack.c.l.b16 %v76
  %v271 = vunpack.c.l.b16 %v77
  %v272 = vunpack.c.l.b16 %v78
  %v273 = vunpack.c.l.b16 %v79
  %v274 = vunpack.c.l.b16 %v80
  %v275 = vunpack.c.l.b16 %v81
  %v276 = vunpack.c.l.b16 %v82
  %v277 = vunpack.c.l.b16 %v83
  %v278 = vunpack.c.l.b16 %v84
  %v279 = vunpack.c.l.b16 %v85
  %v280 = vunpack.c.l.b16 %v86
  %v281 = vunpack.c.l.b16 %v87
  %v282 = vunpack.c.l.b16 %v88
  %v283 = vunpack.c.l.b16 %v89
  %v284 = vunpack.c.l.b16 %v90
  %v285 = vunpack.c.l.b16 %v91
  %v286 = vunpack.c.l.b16 %v92
  %v287 = vunpack.c.l.b16 %v93
  %v288 = vunpack.c.l.b16 %v94
  %v289 = vunpack.c.l.b16 %v95
  %v290 = vunpack.c.l.b16 %v96
  %v291 = vunpack.c.l.b16 %v97
  %v292 = vunpack.c.l.b16 %v98
  %v293 = vunpack.c.l.b16 %v99
  %v294 = vunpack.c.l.b16 %v100
  %v295 = vunpack.c.l.b16 %v101
  %v296 = vunpack.c.l.b16 %v102
  %v297 = vunpack.c.l.b16 %v103
  %v298 = vunpack.c.l.b16 %v104
  %v299 = vpack.c.b16 %v228, %v227
  %v300 = vpack.c.b16 %v230, %v229
  %v301 = vpack.c.b16 %v232, %v231
  %v302 = vpack.c.b16 %v234, %v233
  %v303 = vpack.c.b16 %v236, %v235
  %v304 = vpack.c.b16 %v238, %v237
  %v305 = vpack.c.b16 %v240, %v239
  %v306 = vpack.c.b16 %v242, %v241
  %v307 = vpack.c.b16 %v244, %v243
  %v308 = vpack.c.b16 %v246, %v245
  %v309 = vpack.c.b16 %v248, %v247
  %v310 = vpack.c.b16 %v250, %v249
  %v311 = vpack.c.b16 %v252, %v251
  %v312 = vpack.c.b16 %v254, %v253
  %v313 = vpack.c.b16 %v256, %v255
  %v314 = vpack.c.b16 %v258, %v257
  %v315 = vpack.c.b16 %v260, %v259
  %v316 = vpack.c.b16 %v262, %v261
  %v317 = vpack.c.b16 %v264, %v263
  %v318 = vpack.c.b16 %v266, %v265
  %v319 = vpack.c.b16 %v268, %v267
  %v320 = vpack.c.b16 %v270, %v269
  %v321 = vpack.c.b16 %v272, %v271
  %v322 = vpack.c.b16 %v274, %v273
  %v323 = vpack.c.b16 %v276, %v275
  %v324 = vpack.c.b16 %v278, %v277
  %v325 = vpack.c.b16 %v280, %v279
  %v326 = vpack.c.b16 %v282, %v281
  %v327 = vpack.c.b16 %v284, %v283
  %v328 = vpack.c.b16 %v286, %v285
  %v329 = vpack.c.b16 %v288, %v287
  %v330 = vpack.c.b16 %v290, %v289
  %v331 = vpack.c.b16 %v292, %v291
  %v332 = vpack.c.b16 %v294, %v293
  %v333 = vpack.c.b16 %v296, %v295
  %v334 = vpack.c.b16 %v298, %v297
  %vm371 = vcmask 523264
  %v373 = vsel %vm371, %v141, 0
  %v376 = vsel %vm371, %v146, 0
  %378 = vmatpush.bf16.msra.mxu0 %v306
  %379 = vmatpush.bf16.msra.mxu0 %v305
  %380 = vmatpush.bf16.msra.mxu0 %v304
  %381 = vmatpush.bf16.msra.mxu0 %v303
  %382 = vmatpush.bf16.msra.mxu0 %v302
  %383 = vmatpush.bf16.msra.mxu0 %v301
  %384 = vmatpush.bf16.msra.mxu0 %v300
  %385 = vmatpush.bf16.msra.mxu0 %v299
  %386 = vmatmul.bf16.gmra.mxu0 %v137
  %v387 = vpop.f32.mrf.mxu0
  %v388 = vadd.f32 0.0, %v387
  %v389 = vpop.f32.mrf.mxu0
  %v390 = vadd.f32 0.0, %v389
  %391 = vmatmul.bf16.gmra.mxu0 %v142
  %v392 = vpop.f32.mrf.mxu0
  %v393 = vadd.f32 0.0, %v392
  %v394 = vpop.f32.mrf.mxu0
  %v395 = vadd.f32 0.0, %v394
  %396 = vdwg.mxu0
  %397 = vmatpush.bf16.msra.mxu0 %v314
  %398 = vmatpush.bf16.msra.mxu0 %v313
  %399 = vmatpush.bf16.msra.mxu0 %v312
  %400 = vmatpush.bf16.msra.mxu0 %v311
  %401 = vmatpush.bf16.msra.mxu0 %v310
  %402 = vmatpush.bf16.msra.mxu0 %v309
  %403 = vmatpush.bf16.msra.mxu0 %v308
  %404 = vmatpush.bf16.msra.mxu0 %v307
  %405 = vmatmul.bf16.gmra.mxu0 %v138
  %v406 = vpop.f32.mrf.mxu0
  %v407 = vadd.f32 %v388, %v406
  %v408 = vpop.f32.mrf.mxu0
  %v409 = vadd.f32 %v390, %v408
  %410 = vmatmul.bf16.gmra.mxu0 %v143
  %v411 = vpop.f32.mrf.mxu0
  %v412 = vadd.f32 %v393, %v411
  %v413 = vpop.f32.mrf.mxu0
  %v414 = vadd.f32 %v395, %v413
  %415 = vdwg.mxu0
  %416 = vmatpush.bf16.msra.mxu0 %v322
  %417 = vmatpush.bf16.msra.mxu0 %v321
  %418 = vmatpush.bf16.msra.mxu0 %v320
  %419 = vmatpush.bf16.msra.mxu0 %v319
  %420 = vmatpush.bf16.msra.mxu0 %v318
  %421 = vmatpush.bf16.msra.mxu0 %v317
  %422 = vmatpush.bf16.msra.mxu0 %v316
  %423 = vmatpush.bf16.msra.mxu0 %v315
  %424 = vmatmul.bf16.gmra.mxu0 %v139
  %v425 = vpop.f32.mrf.mxu0
  %v426 = vadd.f32 %v407, %v425
  %v427 = vpop.f32.mrf.mxu0
  %v428 = vadd.f32 %v409, %v427
  %429 = vmatmul.bf16.gmra.mxu0 %v144
  %v430 = vpop.f32.mrf.mxu0
  %v431 = vadd.f32 %v412, %v430
  %v432 = vpop.f32.mrf.mxu0
  %v433 = vadd.f32 %v414, %v432
  %434 = vdwg.mxu0
  %435 = vmatpush.bf16.msra.mxu0 %v330
  %436 = vmatpush.bf16.msra.mxu0 %v329
  %437 = vmatpush.bf16.msra.mxu0 %v328
  %438 = vmatpush.bf16.msra.mxu0 %v327
  %439 = vmatpush.bf16.msra.mxu0 %v326
  %440 = vmatpush.bf16.msra.mxu0 %v325
  %441 = vmatpush.bf16.msra.mxu0 %v324
  %442 = vmatpush.bf16.msra.mxu0 %v323
  %443 = vmatmul.bf16.gmra.mxu0 %v140
  %v444 = vpop.f32.mrf.mxu0
  %v445 = vadd.f32 %v426, %v444
  %v446 = vpop.f32.mrf.mxu0
  %v447 = vadd.f32 %v428, %v446
  %448 = vmatmul.bf16.gmra.mxu0 %v145
  %v449 = vpop.f32.mrf.mxu0
  %v450 = vadd.f32 %v431, %v449
  %v451 = vpop.f32.mrf.mxu0
  %v452 = vadd.f32 %v433, %v451
  %453 = vdwg.mxu0
  %454 = vmatpush.bf16.msra.mxu0 0
  %455 = vmatpush.bf16.msra.mxu0 0
  %456 = vmatpush.bf16.msra.mxu0 0
  %457 = vmatpush.bf16.msra.mxu0 0
  %458 = vmatpush.bf16.msra.mxu0 %v334
  %459 = vmatpush.bf16.msra.mxu0 %v333
  %460 = vmatpush.bf16.msra.mxu0 %v332
  %461 = vmatpush.bf16.msra.mxu0 %v331
  %462 = vmatmul.bf16.gmra.mxu0 %v373
  %v463 = vpop.f32.mrf.mxu0
  %v464 = vadd.f32 %v445, %v463
  %v465 = vpop.f32.mrf.mxu0
  %v466 = vadd.f32 %v447, %v465
  %467 = vmatmul.bf16.gmra.mxu0 %v376
  %v468 = vpop.f32.mrf.mxu0
  %v469 = vadd.f32 %v450, %v468
  %v470 = vpop.f32.mrf.mxu0
  %v471 = vadd.f32 %v452, %v470
  %472 = vdwg.mxu0
  %v473 = vsel %vm371, %v464, 0.0
  %v474 = vsel %vm371, %v466, 0.0
  %v475 = vadd.f32 %v473, %v474
  %v476 = vsel %vm371, %v469, 0.0
  %v477 = vadd.f32 %v475, %v476
  %v478 = vsel %vm371, %v471, 0.0
  %v479 = vadd.f32 %v477, %v478
  %v480 = vrot.slane %v479, 4
  %v481 = vadd.f32 %v479, %v480
  %v482 = vrot.slane %v481, 2
  %v483 = vadd.f32 %v481, %v482
  %v484 = vrot.slane %v483, 1
  %v485 = vadd.f32 %v483, %v484
  %v486 = vmul.f32 %v485, 0.03125
  %v487 = vsub.f32 %v464, %v486
  %v488 = vsub.f32 %v466, %v486
  %v489 = vsub.f32 %v469, %v486
  %v490 = vsub.f32 %v471, %v486
  %v491 = vmul.f32 %v487, %v487
  %v492 = vmul.f32 %v488, %v488
  %v493 = vmul.f32 %v489, %v489
  %v494 = vmul.f32 %v490, %v490
  %v495 = vsel %vm371, %v491, 0.0
  %v496 = vsel %vm371, %v492, 0.0
  %v497 = vadd.f32 %v495, %v496
  %v498 = vsel %vm371, %v493, 0.0
  %v499 = vadd.f32 %v497, %v498
  %v500 = vsel %vm371, %v494, 0.0
  %v501 = vadd.f32 %v499, %v500
  %v502 = vrot.slane %v501, 4
  %v503 = vadd.f32 %v501, %v502
  %v504 = vrot.slane %v503, 2
  %v505 = vadd.f32 %v503, %v504
  %v506 = vrot.slane %v505, 1
  %v507 = vadd.f32 %v505, %v506
  %v508 = vmul.f32 %v507, 0.03125
  %v509 = vld [vmem:[%s2] sm:$0x1]
  %v510 = vadd.f32 %v508, 1e-05
  %v511 = vrsqrt.pop %v510
  %v512 = vmul.f32 %v511, %v510
  %v513 = vmul.f32 %v512, %v511
  %v514 = vmul.f32 0.5, %v513
  %v515 = vsub.f32 1.5, %v514
  %v516 = vmul.f32 %v511, %v515
  %vm517 = vweird.f32 %v510
  %vm518 = vweird.f32 %v511
  %vm519 = vmor %vm517, %vm518
  %v520 = vsel %vm519, %v511, %v516
  %v521 = vmul.f32 %v509, %v520
  %v523 = vperm.slane %v521, 0
  %v525 = vmul.f32 %v487, %v523
  %v526 = vmul.f32 %v488, %v523
  %v527 = vmul.f32 %v489, %v523
  %v528 = vmul.f32 %v490, %v523
  %v529 = vld [vmem:[%s3] sm:$0x1]
  %v531 = vperm.slane %v529, 0
  %v533 = vadd.f32 %v525, %v531
  %v534 = vadd.f32 %v526, %v531
  %v535 = vadd.f32 %v527, %v531
  %v536 = vadd.f32 %v528, %v531
  %v537 = vld [vmem:[%s4] sm:$0xff]
  %v538 = vld [vmem:[%s4 + $0x8] sm:$0xff]
  %v539 = vld [vmem:[%s4 + $0x10] sm:$0xff]
  %v540 = vld [vmem:[%s4 + $0x18] sm:$0xff]
  %v541 = vadd.f32 %v533, %v537
  %v542 = vadd.f32 %v534, %v538
  %v543 = vadd.f32 %v535, %v539
  %v544 = vadd.f32 %v536, %v540
  %v545 = vmax.f32 %v541, 0.0
  %v546 = vmax.f32 %v542, 0.0
  %v547 = vmax.f32 %v543, 0.0
  %v548 = vmax.f32 %v544, 0.0
  %549 = vst.msk [vmem:[%s5] sm:$0xff] %vm371, %v545
  %550 = vst.msk [vmem:[%s5 + $0x8] sm:$0xff] %vm371, %v546
  %551 = vst.msk [vmem:[%s5 + $0x10] sm:$0xff] %vm371, %v547
  %552 = vst.msk [vmem:[%s5 + $0x18] sm:$0xff] %vm371, %v548
  // Predicated region
  $region22: #{_lambda_.23} parent=0 // pred_check
    _
  $region23: #{_lambda_.23} parent=0 // pred_check_branch
    %554 = sbr.rel (0) target = $region25
  $region24: #{_lambda_.23} parent=0 // pred_region
    _
  $region25: #{_lambda_.23} parent=0 // pred_fallthru
    _
  // Predicated region
  $region26: #{_lambda_.23} parent=0 // pred_check
    _
  $region27: #{_lambda_.23} parent=0 // pred_check_branch
    %556 = sbr.rel (0) target = $region29
  $region28: #{_lambda_.23} parent=0 // pred_region
    _
  $region29: #{_lambda_.23} parent=0 // pred_fallthru
    _

// kernel: _lambda_.24
$region0: #{_lambda_.24}
  #allocation0 [shape = 'u32[]', space=smem, size = 0x4, offset = 0x4, fixed_abs, tag = 'smem constant byte address 0x4 - core index']
  #allocation1 [shape = 'u32[72,128]{1,0:T(1,128)}', space=vmem, size = 0x9000, scoped, tag = 'internal scratch']
  %s0 = inlined_call_operand.vmem [shape: bf16[32,576], index: 0, kind: input, shape index: {}]
  %s1 = inlined_call_operand.vmem [shape: bf16[576,64], index: 1, kind: input, shape index: {}]
  %s2 = inlined_call_operand.vmem [shape: f32[1,64], index: 2, kind: input, shape index: {}]
  %s3 = inlined_call_operand.vmem [shape: f32[1,64], index: 3, kind: input, shape index: {}]
  %s4 = inlined_call_operand.vmem [shape: f32[32,64], index: 4, kind: output, shape index: {}]
  %s5 = sld [smem:[#allocation0]]
  $region26: #{_lambda_.24} parent=0
    _
  %s7 = ssub.s32 1, %s5
  %s8 = scalar_select 0, %s7, %s5
  // Predicated region
  $region2: #{_lambda_.24} parent=0 // pred_check
    _
  $region3: #{_lambda_.24} parent=0 // pred_check_branch
    %10 = sbr.rel (0) target = $region5
  $region4: #{_lambda_.24} parent=0 // pred_region
    _
  $region5: #{_lambda_.24} parent=0 // pred_fallthru
    _
  // Predicated region
  $region6: #{_lambda_.24} parent=0 // pred_check
    _
  $region7: #{_lambda_.24} parent=0 // pred_check_branch
    %12 = sbr.rel (0) target = $region9
  $region8: #{_lambda_.24} parent=0 // pred_region
    _
  $region9: #{_lambda_.24} parent=0 // pred_fallthru
    _
  // Predicated region
  $region10: #{_lambda_.24} parent=0 // pred_check
    _
  $region11: #{_lambda_.24} parent=0 // pred_check_branch
    %14 = sbr.rel (0) target = $region13
  $region12: #{_lambda_.24} parent=0 // pred_region
    _
  $region13: #{_lambda_.24} parent=0 // pred_fallthru
    _
  // Predicated region
  $region14: #{_lambda_.24} parent=0 // pred_check
    _
  $region15: #{_lambda_.24} parent=0 // pred_check_branch
    %16 = sbr.rel (0) target = $region17
  $region16: #{_lambda_.24} parent=0 // pred_region
    _
  $region17: #{_lambda_.24} parent=0 // pred_fallthru
    _
  %v18 = vld [vmem:[%s0] sm:$0xff]
  %v19 = vld [vmem:[%s0 + $0x8] sm:$0xff]
  %v20 = vld [vmem:[%s0 + $0x10] sm:$0xf]
  %v21 = vld [vmem:[%s0 + $0x14] sm:$0xff]
  %v22 = vld [vmem:[%s0 + $0x1c] sm:$0xff]
  %v23 = vld [vmem:[%s0 + $0x24] sm:$0xf]
  %v24 = vld [vmem:[%s0 + $0x28] sm:$0xff]
  %v25 = vld [vmem:[%s0 + $0x30] sm:$0xff]
  %v26 = vld [vmem:[%s0 + $0x38] sm:$0xf]
  %v27 = vld [vmem:[%s0 + $0x3c] sm:$0xff]
  %v28 = vld [vmem:[%s0 + $0x44] sm:$0xff]
  %v29 = vld [vmem:[%s0 + $0x4c] sm:$0xf]
  %v30 = vld [vmem:[%s1] sm:$0xf]
  %v31 = vld [vmem:[%s1 + $0x4] sm:$0xf]
  %v32 = vld [vmem:[%s1 + $0x8] sm:$0xf]
  %v33 = vld [vmem:[%s1 + $0xc] sm:$0xf]
  %v34 = vld [vmem:[%s1 + $0x10] sm:$0xf]
  %v35 = vld [vmem:[%s1 + $0x14] sm:$0xf]
  %v36 = vld [vmem:[%s1 + $0x18] sm:$0xf]
  %v37 = vld [vmem:[%s1 + $0x1c] sm:$0xf]
  %v38 = vld [vmem:[%s1 + $0x20] sm:$0xf]
  %v39 = vld [vmem:[%s1 + $0x24] sm:$0xf]
  %v40 = vld [vmem:[%s1 + $0x28] sm:$0xf]
  %v41 = vld [vmem:[%s1 + $0x2c] sm:$0xf]
  %v42 = vld [vmem:[%s1 + $0x30] sm:$0xf]
  %v43 = vld [vmem:[%s1 + $0x34] sm:$0xf]
  %v44 = vld [vmem:[%s1 + $0x38] sm:$0xf]
  %v45 = vld [vmem:[%s1 + $0x3c] sm:$0xf]
  %v46 = vld [vmem:[%s1 + $0x40] sm:$0xf]
  %v47 = vld [vmem:[%s1 + $0x44] sm:$0xf]
  %v48 = vld [vmem:[%s1 + $0x48] sm:$0xf]
  %v49 = vld [vmem:[%s1 + $0x4c] sm:$0xf]
  %v50 = vld [vmem:[%s1 + $0x50] sm:$0xf]
  %v51 = vld [vmem:[%s1 + $0x54] sm:$0xf]
  %v52 = vld [vmem:[%s1 + $0x58] sm:$0xf]
  %v53 = vld [vmem:[%s1 + $0x5c] sm:$0xf]
  %v54 = vld [vmem:[%s1 + $0x60] sm:$0xf]
  %v55 = vld [vmem:[%s1 + $0x64] sm:$0xf]
  %v56 = vld [vmem:[%s1 + $0x68] sm:$0xf]
  %v57 = vld [vmem:[%s1 + $0x6c] sm:$0xf]
  %v58 = vld [vmem:[%s1 + $0x70] sm:$0xf]
  %v59 = vld [vmem:[%s1 + $0x74] sm:$0xf]
  %v60 = vld [vmem:[%s1 + $0x78] sm:$0xf]
  %v61 = vld [vmem:[%s1 + $0x7c] sm:$0xf]
  %v62 = vld [vmem:[%s1 + $0x80] sm:$0xf]
  %v63 = vld [vmem:[%s1 + $0x84] sm:$0xf]
  %v64 = vld [vmem:[%s1 + $0x88] sm:$0xf]
  %v65 = vld [vmem:[%s1 + $0x8c] sm:$0xf]
  %v66 = vld [vmem:[%s1 + $0x90] sm:$0xf]
  %v67 = vld [vmem:[%s1 + $0x94] sm:$0xf]
  %v68 = vld [vmem:[%s1 + $0x98] sm:$0xf]
  %v69 = vld [vmem:[%s1 + $0x9c] sm:$0xf]
  %v70 = vld [vmem:[%s1 + $0xa0] sm:$0xf]
  %v71 = vld [vmem:[%s1 + $0xa4] sm:$0xf]
  %v72 = vld [vmem:[%s1 + $0xa8] sm:$0xf]
  %v73 = vld [vmem:[%s1 + $0xac] sm:$0xf]
  %v74 = vld [vmem:[%s1 + $0xb0] sm:$0xf]
  %v75 = vld [vmem:[%s1 + $0xb4] sm:$0xf]
  %v76 = vld [vmem:[%s1 + $0xb8] sm:$0xf]
  %v77 = vld [vmem:[%s1 + $0xbc] sm:$0xf]
  %v78 = vld [vmem:[%s1 + $0xc0] sm:$0xf]
  %v79 = vld [vmem:[%s1 + $0xc4] sm:$0xf]
  %v80 = vld [vmem:[%s1 + $0xc8] sm:$0xf]
  %v81 = vld [vmem:[%s1 + $0xcc] sm:$0xf]
  %v82 = vld [vmem:[%s1 + $0xd0] sm:$0xf]
  %v83 = vld [vmem:[%s1 + $0xd4] sm:$0xf]
  %v84 = vld [vmem:[%s1 + $0xd8] sm:$0xf]
  %v85 = vld [vmem:[%s1 + $0xdc] sm:$0xf]
  %v86 = vld [vmem:[%s1 + $0xe0] sm:$0xf]
  %v87 = vld [vmem:[%s1 + $0xe4] sm:$0xf]
  %v88 = vld [vmem:[%s1 + $0xe8] sm:$0xf]
  %v89 = vld [vmem:[%s1 + $0xec] sm:$0xf]
  %v90 = vld [vmem:[%s1 + $0xf0] sm:$0xf]
  %v91 = vld [vmem:[%s1 + $0xf4] sm:$0xf]
  %v92 = vld [vmem:[%s1 + $0xf8] sm:$0xf]
  %v93 = vld [vmem:[%s1 + $0xfc] sm:$0xf]
  %v94 = vld [vmem:[%s1 + $0x100] sm:$0xf]
  %v95 = vld [vmem:[%s1 + $0x104] sm:$0xf]
  %v96 = vld [vmem:[%s1 + $0x108] sm:$0xf]
  %v97 = vld [vmem:[%s1 + $0x10c] sm:$0xf]
  %v98 = vld [vmem:[%s1 + $0x110] sm:$0xf]
  %v99 = vld [vmem:[%s1 + $0x114] sm:$0xf]
  %v100 = vld [vmem:[%s1 + $0x118] sm:$0xf]
  %v101 = vld [vmem:[%s1 + $0x11c] sm:$0xf]
  %v114 = vunpack.c.l.b16 %v18
  %v115 = vunpack.c.h.b16 %v18
  %v116 = vunpack.c.l.b16 %v19
  %v117 = vunpack.c.h.b16 %v19
  %v118 = vunpack.c.l.b16 %v20
  %v119 = vunpack.c.l.b16 %v21
  %v120 = vunpack.c.h.b16 %v21
  %v121 = vunpack.c.l.b16 %v22
  %v122 = vunpack.c.h.b16 %v22
  %v123 = vunpack.c.l.b16 %v23
  %v124 = vunpack.c.l.b16 %v24
  %v125 = vunpack.c.h.b16 %v24
  %v126 = vunpack.c.l.b16 %v25
  %v127 = vunpack.c.h.b16 %v25
  %v128 = vunpack.c.l.b16 %v26
  %v129 = vunpack.c.l.b16 %v27
  %v130 = vunpack.c.h.b16 %v27
  %v131 = vunpack.c.l.b16 %v28
  %v132 = vunpack.c.h.b16 %v28
  %v133 = vunpack.c.l.b16 %v29
  %v134 = vpack.c.b16 %v119, %v114
  %v135 = vpack.c.b16 %v120, %v115
  %v136 = vpack.c.b16 %v121, %v116
  %v137 = vpack.c.b16 %v122, %v117
  %v138 = vpack.c.b16 %v123, %v118
  %v139 = vpack.c.b16 %v129, %v124
  %v140 = vpack.c.b16 %v130, %v125
  %v141 = vpack.c.b16 %v131, %v126
  %v142 = vpack.c.b16 %v132, %v127
  %v143 = vpack.c.b16 %v133, %v128
  %v224 = vunpack.c.l.b16 %v30
  %v225 = vunpack.c.l.b16 %v31
  %v226 = vunpack.c.l.b16 %v32
  %v227 = vunpack.c.l.b16 %v33
  %v228 = vunpack.c.l.b16 %v34
  %v229 = vunpack.c.l.b16 %v35
  %v230 = vunpack.c.l.b16 %v36
  %v231 = vunpack.c.l.b16 %v37
  %v232 = vunpack.c.l.b16 %v38
  %v233 = vunpack.c.l.b16 %v39
  %v234 = vunpack.c.l.b16 %v40
  %v235 = vunpack.c.l.b16 %v41
  %v236 = vunpack.c.l.b16 %v42
  %v237 = vunpack.c.l.b16 %v43
  %v238 = vunpack.c.l.b16 %v44
  %v239 = vunpack.c.l.b16 %v45
  %v240 = vunpack.c.l.b16 %v46
  %v241 = vunpack.c.l.b16 %v47
  %v242 = vunpack.c.l.b16 %v48
  %v243 = vunpack.c.l.b16 %v49
  %v244 = vunpack.c.l.b16 %v50
  %v245 = vunpack.c.l.b16 %v51
  %v246 = vunpack.c.l.b16 %v52
  %v247 = vunpack.c.l.b16 %v53
  %v248 = vunpack.c.l.b16 %v54
  %v249 = vunpack.c.l.b16 %v55
  %v250 = vunpack.c.l.b16 %v56
  %v251 = vunpack.c.l.b16 %v57
  %v252 = vunpack.c.l.b16 %v58
  %v253 = vunpack.c.l.b16 %v59
  %v254 = vunpack.c.l.b16 %v60
  %v255 = vunpack.c.l.b16 %v61
  %v256 = vunpack.c.l.b16 %v62
  %v257 = vunpack.c.l.b16 %v63
  %v258 = vunpack.c.l.b16 %v64
  %v259 = vunpack.c.l.b16 %v65
  %v260 = vunpack.c.l.b16 %v66
  %v261 = vunpack.c.l.b16 %v67
  %v262 = vunpack.c.l.b16 %v68
  %v263 = vunpack.c.l.b16 %v69
  %v264 = vunpack.c.l.b16 %v70
  %v265 = vunpack.c.l.b16 %v71
  %v266 = vunpack.c.l.b16 %v72
  %v267 = vunpack.c.l.b16 %v73
  %v268 = vunpack.c.l.b16 %v74
  %v269 = vunpack.c.l.b16 %v75
  %v270 = vunpack.c.l.b16 %v76
  %v271 = vunpack.c.l.b16 %v77
  %v272 = vunpack.c.l.b16 %v78
  %v273 = vunpack.c.l.b16 %v79
  %v274 = vunpack.c.l.b16 %v80
  %v275 = vunpack.c.l.b16 %v81
  %v276 = vunpack.c.l.b16 %v82
  %v277 = vunpack.c.l.b16 %v83
  %v278 = vunpack.c.l.b16 %v84
  %v279 = vunpack.c.l.b16 %v85
  %v280 = vunpack.c.l.b16 %v86
  %v281 = vunpack.c.l.b16 %v87
  %v282 = vunpack.c.l.b16 %v88
  %v283 = vunpack.c.l.b16 %v89
  %v284 = vunpack.c.l.b16 %v90
  %v285 = vunpack.c.l.b16 %v91
  %v286 = vunpack.c.l.b16 %v92
  %v287 = vunpack.c.l.b16 %v93
  %v288 = vunpack.c.l.b16 %v94
  %v289 = vunpack.c.l.b16 %v95
  %v290 = vunpack.c.l.b16 %v96
  %v291 = vunpack.c.l.b16 %v97
  %v292 = vunpack.c.l.b16 %v98
  %v293 = vunpack.c.l.b16 %v99
  %v294 = vunpack.c.l.b16 %v100
  %v295 = vunpack.c.l.b16 %v101
  %v296 = vpack.c.b16 %v225, %v224
  %v297 = vpack.c.b16 %v227, %v226
  %v298 = vpack.c.b16 %v229, %v228
  %v299 = vpack.c.b16 %v231, %v230
  %v300 = vpack.c.b16 %v233, %v232
  %v301 = vpack.c.b16 %v235, %v234
  %v302 = vpack.c.b16 %v237, %v236
  %v303 = vpack.c.b16 %v239, %v238
  %v304 = vpack.c.b16 %v241, %v240
  %v305 = vpack.c.b16 %v243, %v242
  %v306 = vpack.c.b16 %v245, %v244
  %v307 = vpack.c.b16 %v247, %v246
  %v308 = vpack.c.b16 %v249, %v248
  %v309 = vpack.c.b16 %v251, %v250
  %v310 = vpack.c.b16 %v253, %v252
  %v311 = vpack.c.b16 %v255, %v254
  %v312 = vpack.c.b16 %v257, %v256
  %v313 = vpack.c.b16 %v259, %v258
  %v314 = vpack.c.b16 %v261, %v260
  %v315 = vpack.c.b16 %v263, %v262
  %v316 = vpack.c.b16 %v265, %v264
  %v317 = vpack.c.b16 %v267, %v266
  %v318 = vpack.c.b16 %v269, %v268
  %v319 = vpack.c.b16 %v271, %v270
  %v320 = vpack.c.b16 %v273, %v272
  %v321 = vpack.c.b16 %v275, %v274
  %v322 = vpack.c.b16 %v277, %v276
  %v323 = vpack.c.b16 %v279, %v278
  %v324 = vpack.c.b16 %v281, %v280
  %v325 = vpack.c.b16 %v283, %v282
  %v326 = vpack.c.b16 %v285, %v284
  %v327 = vpack.c.b16 %v287, %v286
  %v328 = vpack.c.b16 %v289, %v288
  %v329 = vpack.c.b16 %v291, %v290
  %v330 = vpack.c.b16 %v293, %v292
  %v331 = vpack.c.b16 %v295, %v294
  %vm368 = vcmask 523264
  %v370 = vsel %vm368, %v138, 0
  %v373 = vsel %vm368, %v143, 0
  %375 = vmatpush.bf16.msra.mxu0 %v303
  %376 = vmatpush.bf16.msra.mxu0 %v302
  %377 = vmatpush.bf16.msra.mxu0 %v301
  %378 = vmatpush.bf16.msra.mxu0 %v300
  %379 = vmatpush.bf16.msra.mxu0 %v299
  %380 = vmatpush.bf16.msra.mxu0 %v298
  %381 = vmatpush.bf16.msra.mxu0 %v297
  %382 = vmatpush.bf16.msra.mxu0 %v296
  %383 = vmatmul.bf16.gmra.mxu0 %v134
  %v384 = vpop.f32.mrf.mxu0
  %v385 = vadd.f32 0.0, %v384
  %v386 = vpop.f32.mrf.mxu0
  %v387 = vadd.f32 0.0, %v386
  %388 = vmatmul.bf16.gmra.mxu0 %v139
  %v389 = vpop.f32.mrf.mxu0
  %v390 = vadd.f32 0.0, %v389
  %v391 = vpop.f32.mrf.mxu0
  %v392 = vadd.f32 0.0, %v391
  %393 = vdwg.mxu0
  %394 = vmatpush.bf16.msra.mxu0 %v311
  %395 = vmatpush.bf16.msra.mxu0 %v310
  %396 = vmatpush.bf16.msra.mxu0 %v309
  %397 = vmatpush.bf16.msra.mxu0 %v308
  %398 = vmatpush.bf16.msra.mxu0 %v307
  %399 = vmatpush.bf16.msra.mxu0 %v306
  %400 = vmatpush.bf16.msra.mxu0 %v305
  %401 = vmatpush.bf16.msra.mxu0 %v304
  %402 = vmatmul.bf16.gmra.mxu0 %v135
  %v403 = vpop.f32.mrf.mxu0
  %v404 = vadd.f32 %v385, %v403
  %v405 = vpop.f32.mrf.mxu0
  %v406 = vadd.f32 %v387, %v405
  %407 = vmatmul.bf16.gmra.mxu0 %v140
  %v408 = vpop.f32.mrf.mxu0
  %v409 = vadd.f32 %v390, %v408
  %v410 = vpop.f32.mrf.mxu0
  %v411 = vadd.f32 %v392, %v410
  %412 = vdwg.mxu0
  %413 = vmatpush.bf16.msra.mxu0 %v319
  %414 = vmatpush.bf16.msra.mxu0 %v318
  %415 = vmatpush.bf16.msra.mxu0 %v317
  %416 = vmatpush.bf16.msra.mxu0 %v316
  %417 = vmatpush.bf16.msra.mxu0 %v315
  %418 = vmatpush.bf16.msra.mxu0 %v314
  %419 = vmatpush.bf16.msra.mxu0 %v313
  %420 = vmatpush.bf16.msra.mxu0 %v312
  %421 = vmatmul.bf16.gmra.mxu0 %v136
  %v422 = vpop.f32.mrf.mxu0
  %v423 = vadd.f32 %v404, %v422
  %v424 = vpop.f32.mrf.mxu0
  %v425 = vadd.f32 %v406, %v424
  %426 = vmatmul.bf16.gmra.mxu0 %v141
  %v427 = vpop.f32.mrf.mxu0
  %v428 = vadd.f32 %v409, %v427
  %v429 = vpop.f32.mrf.mxu0
  %v430 = vadd.f32 %v411, %v429
  %431 = vdwg.mxu0
  %432 = vmatpush.bf16.msra.mxu0 %v327
  %433 = vmatpush.bf16.msra.mxu0 %v326
  %434 = vmatpush.bf16.msra.mxu0 %v325
  %435 = vmatpush.bf16.msra.mxu0 %v324
  %436 = vmatpush.bf16.msra.mxu0 %v323
  %437 = vmatpush.bf16.msra.mxu0 %v322
  %438 = vmatpush.bf16.msra.mxu0 %v321
  %439 = vmatpush.bf16.msra.mxu0 %v320
  %440 = vmatmul.bf16.gmra.mxu0 %v137
  %v441 = vpop.f32.mrf.mxu0
  %v442 = vadd.f32 %v423, %v441
  %v443 = vpop.f32.mrf.mxu0
  %v444 = vadd.f32 %v425, %v443
  %445 = vmatmul.bf16.gmra.mxu0 %v142
  %v446 = vpop.f32.mrf.mxu0
  %v447 = vadd.f32 %v428, %v446
  %v448 = vpop.f32.mrf.mxu0
  %v449 = vadd.f32 %v430, %v448
  %450 = vdwg.mxu0
  %451 = vmatpush.bf16.msra.mxu0 0
  %452 = vmatpush.bf16.msra.mxu0 0
  %453 = vmatpush.bf16.msra.mxu0 0
  %454 = vmatpush.bf16.msra.mxu0 0
  %455 = vmatpush.bf16.msra.mxu0 %v331
  %456 = vmatpush.bf16.msra.mxu0 %v330
  %457 = vmatpush.bf16.msra.mxu0 %v329
  %458 = vmatpush.bf16.msra.mxu0 %v328
  %459 = vmatmul.bf16.gmra.mxu0 %v370
  %v460 = vpop.f32.mrf.mxu0
  %v461 = vadd.f32 %v442, %v460
  %v462 = vpop.f32.mrf.mxu0
  %v463 = vadd.f32 %v444, %v462
  %464 = vmatmul.bf16.gmra.mxu0 %v373
  %v465 = vpop.f32.mrf.mxu0
  %v466 = vadd.f32 %v447, %v465
  %v467 = vpop.f32.mrf.mxu0
  %v468 = vadd.f32 %v449, %v467
  %469 = vdwg.mxu0
  %v470 = vsel %vm368, %v461, 0.0
  %v471 = vsel %vm368, %v463, 0.0
  %v472 = vadd.f32 %v470, %v471
  %v473 = vsel %vm368, %v466, 0.0
  %v474 = vadd.f32 %v472, %v473
  %v475 = vsel %vm368, %v468, 0.0
  %v476 = vadd.f32 %v474, %v475
  %v477 = vrot.slane %v476, 4
  %v478 = vadd.f32 %v476, %v477
  %v479 = vrot.slane %v478, 2
  %v480 = vadd.f32 %v478, %v479
  %v481 = vrot.slane %v480, 1
  %v482 = vadd.f32 %v480, %v481
  %v483 = vmul.f32 %v482, 0.03125
  %v484 = vsub.f32 %v461, %v483
  %v485 = vsub.f32 %v463, %v483
  %v486 = vsub.f32 %v466, %v483
  %v487 = vsub.f32 %v468, %v483
  %v488 = vmul.f32 %v484, %v484
  %v489 = vmul.f32 %v485, %v485
  %v490 = vmul.f32 %v486, %v486
  %v491 = vmul.f32 %v487, %v487
  %v492 = vsel %vm368, %v488, 0.0
  %v493 = vsel %vm368, %v489, 0.0
  %v494 = vadd.f32 %v492, %v493
  %v495 = vsel %vm368, %v490, 0.0
  %v496 = vadd.f32 %v494, %v495
  %v497 = vsel %vm368, %v491, 0.0
  %v498 = vadd.f32 %v496, %v497
  %v499 = vrot.slane %v498, 4
  %v500 = vadd.f32 %v498, %v499
  %v501 = vrot.slane %v500, 2
  %v502 = vadd.f32 %v500, %v501
  %v503 = vrot.slane %v502, 1
  %v504 = vadd.f32 %v502, %v503
  %v505 = vmul.f32 %v504, 0.03125
  %v506 = vld [vmem:[%s2] sm:$0x1]
  %v507 = vadd.f32 %v505, 1e-05
  %v508 = vrsqrt.pop %v507
  %v509 = vmul.f32 %v508, %v507
  %v510 = vmul.f32 %v509, %v508
  %v511 = vmul.f32 0.5, %v510
  %v512 = vsub.f32 1.5, %v511
  %v513 = vmul.f32 %v508, %v512
  %vm514 = vweird.f32 %v507
  %vm515 = vweird.f32 %v508
  %vm516 = vmor %vm514, %vm515
  %v517 = vsel %vm516, %v508, %v513
  %v518 = vmul.f32 %v506, %v517
  %v520 = vperm.slane %v518, 0
  %v522 = vmul.f32 %v484, %v520
  %v523 = vmul.f32 %v485, %v520
  %v524 = vmul.f32 %v486, %v520
  %v525 = vmul.f32 %v487, %v520
  %v526 = vld [vmem:[%s3] sm:$0x1]
  %v528 = vperm.slane %v526, 0
  %v530 = vadd.f32 %v522, %v528
  %v531 = vadd.f32 %v523, %v528
  %v532 = vadd.f32 %v524, %v528
  %v533 = vadd.f32 %v525, %v528
  %v534 = vmax.f32 %v530, 0.0
  %v535 = vmax.f32 %v531, 0.0
  %v536 = vmax.f32 %v532, 0.0
  %v537 = vmax.f32 %v533, 0.0
  %538 = vst.msk [vmem:[%s4] sm:$0xff] %vm368, %v534
  %539 = vst.msk [vmem:[%s4 + $0x8] sm:$0xff] %vm368, %v535
  %540 = vst.msk [vmem:[%s4 + $0x10] sm:$0xff] %vm368, %v536
  %541 = vst.msk [vmem:[%s4 + $0x18] sm:$0xff] %vm368, %v537
  // Predicated region
  $region18: #{_lambda_.24} parent=0 // pred_check
    _
  $region19: #{_lambda_.24} parent=0 // pred_check_branch
    %543 = sbr.rel (0) target = $region21
  $region20: #{_lambda_.24} parent=0 // pred_region
    _
  $region21: #{_lambda_.24} parent=0 // pred_fallthru
    _
  // Predicated region
  $region22: #{_lambda_.24} parent=0 // pred_check
    _
  $region23: #{_lambda_.24} parent=0 // pred_check_branch
    %545 = sbr.rel (0) target = $region25
  $region24: #{_lambda_.24} parent=0 // pred_region
    _
  $region25: #{_lambda_.24} parent=0 // pred_fallthru
    _

// kernel: _lambda_.25
$region0: #{_lambda_.25}
  #allocation0 [shape = 'u32[]', space=smem, size = 0x4, offset = 0x4, fixed_abs, tag = 'smem constant byte address 0x4 - core index']
  #allocation1 [shape = 'u32[72,128]{1,0:T(1,128)}', space=vmem, size = 0x9000, scoped, tag = 'internal scratch']
  %s0 = inlined_call_operand.vmem [shape: bf16[32,576], index: 0, kind: input, shape index: {}]
  %s1 = inlined_call_operand.vmem [shape: bf16[576,64], index: 1, kind: input, shape index: {}]
  %s2 = inlined_call_operand.vmem [shape: f32[1,64], index: 2, kind: input, shape index: {}]
  %s3 = inlined_call_operand.vmem [shape: f32[1,64], index: 3, kind: input, shape index: {}]
  %s4 = inlined_call_operand.vmem [shape: f32[32,64], index: 4, kind: input, shape index: {}]
  %s5 = inlined_call_operand.hbm [shape: f32[32,64], index: 5, kind: output, shape index: {}]
  %s6 = sld [smem:[#allocation0]]
  $region30: #{_lambda_.25} parent=0
    _
  %s8 = ssub.s32 1, %s6
  %s9 = scalar_select 0, %s8, %s6
  $region1: #{_lambda_.25} parent=0
    #allocation2 [shape = 'u8[16384]{0}', space=vmem, size = 0x4000, scoped, tag = 'output window, operand 0, single buffered']
    #allocation3 [shape = 's32[1]{0}', space=sflag, size = 0x4, scoped, tag = 'scoped memory for _lambda_.25']
    %10 = vsyncpa [#allocation3], 0
    // Predicated region
    $region2: #{_lambda_.25} parent=1 // pred_check
      _
    $region3: #{_lambda_.25} parent=1 // pred_check_branch
      %12 = sbr.rel (0) target = $region5
    $region4: #{_lambda_.25} parent=1 // pred_region
      _
    $region5: #{_lambda_.25} parent=1 // pred_fallthru
      _
    // Predicated region
    $region6: #{_lambda_.25} parent=1 // pred_check
      _
    $region7: #{_lambda_.25} parent=1 // pred_check_branch
      %14 = sbr.rel (0) target = $region9
    $region8: #{_lambda_.25} parent=1 // pred_region
      _
    $region9: #{_lambda_.25} parent=1 // pred_fallthru
      _
    // Predicated region
    $region10: #{_lambda_.25} parent=1 // pred_check
      _
    $region11: #{_lambda_.25} parent=1 // pred_check_branch
      %16 = sbr.rel (0) target = $region13
    $region12: #{_lambda_.25} parent=1 // pred_region
      _
    $region13: #{_lambda_.25} parent=1 // pred_fallthru
      _
    // Predicated region
    $region14: #{_lambda_.25} parent=1 // pred_check
      _
    $region15: #{_lambda_.25} parent=1 // pred_check_branch
      %18 = sbr.rel (0) target = $region17
    $region16: #{_lambda_.25} parent=1 // pred_region
      _
    $region17: #{_lambda_.25} parent=1 // pred_fallthru
      _
    // Predicated region
    $region18: #{_lambda_.25} parent=1 // pred_check
      _
    $region19: #{_lambda_.25} parent=1 // pred_check_branch
      %20 = sbr.rel (0) target = $region21
    $region20: #{_lambda_.25} parent=1 // pred_region
      _
    $region21: #{_lambda_.25} parent=1 // pred_fallthru
      _
    %v22 = vld [vmem:[%s0] sm:$0xff]
    %v23 = vld [vmem:[%s0 + $0x8] sm:$0xff]
    %v24 = vld [vmem:[%s0 + $0x10] sm:$0xf]
    %v25 = vld [vmem:[%s0 + $0x14] sm:$0xff]
    %v26 = vld [vmem:[%s0 + $0x1c] sm:$0xff]
    %v27 = vld [vmem:[%s0 + $0x24] sm:$0xf]
    %v28 = vld [vmem:[%s0 + $0x28] sm:$0xff]
    %v29 = vld [vmem:[%s0 + $0x30] sm:$0xff]
    %v30 = vld [vmem:[%s0 + $0x38] sm:$0xf]
    %v31 = vld [vmem:[%s0 + $0x3c] sm:$0xff]
    %v32 = vld [vmem:[%s0 + $0x44] sm:$0xff]
    %v33 = vld [vmem:[%s0 + $0x4c] sm:$0xf]
    %v34 = vld [vmem:[%s1] sm:$0xf]
    %v35 = vld [vmem:[%s1 + $0x4] sm:$0xf]
    %v36 = vld [vmem:[%s1 + $0x8] sm:$0xf]
    %v37 = vld [vmem:[%s1 + $0xc] sm:$0xf]
    %v38 = vld [vmem:[%s1 + $0x10] sm:$0xf]
    %v39 = vld [vmem:[%s1 + $0x14] sm:$0xf]
    %v40 = vld [vmem:[%s1 + $0x18] sm:$0xf]
    %v41 = vld [vmem:[%s1 + $0x1c] sm:$0xf]
    %v42 = vld [vmem:[%s1 + $0x20] sm:$0xf]
    %v43 = vld [vmem:[%s1 + $0x24] sm:$0xf]
    %v44 = vld [vmem:[%s1 + $0x28] sm:$0xf]
    %v45 = vld [vmem:[%s1 + $0x2c] sm:$0xf]
    %v46 = vld [vmem:[%s1 + $0x30] sm:$0xf]
    %v47 = vld [vmem:[%s1 + $0x34] sm:$0xf]
    %v48 = vld [vmem:[%s1 + $0x38] sm:$0xf]
    %v49 = vld [vmem:[%s1 + $0x3c] sm:$0xf]
    %v50 = vld [vmem:[%s1 + $0x40] sm:$0xf]
    %v51 = vld [vmem:[%s1 + $0x44] sm:$0xf]
    %v52 = vld [vmem:[%s1 + $0x48] sm:$0xf]
    %v53 = vld [vmem:[%s1 + $0x4c] sm:$0xf]
    %v54 = vld [vmem:[%s1 + $0x50] sm:$0xf]
    %v55 = vld [vmem:[%s1 + $0x54] sm:$0xf]
    %v56 = vld [vmem:[%s1 + $0x58] sm:$0xf]
    %v57 = vld [vmem:[%s1 + $0x5c] sm:$0xf]
    %v58 = vld [vmem:[%s1 + $0x60] sm:$0xf]
    %v59 = vld [vmem:[%s1 + $0x64] sm:$0xf]
    %v60 = vld [vmem:[%s1 + $0x68] sm:$0xf]
    %v61 = vld [vmem:[%s1 + $0x6c] sm:$0xf]
    %v62 = vld [vmem:[%s1 + $0x70] sm:$0xf]
    %v63 = vld [vmem:[%s1 + $0x74] sm:$0xf]
    %v64 = vld [vmem:[%s1 + $0x78] sm:$0xf]
    %v65 = vld [vmem:[%s1 + $0x7c] sm:$0xf]
    %v66 = vld [vmem:[%s1 + $0x80] sm:$0xf]
    %v67 = vld [vmem:[%s1 + $0x84] sm:$0xf]
    %v68 = vld [vmem:[%s1 + $0x88] sm:$0xf]
    %v69 = vld [vmem:[%s1 + $0x8c] sm:$0xf]
    %v70 = vld [vmem:[%s1 + $0x90] sm:$0xf]
    %v71 = vld [vmem:[%s1 + $0x94] sm:$0xf]
    %v72 = vld [vmem:[%s1 + $0x98] sm:$0xf]
    %v73 = vld [vmem:[%s1 + $0x9c] sm:$0xf]
    %v74 = vld [vmem:[%s1 + $0xa0] sm:$0xf]
    %v75 = vld [vmem:[%s1 + $0xa4] sm:$0xf]
    %v76 = vld [vmem:[%s1 + $0xa8] sm:$0xf]
    %v77 = vld [vmem:[%s1 + $0xac] sm:$0xf]
    %v78 = vld [vmem:[%s1 + $0xb0] sm:$0xf]
    %v79 = vld [vmem:[%s1 + $0xb4] sm:$0xf]
    %v80 = vld [vmem:[%s1 + $0xb8] sm:$0xf]
    %v81 = vld [vmem:[%s1 + $0xbc] sm:$0xf]
    %v82 = vld [vmem:[%s1 + $0xc0] sm:$0xf]
    %v83 = vld [vmem:[%s1 + $0xc4] sm:$0xf]
    %v84 = vld [vmem:[%s1 + $0xc8] sm:$0xf]
    %v85 = vld [vmem:[%s1 + $0xcc] sm:$0xf]
    %v86 = vld [vmem:[%s1 + $0xd0] sm:$0xf]
    %v87 = vld [vmem:[%s1 + $0xd4] sm:$0xf]
    %v88 = vld [vmem:[%s1 + $0xd8] sm:$0xf]
    %v89 = vld [vmem:[%s1 + $0xdc] sm:$0xf]
    %v90 = vld [vmem:[%s1 + $0xe0] sm:$0xf]
    %v91 = vld [vmem:[%s1 + $0xe4] sm:$0xf]
    %v92 = vld [vmem:[%s1 + $0xe8] sm:$0xf]
    %v93 = vld [vmem:[%s1 + $0xec] sm:$0xf]
    %v94 = vld [vmem:[%s1 + $0xf0] sm:$0xf]
    %v95 = vld [vmem:[%s1 + $0xf4] sm:$0xf]
    %v96 = vld [vmem:[%s1 + $0xf8] sm:$0xf]
    %v97 = vld [vmem:[%s1 + $0xfc] sm:$0xf]
    %v98 = vld [vmem:[%s1 + $0x100] sm:$0xf]
    %v99 = vld [vmem:[%s1 + $0x104] sm:$0xf]
    %v100 = vld [vmem:[%s1 + $0x108] sm:$0xf]
    %v101 = vld [vmem:[%s1 + $0x10c] sm:$0xf]
    %v102 = vld [vmem:[%s1 + $0x110] sm:$0xf]
    %v103 = vld [vmem:[%s1 + $0x114] sm:$0xf]
    %v104 = vld [vmem:[%s1 + $0x118] sm:$0xf]
    %v105 = vld [vmem:[%s1 + $0x11c] sm:$0xf]
    %v118 = vunpack.c.l.b16 %v22
    %v119 = vunpack.c.h.b16 %v22
    %v120 = vunpack.c.l.b16 %v23
    %v121 = vunpack.c.h.b16 %v23
    %v122 = vunpack.c.l.b16 %v24
    %v123 = vunpack.c.l.b16 %v25
    %v124 = vunpack.c.h.b16 %v25
    %v125 = vunpack.c.l.b16 %v26
    %v126 = vunpack.c.h.b16 %v26
    %v127 = vunpack.c.l.b16 %v27
    %v128 = vunpack.c.l.b16 %v28
    %v129 = vunpack.c.h.b16 %v28
    %v130 = vunpack.c.l.b16 %v29
    %v131 = vunpack.c.h.b16 %v29
    %v132 = vunpack.c.l.b16 %v30
    %v133 = vunpack.c.l.b16 %v31
    %v134 = vunpack.c.h.b16 %v31
    %v135 = vunpack.c.l.b16 %v32
    %v136 = vunpack.c.h.b16 %v32
    %v137 = vunpack.c.l.b16 %v33
    %v138 = vpack.c.b16 %v123, %v118
    %v139 = vpack.c.b16 %v124, %v119
    %v140 = vpack.c.b16 %v125, %v120
    %v141 = vpack.c.b16 %v126, %v121
    %v142 = vpack.c.b16 %v127, %v122
    %v143 = vpack.c.b16 %v133, %v128
    %v144 = vpack.c.b16 %v134, %v129
    %v145 = vpack.c.b16 %v135, %v130
    %v146 = vpack.c.b16 %v136, %v131
    %v147 = vpack.c.b16 %v137, %v132
    %v228 = vunpack.c.l.b16 %v34
    %v229 = vunpack.c.l.b16 %v35
    %v230 = vunpack.c.l.b16 %v36
    %v231 = vunpack.c.l.b16 %v37
    %v232 = vunpack.c.l.b16 %v38
    %v233 = vunpack.c.l.b16 %v39
    %v234 = vunpack.c.l.b16 %v40
    %v235 = vunpack.c.l.b16 %v41
    %v236 = vunpack.c.l.b16 %v42
    %v237 = vunpack.c.l.b16 %v43
    %v238 = vunpack.c.l.b16 %v44
    %v239 = vunpack.c.l.b16 %v45
    %v240 = vunpack.c.l.b16 %v46
    %v241 = vunpack.c.l.b16 %v47
    %v242 = vunpack.c.l.b16 %v48
    %v243 = vunpack.c.l.b16 %v49
    %v244 = vunpack.c.l.b16 %v50
    %v245 = vunpack.c.l.b16 %v51
    %v246 = vunpack.c.l.b16 %v52
    %v247 = vunpack.c.l.b16 %v53
    %v248 = vunpack.c.l.b16 %v54
    %v249 = vunpack.c.l.b16 %v55
    %v250 = vunpack.c.l.b16 %v56
    %v251 = vunpack.c.l.b16 %v57
    %v252 = vunpack.c.l.b16 %v58
    %v253 = vunpack.c.l.b16 %v59
    %v254 = vunpack.c.l.b16 %v60
    %v255 = vunpack.c.l.b16 %v61
    %v256 = vunpack.c.l.b16 %v62
    %v257 = vunpack.c.l.b16 %v63
    %v258 = vunpack.c.l.b16 %v64
    %v259 = vunpack.c.l.b16 %v65
    %v260 = vunpack.c.l.b16 %v66
    %v261 = vunpack.c.l.b16 %v67
    %v262 = vunpack.c.l.b16 %v68
    %v263 = vunpack.c.l.b16 %v69
    %v264 = vunpack.c.l.b16 %v70
    %v265 = vunpack.c.l.b16 %v71
    %v266 = vunpack.c.l.b16 %v72
    %v267 = vunpack.c.l.b16 %v73
    %v268 = vunpack.c.l.b16 %v74
    %v269 = vunpack.c.l.b16 %v75
    %v270 = vunpack.c.l.b16 %v76
    %v271 = vunpack.c.l.b16 %v77
    %v272 = vunpack.c.l.b16 %v78
    %v273 = vunpack.c.l.b16 %v79
    %v274 = vunpack.c.l.b16 %v80
    %v275 = vunpack.c.l.b16 %v81
    %v276 = vunpack.c.l.b16 %v82
    %v277 = vunpack.c.l.b16 %v83
    %v278 = vunpack.c.l.b16 %v84
    %v279 = vunpack.c.l.b16 %v85
    %v280 = vunpack.c.l.b16 %v86
    %v281 = vunpack.c.l.b16 %v87
    %v282 = vunpack.c.l.b16 %v88
    %v283 = vunpack.c.l.b16 %v89
    %v284 = vunpack.c.l.b16 %v90
    %v285 = vunpack.c.l.b16 %v91
    %v286 = vunpack.c.l.b16 %v92
    %v287 = vunpack.c.l.b16 %v93
    %v288 = vunpack.c.l.b16 %v94
    %v289 = vunpack.c.l.b16 %v95
    %v290 = vunpack.c.l.b16 %v96
    %v291 = vunpack.c.l.b16 %v97
    %v292 = vunpack.c.l.b16 %v98
    %v293 = vunpack.c.l.b16 %v99
    %v294 = vunpack.c.l.b16 %v100
    %v295 = vunpack.c.l.b16 %v101
    %v296 = vunpack.c.l.b16 %v102
    %v297 = vunpack.c.l.b16 %v103
    %v298 = vunpack.c.l.b16 %v104
    %v299 = vunpack.c.l.b16 %v105
    %v300 = vpack.c.b16 %v229, %v228
    %v301 = vpack.c.b16 %v231, %v230
    %v302 = vpack.c.b16 %v233, %v232
    %v303 = vpack.c.b16 %v235, %v234
    %v304 = vpack.c.b16 %v237, %v236
    %v305 = vpack.c.b16 %v239, %v238
    %v306 = vpack.c.b16 %v241, %v240
    %v307 = vpack.c.b16 %v243, %v242
    %v308 = vpack.c.b16 %v245, %v244
    %v309 = vpack.c.b16 %v247, %v246
    %v310 = vpack.c.b16 %v249, %v248
    %v311 = vpack.c.b16 %v251, %v250
    %v312 = vpack.c.b16 %v253, %v252
    %v313 = vpack.c.b16 %v255, %v254
    %v314 = vpack.c.b16 %v257, %v256
    %v315 = vpack.c.b16 %v259, %v258
    %v316 = vpack.c.b16 %v261, %v260
    %v317 = vpack.c.b16 %v263, %v262
    %v318 = vpack.c.b16 %v265, %v264
    %v319 = vpack.c.b16 %v267, %v266
    %v320 = vpack.c.b16 %v269, %v268
    %v321 = vpack.c.b16 %v271, %v270
    %v322 = vpack.c.b16 %v273, %v272
    %v323 = vpack.c.b16 %v275, %v274
    %v324 = vpack.c.b16 %v277, %v276
    %v325 = vpack.c.b16 %v279, %v278
    %v326 = vpack.c.b16 %v281, %v280
    %v327 = vpack.c.b16 %v283, %v282
    %v328 = vpack.c.b16 %v285, %v284
    %v329 = vpack.c.b16 %v287, %v286
    %v330 = vpack.c.b16 %v289, %v288
    %v331 = vpack.c.b16 %v291, %v290
    %v332 = vpack.c.b16 %v293, %v292
    %v333 = vpack.c.b16 %v295, %v294
    %v334 = vpack.c.b16 %v297, %v296
    %v335 = vpack.c.b16 %v299, %v298
    %vm372 = vcmask 523264
    %v374 = vsel %vm372, %v142, 0
    %v377 = vsel %vm372, %v147, 0
    %379 = vmatpush.bf16.msra.mxu0 %v307
    %380 = vmatpush.bf16.msra.mxu0 %v306
    %381 = vmatpush.bf16.msra.mxu0 %v305
    %382 = vmatpush.bf16.msra.mxu0 %v304
    %383 = vmatpush.bf16.msra.mxu0 %v303
    %384 = vmatpush.bf16.msra.mxu0 %v302
    %385 = vmatpush.bf16.msra.mxu0 %v301
    %386 = vmatpush.bf16.msra.mxu0 %v300
    %387 = vmatmul.bf16.gmra.mxu0 %v138
    %v388 = vpop.f32.mrf.mxu0
    %v389 = vadd.f32 0.0, %v388
    %v390 = vpop.f32.mrf.mxu0
    %v391 = vadd.f32 0.0, %v390
    %392 = vmatmul.bf16.gmra.mxu0 %v143
    %v393 = vpop.f32.mrf.mxu0
    %v394 = vadd.f32 0.0, %v393
    %v395 = vpop.f32.mrf.mxu0
    %v396 = vadd.f32 0.0, %v395
    %397 = vdwg.mxu0
    %398 = vmatpush.bf16.msra.mxu0 %v315
    %399 = vmatpush.bf16.msra.mxu0 %v314
    %400 = vmatpush.bf16.msra.mxu0 %v313
    %401 = vmatpush.bf16.msra.mxu0 %v312
    %402 = vmatpush.bf16.msra.mxu0 %v311
    %403 = vmatpush.bf16.msra.mxu0 %v310
    %404 = vmatpush.bf16.msra.mxu0 %v309
    %405 = vmatpush.bf16.msra.mxu0 %v308
    %406 = vmatmul.bf16.gmra.mxu0 %v139
    %v407 = vpop.f32.mrf.mxu0
    %v408 = vadd.f32 %v389, %v407
    %v409 = vpop.f32.mrf.mxu0
    %v410 = vadd.f32 %v391, %v409
    %411 = vmatmul.bf16.gmra.mxu0 %v144
    %v412 = vpop.f32.mrf.mxu0
    %v413 = vadd.f32 %v394, %v412
    %v414 = vpop.f32.mrf.mxu0
    %v415 = vadd.f32 %v396, %v414
    %416 = vdwg.mxu0
    %417 = vmatpush.bf16.msra.mxu0 %v323
    %418 = vmatpush.bf16.msra.mxu0 %v322
    %419 = vmatpush.bf16.msra.mxu0 %v321
    %420 = vmatpush.bf16.msra.mxu0 %v320
    %421 = vmatpush.bf16.msra.mxu0 %v319
    %422 = vmatpush.bf16.msra.mxu0 %v318
    %423 = vmatpush.bf16.msra.mxu0 %v317
    %424 = vmatpush.bf16.msra.mxu0 %v316
    %425 = vmatmul.bf16.gmra.mxu0 %v140
    %v426 = vpop.f32.mrf.mxu0
    %v427 = vadd.f32 %v408, %v426
    %v428 = vpop.f32.mrf.mxu0
    %v429 = vadd.f32 %v410, %v428
    %430 = vmatmul.bf16.gmra.mxu0 %v145
    %v431 = vpop.f32.mrf.mxu0
    %v432 = vadd.f32 %v413, %v431
    %v433 = vpop.f32.mrf.mxu0
    %v434 = vadd.f32 %v415, %v433
    %435 = vdwg.mxu0
    %436 = vmatpush.bf16.msra.mxu0 %v331
    %437 = vmatpush.bf16.msra.mxu0 %v330
    %438 = vmatpush.bf16.msra.mxu0 %v329
    %439 = vmatpush.bf16.msra.mxu0 %v328
    %440 = vmatpush.bf16.msra.mxu0 %v327
    %441 = vmatpush.bf16.msra.mxu0 %v326
    %442 = vmatpush.bf16.msra.mxu0 %v325
    %443 = vmatpush.bf16.msra.mxu0 %v324
    %444 = vmatmul.bf16.gmra.mxu0 %v141
    %v445 = vpop.f32.mrf.mxu0
    %v446 = vadd.f32 %v427, %v445
    %v447 = vpop.f32.mrf.mxu0
    %v448 = vadd.f32 %v429, %v447
    %449 = vmatmul.bf16.gmra.mxu0 %v146
    %v450 = vpop.f32.mrf.mxu0
    %v451 = vadd.f32 %v432, %v450
    %v452 = vpop.f32.mrf.mxu0
    %v453 = vadd.f32 %v434, %v452
    %454 = vdwg.mxu0
    %455 = vmatpush.bf16.msra.mxu0 0
    %456 = vmatpush.bf16.msra.mxu0 0
    %457 = vmatpush.bf16.msra.mxu0 0
    %458 = vmatpush.bf16.msra.mxu0 0
    %459 = vmatpush.bf16.msra.mxu0 %v335
    %460 = vmatpush.bf16.msra.mxu0 %v334
    %461 = vmatpush.bf16.msra.mxu0 %v333
    %462 = vmatpush.bf16.msra.mxu0 %v332
    %463 = vmatmul.bf16.gmra.mxu0 %v374
    %v464 = vpop.f32.mrf.mxu0
    %v465 = vadd.f32 %v446, %v464
    %v466 = vpop.f32.mrf.mxu0
    %v467 = vadd.f32 %v448, %v466
    %468 = vmatmul.bf16.gmra.mxu0 %v377
    %v469 = vpop.f32.mrf.mxu0
    %v470 = vadd.f32 %v451, %v469
    %v471 = vpop.f32.mrf.mxu0
    %v472 = vadd.f32 %v453, %v471
    %473 = vdwg.mxu0
    %v474 = vsel %vm372, %v465, 0.0
    %v475 = vsel %vm372, %v467, 0.0
    %v476 = vadd.f32 %v474, %v475
    %v477 = vsel %vm372, %v470, 0.0
    %v478 = vadd.f32 %v476, %v477
    %v479 = vsel %vm372, %v472, 0.0
    %v480 = vadd.f32 %v478, %v479
    %v481 = vrot.slane %v480, 4
    %v482 = vadd.f32 %v480, %v481
    %v483 = vrot.slane %v482, 2
    %v484 = vadd.f32 %v482, %v483
    %v485 = vrot.slane %v484, 1
    %v486 = vadd.f32 %v484, %v485
    %v487 = vmul.f32 %v486, 0.03125
    %v488 = vsub.f32 %v465, %v487
    %v489 = vsub.f32 %v467, %v487
    %v490 = vsub.f32 %v470, %v487
    %v491 = vsub.f32 %v472, %v487
    %v492 = vmul.f32 %v488, %v488
    %v493 = vmul.f32 %v489, %v489
    %v494 = vmul.f32 %v490, %v490
    %v495 = vmul.f32 %v491, %v491
    %v496 = vsel %vm372, %v492, 0.0
    %v497 = vsel %vm372, %v493, 0.0
    %v498 = vadd.f32 %v496, %v497
    %v499 = vsel %vm372, %v494, 0.0
    %v500 = vadd.f32 %v498, %v499
    %v501 = vsel %vm372, %v495, 0.0
    %v502 = vadd.f32 %v500, %v501
    %v503 = vrot.slane %v502, 4
    %v504 = vadd.f32 %v502, %v503
    %v505 = vrot.slane %v504, 2
    %v506 = vadd.f32 %v504, %v505
    %v507 = vrot.slane %v506, 1
    %v508 = vadd.f32 %v506, %v507
    %v509 = vmul.f32 %v508, 0.03125
    %v510 = vld [vmem:[%s2] sm:$0x1]
    %v511 = vadd.f32 %v509, 1e-05
    %v512 = vrsqrt.pop %v511
    %v513 = vmul.f32 %v512, %v511
    %v514 = vmul.f32 %v513, %v512
    %v515 = vmul.f32 0.5, %v514
    %v516 = vsub.f32 1.5, %v515
    %v517 = vmul.f32 %v512, %v516
    %vm518 = vweird.f32 %v511
    %vm519 = vweird.f32 %v512
    %vm520 = vmor %vm518, %vm519
    %v521 = vsel %vm520, %v512, %v517
    %v522 = vmul.f32 %v510, %v521
    %v524 = vperm.slane %v522, 0
    %v526 = vmul.f32 %v488, %v524
    %v527 = vmul.f32 %v489, %v524
    %v528 = vmul.f32 %v490, %v524
    %v529 = vmul.f32 %v491, %v524
    %v530 = vld [vmem:[%s3] sm:$0x1]
    %v532 = vperm.slane %v530, 0
    %v534 = vadd.f32 %v526, %v532
    %v535 = vadd.f32 %v527, %v532
    %v536 = vadd.f32 %v528, %v532
    %v537 = vadd.f32 %v529, %v532
    %v538 = vld [vmem:[%s4] sm:$0xff]
    %v539 = vld [vmem:[%s4 + $0x8] sm:$0xff]
    %v540 = vld [vmem:[%s4 + $0x10] sm:$0xff]
    %v541 = vld [vmem:[%s4 + $0x18] sm:$0xff]
    %v542 = vadd.f32 %v534, %v538
    %v543 = vadd.f32 %v535, %v539
    %v544 = vadd.f32 %v536, %v540
    %v545 = vadd.f32 %v537, %v541
    %v546 = vmax.f32 %v542, 0.0
    %v547 = vmax.f32 %v543, 0.0
    %v548 = vmax.f32 %v544, 0.0
    %v549 = vmax.f32 %v545, 0.0
    %550 = vst.msk [vmem:[#allocation2] sm:$0xff] %vm372, %v546
    %551 = vst.msk [vmem:[#allocation2 + $0x8] sm:$0xff] %vm372, %v547
    %552 = vst.msk [vmem:[#allocation2 + $0x10] sm:$0xff] %vm372, %v548
    %553 = vst.msk [vmem:[#allocation2 + $0x18] sm:$0xff] %vm372, %v549
    // Predicated region
    $region22: #{_lambda_.25} parent=1 // pred_check
      _
    $region23: #{_lambda_.25} parent=1 // pred_check_branch
      %555 = sbr.rel (0) target = $region25
    $region24: #{_lambda_.25} parent=1 // pred_region
      %557 = vsyncadd [#allocation3], 0
      %s558 = sshll.u32 [#allocation2], 4
      %s559 = int_to_ptr.vmem [resolvable:$true] %s558
      %s560 = sshll.u32 %s5, 4
      %s561 = int_to_ptr.hbm [resolvable:$true] %s560
      %566 = dma.vmem_to_hbm [thread:$0]  %s559, 512, %s561, [#allocation3], 128, 128, 8
    $region25: #{_lambda_.25} parent=1 // pred_fallthru
      _
    // Predicated region
    $region26: #{_lambda_.25} parent=1 // pred_check
      _
    $region27: #{_lambda_.25} parent=1 // pred_check_branch
      %568 = sbr.rel (0) target = $region29
    $region28: #{_lambda_.25} parent=1 // pred_region
      %570 = dma.done [#allocation3], 512
    $region29: #{_lambda_.25} parent=1 // pred_fallthru
      _
    %571 = vsyncpa [#allocation3], 1

</llo_original>
